<compile_context>
chip_gen: v6e
topology: v6e:2x2x1
jax: 0.10.0
libtpu: 0.0.40
codegen_flags: <defaults>
</compile_context>

<pallas_src>
import functools

import jax
import jax.numpy as jnp
from jax import lax
from jax.experimental import pallas as pl
from jax.experimental.pallas import tpu as pltpu

# ---------------- static module config (SwinBlock __init__ args) -------------
DIM = 32          # dim
HEADS = 2         # heads
HEAD_DIM = 16     # head_dim
INNER = HEADS * HEAD_DIM
MLP_DIM = 64      # mlp_dim
WINDOW = 4        # window_size
SHIFTED = True    # shifted
REL_POS = True    # relative_pos_embedding
EPS = 1e-5
NEG = -1e9        # large finite negative; exp underflows to exactly 0 (== -inf result)


# ---------------- fused kernel -------------------------------------------------
def _swin_kernel(x_ref, bias_ref, wq_ref, wk_ref, wv_ref, wo_ref, bo_ref,
                 ln1g_ref, ln1b_ref, ln2g_ref, ln2b_ref,
                 w1_ref, b1_ref, w2_ref, b2_ref, o_ref,
                 *, heads, head_dim, nw, t):
  """One batch element (all windows): LN1 -> per-window MHSA -> out-proj ->
  +res -> LN2 -> MLP(GELU) -> +res.  Tokens are in shifted/window order."""
  n_tok = nw * t
  x = x_ref[0]                                             # (N, C) f32

  # ---- LayerNorm 1 (f32) ----
  mu = jnp.mean(x, axis=-1, keepdims=True)
  var = jnp.mean((x - mu) ** 2, axis=-1, keepdims=True)
  xn = (x - mu) * lax.rsqrt(var + EPS) * ln1g_ref[0] + ln1b_ref[0]
  xn_b = xn.astype(jnp.bfloat16)

  bias = bias_ref[...]                                     # (NW, T, T) f32

  # ---- per-head, per-window batched attention ----
  acc = None
  for h in range(heads):
    # Per-head projections (weights already bf16; scale folded into Wq).
    qh = jnp.dot(xn_b, wq_ref[h], preferred_element_type=jnp.float32)   # (N, hd)
    kh = jnp.dot(xn_b, wk_ref[h], preferred_element_type=jnp.float32)
    vh = jnp.dot(xn_b, wv_ref[h], preferred_element_type=jnp.float32)
    # Tokens are window-major, T=16 is sublane-aligned -> leading-dim split only.
    q3 = qh.reshape(nw, t, head_dim).astype(jnp.bfloat16)
    k3 = kh.reshape(nw, t, head_dim).astype(jnp.bfloat16)
    v3 = vh.reshape(nw, t, head_dim).astype(jnp.bfloat16)

    # scores: (NW, T, T) with NW as a batch dim — 16 KiB instead of 256 KiB.
    s = lax.dot_general(q3, k3, (((2,), (2,)), ((0,), (0,))),
                        preferred_element_type=jnp.float32)
    s = s + bias                                           # rel-pos + shift masks

    m = jnp.max(s, axis=-1, keepdims=True)                 # finite (own window unmasked)
    e = jnp.exp(s - m)
    inv = pl.reciprocal(jnp.sum(e, axis=-1, keepdims=True), approx=True)
    p = (e * inv).astype(jnp.bfloat16)

    oh = lax.dot_general(p, v3, (((2,), (1,)), ((0,), (0,))),
                         preferred_element_type=jnp.float32)            # (NW, T, hd)
    # Per-head out-projection (avoids a lane concat of two 16-wide halves).
    contrib = jnp.dot(oh.reshape(n_tok, head_dim).astype(jnp.bfloat16),
                      wo_ref[h], preferred_element_type=jnp.float32)    # (N, C)
    acc = contrib if acc is None else acc + contrib

  y = x + acc + bo_ref[0]                                  # residual #1

  # ---- fused MLP: LN2 -> Linear -> GELU(tanh) -> Linear -> residual ----
  mu2 = jnp.mean(y, axis=-1, keepdims=True)
  var2 = jnp.mean((y - mu2) ** 2, axis=-1, keepdims=True)
  yn = (y - mu2) * lax.rsqrt(var2 + EPS) * ln2g_ref[0] + ln2b_ref[0]
  h1 = jnp.dot(yn.astype(jnp.bfloat16), w1_ref[...],
               preferred_element_type=jnp.float32) + b1_ref[0]
  # TODO(synk): exact erf GELU if Mosaic exposes lax.erf; tanh approx (|err|~1e-3)
  # lands on the otherwise-idle EUP slot.
  g = 0.5 * h1 * (1.0 + jnp.tanh(
      0.7978845608028654 * (h1 + 0.044715 * h1 * h1 * h1)))
  z = jnp.dot(g.astype(jnp.bfloat16), w2_ref[...],
              preferred_element_type=jnp.float32) + b2_ref[0]
  o_ref[0] = y + z                                         # residual #2


# ---------------- JAX glue: window plumbing & bias precompute -----------------
def window_partition(x, ws):
  B, H, W, C = x.shape
  nwh, nww = H // ws, W // ws
  x = x.reshape(B, nwh, ws, nww, ws, C).transpose(0, 1, 3, 2, 4, 5)
  return x.reshape(B, nwh * nww, ws * ws, C)


def window_merge(x, H, W, ws):
  B, _, _, C = x.shape
  nwh, nww = H // ws, W // ws
  x = x.reshape(B, nwh, nww, ws, ws, C).transpose(0, 1, 3, 2, 4, 5)
  return x.reshape(B, H, W, C)


def _shift_masks(ws):
  T = ws * ws
  d = ws // 2
  ul = jnp.zeros((T, T), jnp.float32)
  ul = ul.at[-d * ws:, :-d * ws].set(NEG)
  ul = ul.at[:-d * ws, -d * ws:].set(NEG)
  m = jnp.zeros((ws, ws, ws, ws), jnp.float32)
  m = m.at[:, -d:, :, :-d].set(NEG)
  m = m.at[:, :-d, :, -d:].set(NEG)
  lr = m.reshape(T, T)
  return ul, lr


def _pos_bias(pos_emb, ws):
  if REL_POS:
    idx = jnp.array([[i, j] for i in range(ws) for j in range(ws)])
    rel = idx[None, :, :] - idx[:, None, :] + (ws - 1)      # (T, T, 2)
    return pos_emb[rel[..., 0], rel[..., 1]]                # (T, T)
  return pos_emb


def build_window_bias(pos_emb, ws, nwh, nww):
  """(NW, T, T) additive bias shared by both heads: rel-pos bias per window,
  plus shift masks (finite NEG) on the boundary windows.  Only ~16 KiB."""
  T = ws * ws
  NW = nwh * nww
  bias = jnp.broadcast_to(_pos_bias(pos_emb, ws), (NW, T, T)).astype(jnp.float32)
  if SHIFTED:
    ul, lr = _shift_masks(ws)
    bias = bias.at[-nww:].add(ul)           # windows in last row of window grid
    bias = bias.at[nww - 1::nww].add(lr)    # windows in last column
  return bias


def prepare_kernel_consts(params, H, W):
  """One-time parameter repack: per-head bf16 weights + per-window bias."""
  ws = WINDOW
  nwh, nww = H // ws, W // ws
  wq, wk, wv = jnp.split(params["w_qkv"], 3, axis=-1)       # each (C, INNER)

  def to_heads(w):                                          # (C, INNER)->(H, C, hd)
    return w.reshape(DIM, HEADS, HEAD_DIM).transpose(1, 0, 2).astype(jnp.bfloat16)

  scale = HEAD_DIM ** -0.5                                  # 0.25, exact in bf16
  return dict(
      bias=build_window_bias(params["pos_emb"], ws, nwh, nww),
      wq=to_heads(wq * scale),                              # scale folded into Wq
      wk=to_heads(wk),
      wv=to_heads(wv),
      wo=params["w_out"].reshape(HEADS, HEAD_DIM, DIM).astype(jnp.bfloat16),
      w1=params["w1"].astype(jnp.bfloat16),
      w2=params["w2"].astype(jnp.bfloat16),
  )


# ---------------- pallas_call wrapper ------------------------------------------
def swin_block(x, params, consts):
  """x: (B, H, W, C) -> SwinBlock(x), matching the PyTorch forward."""
  B, H, W, C = x.shape
  ws = WINDOW
  nwh, nww = H // ws, W // ws
  NW, T = nwh * nww, ws * ws
  N = NW * T
  d = ws // 2 if SHIFTED else 0

  # TODO(synk): fold cyclic shift + window partition/merge into the kernel
  # (pltpu.roll + in-VMEM permutation) to drop the two remaining XLA copies.
  x_sh = jnp.roll(x, shift=(-d, -d), axis=(1, 2)) if SHIFTED else x
  x_flat = window_partition(x_sh, ws).reshape(B, N, C)

  kernel = functools.partial(_swin_kernel, heads=HEADS, head_dim=HEAD_DIM,
                             nw=NW, t=T)
  c2 = lambda b: (0, 0)
  c3 = lambda b: (0, 0, 0)

  flops_per_img = (2 * N * C * 3 * INNER                      # qkv
                   + HEADS * NW * (2 * T * T * HEAD_DIM) * 2  # scores + attn@v
                   + 2 * N * INNER * C                        # out-proj
                   + 2 * (2 * N * C * MLP_DIM))               # mlp
  trans_per_img = HEADS * NW * T * T + N * MLP_DIM + 2 * N
  cost = pl.CostEstimate(
      flops=B * flops_per_img,
      transcendentals=B * trans_per_img,
      bytes_accessed=B * 2 * N * C * 4 + 40_000)

  out_flat = pl.pallas_call(
      kernel,
      out_shape=jax.ShapeDtypeStruct((B, N, C), jnp.float32),
      grid=(B,),
      in_specs=[
          pl.BlockSpec((1, N, C), lambda b: (b, 0, 0)),      # all windows of one image
          pl.BlockSpec((NW, T, T), c3),                      # per-window bias + masks
          pl.BlockSpec((HEADS, C, HEAD_DIM), c3),            # Wq (bf16, pre-scaled)
          pl.BlockSpec((HEADS, C, HEAD_DIM), c3),            # Wk (bf16)
          pl.BlockSpec((HEADS, C, HEAD_DIM), c3),            # Wv (bf16)
          pl.BlockSpec((HEADS, HEAD_DIM, C), c3),            # Wout per head (bf16)
          pl.BlockSpec((1, C), c2),                          # b_out
          pl.BlockSpec((1, C), c2),                          # ln1 gamma
          pl.BlockSpec((1, C), c2),                          # ln1 beta
          pl.BlockSpec((1, C), c2),                          # ln2 gamma
          pl.BlockSpec((1, C), c2),                          # ln2 beta
          pl.BlockSpec((C, MLP_DIM), c2),                    # W1 (bf16)
          pl.BlockSpec((1, MLP_DIM), c2),                    # b1
          pl.BlockSpec((MLP_DIM, C), c2),                    # W2 (bf16)
          pl.BlockSpec((1, C), c2),                          # b2
      ],
      out_specs=pl.BlockSpec((1, N, C), lambda b: (b, 0, 0)),
      compiler_params=pltpu.CompilerParams(
          dimension_semantics=("parallel",)),                # B=2 -> both v7x TCs
      cost_estimate=cost,
  )(x_flat, consts["bias"], consts["wq"], consts["wk"], consts["wv"],
    consts["wo"], params["b_out"], params["ln1_g"], params["ln1_b"],
    params["ln2_g"], params["ln2_b"], consts["w1"], params["b1"],
    consts["w2"], params["b2"])

  out = window_merge(out_flat.reshape(B, NW, T, C), H, W, ws)
  if SHIFTED:
    out = jnp.roll(out, shift=(d, d), axis=(1, 2))
  return out


# ---------------- deterministic parameter init --------------------------------
def init_params(key):
  ks = jax.random.split(key, 12)

  def n(k, shape, s=0.05):
    return (s * jax.random.normal(k, shape)).astype(jnp.float32)

  pos_shape = (2 * WINDOW - 1, 2 * WINDOW - 1) if REL_POS else (WINDOW ** 2, WINDOW ** 2)
  return dict(
      ln1_g=1.0 + n(ks[0], (1, DIM), 0.1),
      ln1_b=n(ks[1], (1, DIM), 0.1),
      w_qkv=n(ks[2], (DIM, 3 * INNER)),
      pos_emb=jax.random.normal(ks[3], pos_shape).astype(jnp.float32),
      w_out=n(ks[4], (INNER, DIM)),
      b_out=n(ks[5], (1, DIM)),
      ln2_g=1.0 + n(ks[6], (1, DIM), 0.1),
      ln2_b=n(ks[7], (1, DIM), 0.1),
      w1=n(ks[8], (DIM, MLP_DIM)),
      b1=n(ks[9], (1, MLP_DIM)),
      w2=n(ks[10], (MLP_DIM, DIM)),
      b2=n(ks[11], (1, DIM)),
  )


# ---------------- pure-JAX reference (mirrors the PyTorch forward) -------------
def _ref_layer_norm(x, g, b):
  mu = x.mean(-1, keepdims=True)
  var = ((x - mu) ** 2).mean(-1, keepdims=True)
  return (x - mu) / jnp.sqrt(var + EPS) * g[0] + b[0]


def _ref_window_attention(x, params):
  B, H, W, _ = x.shape
  ws, heads, hd = WINDOW, HEADS, HEAD_DIM
  T = ws * ws
  d = ws // 2
  if SHIFTED:
    x = jnp.roll(x, (-d, -d), axis=(1, 2))
  qkv = x @ params["w_qkv"]
  q, k, v = jnp.split(qkv, 3, axis=-1)
  nwh, nww = H // ws, W // ws

  def rearr(t):
    t = t.reshape(B, nwh, ws, nww, ws, heads, hd).transpose(0, 5, 1, 3, 2, 4, 6)
    return t.reshape(B, heads, nwh * nww, T, hd)

  q, k, v = rearr(q), rearr(k), rearr(v)
  dots = jnp.einsum("bhwid,bhwjd->bhwij", q, k) * (hd ** -0.5)
  dots = dots + _pos_bias(params["pos_emb"], ws)
  if SHIFTED:
    ul, lr = _shift_masks(ws)
    dots = dots.at[:, :, -nww:].add(ul)
    dots = dots.at[:, :, nww - 1::nww].add(lr)
  attn = jax.nn.softmax(dots, axis=-1)
  out = jnp.einsum("bhwij,bhwjd->bhwid", attn, v)
  out = out.reshape(B, heads, nwh, nww, ws, ws, hd).transpose(0, 2, 4, 3, 5, 1, 6)
  out = out.reshape(B, H, W, heads * hd)
  out = out @ params["w_out"] + params["b_out"][0]
  if SHIFTED:
    out = jnp.roll(out, (d, d), axis=(1, 2))
  return out


def ref_swin_block(x, params):
  y = x + _ref_window_attention(
      _ref_layer_norm(x, params["ln1_g"], params["ln1_b"]), params)
  zn = _ref_layer_norm(y, params["ln2_g"], params["ln2_b"])
  h = zn @ params["w1"] + params["b1"][0]
  h = 0.5 * h * (1.0 + jax.lax.erf(h / jnp.sqrt(2.0)))   # exact GELU
  z = h @ params["w2"] + params["b2"][0]
  return y + z


# ---------------- main ---------------------------------------------------------
if __name__ == "__main__":
  key = jax.random.PRNGKey(0)
  kx, kp = jax.random.split(key)
  B, H, W = 2, 16, 16
  x = jax.random.normal(kx, (B, H, W, DIM), dtype=jnp.float32)
  params = init_params(kp)
  consts = prepare_kernel_consts(params, H, W)   # one-time bf16 repack + bias

  fwd = jax.jit(swin_block)
  out = fwd(x, params, consts)
  out = jax.block_until_ready(out)

  ref = ref_swin_block(x, params)
  assert out.shape == x.shape
  max_err = float(jnp.max(jnp.abs(out - ref)))
  assert max_err < 2e-2, f"mismatch vs reference: {max_err}"

  print("KERNEL_OK")
</pallas_src>

<mosaic_0001>
module attributes {stable_mosaic.version = 11 : i64} {
  func.func @_swin_kernel(%arg0: i32, %arg1: memref<1x256x32xf32, #tpu.memory_space<vmem>>, %arg2: memref<16x16x16xf32, #tpu.memory_space<vmem>>, %arg3: memref<2x32x16xbf16, #tpu.memory_space<vmem>>, %arg4: memref<2x32x16xbf16, #tpu.memory_space<vmem>>, %arg5: memref<2x32x16xbf16, #tpu.memory_space<vmem>>, %arg6: memref<2x16x32xbf16, #tpu.memory_space<vmem>>, %arg7: memref<1x32xf32, #tpu.memory_space<vmem>>, %arg8: memref<1x32xf32, #tpu.memory_space<vmem>>, %arg9: memref<1x32xf32, #tpu.memory_space<vmem>>, %arg10: memref<1x32xf32, #tpu.memory_space<vmem>>, %arg11: memref<1x32xf32, #tpu.memory_space<vmem>>, %arg12: memref<32x64xbf16, #tpu.memory_space<vmem>>, %arg13: memref<1x64xf32, #tpu.memory_space<vmem>>, %arg14: memref<64x32xbf16, #tpu.memory_space<vmem>>, %arg15: memref<1x32xf32, #tpu.memory_space<vmem>>, %arg16: memref<1x256x32xf32, #tpu.memory_space<vmem>>) attributes {dimension_semantics = [#tpu.dimension_semantics<parallel>], iteration_bounds = array<i64: 2>, scalar_prefetch = 0 : i64, scratch_operands = 0 : i64, tpu.core_type = #tpu.core_type<tc>, window_params = [{transform_indices = @transform_0, window_bounds = array<i64: 1, 256, 32>}, {pipeline_mode = #tpu.pipeline_mode<synchronous>, transform_indices = @transform_1, window_bounds = array<i64: 16, 16, 16>}, {pipeline_mode = #tpu.pipeline_mode<synchronous>, transform_indices = @transform_2, window_bounds = array<i64: 2, 32, 16>}, {pipeline_mode = #tpu.pipeline_mode<synchronous>, transform_indices = @transform_3, window_bounds = array<i64: 2, 32, 16>}, {pipeline_mode = #tpu.pipeline_mode<synchronous>, transform_indices = @transform_4, window_bounds = array<i64: 2, 32, 16>}, {pipeline_mode = #tpu.pipeline_mode<synchronous>, transform_indices = @transform_5, window_bounds = array<i64: 2, 16, 32>}, {pipeline_mode = #tpu.pipeline_mode<synchronous>, transform_indices = @transform_6, window_bounds = array<i64: 1, 32>}, {pipeline_mode = #tpu.pipeline_mode<synchronous>, transform_indices = @transform_7, window_bounds = array<i64: 1, 32>}, {pipeline_mode = #tpu.pipeline_mode<synchronous>, transform_indices = @transform_8, window_bounds = array<i64: 1, 32>}, {pipeline_mode = #tpu.pipeline_mode<synchronous>, transform_indices = @transform_9, window_bounds = array<i64: 1, 32>}, {pipeline_mode = #tpu.pipeline_mode<synchronous>, transform_indices = @transform_10, window_bounds = array<i64: 1, 32>}, {pipeline_mode = #tpu.pipeline_mode<synchronous>, transform_indices = @transform_11, window_bounds = array<i64: 32, 64>}, {pipeline_mode = #tpu.pipeline_mode<synchronous>, transform_indices = @transform_12, window_bounds = array<i64: 1, 64>}, {pipeline_mode = #tpu.pipeline_mode<synchronous>, transform_indices = @transform_13, window_bounds = array<i64: 64, 32>}, {pipeline_mode = #tpu.pipeline_mode<synchronous>, transform_indices = @transform_14, window_bounds = array<i64: 1, 32>}, {transform_indices = @transform_15, window_bounds = array<i64: 1, 256, 32>}]} {
    %c0 = arith.constant 0 : index
    %c0_0 = arith.constant 0 : index
    %c0_1 = arith.constant 0 : index
    %0 = vector.load %arg1[%c0, %c0_0, %c0_1] : memref<1x256x32xf32, #tpu.memory_space<vmem>>, vector<1x256x32xf32>
    %1 = vector.shape_cast %0 : vector<1x256x32xf32> to vector<256x32xf32>
    %cst = arith.constant dense<0.000000e+00> : vector<256xf32>
    %2 = vector.multi_reduction <add>, %1, %cst [1] : vector<256x32xf32> to vector<256xf32>
    %3 = vector.shape_cast %2 : vector<256xf32> to vector<256x1xf32>
    %cst_2 = arith.constant 3.200000e+01 : f32
    %4 = vector.broadcast %cst_2 : f32 to vector<256x1xf32>
    %5 = arith.divf %3, %4 : vector<256x1xf32>
    %6 = vector.broadcast %5 : vector<256x1xf32> to vector<256x32xf32>
    %7 = arith.subf %1, %6 : vector<256x32xf32>
    %8 = arith.mulf %7, %7 : vector<256x32xf32>
    %cst_3 = arith.constant dense<0.000000e+00> : vector<256xf32>
    %9 = vector.multi_reduction <add>, %8, %cst_3 [1] : vector<256x32xf32> to vector<256xf32>
    %10 = vector.shape_cast %9 : vector<256xf32> to vector<256x1xf32>
    %cst_4 = arith.constant 3.200000e+01 : f32
    %11 = vector.broadcast %cst_4 : f32 to vector<256x1xf32>
    %12 = arith.divf %10, %11 : vector<256x1xf32>
    %13 = vector.broadcast %5 : vector<256x1xf32> to vector<256x32xf32>
    %14 = arith.subf %1, %13 : vector<256x32xf32>
    %cst_5 = arith.constant 9.99999974E-6 : f32
    %15 = vector.broadcast %cst_5 : f32 to vector<256x1xf32>
    %16 = arith.addf %12, %15 : vector<256x1xf32>
    %17 = math.rsqrt %16 : vector<256x1xf32>
    %18 = vector.broadcast %17 : vector<256x1xf32> to vector<256x32xf32>
    %19 = arith.mulf %14, %18 : vector<256x32xf32>
    %c0_6 = arith.constant 0 : index
    %c0_7 = arith.constant 0 : index
    %20 = vector.load %arg8[%c0_6, %c0_7] : memref<1x32xf32, #tpu.memory_space<vmem>>, vector<1x32xf32>
    %21 = vector.shape_cast %20 : vector<1x32xf32> to vector<32xf32>
    %22 = vector.shape_cast %21 : vector<32xf32> to vector<1x32xf32>
    %23 = vector.broadcast %22 : vector<1x32xf32> to vector<256x32xf32>
    %24 = arith.mulf %19, %23 : vector<256x32xf32>
    %c0_8 = arith.constant 0 : index
    %c0_9 = arith.constant 0 : index
    %25 = vector.load %arg9[%c0_8, %c0_9] : memref<1x32xf32, #tpu.memory_space<vmem>>, vector<1x32xf32>
    %26 = vector.shape_cast %25 : vector<1x32xf32> to vector<32xf32>
    %27 = vector.shape_cast %26 : vector<32xf32> to vector<1x32xf32>
    %28 = vector.broadcast %27 : vector<1x32xf32> to vector<256x32xf32>
    %29 = arith.addf %24, %28 : vector<256x32xf32>
    %30 = arith.truncf %29 : vector<256x32xf32> to vector<256x32xbf16>
    %c0_10 = arith.constant 0 : index
    %c0_11 = arith.constant 0 : index
    %c0_12 = arith.constant 0 : index
    %31 = vector.load %arg2[%c0_10, %c0_11, %c0_12] : memref<16x16x16xf32, #tpu.memory_space<vmem>>, vector<16x16x16xf32>
    %c0_13 = arith.constant 0 : index
    %c0_14 = arith.constant 0 : index
    %c0_15 = arith.constant 0 : index
    %32 = vector.load %arg3[%c0_13, %c0_14, %c0_15] : memref<2x32x16xbf16, #tpu.memory_space<vmem>>, vector<1x32x16xbf16>
    %33 = vector.shape_cast %32 : vector<1x32x16xbf16> to vector<32x16xbf16>
    %cst_16 = arith.constant dense<0.000000e+00> : vector<256x16xf32>
    %34 = tpu.matmul %30, %33, %cst_16 {dimension_numbers = #tpu.dot_dimension_numbers<[1], [0], [0], [1], [0, 0, 1, 1], [], []>} : vector<256x32xbf16>, vector<32x16xbf16>, vector<256x16xf32> -> vector<256x16xf32>
    %c0_17 = arith.constant 0 : index
    %c0_18 = arith.constant 0 : index
    %c0_19 = arith.constant 0 : index
    %35 = vector.load %arg4[%c0_17, %c0_18, %c0_19] : memref<2x32x16xbf16, #tpu.memory_space<vmem>>, vector<1x32x16xbf16>
    %36 = vector.shape_cast %35 : vector<1x32x16xbf16> to vector<32x16xbf16>
    %cst_20 = arith.constant dense<0.000000e+00> : vector<256x16xf32>
    %37 = tpu.matmul %30, %36, %cst_20 {dimension_numbers = #tpu.dot_dimension_numbers<[1], [0], [0], [1], [0, 0, 1, 1], [], []>} : vector<256x32xbf16>, vector<32x16xbf16>, vector<256x16xf32> -> vector<256x16xf32>
    %c0_21 = arith.constant 0 : index
    %c0_22 = arith.constant 0 : index
    %c0_23 = arith.constant 0 : index
    %38 = vector.load %arg5[%c0_21, %c0_22, %c0_23] : memref<2x32x16xbf16, #tpu.memory_space<vmem>>, vector<1x32x16xbf16>
    %39 = vector.shape_cast %38 : vector<1x32x16xbf16> to vector<32x16xbf16>
    %cst_24 = arith.constant dense<0.000000e+00> : vector<256x16xf32>
    %40 = tpu.matmul %30, %39, %cst_24 {dimension_numbers = #tpu.dot_dimension_numbers<[1], [0], [0], [1], [0, 0, 1, 1], [], []>} : vector<256x32xbf16>, vector<32x16xbf16>, vector<256x16xf32> -> vector<256x16xf32>
    %41 = vector.shape_cast %34 : vector<256x16xf32> to vector<16x16x16xf32>
    %42 = arith.truncf %41 : vector<16x16x16xf32> to vector<16x16x16xbf16>
    %43 = vector.shape_cast %37 : vector<256x16xf32> to vector<16x16x16xf32>
    %44 = arith.truncf %43 : vector<16x16x16xf32> to vector<16x16x16xbf16>
    %45 = vector.shape_cast %40 : vector<256x16xf32> to vector<16x16x16xf32>
    %46 = arith.truncf %45 : vector<16x16x16xf32> to vector<16x16x16xbf16>
    %cst_25 = arith.constant dense<0.000000e+00> : vector<16x16x16xf32>
    %47 = tpu.matmul %42, %44, %cst_25 {dimension_numbers = #tpu.dot_dimension_numbers<[2], [2], [1], [1], [0, 0, 0, 1, 1, 1], [0], [0]>} : vector<16x16x16xbf16>, vector<16x16x16xbf16>, vector<16x16x16xf32> -> vector<16x16x16xf32>
    %48 = arith.addf %47, %31 : vector<16x16x16xf32>
    %cst_26 = arith.constant dense<0xFF800000> : vector<16x16xf32>
    %49 = vector.multi_reduction <maximumf>, %48, %cst_26 [2] : vector<16x16x16xf32> to vector<16x16xf32>
    %50 = vector.shape_cast %49 : vector<16x16xf32> to vector<16x16x1xf32>
    %51 = vector.broadcast %50 : vector<16x16x1xf32> to vector<16x16x16xf32>
    %52 = arith.subf %48, %51 : vector<16x16x16xf32>
    %53 = math.exp %52 : vector<16x16x16xf32>
    %cst_27 = arith.constant dense<0.000000e+00> : vector<16x16xf32>
    %54 = vector.multi_reduction <add>, %53, %cst_27 [2] : vector<16x16x16xf32> to vector<16x16xf32>
    %55 = vector.shape_cast %54 : vector<16x16xf32> to vector<16x16x1xf32>
    %56 = tpu.reciprocal %55 {approx = true} : vector<16x16x1xf32> -> vector<16x16x1xf32>
    %57 = vector.broadcast %56 : vector<16x16x1xf32> to vector<16x16x16xf32>
    %58 = arith.mulf %53, %57 : vector<16x16x16xf32>
    %59 = arith.truncf %58 : vector<16x16x16xf32> to vector<16x16x16xbf16>
    %cst_28 = arith.constant dense<0.000000e+00> : vector<16x16x16xf32>
    %60 = tpu.matmul %59, %46, %cst_28 {dimension_numbers = #tpu.dot_dimension_numbers<[2], [1], [1], [2], [0, 0, 0, 1, 1, 2], [0], [0]>} : vector<16x16x16xbf16>, vector<16x16x16xbf16>, vector<16x16x16xf32> -> vector<16x16x16xf32>
    %61 = vector.shape_cast %60 : vector<16x16x16xf32> to vector<256x16xf32>
    %62 = arith.truncf %61 : vector<256x16xf32> to vector<256x16xbf16>
    %c0_29 = arith.constant 0 : index
    %c0_30 = arith.constant 0 : index
    %c0_31 = arith.constant 0 : index
    %63 = vector.load %arg6[%c0_29, %c0_30, %c0_31] : memref<2x16x32xbf16, #tpu.memory_space<vmem>>, vector<1x16x32xbf16>
    %64 = vector.shape_cast %63 : vector<1x16x32xbf16> to vector<16x32xbf16>
    %cst_32 = arith.constant dense<0.000000e+00> : vector<256x32xf32>
    %65 = tpu.matmul %62, %64, %cst_32 {dimension_numbers = #tpu.dot_dimension_numbers<[1], [0], [0], [1], [0, 0, 1, 1], [], []>} : vector<256x16xbf16>, vector<16x32xbf16>, vector<256x32xf32> -> vector<256x32xf32>
    %c1 = arith.constant 1 : index
    %c0_33 = arith.constant 0 : index
    %c0_34 = arith.constant 0 : index
    %66 = vector.load %arg3[%c1, %c0_33, %c0_34] : memref<2x32x16xbf16, #tpu.memory_space<vmem>>, vector<1x32x16xbf16>
    %67 = vector.shape_cast %66 : vector<1x32x16xbf16> to vector<32x16xbf16>
    %cst_35 = arith.constant dense<0.000000e+00> : vector<256x16xf32>
    %68 = tpu.matmul %30, %67, %cst_35 {dimension_numbers = #tpu.dot_dimension_numbers<[1], [0], [0], [1], [0, 0, 1, 1], [], []>} : vector<256x32xbf16>, vector<32x16xbf16>, vector<256x16xf32> -> vector<256x16xf32>
    %c1_36 = arith.constant 1 : index
    %c0_37 = arith.constant 0 : index
    %c0_38 = arith.constant 0 : index
    %69 = vector.load %arg4[%c1_36, %c0_37, %c0_38] : memref<2x32x16xbf16, #tpu.memory_space<vmem>>, vector<1x32x16xbf16>
    %70 = vector.shape_cast %69 : vector<1x32x16xbf16> to vector<32x16xbf16>
    %cst_39 = arith.constant dense<0.000000e+00> : vector<256x16xf32>
    %71 = tpu.matmul %30, %70, %cst_39 {dimension_numbers = #tpu.dot_dimension_numbers<[1], [0], [0], [1], [0, 0, 1, 1], [], []>} : vector<256x32xbf16>, vector<32x16xbf16>, vector<256x16xf32> -> vector<256x16xf32>
    %c1_40 = arith.constant 1 : index
    %c0_41 = arith.constant 0 : index
    %c0_42 = arith.constant 0 : index
    %72 = vector.load %arg5[%c1_40, %c0_41, %c0_42] : memref<2x32x16xbf16, #tpu.memory_space<vmem>>, vector<1x32x16xbf16>
    %73 = vector.shape_cast %72 : vector<1x32x16xbf16> to vector<32x16xbf16>
    %cst_43 = arith.constant dense<0.000000e+00> : vector<256x16xf32>
    %74 = tpu.matmul %30, %73, %cst_43 {dimension_numbers = #tpu.dot_dimension_numbers<[1], [0], [0], [1], [0, 0, 1, 1], [], []>} : vector<256x32xbf16>, vector<32x16xbf16>, vector<256x16xf32> -> vector<256x16xf32>
    %75 = vector.shape_cast %68 : vector<256x16xf32> to vector<16x16x16xf32>
    %76 = arith.truncf %75 : vector<16x16x16xf32> to vector<16x16x16xbf16>
    %77 = vector.shape_cast %71 : vector<256x16xf32> to vector<16x16x16xf32>
    %78 = arith.truncf %77 : vector<16x16x16xf32> to vector<16x16x16xbf16>
    %79 = vector.shape_cast %74 : vector<256x16xf32> to vector<16x16x16xf32>
    %80 = arith.truncf %79 : vector<16x16x16xf32> to vector<16x16x16xbf16>
    %cst_44 = arith.constant dense<0.000000e+00> : vector<16x16x16xf32>
    %81 = tpu.matmul %76, %78, %cst_44 {dimension_numbers = #tpu.dot_dimension_numbers<[2], [2], [1], [1], [0, 0, 0, 1, 1, 1], [0], [0]>} : vector<16x16x16xbf16>, vector<16x16x16xbf16>, vector<16x16x16xf32> -> vector<16x16x16xf32>
    %82 = arith.addf %81, %31 : vector<16x16x16xf32>
    %cst_45 = arith.constant dense<0xFF800000> : vector<16x16xf32>
    %83 = vector.multi_reduction <maximumf>, %82, %cst_45 [2] : vector<16x16x16xf32> to vector<16x16xf32>
    %84 = vector.shape_cast %83 : vector<16x16xf32> to vector<16x16x1xf32>
    %85 = vector.broadcast %84 : vector<16x16x1xf32> to vector<16x16x16xf32>
    %86 = arith.subf %82, %85 : vector<16x16x16xf32>
    %87 = math.exp %86 : vector<16x16x16xf32>
    %cst_46 = arith.constant dense<0.000000e+00> : vector<16x16xf32>
    %88 = vector.multi_reduction <add>, %87, %cst_46 [2] : vector<16x16x16xf32> to vector<16x16xf32>
    %89 = vector.shape_cast %88 : vector<16x16xf32> to vector<16x16x1xf32>
    %90 = tpu.reciprocal %89 {approx = true} : vector<16x16x1xf32> -> vector<16x16x1xf32>
    %91 = vector.broadcast %90 : vector<16x16x1xf32> to vector<16x16x16xf32>
    %92 = arith.mulf %87, %91 : vector<16x16x16xf32>
    %93 = arith.truncf %92 : vector<16x16x16xf32> to vector<16x16x16xbf16>
    %cst_47 = arith.constant dense<0.000000e+00> : vector<16x16x16xf32>
    %94 = tpu.matmul %93, %80, %cst_47 {dimension_numbers = #tpu.dot_dimension_numbers<[2], [1], [1], [2], [0, 0, 0, 1, 1, 2], [0], [0]>} : vector<16x16x16xbf16>, vector<16x16x16xbf16>, vector<16x16x16xf32> -> vector<16x16x16xf32>
    %95 = vector.shape_cast %94 : vector<16x16x16xf32> to vector<256x16xf32>
    %96 = arith.truncf %95 : vector<256x16xf32> to vector<256x16xbf16>
    %c1_48 = arith.constant 1 : index
    %c0_49 = arith.constant 0 : index
    %c0_50 = arith.constant 0 : index
    %97 = vector.load %arg6[%c1_48, %c0_49, %c0_50] : memref<2x16x32xbf16, #tpu.memory_space<vmem>>, vector<1x16x32xbf16>
    %98 = vector.shape_cast %97 : vector<1x16x32xbf16> to vector<16x32xbf16>
    %cst_51 = arith.constant dense<0.000000e+00> : vector<256x32xf32>
    %99 = tpu.matmul %96, %98, %cst_51 {dimension_numbers = #tpu.dot_dimension_numbers<[1], [0], [0], [1], [0, 0, 1, 1], [], []>} : vector<256x16xbf16>, vector<16x32xbf16>, vector<256x32xf32> -> vector<256x32xf32>
    %100 = arith.addf %65, %99 : vector<256x32xf32>
    %101 = arith.addf %1, %100 : vector<256x32xf32>
    %c0_52 = arith.constant 0 : index
    %c0_53 = arith.constant 0 : index
    %102 = vector.load %arg7[%c0_52, %c0_53] : memref<1x32xf32, #tpu.memory_space<vmem>>, vector<1x32xf32>
    %103 = vector.shape_cast %102 : vector<1x32xf32> to vector<32xf32>
    %104 = vector.shape_cast %103 : vector<32xf32> to vector<1x32xf32>
    %105 = vector.broadcast %104 : vector<1x32xf32> to vector<256x32xf32>
    %106 = arith.addf %101, %105 : vector<256x32xf32>
    %cst_54 = arith.constant dense<0.000000e+00> : vector<256xf32>
    %107 = vector.multi_reduction <add>, %106, %cst_54 [1] : vector<256x32xf32> to vector<256xf32>
    %108 = vector.shape_cast %107 : vector<256xf32> to vector<256x1xf32>
    %cst_55 = arith.constant 3.200000e+01 : f32
    %109 = vector.broadcast %cst_55 : f32 to vector<256x1xf32>
    %110 = arith.divf %108, %109 : vector<256x1xf32>
    %111 = vector.broadcast %110 : vector<256x1xf32> to vector<256x32xf32>
    %112 = arith.subf %106, %111 : vector<256x32xf32>
    %113 = arith.mulf %112, %112 : vector<256x32xf32>
    %cst_56 = arith.constant dense<0.000000e+00> : vector<256xf32>
    %114 = vector.multi_reduction <add>, %113, %cst_56 [1] : vector<256x32xf32> to vector<256xf32>
    %115 = vector.shape_cast %114 : vector<256xf32> to vector<256x1xf32>
    %cst_57 = arith.constant 3.200000e+01 : f32
    %116 = vector.broadcast %cst_57 : f32 to vector<256x1xf32>
    %117 = arith.divf %115, %116 : vector<256x1xf32>
    %118 = vector.broadcast %110 : vector<256x1xf32> to vector<256x32xf32>
    %119 = arith.subf %106, %118 : vector<256x32xf32>
    %cst_58 = arith.constant 9.99999974E-6 : f32
    %120 = vector.broadcast %cst_58 : f32 to vector<256x1xf32>
    %121 = arith.addf %117, %120 : vector<256x1xf32>
    %122 = math.rsqrt %121 : vector<256x1xf32>
    %123 = vector.broadcast %122 : vector<256x1xf32> to vector<256x32xf32>
    %124 = arith.mulf %119, %123 : vector<256x32xf32>
    %c0_59 = arith.constant 0 : index
    %c0_60 = arith.constant 0 : index
    %125 = vector.load %arg10[%c0_59, %c0_60] : memref<1x32xf32, #tpu.memory_space<vmem>>, vector<1x32xf32>
    %126 = vector.shape_cast %125 : vector<1x32xf32> to vector<32xf32>
    %127 = vector.shape_cast %126 : vector<32xf32> to vector<1x32xf32>
    %128 = vector.broadcast %127 : vector<1x32xf32> to vector<256x32xf32>
    %129 = arith.mulf %124, %128 : vector<256x32xf32>
    %c0_61 = arith.constant 0 : index
    %c0_62 = arith.constant 0 : index
    %130 = vector.load %arg11[%c0_61, %c0_62] : memref<1x32xf32, #tpu.memory_space<vmem>>, vector<1x32xf32>
    %131 = vector.shape_cast %130 : vector<1x32xf32> to vector<32xf32>
    %132 = vector.shape_cast %131 : vector<32xf32> to vector<1x32xf32>
    %133 = vector.broadcast %132 : vector<1x32xf32> to vector<256x32xf32>
    %134 = arith.addf %129, %133 : vector<256x32xf32>
    %135 = arith.truncf %134 : vector<256x32xf32> to vector<256x32xbf16>
    %c0_63 = arith.constant 0 : index
    %c0_64 = arith.constant 0 : index
    %136 = vector.load %arg12[%c0_63, %c0_64] : memref<32x64xbf16, #tpu.memory_space<vmem>>, vector<32x64xbf16>
    %cst_65 = arith.constant dense<0.000000e+00> : vector<256x64xf32>
    %137 = tpu.matmul %135, %136, %cst_65 {dimension_numbers = #tpu.dot_dimension_numbers<[1], [0], [0], [1], [0, 0, 1, 1], [], []>} : vector<256x32xbf16>, vector<32x64xbf16>, vector<256x64xf32> -> vector<256x64xf32>
    %c0_66 = arith.constant 0 : index
    %c0_67 = arith.constant 0 : index
    %138 = vector.load %arg13[%c0_66, %c0_67] : memref<1x64xf32, #tpu.memory_space<vmem>>, vector<1x64xf32>
    %139 = vector.shape_cast %138 : vector<1x64xf32> to vector<64xf32>
    %140 = vector.shape_cast %139 : vector<64xf32> to vector<1x64xf32>
    %141 = vector.broadcast %140 : vector<1x64xf32> to vector<256x64xf32>
    %142 = arith.addf %137, %141 : vector<256x64xf32>
    %cst_68 = arith.constant 5.000000e-01 : f32
    %143 = vector.broadcast %cst_68 : f32 to vector<256x64xf32>
    %144 = arith.mulf %143, %142 : vector<256x64xf32>
    %cst_69 = arith.constant 4.471500e-02 : f32
    %145 = vector.broadcast %cst_69 : f32 to vector<256x64xf32>
    %146 = arith.mulf %145, %142 : vector<256x64xf32>
    %147 = arith.mulf %146, %142 : vector<256x64xf32>
    %148 = arith.mulf %147, %142 : vector<256x64xf32>
    %149 = arith.addf %142, %148 : vector<256x64xf32>
    %cst_70 = arith.constant 0.797884583 : f32
    %150 = vector.broadcast %cst_70 : f32 to vector<256x64xf32>
    %151 = arith.mulf %150, %149 : vector<256x64xf32>
    %152 = math.tanh %151 : vector<256x64xf32>
    %cst_71 = arith.constant 1.000000e+00 : f32
    %153 = vector.broadcast %cst_71 : f32 to vector<256x64xf32>
    %154 = arith.addf %153, %152 : vector<256x64xf32>
    %155 = arith.mulf %144, %154 : vector<256x64xf32>
    %156 = arith.truncf %155 : vector<256x64xf32> to vector<256x64xbf16>
    %c0_72 = arith.constant 0 : index
    %c0_73 = arith.constant 0 : index
    %157 = vector.load %arg14[%c0_72, %c0_73] : memref<64x32xbf16, #tpu.memory_space<vmem>>, vector<64x32xbf16>
    %cst_74 = arith.constant dense<0.000000e+00> : vector<256x32xf32>
    %158 = tpu.matmul %156, %157, %cst_74 {dimension_numbers = #tpu.dot_dimension_numbers<[1], [0], [0], [1], [0, 0, 1, 1], [], []>} : vector<256x64xbf16>, vector<64x32xbf16>, vector<256x32xf32> -> vector<256x32xf32>
    %c0_75 = arith.constant 0 : index
    %c0_76 = arith.constant 0 : index
    %159 = vector.load %arg15[%c0_75, %c0_76] : memref<1x32xf32, #tpu.memory_space<vmem>>, vector<1x32xf32>
    %160 = vector.shape_cast %159 : vector<1x32xf32> to vector<32xf32>
    %161 = vector.shape_cast %160 : vector<32xf32> to vector<1x32xf32>
    %162 = vector.broadcast %161 : vector<1x32xf32> to vector<256x32xf32>
    %163 = arith.addf %158, %162 : vector<256x32xf32>
    %164 = arith.addf %106, %163 : vector<256x32xf32>
    %c0_77 = arith.constant 0 : index
    %c0_78 = arith.constant 0 : index
    %c0_79 = arith.constant 0 : index
    %165 = vector.load %arg16[%c0_77, %c0_78, %c0_79] : memref<1x256x32xf32, #tpu.memory_space<vmem>>, vector<1x256x32xf32>
    %166 = vector.shape_cast %165 : vector<1x256x32xf32> to vector<256x32xf32>
    %167 = vector.shape_cast %164 : vector<256x32xf32> to vector<1x256x32xf32>
    tpu.vector_store %arg16[%c0_77, %c0_78, %c0_79], %167 {strides = array<i32>} : memref<1x256x32xf32, #tpu.memory_space<vmem>>, vector<1x256x32xf32>,
    return
  }
  func.func @transform_0(%arg0: i32) -> (i32, i32, i32) {
    %c0_i32 = arith.constant 0 : i32
    %c0_i32_0 = arith.constant 0 : i32
    %c0_i32_1 = arith.constant 0 : i32
    return %arg0, %c0_i32, %c0_i32_0 : i32, i32, i32
  }
  func.func @transform_1(%arg0: i32) -> (i32, i32, i32) {
    %c0_i32 = arith.constant 0 : i32
    %c0_i32_0 = arith.constant 0 : i32
    %c0_i32_1 = arith.constant 0 : i32
    %c0_i32_2 = arith.constant 0 : i32
    return %c0_i32, %c0_i32_0, %c0_i32_1 : i32, i32, i32
  }
  func.func @transform_2(%arg0: i32) -> (i32, i32, i32) {
    %c0_i32 = arith.constant 0 : i32
    %c0_i32_0 = arith.constant 0 : i32
    %c0_i32_1 = arith.constant 0 : i32
    %c0_i32_2 = arith.constant 0 : i32
    return %c0_i32, %c0_i32_0, %c0_i32_1 : i32, i32, i32
  }
  func.func @transform_3(%arg0: i32) -> (i32, i32, i32) {
    %c0_i32 = arith.constant 0 : i32
    %c0_i32_0 = arith.constant 0 : i32
    %c0_i32_1 = arith.constant 0 : i32
    %c0_i32_2 = arith.constant 0 : i32
    return %c0_i32, %c0_i32_0, %c0_i32_1 : i32, i32, i32
  }
  func.func @transform_4(%arg0: i32) -> (i32, i32, i32) {
    %c0_i32 = arith.constant 0 : i32
    %c0_i32_0 = arith.constant 0 : i32
    %c0_i32_1 = arith.constant 0 : i32
    %c0_i32_2 = arith.constant 0 : i32
    return %c0_i32, %c0_i32_0, %c0_i32_1 : i32, i32, i32
  }
  func.func @transform_5(%arg0: i32) -> (i32, i32, i32) {
    %c0_i32 = arith.constant 0 : i32
    %c0_i32_0 = arith.constant 0 : i32
    %c0_i32_1 = arith.constant 0 : i32
    %c0_i32_2 = arith.constant 0 : i32
    return %c0_i32, %c0_i32_0, %c0_i32_1 : i32, i32, i32
  }
  func.func @transform_6(%arg0: i32) -> (i32, i32) {
    %c0_i32 = arith.constant 0 : i32
    %c0_i32_0 = arith.constant 0 : i32
    %c0_i32_1 = arith.constant 0 : i32
    return %c0_i32, %c0_i32_0 : i32, i32
  }
  func.func @transform_7(%arg0: i32) -> (i32, i32) {
    %c0_i32 = arith.constant 0 : i32
    %c0_i32_0 = arith.constant 0 : i32
    %c0_i32_1 = arith.constant 0 : i32
    return %c0_i32, %c0_i32_0 : i32, i32
  }
  func.func @transform_8(%arg0: i32) -> (i32, i32) {
    %c0_i32 = arith.constant 0 : i32
    %c0_i32_0 = arith.constant 0 : i32
    %c0_i32_1 = arith.constant 0 : i32
    return %c0_i32, %c0_i32_0 : i32, i32
  }
  func.func @transform_9(%arg0: i32) -> (i32, i32) {
    %c0_i32 = arith.constant 0 : i32
    %c0_i32_0 = arith.constant 0 : i32
    %c0_i32_1 = arith.constant 0 : i32
    return %c0_i32, %c0_i32_0 : i32, i32
  }
  func.func @transform_10(%arg0: i32) -> (i32, i32) {
    %c0_i32 = arith.constant 0 : i32
    %c0_i32_0 = arith.constant 0 : i32
    %c0_i32_1 = arith.constant 0 : i32
    return %c0_i32, %c0_i32_0 : i32, i32
  }
  func.func @transform_11(%arg0: i32) -> (i32, i32) {
    %c0_i32 = arith.constant 0 : i32
    %c0_i32_0 = arith.constant 0 : i32
    %c0_i32_1 = arith.constant 0 : i32
    return %c0_i32, %c0_i32_0 : i32, i32
  }
  func.func @transform_12(%arg0: i32) -> (i32, i32) {
    %c0_i32 = arith.constant 0 : i32
    %c0_i32_0 = arith.constant 0 : i32
    %c0_i32_1 = arith.constant 0 : i32
    return %c0_i32, %c0_i32_0 : i32, i32
  }
  func.func @transform_13(%arg0: i32) -> (i32, i32) {
    %c0_i32 = arith.constant 0 : i32
    %c0_i32_0 = arith.constant 0 : i32
    %c0_i32_1 = arith.constant 0 : i32
    return %c0_i32, %c0_i32_0 : i32, i32
  }
  func.func @transform_14(%arg0: i32) -> (i32, i32) {
    %c0_i32 = arith.constant 0 : i32
    %c0_i32_0 = arith.constant 0 : i32
    %c0_i32_1 = arith.constant 0 : i32
    return %c0_i32, %c0_i32_0 : i32, i32
  }
  func.func @transform_15(%arg0: i32) -> (i32, i32, i32) {
    %c0_i32 = arith.constant 0 : i32
    %c0_i32_0 = arith.constant 0 : i32
    %c0_i32_1 = arith.constant 0 : i32
    return %arg0, %c0_i32, %c0_i32_0 : i32, i32, i32
  }
}

</mosaic_0001>

<llo_original>
// kernel: swin_block.1
$region0: #{swin_block.1}
  #allocation0 [shape = 'u32[]', space=smem, size = 0x4, offset = 0x4, fixed_abs, tag = 'smem constant byte address 0x4 - core index']
  #allocation1 [shape = 'u32[144,128]{1,0:T(1,128)}', space=vmem, size = 0x12000, scoped, tag = 'internal scratch']
  %s0 = inlined_call_operand.vmem [shape: f32[2,256,32], index: 0, kind: input, shape index: {}]
  %s1 = inlined_call_operand.vmem [shape: f32[16,16,16], index: 1, kind: input, shape index: {}]
  %s2 = inlined_call_operand.vmem [shape: bf16[2,32,16], index: 2, kind: input, shape index: {}]
  %s3 = inlined_call_operand.vmem [shape: bf16[2,32,16], index: 3, kind: input, shape index: {}]
  %s4 = inlined_call_operand.vmem [shape: bf16[2,32,16], index: 4, kind: input, shape index: {}]
  %s5 = inlined_call_operand.vmem [shape: bf16[2,16,32], index: 5, kind: input, shape index: {}]
  %s6 = inlined_call_operand.vmem [shape: f32[1,32], index: 6, kind: input, shape index: {}]
  %s7 = inlined_call_operand.vmem [shape: f32[1,32], index: 7, kind: input, shape index: {}]
  %s8 = inlined_call_operand.vmem [shape: f32[1,32], index: 8, kind: input, shape index: {}]
  %s9 = inlined_call_operand.vmem [shape: f32[1,32], index: 9, kind: input, shape index: {}]
  %s10 = inlined_call_operand.vmem [shape: f32[1,32], index: 10, kind: input, shape index: {}]
  %s11 = inlined_call_operand.vmem [shape: bf16[32,64], index: 11, kind: input, shape index: {}]
  %s12 = inlined_call_operand.vmem [shape: f32[1,64], index: 12, kind: input, shape index: {}]
  %s13 = inlined_call_operand.vmem [shape: bf16[64,32], index: 13, kind: input, shape index: {}]
  %s14 = inlined_call_operand.vmem [shape: f32[1,32], index: 14, kind: input, shape index: {}]
  %s15 = inlined_call_operand.vmem [shape: f32[2,256,32], index: 15, kind: output, shape index: {}]
  %s16 = sld [smem:[#allocation0]]
  $region93: #{swin_block.1} parent=0
    _
  %s18 = ssub.s32 1, %s16
  %s19 = scalar_select 0, %s18, %s16
  loop: start=0, step=1, limit=4
  $region2: #{swin_block.1} parent=0 // loop_pre_header
    _
  $region3: #{swin_block.1} parent=0 // loop_header
    %s21 = sphi 0, %s25
    %p22 = scmp.ge.s32.totalorder %s21, 4
    %s31 = sphi 0, %s33
    %s34 = sphi 0, %s31
    %s35 = sphi 0, %s34
    %s51 = sphi 0, %s35
    %s55 = sphi 0, %s55
    %s57 = sphi 0, %s55
    %s58 = sphi 0, %s57
    %s72 = sphi 0, %s58
    %s76 = sphi 0, %s76
    %s78 = sphi 0, %s76
    %s79 = sphi 0, %s78
    %s93 = sphi 0, %s79
    %s97 = sphi 0, %s97
    %s99 = sphi 0, %s97
    %s100 = sphi 0, %s99
    %s114 = sphi 0, %s100
    %s118 = sphi 0, %s118
    %s120 = sphi 0, %s118
    %s121 = sphi 0, %s120
    %s135 = sphi 0, %s121
    %s139 = sphi 0, %s139
    %s141 = sphi 0, %s139
    %s142 = sphi 0, %s141
    %s156 = sphi 0, %s142
    %s160 = sphi 0, %s160
    %s162 = sphi 0, %s160
    %s163 = sphi 0, %s162
    %s177 = sphi 0, %s163
    %s181 = sphi 0, %s181
    %s183 = sphi 0, %s181
    %s184 = sphi 0, %s183
    %s198 = sphi 0, %s184
    %s202 = sphi 0, %s202
    %s204 = sphi 0, %s202
    %s205 = sphi 0, %s204
    %s219 = sphi 0, %s205
    %s223 = sphi 0, %s223
    %s225 = sphi 0, %s223
    %s226 = sphi 0, %s225
    %s240 = sphi 0, %s226
    %s244 = sphi 0, %s244
    %s246 = sphi 0, %s244
    %s247 = sphi 0, %s246
    %s261 = sphi 0, %s247
    %s265 = sphi 0, %s265
    %s267 = sphi 0, %s265
    %s268 = sphi 0, %s267
    %s282 = sphi 0, %s268
    %s286 = sphi 0, %s286
    %s288 = sphi 0, %s286
    %s289 = sphi 0, %s288
    %s303 = sphi 0, %s289
    %s307 = sphi 0, %s307
    %s309 = sphi 0, %s307
    %s310 = sphi 0, %s309
    %s324 = sphi 0, %s310
    %s328 = sphi 0, %s328
    %s330 = sphi 0, %s328
    %s331 = sphi 0, %s330
    %s345 = sphi 0, %s331
    %s351 = sphi 0, %s353
    %s354 = sphi 0, %s351
    %s355 = sphi 0, %s354
    %s371 = sphi 0, %s355
  $region4: #{swin_block.1} parent=0 // loop_header_branch
    %24 = sbr.rel (%p22) target = $region8
  $region5: #{swin_block.1} parent=0 // loop_body
    %s26 = ssub.s32 %s21, 1
    %s27 = ssub.s32 %s21, 2
    %s28 = sadd.s32 %s21, 1
    %s29 = ssub.s32 %s21, %s28
    %p30 = scmp.eq.s32.totalorder %s29, 0
    %s32 = sadd.s32 %s31, 1
    %s33 = scalar_select %p30, %s31, %s32
    %p36 = pneg %p30
    %p37 = scmp.eq.s32.totalorder %s21, 1
    %p38 = por %p36, %p37
    %p39 = scmp.ne.s32.totalorder %s31, %s34
    %p40 = scmp.eq.s32.totalorder %s21, 0
    %p41 = por %p39, %p40
    %p42 = scmp.ne.s32.totalorder %s31, %s34
    %p43 = scmp.eq.s32.totalorder %s26, 1
    %p44 = por %p42, %p43
    %p45 = scmp.ne.s32.totalorder %s34, %s35
    %p46 = scmp.eq.s32.totalorder %s26, 0
    %p47 = por %p45, %p46
    %p48 = scmp.ne.s32.totalorder %s34, %s35
    %p49 = scmp.eq.s32.totalorder %s27, 1
    %p50 = por %p48, %p49
    %p52 = scmp.ne.s32.totalorder %s35, %s51
    %p53 = scmp.eq.s32.totalorder %s27, 0
    %p54 = por %p52, %p53
    %s56 = sadd.s32 %s55, 1
    %p59 = scmp.eq.s32.totalorder %s21, 1
    %p60 = scmp.ne.s32.totalorder %s55, %s57
    %p61 = scmp.eq.s32.totalorder %s21, 0
    %p62 = por %p60, %p61
    %p63 = scmp.ne.s32.totalorder %s55, %s57
    %p64 = scmp.eq.s32.totalorder %s26, 1
    %p65 = por %p63, %p64
    %p66 = scmp.ne.s32.totalorder %s57, %s58
    %p67 = scmp.eq.s32.totalorder %s26, 0
    %p68 = por %p66, %p67
    %p69 = scmp.ne.s32.totalorder %s57, %s58
    %p70 = scmp.eq.s32.totalorder %s27, 1
    %p71 = por %p69, %p70
    %p73 = scmp.ne.s32.totalorder %s58, %s72
    %p74 = scmp.eq.s32.totalorder %s27, 0
    %p75 = por %p73, %p74
    %s77 = sadd.s32 %s76, 1
    %p80 = scmp.eq.s32.totalorder %s21, 1
    %p81 = scmp.ne.s32.totalorder %s76, %s78
    %p82 = scmp.eq.s32.totalorder %s21, 0
    %p83 = por %p81, %p82
    %p84 = scmp.ne.s32.totalorder %s76, %s78
    %p85 = scmp.eq.s32.totalorder %s26, 1
    %p86 = por %p84, %p85
    %p87 = scmp.ne.s32.totalorder %s78, %s79
    %p88 = scmp.eq.s32.totalorder %s26, 0
    %p89 = por %p87, %p88
    %p90 = scmp.ne.s32.totalorder %s78, %s79
    %p91 = scmp.eq.s32.totalorder %s27, 1
    %p92 = por %p90, %p91
    %p94 = scmp.ne.s32.totalorder %s79, %s93
    %p95 = scmp.eq.s32.totalorder %s27, 0
    %p96 = por %p94, %p95
    %s98 = sadd.s32 %s97, 1
    %p101 = scmp.eq.s32.totalorder %s21, 1
    %p102 = scmp.ne.s32.totalorder %s97, %s99
    %p103 = scmp.eq.s32.totalorder %s21, 0
    %p104 = por %p102, %p103
    %p105 = scmp.ne.s32.totalorder %s97, %s99
    %p106 = scmp.eq.s32.totalorder %s26, 1
    %p107 = por %p105, %p106
    %p108 = scmp.ne.s32.totalorder %s99, %s100
    %p109 = scmp.eq.s32.totalorder %s26, 0
    %p110 = por %p108, %p109
    %p111 = scmp.ne.s32.totalorder %s99, %s100
    %p112 = scmp.eq.s32.totalorder %s27, 1
    %p113 = por %p111, %p112
    %p115 = scmp.ne.s32.totalorder %s100, %s114
    %p116 = scmp.eq.s32.totalorder %s27, 0
    %p117 = por %p115, %p116
    %s119 = sadd.s32 %s118, 1
    %p122 = scmp.eq.s32.totalorder %s21, 1
    %p123 = scmp.ne.s32.totalorder %s118, %s120
    %p124 = scmp.eq.s32.totalorder %s21, 0
    %p125 = por %p123, %p124
    %p126 = scmp.ne.s32.totalorder %s118, %s120
    %p127 = scmp.eq.s32.totalorder %s26, 1
    %p128 = por %p126, %p127
    %p129 = scmp.ne.s32.totalorder %s120, %s121
    %p130 = scmp.eq.s32.totalorder %s26, 0
    %p131 = por %p129, %p130
    %p132 = scmp.ne.s32.totalorder %s120, %s121
    %p133 = scmp.eq.s32.totalorder %s27, 1
    %p134 = por %p132, %p133
    %p136 = scmp.ne.s32.totalorder %s121, %s135
    %p137 = scmp.eq.s32.totalorder %s27, 0
    %p138 = por %p136, %p137
    %s140 = sadd.s32 %s139, 1
    %p143 = scmp.eq.s32.totalorder %s21, 1
    %p144 = scmp.ne.s32.totalorder %s139, %s141
    %p145 = scmp.eq.s32.totalorder %s21, 0
    %p146 = por %p144, %p145
    %p147 = scmp.ne.s32.totalorder %s139, %s141
    %p148 = scmp.eq.s32.totalorder %s26, 1
    %p149 = por %p147, %p148
    %p150 = scmp.ne.s32.totalorder %s141, %s142
    %p151 = scmp.eq.s32.totalorder %s26, 0
    %p152 = por %p150, %p151
    %p153 = scmp.ne.s32.totalorder %s141, %s142
    %p154 = scmp.eq.s32.totalorder %s27, 1
    %p155 = por %p153, %p154
    %p157 = scmp.ne.s32.totalorder %s142, %s156
    %p158 = scmp.eq.s32.totalorder %s27, 0
    %p159 = por %p157, %p158
    %s161 = sadd.s32 %s160, 1
    %p164 = scmp.eq.s32.totalorder %s21, 1
    %p165 = scmp.ne.s32.totalorder %s160, %s162
    %p166 = scmp.eq.s32.totalorder %s21, 0
    %p167 = por %p165, %p166
    %p168 = scmp.ne.s32.totalorder %s160, %s162
    %p169 = scmp.eq.s32.totalorder %s26, 1
    %p170 = por %p168, %p169
    %p171 = scmp.ne.s32.totalorder %s162, %s163
    %p172 = scmp.eq.s32.totalorder %s26, 0
    %p173 = por %p171, %p172
    %p174 = scmp.ne.s32.totalorder %s162, %s163
    %p175 = scmp.eq.s32.totalorder %s27, 1
    %p176 = por %p174, %p175
    %p178 = scmp.ne.s32.totalorder %s163, %s177
    %p179 = scmp.eq.s32.totalorder %s27, 0
    %p180 = por %p178, %p179
    %s182 = sadd.s32 %s181, 1
    %p185 = scmp.eq.s32.totalorder %s21, 1
    %p186 = scmp.ne.s32.totalorder %s181, %s183
    %p187 = scmp.eq.s32.totalorder %s21, 0
    %p188 = por %p186, %p187
    %p189 = scmp.ne.s32.totalorder %s181, %s183
    %p190 = scmp.eq.s32.totalorder %s26, 1
    %p191 = por %p189, %p190
    %p192 = scmp.ne.s32.totalorder %s183, %s184
    %p193 = scmp.eq.s32.totalorder %s26, 0
    %p194 = por %p192, %p193
    %p195 = scmp.ne.s32.totalorder %s183, %s184
    %p196 = scmp.eq.s32.totalorder %s27, 1
    %p197 = por %p195, %p196
    %p199 = scmp.ne.s32.totalorder %s184, %s198
    %p200 = scmp.eq.s32.totalorder %s27, 0
    %p201 = por %p199, %p200
    %s203 = sadd.s32 %s202, 1
    %p206 = scmp.eq.s32.totalorder %s21, 1
    %p207 = scmp.ne.s32.totalorder %s202, %s204
    %p208 = scmp.eq.s32.totalorder %s21, 0
    %p209 = por %p207, %p208
    %p210 = scmp.ne.s32.totalorder %s202, %s204
    %p211 = scmp.eq.s32.totalorder %s26, 1
    %p212 = por %p210, %p211
    %p213 = scmp.ne.s32.totalorder %s204, %s205
    %p214 = scmp.eq.s32.totalorder %s26, 0
    %p215 = por %p213, %p214
    %p216 = scmp.ne.s32.totalorder %s204, %s205
    %p217 = scmp.eq.s32.totalorder %s27, 1
    %p218 = por %p216, %p217
    %p220 = scmp.ne.s32.totalorder %s205, %s219
    %p221 = scmp.eq.s32.totalorder %s27, 0
    %p222 = por %p220, %p221
    %s224 = sadd.s32 %s223, 1
    %p227 = scmp.eq.s32.totalorder %s21, 1
    %p228 = scmp.ne.s32.totalorder %s223, %s225
    %p229 = scmp.eq.s32.totalorder %s21, 0
    %p230 = por %p228, %p229
    %p231 = scmp.ne.s32.totalorder %s223, %s225
    %p232 = scmp.eq.s32.totalorder %s26, 1
    %p233 = por %p231, %p232
    %p234 = scmp.ne.s32.totalorder %s225, %s226
    %p235 = scmp.eq.s32.totalorder %s26, 0
    %p236 = por %p234, %p235
    %p237 = scmp.ne.s32.totalorder %s225, %s226
    %p238 = scmp.eq.s32.totalorder %s27, 1
    %p239 = por %p237, %p238
    %p241 = scmp.ne.s32.totalorder %s226, %s240
    %p242 = scmp.eq.s32.totalorder %s27, 0
    %p243 = por %p241, %p242
    %s245 = sadd.s32 %s244, 1
    %p248 = scmp.eq.s32.totalorder %s21, 1
    %p249 = scmp.ne.s32.totalorder %s244, %s246
    %p250 = scmp.eq.s32.totalorder %s21, 0
    %p251 = por %p249, %p250
    %p252 = scmp.ne.s32.totalorder %s244, %s246
    %p253 = scmp.eq.s32.totalorder %s26, 1
    %p254 = por %p252, %p253
    %p255 = scmp.ne.s32.totalorder %s246, %s247
    %p256 = scmp.eq.s32.totalorder %s26, 0
    %p257 = por %p255, %p256
    %p258 = scmp.ne.s32.totalorder %s246, %s247
    %p259 = scmp.eq.s32.totalorder %s27, 1
    %p260 = por %p258, %p259
    %p262 = scmp.ne.s32.totalorder %s247, %s261
    %p263 = scmp.eq.s32.totalorder %s27, 0
    %p264 = por %p262, %p263
    %s266 = sadd.s32 %s265, 1
    %p269 = scmp.eq.s32.totalorder %s21, 1
    %p270 = scmp.ne.s32.totalorder %s265, %s267
    %p271 = scmp.eq.s32.totalorder %s21, 0
    %p272 = por %p270, %p271
    %p273 = scmp.ne.s32.totalorder %s265, %s267
    %p274 = scmp.eq.s32.totalorder %s26, 1
    %p275 = por %p273, %p274
    %p276 = scmp.ne.s32.totalorder %s267, %s268
    %p277 = scmp.eq.s32.totalorder %s26, 0
    %p278 = por %p276, %p277
    %p279 = scmp.ne.s32.totalorder %s267, %s268
    %p280 = scmp.eq.s32.totalorder %s27, 1
    %p281 = por %p279, %p280
    %p283 = scmp.ne.s32.totalorder %s268, %s282
    %p284 = scmp.eq.s32.totalorder %s27, 0
    %p285 = por %p283, %p284
    %s287 = sadd.s32 %s286, 1
    %p290 = scmp.eq.s32.totalorder %s21, 1
    %p291 = scmp.ne.s32.totalorder %s286, %s288
    %p292 = scmp.eq.s32.totalorder %s21, 0
    %p293 = por %p291, %p292
    %p294 = scmp.ne.s32.totalorder %s286, %s288
    %p295 = scmp.eq.s32.totalorder %s26, 1
    %p296 = por %p294, %p295
    %p297 = scmp.ne.s32.totalorder %s288, %s289
    %p298 = scmp.eq.s32.totalorder %s26, 0
    %p299 = por %p297, %p298
    %p300 = scmp.ne.s32.totalorder %s288, %s289
    %p301 = scmp.eq.s32.totalorder %s27, 1
    %p302 = por %p300, %p301
    %p304 = scmp.ne.s32.totalorder %s289, %s303
    %p305 = scmp.eq.s32.totalorder %s27, 0
    %p306 = por %p304, %p305
    %s308 = sadd.s32 %s307, 1
    %p311 = scmp.eq.s32.totalorder %s21, 1
    %p312 = scmp.ne.s32.totalorder %s307, %s309
    %p313 = scmp.eq.s32.totalorder %s21, 0
    %p314 = por %p312, %p313
    %p315 = scmp.ne.s32.totalorder %s307, %s309
    %p316 = scmp.eq.s32.totalorder %s26, 1
    %p317 = por %p315, %p316
    %p318 = scmp.ne.s32.totalorder %s309, %s310
    %p319 = scmp.eq.s32.totalorder %s26, 0
    %p320 = por %p318, %p319
    %p321 = scmp.ne.s32.totalorder %s309, %s310
    %p322 = scmp.eq.s32.totalorder %s27, 1
    %p323 = por %p321, %p322
    %p325 = scmp.ne.s32.totalorder %s310, %s324
    %p326 = scmp.eq.s32.totalorder %s27, 0
    %p327 = por %p325, %p326
    %s329 = sadd.s32 %s328, 1
    %p332 = scmp.eq.s32.totalorder %s21, 1
    %p333 = scmp.ne.s32.totalorder %s328, %s330
    %p334 = scmp.eq.s32.totalorder %s21, 0
    %p335 = por %p333, %p334
    %p336 = scmp.ne.s32.totalorder %s328, %s330
    %p337 = scmp.eq.s32.totalorder %s26, 1
    %p338 = por %p336, %p337
    %p339 = scmp.ne.s32.totalorder %s330, %s331
    %p340 = scmp.eq.s32.totalorder %s26, 0
    %p341 = por %p339, %p340
    %p342 = scmp.ne.s32.totalorder %s330, %s331
    %p343 = scmp.eq.s32.totalorder %s27, 1
    %p344 = por %p342, %p343
    %p346 = scmp.ne.s32.totalorder %s331, %s345
    %p347 = scmp.eq.s32.totalorder %s27, 0
    %p348 = por %p346, %p347
    %s349 = ssub.s32 %s21, %s28
    %p350 = scmp.eq.s32.totalorder %s349, 0
    %s352 = sadd.s32 %s351, 1
    %s353 = scalar_select %p350, %s351, %s352
    %p356 = pneg %p350
    %p357 = scmp.eq.s32.totalorder %s21, 1
    %p358 = por %p356, %p357
    %p359 = scmp.ne.s32.totalorder %s351, %s354
    %p360 = scmp.eq.s32.totalorder %s21, 0
    %p361 = por %p359, %p360
    %p362 = scmp.ne.s32.totalorder %s351, %s354
    %p363 = scmp.eq.s32.totalorder %s26, 1
    %p364 = por %p362, %p363
    %p365 = scmp.ne.s32.totalorder %s354, %s355
    %p366 = scmp.eq.s32.totalorder %s26, 0
    %p367 = por %p365, %p366
    %p368 = scmp.ne.s32.totalorder %s354, %s355
    %p369 = scmp.eq.s32.totalorder %s27, 1
    %p370 = por %p368, %p369
    %p372 = scmp.ne.s32.totalorder %s355, %s371
    %p373 = scmp.eq.s32.totalorder %s27, 0
    %p374 = por %p372, %p373
    %p375 = scmp.le.s32.totalorder 1, %s21
    %p376 = scmp.lt.s32.totalorder %s21, 3
    %p377 = pnand %p375, %p376
    %p378 = pneg %p377
    // Predicated region
    $region9: #{swin_block.1} parent=5 // pred_check
      _
    $region10: #{swin_block.1} parent=5 // pred_check_branch
      %380 = sbr.rel (%p377) target = $region12
    $region11: #{swin_block.1} parent=5 // pred_region
      %s381 = ssub.s32 %s21, 1
      // Predicated region
      $region13: #{swin_block.1} parent=11 // pred_check
        %p382 = pneg %p68
      $region14: #{swin_block.1} parent=11 // pred_check_branch
        %384 = sbr.rel (%p382) target = $region16
      $region15: #{swin_block.1} parent=11 // pred_region
        _
      $region16: #{swin_block.1} parent=11 // pred_fallthru
        _
      // Predicated region
      $region17: #{swin_block.1} parent=11 // pred_check
        %p385 = pneg %p89
      $region18: #{swin_block.1} parent=11 // pred_check_branch
        %387 = sbr.rel (%p385) target = $region20
      $region19: #{swin_block.1} parent=11 // pred_region
        _
      $region20: #{swin_block.1} parent=11 // pred_fallthru
        _
      // Predicated region
      $region21: #{swin_block.1} parent=11 // pred_check
        %p388 = pneg %p110
      $region22: #{swin_block.1} parent=11 // pred_check_branch
        %390 = sbr.rel (%p388) target = $region24
      $region23: #{swin_block.1} parent=11 // pred_region
        _
      $region24: #{swin_block.1} parent=11 // pred_fallthru
        _
      // Predicated region
      $region25: #{swin_block.1} parent=11 // pred_check
        %p391 = pneg %p131
      $region26: #{swin_block.1} parent=11 // pred_check_branch
        %393 = sbr.rel (%p391) target = $region28
      $region27: #{swin_block.1} parent=11 // pred_region
        _
      $region28: #{swin_block.1} parent=11 // pred_fallthru
        _
      // Predicated region
      $region29: #{swin_block.1} parent=11 // pred_check
        %p394 = pneg %p152
      $region30: #{swin_block.1} parent=11 // pred_check_branch
        %396 = sbr.rel (%p394) target = $region32
      $region31: #{swin_block.1} parent=11 // pred_region
        _
      $region32: #{swin_block.1} parent=11 // pred_fallthru
        _
      // Predicated region
      $region33: #{swin_block.1} parent=11 // pred_check
        %p397 = pneg %p173
      $region34: #{swin_block.1} parent=11 // pred_check_branch
        %399 = sbr.rel (%p397) target = $region36
      $region35: #{swin_block.1} parent=11 // pred_region
        _
      $region36: #{swin_block.1} parent=11 // pred_fallthru
        _
      // Predicated region
      $region37: #{swin_block.1} parent=11 // pred_check
        %p400 = pneg %p194
      $region38: #{swin_block.1} parent=11 // pred_check_branch
        %402 = sbr.rel (%p400) target = $region40
      $region39: #{swin_block.1} parent=11 // pred_region
        _
      $region40: #{swin_block.1} parent=11 // pred_fallthru
        _
      // Predicated region
      $region41: #{swin_block.1} parent=11 // pred_check
        %p403 = pneg %p215
      $region42: #{swin_block.1} parent=11 // pred_check_branch
        %405 = sbr.rel (%p403) target = $region44
      $region43: #{swin_block.1} parent=11 // pred_region
        _
      $region44: #{swin_block.1} parent=11 // pred_fallthru
        _
      // Predicated region
      $region45: #{swin_block.1} parent=11 // pred_check
        %p406 = pneg %p236
      $region46: #{swin_block.1} parent=11 // pred_check_branch
        %408 = sbr.rel (%p406) target = $region48
      $region47: #{swin_block.1} parent=11 // pred_region
        _
      $region48: #{swin_block.1} parent=11 // pred_fallthru
        _
      // Predicated region
      $region49: #{swin_block.1} parent=11 // pred_check
        %p409 = pneg %p257
      $region50: #{swin_block.1} parent=11 // pred_check_branch
        %411 = sbr.rel (%p409) target = $region52
      $region51: #{swin_block.1} parent=11 // pred_region
        _
      $region52: #{swin_block.1} parent=11 // pred_fallthru
        _
      // Predicated region
      $region53: #{swin_block.1} parent=11 // pred_check
        %p412 = pneg %p278
      $region54: #{swin_block.1} parent=11 // pred_check_branch
        %414 = sbr.rel (%p412) target = $region56
      $region55: #{swin_block.1} parent=11 // pred_region
        _
      $region56: #{swin_block.1} parent=11 // pred_fallthru
        _
      // Predicated region
      $region57: #{swin_block.1} parent=11 // pred_check
        %p415 = pneg %p299
      $region58: #{swin_block.1} parent=11 // pred_check_branch
        %417 = sbr.rel (%p415) target = $region60
      $region59: #{swin_block.1} parent=11 // pred_region
        _
      $region60: #{swin_block.1} parent=11 // pred_fallthru
        _
      // Predicated region
      $region61: #{swin_block.1} parent=11 // pred_check
        %p418 = pneg %p320
      $region62: #{swin_block.1} parent=11 // pred_check_branch
        %420 = sbr.rel (%p418) target = $region64
      $region63: #{swin_block.1} parent=11 // pred_region
        _
      $region64: #{swin_block.1} parent=11 // pred_fallthru
        _
      // Predicated region
      $region65: #{swin_block.1} parent=11 // pred_check
        %p421 = pneg %p341
      $region66: #{swin_block.1} parent=11 // pred_check_branch
        %423 = sbr.rel (%p421) target = $region68
      $region67: #{swin_block.1} parent=11 // pred_region
        _
      $region68: #{swin_block.1} parent=11 // pred_fallthru
        _
    $region12: #{swin_block.1} parent=5 // pred_fallthru
      _
    %p424 = scmp.lt.s32.totalorder %s21, 2
    // Predicated region
    $region69: #{swin_block.1} parent=5 // pred_check
      %p425 = pneg %p424
    $region70: #{swin_block.1} parent=5 // pred_check_branch
      %427 = sbr.rel (%p425) target = $region72
    $region71: #{swin_block.1} parent=5 // pred_region
      // Predicated region
      $region73: #{swin_block.1} parent=71 // pred_check
        %p428 = pneg %p41
      $region74: #{swin_block.1} parent=71 // pred_check_branch
        %430 = sbr.rel (%p428) target = $region76
      $region75: #{swin_block.1} parent=71 // pred_region
        %p431 = scmp.lt.s32.totalorder %s21, 1
        %s432 = scalar_select %p431, %s21, 1
        %s433 = smul.addr %s432, 32
        %s434 = smul.addr %s433, 8
        %s435 = scalar_lea.vmem %s0, %s434
      $region76: #{swin_block.1} parent=71 // pred_fallthru
        _
    $region72: #{swin_block.1} parent=5 // pred_fallthru
      _
    %p436 = scmp.le.s32.totalorder 1, %s21
    %p437 = scmp.lt.s32.totalorder %s21, 3
    %p438 = pnand %p436, %p437
    %p439 = pneg %p438
    // Predicated region
    $region77: #{swin_block.1} parent=5 // pred_check
      _
    $region78: #{swin_block.1} parent=5 // pred_check_branch
      %441 = sbr.rel (%p438) target = $region80
    $region79: #{swin_block.1} parent=5 // pred_region
      %s442 = ssub.s32 %s21, 1
      %p443 = scmp.lt.s32.totalorder %s26, 1
      %s444 = scalar_select %p443, %s26, 1
      %s445 = smul.addr %s444, 32
      %s446 = smul.addr %s445, 8
      %s447 = scalar_lea.vmem %s0, %s446
      %p448 = pneg %p47
      %p449 = pneg %p44
      %p450 = pneg %p68
      %p451 = pneg %p65
      %p452 = pneg %p89
      %p453 = pneg %p86
      %p454 = pneg %p110
      %p455 = pneg %p107
      %p456 = pneg %p131
      %p457 = pneg %p128
      %p458 = pneg %p152
      %p459 = pneg %p149
      %p460 = pneg %p173
      %p461 = pneg %p170
      %p462 = pneg %p194
      %p463 = pneg %p191
      %p464 = pneg %p215
      %p465 = pneg %p212
      %p466 = pneg %p236
      %p467 = pneg %p233
      %p468 = pneg %p257
      %p469 = pneg %p254
      %p470 = pneg %p278
      %p471 = pneg %p275
      %p472 = pneg %p299
      %p473 = pneg %p296
      %p474 = pneg %p320
      %p475 = pneg %p317
      %p476 = pneg %p341
      %p477 = pneg %p338
      %p478 = pneg %p367
      %p479 = pneg %p364
      %p480 = scmp.lt.s32.totalorder %s26, 1
      %s481 = scalar_select %p480, %s26, 1
      %s482 = smul.addr %s481, 32
      %s483 = smul.addr %s482, 8
      %s484 = scalar_lea.vmem %s15, %s483
      %p485 = scmp.lt.s32.totalorder %s26, 1
      %s486 = scalar_select %p485, %s26, 1
      %s487 = smul.addr %s486, 32
      %s488 = smul.addr %s487, 8
      %s489 = scalar_lea.vmem %s0, %s488
      %p490 = scmp.lt.s32.totalorder %s26, 1
      %s491 = scalar_select %p490, %s26, 1
      %s492 = smul.addr %s491, 32
      %s493 = smul.addr %s492, 8
      %s494 = scalar_lea.vmem %s15, %s493
      %v496 = vld [vmem:[%s489] sm:$0xff]
      %v497 = vld [vmem:[%s489 + $0x8] sm:$0xff]
      %v498 = vld [vmem:[%s489 + $0x10] sm:$0xff]
      %v499 = vld [vmem:[%s489 + $0x18] sm:$0xff]
      %v500 = vld [vmem:[%s489 + $0x20] sm:$0xff]
      %v501 = vld [vmem:[%s489 + $0x28] sm:$0xff]
      %v502 = vld [vmem:[%s489 + $0x30] sm:$0xff]
      %v503 = vld [vmem:[%s489 + $0x38] sm:$0xff]
      %v504 = vld [vmem:[%s489 + $0x40] sm:$0xff]
      %v505 = vld [vmem:[%s489 + $0x48] sm:$0xff]
      %v506 = vld [vmem:[%s489 + $0x50] sm:$0xff]
      %v507 = vld [vmem:[%s489 + $0x58] sm:$0xff]
      %v508 = vld [vmem:[%s489 + $0x60] sm:$0xff]
      %v509 = vld [vmem:[%s489 + $0x68] sm:$0xff]
      %v510 = vld [vmem:[%s489 + $0x70] sm:$0xff]
      %v511 = vld [vmem:[%s489 + $0x78] sm:$0xff]
      %v512 = vld [vmem:[%s489 + $0x80] sm:$0xff]
      %v513 = vld [vmem:[%s489 + $0x88] sm:$0xff]
      %v514 = vld [vmem:[%s489 + $0x90] sm:$0xff]
      %v515 = vld [vmem:[%s489 + $0x98] sm:$0xff]
      %v516 = vld [vmem:[%s489 + $0xa0] sm:$0xff]
      %v517 = vld [vmem:[%s489 + $0xa8] sm:$0xff]
      %v518 = vld [vmem:[%s489 + $0xb0] sm:$0xff]
      %v519 = vld [vmem:[%s489 + $0xb8] sm:$0xff]
      %v520 = vld [vmem:[%s489 + $0xc0] sm:$0xff]
      %v521 = vld [vmem:[%s489 + $0xc8] sm:$0xff]
      %v522 = vld [vmem:[%s489 + $0xd0] sm:$0xff]
      %v523 = vld [vmem:[%s489 + $0xd8] sm:$0xff]
      %v524 = vld [vmem:[%s489 + $0xe0] sm:$0xff]
      %v525 = vld [vmem:[%s489 + $0xe8] sm:$0xff]
      %v526 = vld [vmem:[%s489 + $0xf0] sm:$0xff]
      %v527 = vld [vmem:[%s489 + $0xf8] sm:$0xff]
      %vm528 = vcmask 261120
      %v529 = vsel %vm528, %v496, 0.0
      %530 = vadd.xlane.f32.xlu0 %v529
      %v531 = vpop.xlane.xlu0 %530
      %v532 = vsel %vm528, %v497, 0.0
      %533 = vadd.xlane.f32.xlu0 %v532
      %v534 = vpop.xlane.xlu0 %533
      %v535 = vsel %vm528, %v498, 0.0
      %536 = vadd.xlane.f32.xlu0 %v535
      %v537 = vpop.xlane.xlu0 %536
      %v538 = vsel %vm528, %v499, 0.0
      %539 = vadd.xlane.f32.xlu0 %v538
      %v540 = vpop.xlane.xlu0 %539
      %v541 = vsel %vm528, %v500, 0.0
      %542 = vadd.xlane.f32.xlu0 %v541
      %v543 = vpop.xlane.xlu0 %542
      %v544 = vsel %vm528, %v501, 0.0
      %545 = vadd.xlane.f32.xlu0 %v544
      %v546 = vpop.xlane.xlu0 %545
      %v547 = vsel %vm528, %v502, 0.0
      %548 = vadd.xlane.f32.xlu0 %v547
      %v549 = vpop.xlane.xlu0 %548
      %v550 = vsel %vm528, %v503, 0.0
      %551 = vadd.xlane.f32.xlu0 %v550
      %v552 = vpop.xlane.xlu0 %551
      %v553 = vsel %vm528, %v504, 0.0
      %554 = vadd.xlane.f32.xlu0 %v553
      %v555 = vpop.xlane.xlu0 %554
      %v556 = vsel %vm528, %v505, 0.0
      %557 = vadd.xlane.f32.xlu0 %v556
      %v558 = vpop.xlane.xlu0 %557
      %v559 = vsel %vm528, %v506, 0.0
      %560 = vadd.xlane.f32.xlu0 %v559
      %v561 = vpop.xlane.xlu0 %560
      %v562 = vsel %vm528, %v507, 0.0
      %563 = vadd.xlane.f32.xlu0 %v562
      %v564 = vpop.xlane.xlu0 %563
      %v565 = vsel %vm528, %v508, 0.0
      %566 = vadd.xlane.f32.xlu0 %v565
      %v567 = vpop.xlane.xlu0 %566
      %v568 = vsel %vm528, %v509, 0.0
      %569 = vadd.xlane.f32.xlu0 %v568
      %v570 = vpop.xlane.xlu0 %569
      %v571 = vsel %vm528, %v510, 0.0
      %572 = vadd.xlane.f32.xlu0 %v571
      %v573 = vpop.xlane.xlu0 %572
      %v574 = vsel %vm528, %v511, 0.0
      %575 = vadd.xlane.f32.xlu0 %v574
      %v576 = vpop.xlane.xlu0 %575
      %v577 = vsel %vm528, %v512, 0.0
      %578 = vadd.xlane.f32.xlu0 %v577
      %v579 = vpop.xlane.xlu0 %578
      %v580 = vsel %vm528, %v513, 0.0
      %581 = vadd.xlane.f32.xlu0 %v580
      %v582 = vpop.xlane.xlu0 %581
      %v583 = vsel %vm528, %v514, 0.0
      %584 = vadd.xlane.f32.xlu0 %v583
      %v585 = vpop.xlane.xlu0 %584
      %v586 = vsel %vm528, %v515, 0.0
      %587 = vadd.xlane.f32.xlu0 %v586
      %v588 = vpop.xlane.xlu0 %587
      %v589 = vsel %vm528, %v516, 0.0
      %590 = vadd.xlane.f32.xlu0 %v589
      %v591 = vpop.xlane.xlu0 %590
      %v592 = vsel %vm528, %v517, 0.0
      %593 = vadd.xlane.f32.xlu0 %v592
      %v594 = vpop.xlane.xlu0 %593
      %v595 = vsel %vm528, %v518, 0.0
      %596 = vadd.xlane.f32.xlu0 %v595
      %v597 = vpop.xlane.xlu0 %596
      %v598 = vsel %vm528, %v519, 0.0
      %599 = vadd.xlane.f32.xlu0 %v598
      %v600 = vpop.xlane.xlu0 %599
      %v601 = vsel %vm528, %v520, 0.0
      %602 = vadd.xlane.f32.xlu0 %v601
      %v603 = vpop.xlane.xlu0 %602
      %v604 = vsel %vm528, %v521, 0.0
      %605 = vadd.xlane.f32.xlu0 %v604
      %v606 = vpop.xlane.xlu0 %605
      %v607 = vsel %vm528, %v522, 0.0
      %608 = vadd.xlane.f32.xlu0 %v607
      %v609 = vpop.xlane.xlu0 %608
      %v610 = vsel %vm528, %v523, 0.0
      %611 = vadd.xlane.f32.xlu0 %v610
      %v612 = vpop.xlane.xlu0 %611
      %v613 = vsel %vm528, %v524, 0.0
      %614 = vadd.xlane.f32.xlu0 %v613
      %v615 = vpop.xlane.xlu0 %614
      %v616 = vsel %vm528, %v525, 0.0
      %617 = vadd.xlane.f32.xlu0 %v616
      %v618 = vpop.xlane.xlu0 %617
      %v619 = vsel %vm528, %v526, 0.0
      %620 = vadd.xlane.f32.xlu0 %v619
      %v621 = vpop.xlane.xlu0 %620
      %v622 = vsel %vm528, %v527, 0.0
      %623 = vadd.xlane.f32.xlu0 %v622
      %v624 = vpop.xlane.xlu0 %623
      %v625 = vrcp.pop 32.0
      %v626 = vmul.f32 %v531, %v625
      %v627 = vmul.f32 %v534, %v625
      %v628 = vmul.f32 %v537, %v625
      %v629 = vmul.f32 %v540, %v625
      %v630 = vmul.f32 %v543, %v625
      %v631 = vmul.f32 %v546, %v625
      %v632 = vmul.f32 %v549, %v625
      %v633 = vmul.f32 %v552, %v625
      %v634 = vmul.f32 %v555, %v625
      %v635 = vmul.f32 %v558, %v625
      %v636 = vmul.f32 %v561, %v625
      %v637 = vmul.f32 %v564, %v625
      %v638 = vmul.f32 %v567, %v625
      %v639 = vmul.f32 %v570, %v625
      %v640 = vmul.f32 %v573, %v625
      %v641 = vmul.f32 %v576, %v625
      %v642 = vmul.f32 %v579, %v625
      %v643 = vmul.f32 %v582, %v625
      %v644 = vmul.f32 %v585, %v625
      %v645 = vmul.f32 %v588, %v625
      %v646 = vmul.f32 %v591, %v625
      %v647 = vmul.f32 %v594, %v625
      %v648 = vmul.f32 %v597, %v625
      %v649 = vmul.f32 %v600, %v625
      %v650 = vmul.f32 %v603, %v625
      %v651 = vmul.f32 %v606, %v625
      %v652 = vmul.f32 %v609, %v625
      %v653 = vmul.f32 %v612, %v625
      %v654 = vmul.f32 %v615, %v625
      %v655 = vmul.f32 %v618, %v625
      %v656 = vmul.f32 %v621, %v625
      %v657 = vmul.f32 %v624, %v625
      %v658 = vsub.f32 %v496, %v626
      %v659 = vsub.f32 %v497, %v627
      %v660 = vsub.f32 %v498, %v628
      %v661 = vsub.f32 %v499, %v629
      %v662 = vsub.f32 %v500, %v630
      %v663 = vsub.f32 %v501, %v631
      %v664 = vsub.f32 %v502, %v632
      %v665 = vsub.f32 %v503, %v633
      %v666 = vsub.f32 %v504, %v634
      %v667 = vsub.f32 %v505, %v635
      %v668 = vsub.f32 %v506, %v636
      %v669 = vsub.f32 %v507, %v637
      %v670 = vsub.f32 %v508, %v638
      %v671 = vsub.f32 %v509, %v639
      %v672 = vsub.f32 %v510, %v640
      %v673 = vsub.f32 %v511, %v641
      %v674 = vsub.f32 %v512, %v642
      %v675 = vsub.f32 %v513, %v643
      %v676 = vsub.f32 %v514, %v644
      %v677 = vsub.f32 %v515, %v645
      %v678 = vsub.f32 %v516, %v646
      %v679 = vsub.f32 %v517, %v647
      %v680 = vsub.f32 %v518, %v648
      %v681 = vsub.f32 %v519, %v649
      %v682 = vsub.f32 %v520, %v650
      %v683 = vsub.f32 %v521, %v651
      %v684 = vsub.f32 %v522, %v652
      %v685 = vsub.f32 %v523, %v653
      %v686 = vsub.f32 %v524, %v654
      %v687 = vsub.f32 %v525, %v655
      %v688 = vsub.f32 %v526, %v656
      %v689 = vsub.f32 %v527, %v657
      %v690 = vmul.f32 %v658, %v658
      %v691 = vmul.f32 %v659, %v659
      %v692 = vmul.f32 %v660, %v660
      %v693 = vmul.f32 %v661, %v661
      %v694 = vmul.f32 %v662, %v662
      %v695 = vmul.f32 %v663, %v663
      %v696 = vmul.f32 %v664, %v664
      %v697 = vmul.f32 %v665, %v665
      %v698 = vmul.f32 %v666, %v666
      %v699 = vmul.f32 %v667, %v667
      %v700 = vmul.f32 %v668, %v668
      %v701 = vmul.f32 %v669, %v669
      %v702 = vmul.f32 %v670, %v670
      %v703 = vmul.f32 %v671, %v671
      %v704 = vmul.f32 %v672, %v672
      %v705 = vmul.f32 %v673, %v673
      %v706 = vmul.f32 %v674, %v674
      %v707 = vmul.f32 %v675, %v675
      %v708 = vmul.f32 %v676, %v676
      %v709 = vmul.f32 %v677, %v677
      %v710 = vmul.f32 %v678, %v678
      %v711 = vmul.f32 %v679, %v679
      %v712 = vmul.f32 %v680, %v680
      %v713 = vmul.f32 %v681, %v681
      %v714 = vmul.f32 %v682, %v682
      %v715 = vmul.f32 %v683, %v683
      %v716 = vmul.f32 %v684, %v684
      %v717 = vmul.f32 %v685, %v685
      %v718 = vmul.f32 %v686, %v686
      %v719 = vmul.f32 %v687, %v687
      %v720 = vmul.f32 %v688, %v688
      %v721 = vmul.f32 %v689, %v689
      %v722 = vsel %vm528, %v690, 0.0
      %723 = vadd.xlane.f32.xlu0 %v722
      %v724 = vpop.xlane.xlu0 %723
      %v725 = vsel %vm528, %v691, 0.0
      %726 = vadd.xlane.f32.xlu0 %v725
      %v727 = vpop.xlane.xlu0 %726
      %v728 = vsel %vm528, %v692, 0.0
      %729 = vadd.xlane.f32.xlu0 %v728
      %v730 = vpop.xlane.xlu0 %729
      %v731 = vsel %vm528, %v693, 0.0
      %732 = vadd.xlane.f32.xlu0 %v731
      %v733 = vpop.xlane.xlu0 %732
      %v734 = vsel %vm528, %v694, 0.0
      %735 = vadd.xlane.f32.xlu0 %v734
      %v736 = vpop.xlane.xlu0 %735
      %v737 = vsel %vm528, %v695, 0.0
      %738 = vadd.xlane.f32.xlu0 %v737
      %v739 = vpop.xlane.xlu0 %738
      %v740 = vsel %vm528, %v696, 0.0
      %741 = vadd.xlane.f32.xlu0 %v740
      %v742 = vpop.xlane.xlu0 %741
      %v743 = vsel %vm528, %v697, 0.0
      %744 = vadd.xlane.f32.xlu0 %v743
      %v745 = vpop.xlane.xlu0 %744
      %v746 = vsel %vm528, %v698, 0.0
      %747 = vadd.xlane.f32.xlu0 %v746
      %v748 = vpop.xlane.xlu0 %747
      %v749 = vsel %vm528, %v699, 0.0
      %750 = vadd.xlane.f32.xlu0 %v749
      %v751 = vpop.xlane.xlu0 %750
      %v752 = vsel %vm528, %v700, 0.0
      %753 = vadd.xlane.f32.xlu0 %v752
      %v754 = vpop.xlane.xlu0 %753
      %v755 = vsel %vm528, %v701, 0.0
      %756 = vadd.xlane.f32.xlu0 %v755
      %v757 = vpop.xlane.xlu0 %756
      %v758 = vsel %vm528, %v702, 0.0
      %759 = vadd.xlane.f32.xlu0 %v758
      %v760 = vpop.xlane.xlu0 %759
      %v761 = vsel %vm528, %v703, 0.0
      %762 = vadd.xlane.f32.xlu0 %v761
      %v763 = vpop.xlane.xlu0 %762
      %v764 = vsel %vm528, %v704, 0.0
      %765 = vadd.xlane.f32.xlu0 %v764
      %v766 = vpop.xlane.xlu0 %765
      %v767 = vsel %vm528, %v705, 0.0
      %768 = vadd.xlane.f32.xlu0 %v767
      %v769 = vpop.xlane.xlu0 %768
      %v770 = vsel %vm528, %v706, 0.0
      %771 = vadd.xlane.f32.xlu0 %v770
      %v772 = vpop.xlane.xlu0 %771
      %v773 = vsel %vm528, %v707, 0.0
      %774 = vadd.xlane.f32.xlu0 %v773
      %v775 = vpop.xlane.xlu0 %774
      %v776 = vsel %vm528, %v708, 0.0
      %777 = vadd.xlane.f32.xlu0 %v776
      %v778 = vpop.xlane.xlu0 %777
      %v779 = vsel %vm528, %v709, 0.0
      %780 = vadd.xlane.f32.xlu0 %v779
      %v781 = vpop.xlane.xlu0 %780
      %v782 = vsel %vm528, %v710, 0.0
      %783 = vadd.xlane.f32.xlu0 %v782
      %v784 = vpop.xlane.xlu0 %783
      %v785 = vsel %vm528, %v711, 0.0
      %786 = vadd.xlane.f32.xlu0 %v785
      %v787 = vpop.xlane.xlu0 %786
      %v788 = vsel %vm528, %v712, 0.0
      %789 = vadd.xlane.f32.xlu0 %v788
      %v790 = vpop.xlane.xlu0 %789
      %v791 = vsel %vm528, %v713, 0.0
      %792 = vadd.xlane.f32.xlu0 %v791
      %v793 = vpop.xlane.xlu0 %792
      %v794 = vsel %vm528, %v714, 0.0
      %795 = vadd.xlane.f32.xlu0 %v794
      %v796 = vpop.xlane.xlu0 %795
      %v797 = vsel %vm528, %v715, 0.0
      %798 = vadd.xlane.f32.xlu0 %v797
      %v799 = vpop.xlane.xlu0 %798
      %v800 = vsel %vm528, %v716, 0.0
      %801 = vadd.xlane.f32.xlu0 %v800
      %v802 = vpop.xlane.xlu0 %801
      %v803 = vsel %vm528, %v717, 0.0
      %804 = vadd.xlane.f32.xlu0 %v803
      %v805 = vpop.xlane.xlu0 %804
      %v806 = vsel %vm528, %v718, 0.0
      %807 = vadd.xlane.f32.xlu0 %v806
      %v808 = vpop.xlane.xlu0 %807
      %v809 = vsel %vm528, %v719, 0.0
      %810 = vadd.xlane.f32.xlu0 %v809
      %v811 = vpop.xlane.xlu0 %810
      %v812 = vsel %vm528, %v720, 0.0
      %813 = vadd.xlane.f32.xlu0 %v812
      %v814 = vpop.xlane.xlu0 %813
      %v815 = vsel %vm528, %v721, 0.0
      %816 = vadd.xlane.f32.xlu0 %v815
      %v817 = vpop.xlane.xlu0 %816
      %v818 = vmul.f32 %v724, %v625
      %v819 = vmul.f32 %v727, %v625
      %v820 = vmul.f32 %v730, %v625
      %v821 = vmul.f32 %v733, %v625
      %v822 = vmul.f32 %v736, %v625
      %v823 = vmul.f32 %v739, %v625
      %v824 = vmul.f32 %v742, %v625
      %v825 = vmul.f32 %v745, %v625
      %v826 = vmul.f32 %v748, %v625
      %v827 = vmul.f32 %v751, %v625
      %v828 = vmul.f32 %v754, %v625
      %v829 = vmul.f32 %v757, %v625
      %v830 = vmul.f32 %v760, %v625
      %v831 = vmul.f32 %v763, %v625
      %v832 = vmul.f32 %v766, %v625
      %v833 = vmul.f32 %v769, %v625
      %v834 = vmul.f32 %v772, %v625
      %v835 = vmul.f32 %v775, %v625
      %v836 = vmul.f32 %v778, %v625
      %v837 = vmul.f32 %v781, %v625
      %v838 = vmul.f32 %v784, %v625
      %v839 = vmul.f32 %v787, %v625
      %v840 = vmul.f32 %v790, %v625
      %v841 = vmul.f32 %v793, %v625
      %v842 = vmul.f32 %v796, %v625
      %v843 = vmul.f32 %v799, %v625
      %v844 = vmul.f32 %v802, %v625
      %v845 = vmul.f32 %v805, %v625
      %v846 = vmul.f32 %v808, %v625
      %v847 = vmul.f32 %v811, %v625
      %v848 = vmul.f32 %v814, %v625
      %v849 = vmul.f32 %v817, %v625
      %v850 = vadd.f32 %v818, 1e-05
      %v851 = vadd.f32 %v819, 1e-05
      %v852 = vadd.f32 %v820, 1e-05
      %v853 = vadd.f32 %v821, 1e-05
      %v854 = vadd.f32 %v822, 1e-05
      %v855 = vadd.f32 %v823, 1e-05
      %v856 = vadd.f32 %v824, 1e-05
      %v857 = vadd.f32 %v825, 1e-05
      %v858 = vadd.f32 %v826, 1e-05
      %v859 = vadd.f32 %v827, 1e-05
      %v860 = vadd.f32 %v828, 1e-05
      %v861 = vadd.f32 %v829, 1e-05
      %v862 = vadd.f32 %v830, 1e-05
      %v863 = vadd.f32 %v831, 1e-05
      %v864 = vadd.f32 %v832, 1e-05
      %v865 = vadd.f32 %v833, 1e-05
      %v866 = vadd.f32 %v834, 1e-05
      %v867 = vadd.f32 %v835, 1e-05
      %v868 = vadd.f32 %v836, 1e-05
      %v869 = vadd.f32 %v837, 1e-05
      %v870 = vadd.f32 %v838, 1e-05
      %v871 = vadd.f32 %v839, 1e-05
      %v872 = vadd.f32 %v840, 1e-05
      %v873 = vadd.f32 %v841, 1e-05
      %v874 = vadd.f32 %v842, 1e-05
      %v875 = vadd.f32 %v843, 1e-05
      %v876 = vadd.f32 %v844, 1e-05
      %v877 = vadd.f32 %v845, 1e-05
      %v878 = vadd.f32 %v846, 1e-05
      %v879 = vadd.f32 %v847, 1e-05
      %v880 = vadd.f32 %v848, 1e-05
      %v881 = vadd.f32 %v849, 1e-05
      %v882 = vrsqrt.pop %v850
      %v883 = vrsqrt.pop %v851
      %v884 = vrsqrt.pop %v852
      %v885 = vrsqrt.pop %v853
      %v886 = vrsqrt.pop %v854
      %v887 = vrsqrt.pop %v855
      %v888 = vrsqrt.pop %v856
      %v889 = vrsqrt.pop %v857
      %v890 = vrsqrt.pop %v858
      %v891 = vrsqrt.pop %v859
      %v892 = vrsqrt.pop %v860
      %v893 = vrsqrt.pop %v861
      %v894 = vrsqrt.pop %v862
      %v895 = vrsqrt.pop %v863
      %v896 = vrsqrt.pop %v864
      %v897 = vrsqrt.pop %v865
      %v898 = vrsqrt.pop %v866
      %v899 = vrsqrt.pop %v867
      %v900 = vrsqrt.pop %v868
      %v901 = vrsqrt.pop %v869
      %v902 = vrsqrt.pop %v870
      %v903 = vrsqrt.pop %v871
      %v904 = vrsqrt.pop %v872
      %v905 = vrsqrt.pop %v873
      %v906 = vrsqrt.pop %v874
      %v907 = vrsqrt.pop %v875
      %v908 = vrsqrt.pop %v876
      %v909 = vrsqrt.pop %v877
      %v910 = vrsqrt.pop %v878
      %v911 = vrsqrt.pop %v879
      %v912 = vrsqrt.pop %v880
      %v913 = vrsqrt.pop %v881
      %v914 = vmul.f32 %v658, %v882
      %v915 = vmul.f32 %v659, %v883
      %v916 = vmul.f32 %v660, %v884
      %v917 = vmul.f32 %v661, %v885
      %v918 = vmul.f32 %v662, %v886
      %v919 = vmul.f32 %v663, %v887
      %v920 = vmul.f32 %v664, %v888
      %v921 = vmul.f32 %v665, %v889
      %v922 = vmul.f32 %v666, %v890
      %v923 = vmul.f32 %v667, %v891
      %v924 = vmul.f32 %v668, %v892
      %v925 = vmul.f32 %v669, %v893
      %v926 = vmul.f32 %v670, %v894
      %v927 = vmul.f32 %v671, %v895
      %v928 = vmul.f32 %v672, %v896
      %v929 = vmul.f32 %v673, %v897
      %v930 = vmul.f32 %v674, %v898
      %v931 = vmul.f32 %v675, %v899
      %v932 = vmul.f32 %v676, %v900
      %v933 = vmul.f32 %v677, %v901
      %v934 = vmul.f32 %v678, %v902
      %v935 = vmul.f32 %v679, %v903
      %v936 = vmul.f32 %v680, %v904
      %v937 = vmul.f32 %v681, %v905
      %v938 = vmul.f32 %v682, %v906
      %v939 = vmul.f32 %v683, %v907
      %v940 = vmul.f32 %v684, %v908
      %v941 = vmul.f32 %v685, %v909
      %v942 = vmul.f32 %v686, %v910
      %v943 = vmul.f32 %v687, %v911
      %v944 = vmul.f32 %v688, %v912
      %v945 = vmul.f32 %v689, %v913
      %v946 = vld [vmem:[%s7] sm:$0x1]
      %v948 = vlaneseq
      %v949 = vshrl.u32 %v948, 7
      %v950 = vsub.s32 0, %v949
      %v951 = vrot.slane %v946, %v950
      %v953 = vmul.f32 %v914, %v951
      %v954 = vmul.f32 %v915, %v951
      %v955 = vmul.f32 %v916, %v951
      %v956 = vmul.f32 %v917, %v951
      %v957 = vmul.f32 %v918, %v951
      %v958 = vmul.f32 %v919, %v951
      %v959 = vmul.f32 %v920, %v951
      %v960 = vmul.f32 %v921, %v951
      %v961 = vmul.f32 %v922, %v951
      %v962 = vmul.f32 %v923, %v951
      %v963 = vmul.f32 %v924, %v951
      %v964 = vmul.f32 %v925, %v951
      %v965 = vmul.f32 %v926, %v951
      %v966 = vmul.f32 %v927, %v951
      %v967 = vmul.f32 %v928, %v951
      %v968 = vmul.f32 %v929, %v951
      %v969 = vmul.f32 %v930, %v951
      %v970 = vmul.f32 %v931, %v951
      %v971 = vmul.f32 %v932, %v951
      %v972 = vmul.f32 %v933, %v951
      %v973 = vmul.f32 %v934, %v951
      %v974 = vmul.f32 %v935, %v951
      %v975 = vmul.f32 %v936, %v951
      %v976 = vmul.f32 %v937, %v951
      %v977 = vmul.f32 %v938, %v951
      %v978 = vmul.f32 %v939, %v951
      %v979 = vmul.f32 %v940, %v951
      %v980 = vmul.f32 %v941, %v951
      %v981 = vmul.f32 %v942, %v951
      %v982 = vmul.f32 %v943, %v951
      %v983 = vmul.f32 %v944, %v951
      %v984 = vmul.f32 %v945, %v951
      %v985 = vld [vmem:[%s8] sm:$0x1]
      %v987 = vlaneseq
      %v988 = vshrl.u32 %v987, 7
      %v989 = vsub.s32 0, %v988
      %v990 = vrot.slane %v985, %v989
      %v992 = vadd.f32 %v953, %v990
      %v993 = vadd.f32 %v954, %v990
      %v994 = vadd.f32 %v955, %v990
      %v995 = vadd.f32 %v956, %v990
      %v996 = vadd.f32 %v957, %v990
      %v997 = vadd.f32 %v958, %v990
      %v998 = vadd.f32 %v959, %v990
      %v999 = vadd.f32 %v960, %v990
      %v1000 = vadd.f32 %v961, %v990
      %v1001 = vadd.f32 %v962, %v990
      %v1002 = vadd.f32 %v963, %v990
      %v1003 = vadd.f32 %v964, %v990
      %v1004 = vadd.f32 %v965, %v990
      %v1005 = vadd.f32 %v966, %v990
      %v1006 = vadd.f32 %v967, %v990
      %v1007 = vadd.f32 %v968, %v990
      %v1008 = vadd.f32 %v969, %v990
      %v1009 = vadd.f32 %v970, %v990
      %v1010 = vadd.f32 %v971, %v990
      %v1011 = vadd.f32 %v972, %v990
      %v1012 = vadd.f32 %v973, %v990
      %v1013 = vadd.f32 %v974, %v990
      %v1014 = vadd.f32 %v975, %v990
      %v1015 = vadd.f32 %v976, %v990
      %v1016 = vadd.f32 %v977, %v990
      %v1017 = vadd.f32 %v978, %v990
      %v1018 = vadd.f32 %v979, %v990
      %v1019 = vadd.f32 %v980, %v990
      %v1020 = vadd.f32 %v981, %v990
      %v1021 = vadd.f32 %v982, %v990
      %v1022 = vadd.f32 %v983, %v990
      %v1023 = vadd.f32 %v984, %v990
      %v1024 = vpack.c.bf16 %v993, %v992
      %v1025 = vpack.c.bf16 %v995, %v994
      %v1026 = vpack.c.bf16 %v997, %v996
      %v1027 = vpack.c.bf16 %v999, %v998
      %v1028 = vpack.c.bf16 %v1001, %v1000
      %v1029 = vpack.c.bf16 %v1003, %v1002
      %v1030 = vpack.c.bf16 %v1005, %v1004
      %v1031 = vpack.c.bf16 %v1007, %v1006
      %v1032 = vpack.c.bf16 %v1009, %v1008
      %v1033 = vpack.c.bf16 %v1011, %v1010
      %v1034 = vpack.c.bf16 %v1013, %v1012
      %v1035 = vpack.c.bf16 %v1015, %v1014
      %v1036 = vpack.c.bf16 %v1017, %v1016
      %v1037 = vpack.c.bf16 %v1019, %v1018
      %v1038 = vpack.c.bf16 %v1021, %v1020
      %v1039 = vpack.c.bf16 %v1023, %v1022
      %v1040 = vld [vmem:[%s1] sm:$0xff]
      %v1041 = vld [vmem:[%s1 + $0x8] sm:$0xff]
      %v1042 = vld [vmem:[%s1 + $0x10] sm:$0xff]
      %v1043 = vld [vmem:[%s1 + $0x18] sm:$0xff]
      %v1044 = vld [vmem:[%s1 + $0x20] sm:$0xff]
      %v1045 = vld [vmem:[%s1 + $0x28] sm:$0xff]
      %v1046 = vld [vmem:[%s1 + $0x30] sm:$0xff]
      %v1047 = vld [vmem:[%s1 + $0x38] sm:$0xff]
      %v1048 = vld [vmem:[%s1 + $0x40] sm:$0xff]
      %v1049 = vld [vmem:[%s1 + $0x48] sm:$0xff]
      %v1050 = vld [vmem:[%s1 + $0x50] sm:$0xff]
      %v1051 = vld [vmem:[%s1 + $0x58] sm:$0xff]
      %v1052 = vld [vmem:[%s1 + $0x60] sm:$0xff]
      %v1053 = vld [vmem:[%s1 + $0x68] sm:$0xff]
      %v1054 = vld [vmem:[%s1 + $0x70] sm:$0xff]
      %v1055 = vld [vmem:[%s1 + $0x78] sm:$0xff]
      %v1056 = vld [vmem:[%s1 + $0x80] sm:$0xff]
      %v1057 = vld [vmem:[%s1 + $0x88] sm:$0xff]
      %v1058 = vld [vmem:[%s1 + $0x90] sm:$0xff]
      %v1059 = vld [vmem:[%s1 + $0x98] sm:$0xff]
      %v1060 = vld [vmem:[%s1 + $0xa0] sm:$0xff]
      %v1061 = vld [vmem:[%s1 + $0xa8] sm:$0xff]
      %v1062 = vld [vmem:[%s1 + $0xb0] sm:$0xff]
      %v1063 = vld [vmem:[%s1 + $0xb8] sm:$0xff]
      %v1064 = vld [vmem:[%s1 + $0xc0] sm:$0xff]
      %v1065 = vld [vmem:[%s1 + $0xc8] sm:$0xff]
      %v1066 = vld [vmem:[%s1 + $0xd0] sm:$0xff]
      %v1067 = vld [vmem:[%s1 + $0xd8] sm:$0xff]
      %v1068 = vld [vmem:[%s1 + $0xe0] sm:$0xff]
      %v1069 = vld [vmem:[%s1 + $0xe8] sm:$0xff]
      %v1070 = vld [vmem:[%s1 + $0xf0] sm:$0xff]
      %v1071 = vld [vmem:[%s1 + $0xf8] sm:$0xff]
      %v1072 = vld [vmem:[%s2] sm:$0xf]
      %v1073 = vld [vmem:[%s2 + $0x4] sm:$0xf]
      %v1074 = vld [vmem:[%s2 + $0x8] sm:$0xf]
      %v1075 = vld [vmem:[%s2 + $0xc] sm:$0xf]
      %v1080 = vunpack.c.l.b16 %v1072
      %v1081 = vunpack.c.l.b16 %v1073
      %v1082 = vunpack.c.l.b16 %v1074
      %v1083 = vunpack.c.l.b16 %v1075
      %v1084 = vpack.c.b16 %v1081, %v1080
      %v1085 = vpack.c.b16 %v1083, %v1082
      %v1089 = vsel %vm528, %v1024, 0
      %v1092 = vsel %vm528, %v1025, 0
      %v1095 = vsel %vm528, %v1026, 0
      %v1098 = vsel %vm528, %v1027, 0
      %v1101 = vsel %vm528, %v1028, 0
      %v1104 = vsel %vm528, %v1029, 0
      %v1107 = vsel %vm528, %v1030, 0
      %v1110 = vsel %vm528, %v1031, 0
      %v1113 = vsel %vm528, %v1032, 0
      %v1116 = vsel %vm528, %v1033, 0
      %v1119 = vsel %vm528, %v1034, 0
      %v1122 = vsel %vm528, %v1035, 0
      %v1125 = vsel %vm528, %v1036, 0
      %v1128 = vsel %vm528, %v1037, 0
      %v1131 = vsel %vm528, %v1038, 0
      %v1134 = vsel %vm528, %v1039, 0
      %1136 = vmatprep.subr.bf16.mxu0 0
      %1137 = vmatpush1.bf16.msra.mxu0 0
      %1138 = vmatprep.subr.bf16.mxu0 0
      %1139 = vmatpush1.bf16.msra.mxu0 0
      %1140 = vmatprep.subr.bf16.mxu0 0
      %1141 = vmatpush1.bf16.msra.mxu0 0
      %1142 = vmatprep.subr.bf16.mxu0 0
      %1143 = vmatpush1.bf16.msra.mxu0 0
      %1144 = vmatprep.subr.bf16.mxu0 0
      %1145 = vmatpush1.bf16.msra.mxu0 0
      %1146 = vmatprep.subr.bf16.mxu0 0
      %1147 = vmatpush1.bf16.msra.mxu0 0
      %1148 = vmatprep.subr.bf16.mxu0 0
      %1149 = vmatpush1.bf16.msra.mxu0 %v1085
      %1150 = vmatprep.subr.bf16.mxu0 0
      %1151 = vmatpush1.bf16.msra.mxu0 %v1084
      %1152 = vmatprep.subr.bf16.mxu0 0
      %1153 = vmatpush2.bf16.msra.mxu0 0
      %1154 = vmatprep.subr.bf16.mxu0 0
      %1155 = vmatpush2.bf16.msra.mxu0 0
      %1156 = vmatprep.subr.bf16.mxu0 0
      %1157 = vmatpush2.bf16.msra.mxu0 0
      %1158 = vmatprep.subr.bf16.mxu0 0
      %1159 = vmatpush2.bf16.msra.mxu0 0
      %1160 = vmatprep.subr.bf16.mxu0 0
      %1161 = vmatpush2.bf16.msra.mxu0 0
      %1162 = vmatprep.subr.bf16.mxu0 0
      %1163 = vmatpush2.bf16.msra.mxu0 0
      %1164 = vmatprep.subr.bf16.mxu0 0
      %1165 = vmatpush2.bf16.msra.mxu0 0
      %1166 = vmatprep.subr.bf16.mxu0 0
      %1167 = vmatpush2.bf16.msra.mxu0 0
      %1168 = vmatprep.mubr.bf16.mxu0 0
      %1169 = vmatmul.mubr.bf16.gmra.mxu0 %v1089
      %v1170 = vpop.f32.mrf.mxu0
      %v1171 = vadd.f32 0.0, %v1170
      %v1172 = vpop.f32.mrf.mxu0
      %v1173 = vpop.f32.mrf.mxu0
      %v1174 = vadd.f32 0.0, %v1173
      %v1175 = vpop.f32.mrf.mxu0
      %1176 = vmatprep.mubr.bf16.mxu0 0
      %1177 = vmatmul.mubr.bf16.gmra.mxu0 %v1092
      %v1178 = vpop.f32.mrf.mxu0
      %v1179 = vadd.f32 0.0, %v1178
      %v1180 = vpop.f32.mrf.mxu0
      %v1181 = vpop.f32.mrf.mxu0
      %v1182 = vadd.f32 0.0, %v1181
      %v1183 = vpop.f32.mrf.mxu0
      %1184 = vmatprep.mubr.bf16.mxu0 0
      %1185 = vmatmul.mubr.bf16.gmra.mxu0 %v1095
      %v1186 = vpop.f32.mrf.mxu0
      %v1187 = vadd.f32 0.0, %v1186
      %v1188 = vpop.f32.mrf.mxu0
      %v1189 = vpop.f32.mrf.mxu0
      %v1190 = vadd.f32 0.0, %v1189
      %v1191 = vpop.f32.mrf.mxu0
      %1192 = vmatprep.mubr.bf16.mxu0 0
      %1193 = vmatmul.mubr.bf16.gmra.mxu0 %v1098
      %v1194 = vpop.f32.mrf.mxu0
      %v1195 = vadd.f32 0.0, %v1194
      %v1196 = vpop.f32.mrf.mxu0
      %v1197 = vpop.f32.mrf.mxu0
      %v1198 = vadd.f32 0.0, %v1197
      %v1199 = vpop.f32.mrf.mxu0
      %1200 = vmatprep.mubr.bf16.mxu0 0
      %1201 = vmatmul.mubr.bf16.gmra.mxu0 %v1101
      %v1202 = vpop.f32.mrf.mxu0
      %v1203 = vadd.f32 0.0, %v1202
      %v1204 = vpop.f32.mrf.mxu0
      %v1205 = vpop.f32.mrf.mxu0
      %v1206 = vadd.f32 0.0, %v1205
      %v1207 = vpop.f32.mrf.mxu0
      %1208 = vmatprep.mubr.bf16.mxu0 0
      %1209 = vmatmul.mubr.bf16.gmra.mxu0 %v1104
      %v1210 = vpop.f32.mrf.mxu0
      %v1211 = vadd.f32 0.0, %v1210
      %v1212 = vpop.f32.mrf.mxu0
      %v1213 = vpop.f32.mrf.mxu0
      %v1214 = vadd.f32 0.0, %v1213
      %v1215 = vpop.f32.mrf.mxu0
      %1216 = vmatprep.mubr.bf16.mxu0 0
      %1217 = vmatmul.mubr.bf16.gmra.mxu0 %v1107
      %v1218 = vpop.f32.mrf.mxu0
      %v1219 = vadd.f32 0.0, %v1218
      %v1220 = vpop.f32.mrf.mxu0
      %v1221 = vpop.f32.mrf.mxu0
      %v1222 = vadd.f32 0.0, %v1221
      %v1223 = vpop.f32.mrf.mxu0
      %1224 = vmatprep.mubr.bf16.mxu0 0
      %1225 = vmatmul.mubr.bf16.gmra.mxu0 %v1110
      %v1226 = vpop.f32.mrf.mxu0
      %v1227 = vadd.f32 0.0, %v1226
      %v1228 = vpop.f32.mrf.mxu0
      %v1229 = vpop.f32.mrf.mxu0
      %v1230 = vadd.f32 0.0, %v1229
      %v1231 = vpop.f32.mrf.mxu0
      %1232 = vmatprep.mubr.bf16.mxu0 0
      %1233 = vmatmul.mubr.bf16.gmra.mxu0 %v1113
      %v1234 = vpop.f32.mrf.mxu0
      %v1235 = vadd.f32 0.0, %v1234
      %v1236 = vpop.f32.mrf.mxu0
      %v1237 = vpop.f32.mrf.mxu0
      %v1238 = vadd.f32 0.0, %v1237
      %v1239 = vpop.f32.mrf.mxu0
      %1240 = vmatprep.mubr.bf16.mxu0 0
      %1241 = vmatmul.mubr.bf16.gmra.mxu0 %v1116
      %v1242 = vpop.f32.mrf.mxu0
      %v1243 = vadd.f32 0.0, %v1242
      %v1244 = vpop.f32.mrf.mxu0
      %v1245 = vpop.f32.mrf.mxu0
      %v1246 = vadd.f32 0.0, %v1245
      %v1247 = vpop.f32.mrf.mxu0
      %1248 = vmatprep.mubr.bf16.mxu0 0
      %1249 = vmatmul.mubr.bf16.gmra.mxu0 %v1119
      %v1250 = vpop.f32.mrf.mxu0
      %v1251 = vadd.f32 0.0, %v1250
      %v1252 = vpop.f32.mrf.mxu0
      %v1253 = vpop.f32.mrf.mxu0
      %v1254 = vadd.f32 0.0, %v1253
      %v1255 = vpop.f32.mrf.mxu0
      %1256 = vmatprep.mubr.bf16.mxu0 0
      %1257 = vmatmul.mubr.bf16.gmra.mxu0 %v1122
      %v1258 = vpop.f32.mrf.mxu0
      %v1259 = vadd.f32 0.0, %v1258
      %v1260 = vpop.f32.mrf.mxu0
      %v1261 = vpop.f32.mrf.mxu0
      %v1262 = vadd.f32 0.0, %v1261
      %v1263 = vpop.f32.mrf.mxu0
      %1264 = vmatprep.mubr.bf16.mxu0 0
      %1265 = vmatmul.mubr.bf16.gmra.mxu0 %v1125
      %v1266 = vpop.f32.mrf.mxu0
      %v1267 = vadd.f32 0.0, %v1266
      %v1268 = vpop.f32.mrf.mxu0
      %v1269 = vpop.f32.mrf.mxu0
      %v1270 = vadd.f32 0.0, %v1269
      %v1271 = vpop.f32.mrf.mxu0
      %1272 = vmatprep.mubr.bf16.mxu0 0
      %1273 = vmatmul.mubr.bf16.gmra.mxu0 %v1128
      %v1274 = vpop.f32.mrf.mxu0
      %v1275 = vadd.f32 0.0, %v1274
      %v1276 = vpop.f32.mrf.mxu0
      %v1277 = vpop.f32.mrf.mxu0
      %v1278 = vadd.f32 0.0, %v1277
      %v1279 = vpop.f32.mrf.mxu0
      %1280 = vmatprep.mubr.bf16.mxu0 0
      %1281 = vmatmul.mubr.bf16.gmra.mxu0 %v1131
      %v1282 = vpop.f32.mrf.mxu0
      %v1283 = vadd.f32 0.0, %v1282
      %v1284 = vpop.f32.mrf.mxu0
      %v1285 = vpop.f32.mrf.mxu0
      %v1286 = vadd.f32 0.0, %v1285
      %v1287 = vpop.f32.mrf.mxu0
      %1288 = vmatprep.mubr.bf16.mxu0 0
      %1289 = vmatmul.mubr.bf16.gmra.mxu0 %v1134
      %v1290 = vpop.f32.mrf.mxu0
      %v1291 = vadd.f32 0.0, %v1290
      %v1292 = vpop.f32.mrf.mxu0
      %v1293 = vpop.f32.mrf.mxu0
      %v1294 = vadd.f32 0.0, %v1293
      %v1295 = vpop.f32.mrf.mxu0
      %1296 = vdwg.mxu0
      %v1297 = vld [vmem:[%s3] sm:$0xf]
      %v1298 = vld [vmem:[%s3 + $0x4] sm:$0xf]
      %v1299 = vld [vmem:[%s3 + $0x8] sm:$0xf]
      %v1300 = vld [vmem:[%s3 + $0xc] sm:$0xf]
      %v1305 = vunpack.c.l.b16 %v1297
      %v1306 = vunpack.c.l.b16 %v1298
      %v1307 = vunpack.c.l.b16 %v1299
      %v1308 = vunpack.c.l.b16 %v1300
      %v1309 = vpack.c.b16 %v1306, %v1305
      %v1310 = vpack.c.b16 %v1308, %v1307
      %1313 = vmatprep.subr.bf16.mxu0 0
      %1314 = vmatpush1.bf16.msra.mxu0 0
      %1315 = vmatprep.subr.bf16.mxu0 0
      %1316 = vmatpush1.bf16.msra.mxu0 0
      %1317 = vmatprep.subr.bf16.mxu0 0
      %1318 = vmatpush1.bf16.msra.mxu0 0
      %1319 = vmatprep.subr.bf16.mxu0 0
      %1320 = vmatpush1.bf16.msra.mxu0 0
      %1321 = vmatprep.subr.bf16.mxu0 0
      %1322 = vmatpush1.bf16.msra.mxu0 0
      %1323 = vmatprep.subr.bf16.mxu0 0
      %1324 = vmatpush1.bf16.msra.mxu0 0
      %1325 = vmatprep.subr.bf16.mxu0 0
      %1326 = vmatpush1.bf16.msra.mxu0 %v1310
      %1327 = vmatprep.subr.bf16.mxu0 0
      %1328 = vmatpush1.bf16.msra.mxu0 %v1309
      %1329 = vmatprep.subr.bf16.mxu0 0
      %1330 = vmatpush2.bf16.msra.mxu0 0
      %1331 = vmatprep.subr.bf16.mxu0 0
      %1332 = vmatpush2.bf16.msra.mxu0 0
      %1333 = vmatprep.subr.bf16.mxu0 0
      %1334 = vmatpush2.bf16.msra.mxu0 0
      %1335 = vmatprep.subr.bf16.mxu0 0
      %1336 = vmatpush2.bf16.msra.mxu0 0
      %1337 = vmatprep.subr.bf16.mxu0 0
      %1338 = vmatpush2.bf16.msra.mxu0 0
      %1339 = vmatprep.subr.bf16.mxu0 0
      %1340 = vmatpush2.bf16.msra.mxu0 0
      %1341 = vmatprep.subr.bf16.mxu0 0
      %1342 = vmatpush2.bf16.msra.mxu0 0
      %1343 = vmatprep.subr.bf16.mxu0 0
      %1344 = vmatpush2.bf16.msra.mxu0 0
      %1345 = vmatprep.mubr.bf16.mxu0 0
      %1346 = vmatmul.mubr.bf16.gmra.mxu0 %v1089
      %v1347 = vpop.f32.mrf.mxu0
      %v1348 = vadd.f32 0.0, %v1347
      %v1349 = vpop.f32.mrf.mxu0
      %v1350 = vpop.f32.mrf.mxu0
      %v1351 = vadd.f32 0.0, %v1350
      %v1352 = vpop.f32.mrf.mxu0
      %1353 = vmatprep.mubr.bf16.mxu0 0
      %1354 = vmatmul.mubr.bf16.gmra.mxu0 %v1092
      %v1355 = vpop.f32.mrf.mxu0
      %v1356 = vadd.f32 0.0, %v1355
      %v1357 = vpop.f32.mrf.mxu0
      %v1358 = vpop.f32.mrf.mxu0
      %v1359 = vadd.f32 0.0, %v1358
      %v1360 = vpop.f32.mrf.mxu0
      %1361 = vmatprep.mubr.bf16.mxu0 0
      %1362 = vmatmul.mubr.bf16.gmra.mxu0 %v1095
      %v1363 = vpop.f32.mrf.mxu0
      %v1364 = vadd.f32 0.0, %v1363
      %v1365 = vpop.f32.mrf.mxu0
      %v1366 = vpop.f32.mrf.mxu0
      %v1367 = vadd.f32 0.0, %v1366
      %v1368 = vpop.f32.mrf.mxu0
      %1369 = vmatprep.mubr.bf16.mxu0 0
      %1370 = vmatmul.mubr.bf16.gmra.mxu0 %v1098
      %v1371 = vpop.f32.mrf.mxu0
      %v1372 = vadd.f32 0.0, %v1371
      %v1373 = vpop.f32.mrf.mxu0
      %v1374 = vpop.f32.mrf.mxu0
      %v1375 = vadd.f32 0.0, %v1374
      %v1376 = vpop.f32.mrf.mxu0
      %1377 = vmatprep.mubr.bf16.mxu0 0
      %1378 = vmatmul.mubr.bf16.gmra.mxu0 %v1101
      %v1379 = vpop.f32.mrf.mxu0
      %v1380 = vadd.f32 0.0, %v1379
      %v1381 = vpop.f32.mrf.mxu0
      %v1382 = vpop.f32.mrf.mxu0
      %v1383 = vadd.f32 0.0, %v1382
      %v1384 = vpop.f32.mrf.mxu0
      %1385 = vmatprep.mubr.bf16.mxu0 0
      %1386 = vmatmul.mubr.bf16.gmra.mxu0 %v1104
      %v1387 = vpop.f32.mrf.mxu0
      %v1388 = vadd.f32 0.0, %v1387
      %v1389 = vpop.f32.mrf.mxu0
      %v1390 = vpop.f32.mrf.mxu0
      %v1391 = vadd.f32 0.0, %v1390
      %v1392 = vpop.f32.mrf.mxu0
      %1393 = vmatprep.mubr.bf16.mxu0 0
      %1394 = vmatmul.mubr.bf16.gmra.mxu0 %v1107
      %v1395 = vpop.f32.mrf.mxu0
      %v1396 = vadd.f32 0.0, %v1395
      %v1397 = vpop.f32.mrf.mxu0
      %v1398 = vpop.f32.mrf.mxu0
      %v1399 = vadd.f32 0.0, %v1398
      %v1400 = vpop.f32.mrf.mxu0
      %1401 = vmatprep.mubr.bf16.mxu0 0
      %1402 = vmatmul.mubr.bf16.gmra.mxu0 %v1110
      %v1403 = vpop.f32.mrf.mxu0
      %v1404 = vadd.f32 0.0, %v1403
      %v1405 = vpop.f32.mrf.mxu0
      %v1406 = vpop.f32.mrf.mxu0
      %v1407 = vadd.f32 0.0, %v1406
      %v1408 = vpop.f32.mrf.mxu0
      %1409 = vmatprep.mubr.bf16.mxu0 0
      %1410 = vmatmul.mubr.bf16.gmra.mxu0 %v1113
      %v1411 = vpop.f32.mrf.mxu0
      %v1412 = vadd.f32 0.0, %v1411
      %v1413 = vpop.f32.mrf.mxu0
      %v1414 = vpop.f32.mrf.mxu0
      %v1415 = vadd.f32 0.0, %v1414
      %v1416 = vpop.f32.mrf.mxu0
      %1417 = vmatprep.mubr.bf16.mxu0 0
      %1418 = vmatmul.mubr.bf16.gmra.mxu0 %v1116
      %v1419 = vpop.f32.mrf.mxu0
      %v1420 = vadd.f32 0.0, %v1419
      %v1421 = vpop.f32.mrf.mxu0
      %v1422 = vpop.f32.mrf.mxu0
      %v1423 = vadd.f32 0.0, %v1422
      %v1424 = vpop.f32.mrf.mxu0
      %1425 = vmatprep.mubr.bf16.mxu0 0
      %1426 = vmatmul.mubr.bf16.gmra.mxu0 %v1119
      %v1427 = vpop.f32.mrf.mxu0
      %v1428 = vadd.f32 0.0, %v1427
      %v1429 = vpop.f32.mrf.mxu0
      %v1430 = vpop.f32.mrf.mxu0
      %v1431 = vadd.f32 0.0, %v1430
      %v1432 = vpop.f32.mrf.mxu0
      %1433 = vmatprep.mubr.bf16.mxu0 0
      %1434 = vmatmul.mubr.bf16.gmra.mxu0 %v1122
      %v1435 = vpop.f32.mrf.mxu0
      %v1436 = vadd.f32 0.0, %v1435
      %v1437 = vpop.f32.mrf.mxu0
      %v1438 = vpop.f32.mrf.mxu0
      %v1439 = vadd.f32 0.0, %v1438
      %v1440 = vpop.f32.mrf.mxu0
      %1441 = vmatprep.mubr.bf16.mxu0 0
      %1442 = vmatmul.mubr.bf16.gmra.mxu0 %v1125
      %v1443 = vpop.f32.mrf.mxu0
      %v1444 = vadd.f32 0.0, %v1443
      %v1445 = vpop.f32.mrf.mxu0
      %v1446 = vpop.f32.mrf.mxu0
      %v1447 = vadd.f32 0.0, %v1446
      %v1448 = vpop.f32.mrf.mxu0
      %1449 = vmatprep.mubr.bf16.mxu0 0
      %1450 = vmatmul.mubr.bf16.gmra.mxu0 %v1128
      %v1451 = vpop.f32.mrf.mxu0
      %v1452 = vadd.f32 0.0, %v1451
      %v1453 = vpop.f32.mrf.mxu0
      %v1454 = vpop.f32.mrf.mxu0
      %v1455 = vadd.f32 0.0, %v1454
      %v1456 = vpop.f32.mrf.mxu0
      %1457 = vmatprep.mubr.bf16.mxu0 0
      %1458 = vmatmul.mubr.bf16.gmra.mxu0 %v1131
      %v1459 = vpop.f32.mrf.mxu0
      %v1460 = vadd.f32 0.0, %v1459
      %v1461 = vpop.f32.mrf.mxu0
      %v1462 = vpop.f32.mrf.mxu0
      %v1463 = vadd.f32 0.0, %v1462
      %v1464 = vpop.f32.mrf.mxu0
      %1465 = vmatprep.mubr.bf16.mxu0 0
      %1466 = vmatmul.mubr.bf16.gmra.mxu0 %v1134
      %v1467 = vpop.f32.mrf.mxu0
      %v1468 = vadd.f32 0.0, %v1467
      %v1469 = vpop.f32.mrf.mxu0
      %v1470 = vpop.f32.mrf.mxu0
      %v1471 = vadd.f32 0.0, %v1470
      %v1472 = vpop.f32.mrf.mxu0
      %1473 = vdwg.mxu0
      %v1474 = vld [vmem:[%s4] sm:$0xf]
      %v1475 = vld [vmem:[%s4 + $0x4] sm:$0xf]
      %v1476 = vld [vmem:[%s4 + $0x8] sm:$0xf]
      %v1477 = vld [vmem:[%s4 + $0xc] sm:$0xf]
      %v1482 = vunpack.c.l.b16 %v1474
      %v1483 = vunpack.c.l.b16 %v1475
      %v1484 = vunpack.c.l.b16 %v1476
      %v1485 = vunpack.c.l.b16 %v1477
      %v1486 = vpack.c.b16 %v1483, %v1482
      %v1487 = vpack.c.b16 %v1485, %v1484
      %1490 = vmatprep.subr.bf16.mxu0 0
      %1491 = vmatpush1.bf16.msra.mxu0 0
      %1492 = vmatprep.subr.bf16.mxu0 0
      %1493 = vmatpush1.bf16.msra.mxu0 0
      %1494 = vmatprep.subr.bf16.mxu0 0
      %1495 = vmatpush1.bf16.msra.mxu0 0
      %1496 = vmatprep.subr.bf16.mxu0 0
      %1497 = vmatpush1.bf16.msra.mxu0 0
      %1498 = vmatprep.subr.bf16.mxu0 0
      %1499 = vmatpush1.bf16.msra.mxu0 0
      %1500 = vmatprep.subr.bf16.mxu0 0
      %1501 = vmatpush1.bf16.msra.mxu0 0
      %1502 = vmatprep.subr.bf16.mxu0 0
      %1503 = vmatpush1.bf16.msra.mxu0 %v1487
      %1504 = vmatprep.subr.bf16.mxu0 0
      %1505 = vmatpush1.bf16.msra.mxu0 %v1486
      %1506 = vmatprep.subr.bf16.mxu0 0
      %1507 = vmatpush2.bf16.msra.mxu0 0
      %1508 = vmatprep.subr.bf16.mxu0 0
      %1509 = vmatpush2.bf16.msra.mxu0 0
      %1510 = vmatprep.subr.bf16.mxu0 0
      %1511 = vmatpush2.bf16.msra.mxu0 0
      %1512 = vmatprep.subr.bf16.mxu0 0
      %1513 = vmatpush2.bf16.msra.mxu0 0
      %1514 = vmatprep.subr.bf16.mxu0 0
      %1515 = vmatpush2.bf16.msra.mxu0 0
      %1516 = vmatprep.subr.bf16.mxu0 0
      %1517 = vmatpush2.bf16.msra.mxu0 0
      %1518 = vmatprep.subr.bf16.mxu0 0
      %1519 = vmatpush2.bf16.msra.mxu0 0
      %1520 = vmatprep.subr.bf16.mxu0 0
      %1521 = vmatpush2.bf16.msra.mxu0 0
      %1522 = vmatprep.mubr.bf16.mxu0 0
      %1523 = vmatmul.mubr.bf16.gmra.mxu0 %v1089
      %v1524 = vpop.f32.mrf.mxu0
      %v1525 = vadd.f32 0.0, %v1524
      %v1526 = vpop.f32.mrf.mxu0
      %v1527 = vpop.f32.mrf.mxu0
      %v1528 = vadd.f32 0.0, %v1527
      %v1529 = vpop.f32.mrf.mxu0
      %1530 = vmatprep.mubr.bf16.mxu0 0
      %1531 = vmatmul.mubr.bf16.gmra.mxu0 %v1092
      %v1532 = vpop.f32.mrf.mxu0
      %v1533 = vadd.f32 0.0, %v1532
      %v1534 = vpop.f32.mrf.mxu0
      %v1535 = vpop.f32.mrf.mxu0
      %v1536 = vadd.f32 0.0, %v1535
      %v1537 = vpop.f32.mrf.mxu0
      %1538 = vmatprep.mubr.bf16.mxu0 0
      %1539 = vmatmul.mubr.bf16.gmra.mxu0 %v1095
      %v1540 = vpop.f32.mrf.mxu0
      %v1541 = vadd.f32 0.0, %v1540
      %v1542 = vpop.f32.mrf.mxu0
      %v1543 = vpop.f32.mrf.mxu0
      %v1544 = vadd.f32 0.0, %v1543
      %v1545 = vpop.f32.mrf.mxu0
      %1546 = vmatprep.mubr.bf16.mxu0 0
      %1547 = vmatmul.mubr.bf16.gmra.mxu0 %v1098
      %v1548 = vpop.f32.mrf.mxu0
      %v1549 = vadd.f32 0.0, %v1548
      %v1550 = vpop.f32.mrf.mxu0
      %v1551 = vpop.f32.mrf.mxu0
      %v1552 = vadd.f32 0.0, %v1551
      %v1553 = vpop.f32.mrf.mxu0
      %1554 = vmatprep.mubr.bf16.mxu0 0
      %1555 = vmatmul.mubr.bf16.gmra.mxu0 %v1101
      %v1556 = vpop.f32.mrf.mxu0
      %v1557 = vadd.f32 0.0, %v1556
      %v1558 = vpop.f32.mrf.mxu0
      %v1559 = vpop.f32.mrf.mxu0
      %v1560 = vadd.f32 0.0, %v1559
      %v1561 = vpop.f32.mrf.mxu0
      %1562 = vmatprep.mubr.bf16.mxu0 0
      %1563 = vmatmul.mubr.bf16.gmra.mxu0 %v1104
      %v1564 = vpop.f32.mrf.mxu0
      %v1565 = vadd.f32 0.0, %v1564
      %v1566 = vpop.f32.mrf.mxu0
      %v1567 = vpop.f32.mrf.mxu0
      %v1568 = vadd.f32 0.0, %v1567
      %v1569 = vpop.f32.mrf.mxu0
      %1570 = vmatprep.mubr.bf16.mxu0 0
      %1571 = vmatmul.mubr.bf16.gmra.mxu0 %v1107
      %v1572 = vpop.f32.mrf.mxu0
      %v1573 = vadd.f32 0.0, %v1572
      %v1574 = vpop.f32.mrf.mxu0
      %v1575 = vpop.f32.mrf.mxu0
      %v1576 = vadd.f32 0.0, %v1575
      %v1577 = vpop.f32.mrf.mxu0
      %1578 = vmatprep.mubr.bf16.mxu0 0
      %1579 = vmatmul.mubr.bf16.gmra.mxu0 %v1110
      %v1580 = vpop.f32.mrf.mxu0
      %v1581 = vadd.f32 0.0, %v1580
      %v1582 = vpop.f32.mrf.mxu0
      %v1583 = vpop.f32.mrf.mxu0
      %v1584 = vadd.f32 0.0, %v1583
      %v1585 = vpop.f32.mrf.mxu0
      %1586 = vmatprep.mubr.bf16.mxu0 0
      %1587 = vmatmul.mubr.bf16.gmra.mxu0 %v1113
      %v1588 = vpop.f32.mrf.mxu0
      %v1589 = vadd.f32 0.0, %v1588
      %v1590 = vpop.f32.mrf.mxu0
      %v1591 = vpop.f32.mrf.mxu0
      %v1592 = vadd.f32 0.0, %v1591
      %v1593 = vpop.f32.mrf.mxu0
      %1594 = vmatprep.mubr.bf16.mxu0 0
      %1595 = vmatmul.mubr.bf16.gmra.mxu0 %v1116
      %v1596 = vpop.f32.mrf.mxu0
      %v1597 = vadd.f32 0.0, %v1596
      %v1598 = vpop.f32.mrf.mxu0
      %v1599 = vpop.f32.mrf.mxu0
      %v1600 = vadd.f32 0.0, %v1599
      %v1601 = vpop.f32.mrf.mxu0
      %1602 = vmatprep.mubr.bf16.mxu0 0
      %1603 = vmatmul.mubr.bf16.gmra.mxu0 %v1119
      %v1604 = vpop.f32.mrf.mxu0
      %v1605 = vadd.f32 0.0, %v1604
      %v1606 = vpop.f32.mrf.mxu0
      %v1607 = vpop.f32.mrf.mxu0
      %v1608 = vadd.f32 0.0, %v1607
      %v1609 = vpop.f32.mrf.mxu0
      %1610 = vmatprep.mubr.bf16.mxu0 0
      %1611 = vmatmul.mubr.bf16.gmra.mxu0 %v1122
      %v1612 = vpop.f32.mrf.mxu0
      %v1613 = vadd.f32 0.0, %v1612
      %v1614 = vpop.f32.mrf.mxu0
      %v1615 = vpop.f32.mrf.mxu0
      %v1616 = vadd.f32 0.0, %v1615
      %v1617 = vpop.f32.mrf.mxu0
      %1618 = vmatprep.mubr.bf16.mxu0 0
      %1619 = vmatmul.mubr.bf16.gmra.mxu0 %v1125
      %v1620 = vpop.f32.mrf.mxu0
      %v1621 = vadd.f32 0.0, %v1620
      %v1622 = vpop.f32.mrf.mxu0
      %v1623 = vpop.f32.mrf.mxu0
      %v1624 = vadd.f32 0.0, %v1623
      %v1625 = vpop.f32.mrf.mxu0
      %1626 = vmatprep.mubr.bf16.mxu0 0
      %1627 = vmatmul.mubr.bf16.gmra.mxu0 %v1128
      %v1628 = vpop.f32.mrf.mxu0
      %v1629 = vadd.f32 0.0, %v1628
      %v1630 = vpop.f32.mrf.mxu0
      %v1631 = vpop.f32.mrf.mxu0
      %v1632 = vadd.f32 0.0, %v1631
      %v1633 = vpop.f32.mrf.mxu0
      %1634 = vmatprep.mubr.bf16.mxu0 0
      %1635 = vmatmul.mubr.bf16.gmra.mxu0 %v1131
      %v1636 = vpop.f32.mrf.mxu0
      %v1637 = vadd.f32 0.0, %v1636
      %v1638 = vpop.f32.mrf.mxu0
      %v1639 = vpop.f32.mrf.mxu0
      %v1640 = vadd.f32 0.0, %v1639
      %v1641 = vpop.f32.mrf.mxu0
      %1642 = vmatprep.mubr.bf16.mxu0 0
      %1643 = vmatmul.mubr.bf16.gmra.mxu0 %v1134
      %v1644 = vpop.f32.mrf.mxu0
      %v1645 = vadd.f32 0.0, %v1644
      %v1646 = vpop.f32.mrf.mxu0
      %v1647 = vpop.f32.mrf.mxu0
      %v1648 = vadd.f32 0.0, %v1647
      %v1649 = vpop.f32.mrf.mxu0
      %1650 = vdwg.mxu0
      %v1651 = vpack.c.bf16 %v1174, %v1171
      %v1652 = vpack.c.bf16 %v1182, %v1179
      %v1653 = vpack.c.bf16 %v1190, %v1187
      %v1654 = vpack.c.bf16 %v1198, %v1195
      %v1655 = vpack.c.bf16 %v1206, %v1203
      %v1656 = vpack.c.bf16 %v1214, %v1211
      %v1657 = vpack.c.bf16 %v1222, %v1219
      %v1658 = vpack.c.bf16 %v1230, %v1227
      %v1659 = vpack.c.bf16 %v1238, %v1235
      %v1660 = vpack.c.bf16 %v1246, %v1243
      %v1661 = vpack.c.bf16 %v1254, %v1251
      %v1662 = vpack.c.bf16 %v1262, %v1259
      %v1663 = vpack.c.bf16 %v1270, %v1267
      %v1664 = vpack.c.bf16 %v1278, %v1275
      %v1665 = vpack.c.bf16 %v1286, %v1283
      %v1666 = vpack.c.bf16 %v1294, %v1291
      %v1667 = vpack.c.bf16 %v1351, %v1348
      %v1668 = vpack.c.bf16 %v1359, %v1356
      %v1669 = vpack.c.bf16 %v1367, %v1364
      %v1670 = vpack.c.bf16 %v1375, %v1372
      %v1671 = vpack.c.bf16 %v1383, %v1380
      %v1672 = vpack.c.bf16 %v1391, %v1388
      %v1673 = vpack.c.bf16 %v1399, %v1396
      %v1674 = vpack.c.bf16 %v1407, %v1404
      %v1675 = vpack.c.bf16 %v1415, %v1412
      %v1676 = vpack.c.bf16 %v1423, %v1420
      %v1677 = vpack.c.bf16 %v1431, %v1428
      %v1678 = vpack.c.bf16 %v1439, %v1436
      %v1679 = vpack.c.bf16 %v1447, %v1444
      %v1680 = vpack.c.bf16 %v1455, %v1452
      %v1681 = vpack.c.bf16 %v1463, %v1460
      %v1682 = vpack.c.bf16 %v1471, %v1468
      %v1683 = vpack.c.bf16 %v1528, %v1525
      %v1684 = vpack.c.bf16 %v1536, %v1533
      %v1685 = vpack.c.bf16 %v1544, %v1541
      %v1686 = vpack.c.bf16 %v1552, %v1549
      %v1687 = vpack.c.bf16 %v1560, %v1557
      %v1688 = vpack.c.bf16 %v1568, %v1565
      %v1689 = vpack.c.bf16 %v1576, %v1573
      %v1690 = vpack.c.bf16 %v1584, %v1581
      %v1691 = vpack.c.bf16 %v1592, %v1589
      %v1692 = vpack.c.bf16 %v1600, %v1597
      %v1693 = vpack.c.bf16 %v1608, %v1605
      %v1694 = vpack.c.bf16 %v1616, %v1613
      %v1695 = vpack.c.bf16 %v1624, %v1621
      %v1696 = vpack.c.bf16 %v1632, %v1629
      %v1697 = vpack.c.bf16 %v1640, %v1637
      %v1698 = vpack.c.bf16 %v1648, %v1645
      %vm1699 = vcmask 130048
      %v1701 = vsel %vm1699, %v1651, 0
      %v1704 = vsel %vm1699, %v1667, 0
      %1706 = vmatprep.subr.bf16.mxu0 0
      %1707 = vmatpush1.bf16.xpose.msra.mxu0 0
      %1708 = vmatprep.subr.bf16.mxu0 0
      %1709 = vmatpush1.bf16.xpose.msra.mxu0 0
      %1710 = vmatprep.subr.bf16.mxu0 0
      %1711 = vmatpush1.bf16.xpose.msra.mxu0 0
      %1712 = vmatprep.subr.bf16.mxu0 0
      %1713 = vmatpush1.bf16.xpose.msra.mxu0 0
      %1714 = vmatprep.subr.bf16.mxu0 0
      %1715 = vmatpush1.bf16.xpose.msra.mxu0 0
      %1716 = vmatprep.subr.bf16.mxu0 0
      %1717 = vmatpush1.bf16.xpose.msra.mxu0 0
      %1718 = vmatprep.subr.bf16.mxu0 0
      %1719 = vmatpush1.bf16.xpose.msra.mxu0 0
      %1720 = vmatprep.subr.bf16.mxu0 0
      %1721 = vmatpush1.bf16.xpose.msra.mxu0 %v1704
      %1722 = vmatprep.subr.bf16.mxu0 0
      %1723 = vmatpush2.bf16.xpose.msra.mxu0 0
      %1724 = vmatprep.subr.bf16.mxu0 0
      %1725 = vmatpush2.bf16.xpose.msra.mxu0 0
      %1726 = vmatprep.subr.bf16.mxu0 0
      %1727 = vmatpush2.bf16.xpose.msra.mxu0 0
      %1728 = vmatprep.subr.bf16.mxu0 0
      %1729 = vmatpush2.bf16.xpose.msra.mxu0 0
      %1730 = vmatprep.subr.bf16.mxu0 0
      %1731 = vmatpush2.bf16.xpose.msra.mxu0 0
      %1732 = vmatprep.subr.bf16.mxu0 0
      %1733 = vmatpush2.bf16.xpose.msra.mxu0 0
      %1734 = vmatprep.subr.bf16.mxu0 0
      %1735 = vmatpush2.bf16.xpose.msra.mxu0 0
      %1736 = vmatprep.subr.bf16.mxu0 0
      %1737 = vmatpush2.bf16.xpose.msra.mxu0 0
      %1738 = vmatprep.mubr.bf16.mxu0 0
      %1739 = vmatmul.mubr.bf16.gmra.mxu0 %v1701
      %v1740 = vpop.f32.mrf.mxu0
      %v1741 = vadd.f32 %v1040, %v1740
      %v1742 = vpop.f32.mrf.mxu0
      %v1743 = vpop.f32.mrf.mxu0
      %v1744 = vadd.f32 %v1041, %v1743
      %v1745 = vpop.f32.mrf.mxu0
      %1746 = vdwg.mxu0
      %v1748 = vsel %vm1699, %v1652, 0
      %v1751 = vsel %vm1699, %v1668, 0
      %1753 = vmatprep.subr.bf16.mxu0 0
      %1754 = vmatpush1.bf16.xpose.msra.mxu0 0
      %1755 = vmatprep.subr.bf16.mxu0 0
      %1756 = vmatpush1.bf16.xpose.msra.mxu0 0
      %1757 = vmatprep.subr.bf16.mxu0 0
      %1758 = vmatpush1.bf16.xpose.msra.mxu0 0
      %1759 = vmatprep.subr.bf16.mxu0 0
      %1760 = vmatpush1.bf16.xpose.msra.mxu0 0
      %1761 = vmatprep.subr.bf16.mxu0 0
      %1762 = vmatpush1.bf16.xpose.msra.mxu0 0
      %1763 = vmatprep.subr.bf16.mxu0 0
      %1764 = vmatpush1.bf16.xpose.msra.mxu0 0
      %1765 = vmatprep.subr.bf16.mxu0 0
      %1766 = vmatpush1.bf16.xpose.msra.mxu0 0
      %1767 = vmatprep.subr.bf16.mxu0 0
      %1768 = vmatpush1.bf16.xpose.msra.mxu0 %v1751
      %1769 = vmatprep.subr.bf16.mxu0 0
      %1770 = vmatpush2.bf16.xpose.msra.mxu0 0
      %1771 = vmatprep.subr.bf16.mxu0 0
      %1772 = vmatpush2.bf16.xpose.msra.mxu0 0
      %1773 = vmatprep.subr.bf16.mxu0 0
      %1774 = vmatpush2.bf16.xpose.msra.mxu0 0
      %1775 = vmatprep.subr.bf16.mxu0 0
      %1776 = vmatpush2.bf16.xpose.msra.mxu0 0
      %1777 = vmatprep.subr.bf16.mxu0 0
      %1778 = vmatpush2.bf16.xpose.msra.mxu0 0
      %1779 = vmatprep.subr.bf16.mxu0 0
      %1780 = vmatpush2.bf16.xpose.msra.mxu0 0
      %1781 = vmatprep.subr.bf16.mxu0 0
      %1782 = vmatpush2.bf16.xpose.msra.mxu0 0
      %1783 = vmatprep.subr.bf16.mxu0 0
      %1784 = vmatpush2.bf16.xpose.msra.mxu0 0
      %1785 = vmatprep.mubr.bf16.mxu0 0
      %1786 = vmatmul.mubr.bf16.gmra.mxu0 %v1748
      %v1787 = vpop.f32.mrf.mxu0
      %v1788 = vadd.f32 %v1042, %v1787
      %v1789 = vpop.f32.mrf.mxu0
      %v1790 = vpop.f32.mrf.mxu0
      %v1791 = vadd.f32 %v1043, %v1790
      %v1792 = vpop.f32.mrf.mxu0
      %1793 = vdwg.mxu0
      %v1795 = vsel %vm1699, %v1653, 0
      %v1798 = vsel %vm1699, %v1669, 0
      %1800 = vmatprep.subr.bf16.mxu0 0
      %1801 = vmatpush1.bf16.xpose.msra.mxu0 0
      %1802 = vmatprep.subr.bf16.mxu0 0
      %1803 = vmatpush1.bf16.xpose.msra.mxu0 0
      %1804 = vmatprep.subr.bf16.mxu0 0
      %1805 = vmatpush1.bf16.xpose.msra.mxu0 0
      %1806 = vmatprep.subr.bf16.mxu0 0
      %1807 = vmatpush1.bf16.xpose.msra.mxu0 0
      %1808 = vmatprep.subr.bf16.mxu0 0
      %1809 = vmatpush1.bf16.xpose.msra.mxu0 0
      %1810 = vmatprep.subr.bf16.mxu0 0
      %1811 = vmatpush1.bf16.xpose.msra.mxu0 0
      %1812 = vmatprep.subr.bf16.mxu0 0
      %1813 = vmatpush1.bf16.xpose.msra.mxu0 0
      %1814 = vmatprep.subr.bf16.mxu0 0
      %1815 = vmatpush1.bf16.xpose.msra.mxu0 %v1798
      %1816 = vmatprep.subr.bf16.mxu0 0
      %1817 = vmatpush2.bf16.xpose.msra.mxu0 0
      %1818 = vmatprep.subr.bf16.mxu0 0
      %1819 = vmatpush2.bf16.xpose.msra.mxu0 0
      %1820 = vmatprep.subr.bf16.mxu0 0
      %1821 = vmatpush2.bf16.xpose.msra.mxu0 0
      %1822 = vmatprep.subr.bf16.mxu0 0
      %1823 = vmatpush2.bf16.xpose.msra.mxu0 0
      %1824 = vmatprep.subr.bf16.mxu0 0
      %1825 = vmatpush2.bf16.xpose.msra.mxu0 0
      %1826 = vmatprep.subr.bf16.mxu0 0
      %1827 = vmatpush2.bf16.xpose.msra.mxu0 0
      %1828 = vmatprep.subr.bf16.mxu0 0
      %1829 = vmatpush2.bf16.xpose.msra.mxu0 0
      %1830 = vmatprep.subr.bf16.mxu0 0
      %1831 = vmatpush2.bf16.xpose.msra.mxu0 0
      %1832 = vmatprep.mubr.bf16.mxu0 0
      %1833 = vmatmul.mubr.bf16.gmra.mxu0 %v1795
      %v1834 = vpop.f32.mrf.mxu0
      %v1835 = vadd.f32 %v1044, %v1834
      %v1836 = vpop.f32.mrf.mxu0
      %v1837 = vpop.f32.mrf.mxu0
      %v1838 = vadd.f32 %v1045, %v1837
      %v1839 = vpop.f32.mrf.mxu0
      %1840 = vdwg.mxu0
      %v1842 = vsel %vm1699, %v1654, 0
      %v1845 = vsel %vm1699, %v1670, 0
      %1847 = vmatprep.subr.bf16.mxu0 0
      %1848 = vmatpush1.bf16.xpose.msra.mxu0 0
      %1849 = vmatprep.subr.bf16.mxu0 0
      %1850 = vmatpush1.bf16.xpose.msra.mxu0 0
      %1851 = vmatprep.subr.bf16.mxu0 0
      %1852 = vmatpush1.bf16.xpose.msra.mxu0 0
      %1853 = vmatprep.subr.bf16.mxu0 0
      %1854 = vmatpush1.bf16.xpose.msra.mxu0 0
      %1855 = vmatprep.subr.bf16.mxu0 0
      %1856 = vmatpush1.bf16.xpose.msra.mxu0 0
      %1857 = vmatprep.subr.bf16.mxu0 0
      %1858 = vmatpush1.bf16.xpose.msra.mxu0 0
      %1859 = vmatprep.subr.bf16.mxu0 0
      %1860 = vmatpush1.bf16.xpose.msra.mxu0 0
      %1861 = vmatprep.subr.bf16.mxu0 0
      %1862 = vmatpush1.bf16.xpose.msra.mxu0 %v1845
      %1863 = vmatprep.subr.bf16.mxu0 0
      %1864 = vmatpush2.bf16.xpose.msra.mxu0 0
      %1865 = vmatprep.subr.bf16.mxu0 0
      %1866 = vmatpush2.bf16.xpose.msra.mxu0 0
      %1867 = vmatprep.subr.bf16.mxu0 0
      %1868 = vmatpush2.bf16.xpose.msra.mxu0 0
      %1869 = vmatprep.subr.bf16.mxu0 0
      %1870 = vmatpush2.bf16.xpose.msra.mxu0 0
      %1871 = vmatprep.subr.bf16.mxu0 0
      %1872 = vmatpush2.bf16.xpose.msra.mxu0 0
      %1873 = vmatprep.subr.bf16.mxu0 0
      %1874 = vmatpush2.bf16.xpose.msra.mxu0 0
      %1875 = vmatprep.subr.bf16.mxu0 0
      %1876 = vmatpush2.bf16.xpose.msra.mxu0 0
      %1877 = vmatprep.subr.bf16.mxu0 0
      %1878 = vmatpush2.bf16.xpose.msra.mxu0 0
      %1879 = vmatprep.mubr.bf16.mxu0 0
      %1880 = vmatmul.mubr.bf16.gmra.mxu0 %v1842
      %v1881 = vpop.f32.mrf.mxu0
      %v1882 = vadd.f32 %v1046, %v1881
      %v1883 = vpop.f32.mrf.mxu0
      %v1884 = vpop.f32.mrf.mxu0
      %v1885 = vadd.f32 %v1047, %v1884
      %v1886 = vpop.f32.mrf.mxu0
      %1887 = vdwg.mxu0
      %v1889 = vsel %vm1699, %v1655, 0
      %v1892 = vsel %vm1699, %v1671, 0
      %1894 = vmatprep.subr.bf16.mxu0 0
      %1895 = vmatpush1.bf16.xpose.msra.mxu0 0
      %1896 = vmatprep.subr.bf16.mxu0 0
      %1897 = vmatpush1.bf16.xpose.msra.mxu0 0
      %1898 = vmatprep.subr.bf16.mxu0 0
      %1899 = vmatpush1.bf16.xpose.msra.mxu0 0
      %1900 = vmatprep.subr.bf16.mxu0 0
      %1901 = vmatpush1.bf16.xpose.msra.mxu0 0
      %1902 = vmatprep.subr.bf16.mxu0 0
      %1903 = vmatpush1.bf16.xpose.msra.mxu0 0
      %1904 = vmatprep.subr.bf16.mxu0 0
      %1905 = vmatpush1.bf16.xpose.msra.mxu0 0
      %1906 = vmatprep.subr.bf16.mxu0 0
      %1907 = vmatpush1.bf16.xpose.msra.mxu0 0
      %1908 = vmatprep.subr.bf16.mxu0 0
      %1909 = vmatpush1.bf16.xpose.msra.mxu0 %v1892
      %1910 = vmatprep.subr.bf16.mxu0 0
      %1911 = vmatpush2.bf16.xpose.msra.mxu0 0
      %1912 = vmatprep.subr.bf16.mxu0 0
      %1913 = vmatpush2.bf16.xpose.msra.mxu0 0
      %1914 = vmatprep.subr.bf16.mxu0 0
      %1915 = vmatpush2.bf16.xpose.msra.mxu0 0
      %1916 = vmatprep.subr.bf16.mxu0 0
      %1917 = vmatpush2.bf16.xpose.msra.mxu0 0
      %1918 = vmatprep.subr.bf16.mxu0 0
      %1919 = vmatpush2.bf16.xpose.msra.mxu0 0
      %1920 = vmatprep.subr.bf16.mxu0 0
      %1921 = vmatpush2.bf16.xpose.msra.mxu0 0
      %1922 = vmatprep.subr.bf16.mxu0 0
      %1923 = vmatpush2.bf16.xpose.msra.mxu0 0
      %1924 = vmatprep.subr.bf16.mxu0 0
      %1925 = vmatpush2.bf16.xpose.msra.mxu0 0
      %1926 = vmatprep.mubr.bf16.mxu0 0
      %1927 = vmatmul.mubr.bf16.gmra.mxu0 %v1889
      %v1928 = vpop.f32.mrf.mxu0
      %v1929 = vadd.f32 %v1048, %v1928
      %v1930 = vpop.f32.mrf.mxu0
      %v1931 = vpop.f32.mrf.mxu0
      %v1932 = vadd.f32 %v1049, %v1931
      %v1933 = vpop.f32.mrf.mxu0
      %1934 = vdwg.mxu0
      %v1936 = vsel %vm1699, %v1656, 0
      %v1939 = vsel %vm1699, %v1672, 0
      %1941 = vmatprep.subr.bf16.mxu0 0
      %1942 = vmatpush1.bf16.xpose.msra.mxu0 0
      %1943 = vmatprep.subr.bf16.mxu0 0
      %1944 = vmatpush1.bf16.xpose.msra.mxu0 0
      %1945 = vmatprep.subr.bf16.mxu0 0
      %1946 = vmatpush1.bf16.xpose.msra.mxu0 0
      %1947 = vmatprep.subr.bf16.mxu0 0
      %1948 = vmatpush1.bf16.xpose.msra.mxu0 0
      %1949 = vmatprep.subr.bf16.mxu0 0
      %1950 = vmatpush1.bf16.xpose.msra.mxu0 0
      %1951 = vmatprep.subr.bf16.mxu0 0
      %1952 = vmatpush1.bf16.xpose.msra.mxu0 0
      %1953 = vmatprep.subr.bf16.mxu0 0
      %1954 = vmatpush1.bf16.xpose.msra.mxu0 0
      %1955 = vmatprep.subr.bf16.mxu0 0
      %1956 = vmatpush1.bf16.xpose.msra.mxu0 %v1939
      %1957 = vmatprep.subr.bf16.mxu0 0
      %1958 = vmatpush2.bf16.xpose.msra.mxu0 0
      %1959 = vmatprep.subr.bf16.mxu0 0
      %1960 = vmatpush2.bf16.xpose.msra.mxu0 0
      %1961 = vmatprep.subr.bf16.mxu0 0
      %1962 = vmatpush2.bf16.xpose.msra.mxu0 0
      %1963 = vmatprep.subr.bf16.mxu0 0
      %1964 = vmatpush2.bf16.xpose.msra.mxu0 0
      %1965 = vmatprep.subr.bf16.mxu0 0
      %1966 = vmatpush2.bf16.xpose.msra.mxu0 0
      %1967 = vmatprep.subr.bf16.mxu0 0
      %1968 = vmatpush2.bf16.xpose.msra.mxu0 0
      %1969 = vmatprep.subr.bf16.mxu0 0
      %1970 = vmatpush2.bf16.xpose.msra.mxu0 0
      %1971 = vmatprep.subr.bf16.mxu0 0
      %1972 = vmatpush2.bf16.xpose.msra.mxu0 0
      %1973 = vmatprep.mubr.bf16.mxu0 0
      %1974 = vmatmul.mubr.bf16.gmra.mxu0 %v1936
      %v1975 = vpop.f32.mrf.mxu0
      %v1976 = vadd.f32 %v1050, %v1975
      %v1977 = vpop.f32.mrf.mxu0
      %v1978 = vpop.f32.mrf.mxu0
      %v1979 = vadd.f32 %v1051, %v1978
      %v1980 = vpop.f32.mrf.mxu0
      %1981 = vdwg.mxu0
      %v1983 = vsel %vm1699, %v1657, 0
      %v1986 = vsel %vm1699, %v1673, 0
      %1988 = vmatprep.subr.bf16.mxu0 0
      %1989 = vmatpush1.bf16.xpose.msra.mxu0 0
      %1990 = vmatprep.subr.bf16.mxu0 0
      %1991 = vmatpush1.bf16.xpose.msra.mxu0 0
      %1992 = vmatprep.subr.bf16.mxu0 0
      %1993 = vmatpush1.bf16.xpose.msra.mxu0 0
      %1994 = vmatprep.subr.bf16.mxu0 0
      %1995 = vmatpush1.bf16.xpose.msra.mxu0 0
      %1996 = vmatprep.subr.bf16.mxu0 0
      %1997 = vmatpush1.bf16.xpose.msra.mxu0 0
      %1998 = vmatprep.subr.bf16.mxu0 0
      %1999 = vmatpush1.bf16.xpose.msra.mxu0 0
      %2000 = vmatprep.subr.bf16.mxu0 0
      %2001 = vmatpush1.bf16.xpose.msra.mxu0 0
      %2002 = vmatprep.subr.bf16.mxu0 0
      %2003 = vmatpush1.bf16.xpose.msra.mxu0 %v1986
      %2004 = vmatprep.subr.bf16.mxu0 0
      %2005 = vmatpush2.bf16.xpose.msra.mxu0 0
      %2006 = vmatprep.subr.bf16.mxu0 0
      %2007 = vmatpush2.bf16.xpose.msra.mxu0 0
      %2008 = vmatprep.subr.bf16.mxu0 0
      %2009 = vmatpush2.bf16.xpose.msra.mxu0 0
      %2010 = vmatprep.subr.bf16.mxu0 0
      %2011 = vmatpush2.bf16.xpose.msra.mxu0 0
      %2012 = vmatprep.subr.bf16.mxu0 0
      %2013 = vmatpush2.bf16.xpose.msra.mxu0 0
      %2014 = vmatprep.subr.bf16.mxu0 0
      %2015 = vmatpush2.bf16.xpose.msra.mxu0 0
      %2016 = vmatprep.subr.bf16.mxu0 0
      %2017 = vmatpush2.bf16.xpose.msra.mxu0 0
      %2018 = vmatprep.subr.bf16.mxu0 0
      %2019 = vmatpush2.bf16.xpose.msra.mxu0 0
      %2020 = vmatprep.mubr.bf16.mxu0 0
      %2021 = vmatmul.mubr.bf16.gmra.mxu0 %v1983
      %v2022 = vpop.f32.mrf.mxu0
      %v2023 = vadd.f32 %v1052, %v2022
      %v2024 = vpop.f32.mrf.mxu0
      %v2025 = vpop.f32.mrf.mxu0
      %v2026 = vadd.f32 %v1053, %v2025
      %v2027 = vpop.f32.mrf.mxu0
      %2028 = vdwg.mxu0
      %v2030 = vsel %vm1699, %v1658, 0
      %v2033 = vsel %vm1699, %v1674, 0
      %2035 = vmatprep.subr.bf16.mxu0 0
      %2036 = vmatpush1.bf16.xpose.msra.mxu0 0
      %2037 = vmatprep.subr.bf16.mxu0 0
      %2038 = vmatpush1.bf16.xpose.msra.mxu0 0
      %2039 = vmatprep.subr.bf16.mxu0 0
      %2040 = vmatpush1.bf16.xpose.msra.mxu0 0
      %2041 = vmatprep.subr.bf16.mxu0 0
      %2042 = vmatpush1.bf16.xpose.msra.mxu0 0
      %2043 = vmatprep.subr.bf16.mxu0 0
      %2044 = vmatpush1.bf16.xpose.msra.mxu0 0
      %2045 = vmatprep.subr.bf16.mxu0 0
      %2046 = vmatpush1.bf16.xpose.msra.mxu0 0
      %2047 = vmatprep.subr.bf16.mxu0 0
      %2048 = vmatpush1.bf16.xpose.msra.mxu0 0
      %2049 = vmatprep.subr.bf16.mxu0 0
      %2050 = vmatpush1.bf16.xpose.msra.mxu0 %v2033
      %2051 = vmatprep.subr.bf16.mxu0 0
      %2052 = vmatpush2.bf16.xpose.msra.mxu0 0
      %2053 = vmatprep.subr.bf16.mxu0 0
      %2054 = vmatpush2.bf16.xpose.msra.mxu0 0
      %2055 = vmatprep.subr.bf16.mxu0 0
      %2056 = vmatpush2.bf16.xpose.msra.mxu0 0
      %2057 = vmatprep.subr.bf16.mxu0 0
      %2058 = vmatpush2.bf16.xpose.msra.mxu0 0
      %2059 = vmatprep.subr.bf16.mxu0 0
      %2060 = vmatpush2.bf16.xpose.msra.mxu0 0
      %2061 = vmatprep.subr.bf16.mxu0 0
      %2062 = vmatpush2.bf16.xpose.msra.mxu0 0
      %2063 = vmatprep.subr.bf16.mxu0 0
      %2064 = vmatpush2.bf16.xpose.msra.mxu0 0
      %2065 = vmatprep.subr.bf16.mxu0 0
      %2066 = vmatpush2.bf16.xpose.msra.mxu0 0
      %2067 = vmatprep.mubr.bf16.mxu0 0
      %2068 = vmatmul.mubr.bf16.gmra.mxu0 %v2030
      %v2069 = vpop.f32.mrf.mxu0
      %v2070 = vadd.f32 %v1054, %v2069
      %v2071 = vpop.f32.mrf.mxu0
      %v2072 = vpop.f32.mrf.mxu0
      %v2073 = vadd.f32 %v1055, %v2072
      %v2074 = vpop.f32.mrf.mxu0
      %2075 = vdwg.mxu0
      %v2077 = vsel %vm1699, %v1659, 0
      %v2080 = vsel %vm1699, %v1675, 0
      %2082 = vmatprep.subr.bf16.mxu0 0
      %2083 = vmatpush1.bf16.xpose.msra.mxu0 0
      %2084 = vmatprep.subr.bf16.mxu0 0
      %2085 = vmatpush1.bf16.xpose.msra.mxu0 0
      %2086 = vmatprep.subr.bf16.mxu0 0
      %2087 = vmatpush1.bf16.xpose.msra.mxu0 0
      %2088 = vmatprep.subr.bf16.mxu0 0
      %2089 = vmatpush1.bf16.xpose.msra.mxu0 0
      %2090 = vmatprep.subr.bf16.mxu0 0
      %2091 = vmatpush1.bf16.xpose.msra.mxu0 0
      %2092 = vmatprep.subr.bf16.mxu0 0
      %2093 = vmatpush1.bf16.xpose.msra.mxu0 0
      %2094 = vmatprep.subr.bf16.mxu0 0
      %2095 = vmatpush1.bf16.xpose.msra.mxu0 0
      %2096 = vmatprep.subr.bf16.mxu0 0
      %2097 = vmatpush1.bf16.xpose.msra.mxu0 %v2080
      %2098 = vmatprep.subr.bf16.mxu0 0
      %2099 = vmatpush2.bf16.xpose.msra.mxu0 0
      %2100 = vmatprep.subr.bf16.mxu0 0
      %2101 = vmatpush2.bf16.xpose.msra.mxu0 0
      %2102 = vmatprep.subr.bf16.mxu0 0
      %2103 = vmatpush2.bf16.xpose.msra.mxu0 0
      %2104 = vmatprep.subr.bf16.mxu0 0
      %2105 = vmatpush2.bf16.xpose.msra.mxu0 0
      %2106 = vmatprep.subr.bf16.mxu0 0
      %2107 = vmatpush2.bf16.xpose.msra.mxu0 0
      %2108 = vmatprep.subr.bf16.mxu0 0
      %2109 = vmatpush2.bf16.xpose.msra.mxu0 0
      %2110 = vmatprep.subr.bf16.mxu0 0
      %2111 = vmatpush2.bf16.xpose.msra.mxu0 0
      %2112 = vmatprep.subr.bf16.mxu0 0
      %2113 = vmatpush2.bf16.xpose.msra.mxu0 0
      %2114 = vmatprep.mubr.bf16.mxu0 0
      %2115 = vmatmul.mubr.bf16.gmra.mxu0 %v2077
      %v2116 = vpop.f32.mrf.mxu0
      %v2117 = vadd.f32 %v1056, %v2116
      %v2118 = vpop.f32.mrf.mxu0
      %v2119 = vpop.f32.mrf.mxu0
      %v2120 = vadd.f32 %v1057, %v2119
      %v2121 = vpop.f32.mrf.mxu0
      %2122 = vdwg.mxu0
      %v2124 = vsel %vm1699, %v1660, 0
      %v2127 = vsel %vm1699, %v1676, 0
      %2129 = vmatprep.subr.bf16.mxu0 0
      %2130 = vmatpush1.bf16.xpose.msra.mxu0 0
      %2131 = vmatprep.subr.bf16.mxu0 0
      %2132 = vmatpush1.bf16.xpose.msra.mxu0 0
      %2133 = vmatprep.subr.bf16.mxu0 0
      %2134 = vmatpush1.bf16.xpose.msra.mxu0 0
      %2135 = vmatprep.subr.bf16.mxu0 0
      %2136 = vmatpush1.bf16.xpose.msra.mxu0 0
      %2137 = vmatprep.subr.bf16.mxu0 0
      %2138 = vmatpush1.bf16.xpose.msra.mxu0 0
      %2139 = vmatprep.subr.bf16.mxu0 0
      %2140 = vmatpush1.bf16.xpose.msra.mxu0 0
      %2141 = vmatprep.subr.bf16.mxu0 0
      %2142 = vmatpush1.bf16.xpose.msra.mxu0 0
      %2143 = vmatprep.subr.bf16.mxu0 0
      %2144 = vmatpush1.bf16.xpose.msra.mxu0 %v2127
      %2145 = vmatprep.subr.bf16.mxu0 0
      %2146 = vmatpush2.bf16.xpose.msra.mxu0 0
      %2147 = vmatprep.subr.bf16.mxu0 0
      %2148 = vmatpush2.bf16.xpose.msra.mxu0 0
      %2149 = vmatprep.subr.bf16.mxu0 0
      %2150 = vmatpush2.bf16.xpose.msra.mxu0 0
      %2151 = vmatprep.subr.bf16.mxu0 0
      %2152 = vmatpush2.bf16.xpose.msra.mxu0 0
      %2153 = vmatprep.subr.bf16.mxu0 0
      %2154 = vmatpush2.bf16.xpose.msra.mxu0 0
      %2155 = vmatprep.subr.bf16.mxu0 0
      %2156 = vmatpush2.bf16.xpose.msra.mxu0 0
      %2157 = vmatprep.subr.bf16.mxu0 0
      %2158 = vmatpush2.bf16.xpose.msra.mxu0 0
      %2159 = vmatprep.subr.bf16.mxu0 0
      %2160 = vmatpush2.bf16.xpose.msra.mxu0 0
      %2161 = vmatprep.mubr.bf16.mxu0 0
      %2162 = vmatmul.mubr.bf16.gmra.mxu0 %v2124
      %v2163 = vpop.f32.mrf.mxu0
      %v2164 = vadd.f32 %v1058, %v2163
      %v2165 = vpop.f32.mrf.mxu0
      %v2166 = vpop.f32.mrf.mxu0
      %v2167 = vadd.f32 %v1059, %v2166
      %v2168 = vpop.f32.mrf.mxu0
      %2169 = vdwg.mxu0
      %v2171 = vsel %vm1699, %v1661, 0
      %v2174 = vsel %vm1699, %v1677, 0
      %2176 = vmatprep.subr.bf16.mxu0 0
      %2177 = vmatpush1.bf16.xpose.msra.mxu0 0
      %2178 = vmatprep.subr.bf16.mxu0 0
      %2179 = vmatpush1.bf16.xpose.msra.mxu0 0
      %2180 = vmatprep.subr.bf16.mxu0 0
      %2181 = vmatpush1.bf16.xpose.msra.mxu0 0
      %2182 = vmatprep.subr.bf16.mxu0 0
      %2183 = vmatpush1.bf16.xpose.msra.mxu0 0
      %2184 = vmatprep.subr.bf16.mxu0 0
      %2185 = vmatpush1.bf16.xpose.msra.mxu0 0
      %2186 = vmatprep.subr.bf16.mxu0 0
      %2187 = vmatpush1.bf16.xpose.msra.mxu0 0
      %2188 = vmatprep.subr.bf16.mxu0 0
      %2189 = vmatpush1.bf16.xpose.msra.mxu0 0
      %2190 = vmatprep.subr.bf16.mxu0 0
      %2191 = vmatpush1.bf16.xpose.msra.mxu0 %v2174
      %2192 = vmatprep.subr.bf16.mxu0 0
      %2193 = vmatpush2.bf16.xpose.msra.mxu0 0
      %2194 = vmatprep.subr.bf16.mxu0 0
      %2195 = vmatpush2.bf16.xpose.msra.mxu0 0
      %2196 = vmatprep.subr.bf16.mxu0 0
      %2197 = vmatpush2.bf16.xpose.msra.mxu0 0
      %2198 = vmatprep.subr.bf16.mxu0 0
      %2199 = vmatpush2.bf16.xpose.msra.mxu0 0
      %2200 = vmatprep.subr.bf16.mxu0 0
      %2201 = vmatpush2.bf16.xpose.msra.mxu0 0
      %2202 = vmatprep.subr.bf16.mxu0 0
      %2203 = vmatpush2.bf16.xpose.msra.mxu0 0
      %2204 = vmatprep.subr.bf16.mxu0 0
      %2205 = vmatpush2.bf16.xpose.msra.mxu0 0
      %2206 = vmatprep.subr.bf16.mxu0 0
      %2207 = vmatpush2.bf16.xpose.msra.mxu0 0
      %2208 = vmatprep.mubr.bf16.mxu0 0
      %2209 = vmatmul.mubr.bf16.gmra.mxu0 %v2171
      %v2210 = vpop.f32.mrf.mxu0
      %v2211 = vadd.f32 %v1060, %v2210
      %v2212 = vpop.f32.mrf.mxu0
      %v2213 = vpop.f32.mrf.mxu0
      %v2214 = vadd.f32 %v1061, %v2213
      %v2215 = vpop.f32.mrf.mxu0
      %2216 = vdwg.mxu0
      %v2218 = vsel %vm1699, %v1662, 0
      %v2221 = vsel %vm1699, %v1678, 0
      %2223 = vmatprep.subr.bf16.mxu0 0
      %2224 = vmatpush1.bf16.xpose.msra.mxu0 0
      %2225 = vmatprep.subr.bf16.mxu0 0
      %2226 = vmatpush1.bf16.xpose.msra.mxu0 0
      %2227 = vmatprep.subr.bf16.mxu0 0
      %2228 = vmatpush1.bf16.xpose.msra.mxu0 0
      %2229 = vmatprep.subr.bf16.mxu0 0
      %2230 = vmatpush1.bf16.xpose.msra.mxu0 0
      %2231 = vmatprep.subr.bf16.mxu0 0
      %2232 = vmatpush1.bf16.xpose.msra.mxu0 0
      %2233 = vmatprep.subr.bf16.mxu0 0
      %2234 = vmatpush1.bf16.xpose.msra.mxu0 0
      %2235 = vmatprep.subr.bf16.mxu0 0
      %2236 = vmatpush1.bf16.xpose.msra.mxu0 0
      %2237 = vmatprep.subr.bf16.mxu0 0
      %2238 = vmatpush1.bf16.xpose.msra.mxu0 %v2221
      %2239 = vmatprep.subr.bf16.mxu0 0
      %2240 = vmatpush2.bf16.xpose.msra.mxu0 0
      %2241 = vmatprep.subr.bf16.mxu0 0
      %2242 = vmatpush2.bf16.xpose.msra.mxu0 0
      %2243 = vmatprep.subr.bf16.mxu0 0
      %2244 = vmatpush2.bf16.xpose.msra.mxu0 0
      %2245 = vmatprep.subr.bf16.mxu0 0
      %2246 = vmatpush2.bf16.xpose.msra.mxu0 0
      %2247 = vmatprep.subr.bf16.mxu0 0
      %2248 = vmatpush2.bf16.xpose.msra.mxu0 0
      %2249 = vmatprep.subr.bf16.mxu0 0
      %2250 = vmatpush2.bf16.xpose.msra.mxu0 0
      %2251 = vmatprep.subr.bf16.mxu0 0
      %2252 = vmatpush2.bf16.xpose.msra.mxu0 0
      %2253 = vmatprep.subr.bf16.mxu0 0
      %2254 = vmatpush2.bf16.xpose.msra.mxu0 0
      %2255 = vmatprep.mubr.bf16.mxu0 0
      %2256 = vmatmul.mubr.bf16.gmra.mxu0 %v2218
      %v2257 = vpop.f32.mrf.mxu0
      %v2258 = vadd.f32 %v1062, %v2257
      %v2259 = vpop.f32.mrf.mxu0
      %v2260 = vpop.f32.mrf.mxu0
      %v2261 = vadd.f32 %v1063, %v2260
      %v2262 = vpop.f32.mrf.mxu0
      %2263 = vdwg.mxu0
      %v2265 = vsel %vm1699, %v1663, 0
      %v2268 = vsel %vm1699, %v1679, 0
      %2270 = vmatprep.subr.bf16.mxu0 0
      %2271 = vmatpush1.bf16.xpose.msra.mxu0 0
      %2272 = vmatprep.subr.bf16.mxu0 0
      %2273 = vmatpush1.bf16.xpose.msra.mxu0 0
      %2274 = vmatprep.subr.bf16.mxu0 0
      %2275 = vmatpush1.bf16.xpose.msra.mxu0 0
      %2276 = vmatprep.subr.bf16.mxu0 0
      %2277 = vmatpush1.bf16.xpose.msra.mxu0 0
      %2278 = vmatprep.subr.bf16.mxu0 0
      %2279 = vmatpush1.bf16.xpose.msra.mxu0 0
      %2280 = vmatprep.subr.bf16.mxu0 0
      %2281 = vmatpush1.bf16.xpose.msra.mxu0 0
      %2282 = vmatprep.subr.bf16.mxu0 0
      %2283 = vmatpush1.bf16.xpose.msra.mxu0 0
      %2284 = vmatprep.subr.bf16.mxu0 0
      %2285 = vmatpush1.bf16.xpose.msra.mxu0 %v2268
      %2286 = vmatprep.subr.bf16.mxu0 0
      %2287 = vmatpush2.bf16.xpose.msra.mxu0 0
      %2288 = vmatprep.subr.bf16.mxu0 0
      %2289 = vmatpush2.bf16.xpose.msra.mxu0 0
      %2290 = vmatprep.subr.bf16.mxu0 0
      %2291 = vmatpush2.bf16.xpose.msra.mxu0 0
      %2292 = vmatprep.subr.bf16.mxu0 0
      %2293 = vmatpush2.bf16.xpose.msra.mxu0 0
      %2294 = vmatprep.subr.bf16.mxu0 0
      %2295 = vmatpush2.bf16.xpose.msra.mxu0 0
      %2296 = vmatprep.subr.bf16.mxu0 0
      %2297 = vmatpush2.bf16.xpose.msra.mxu0 0
      %2298 = vmatprep.subr.bf16.mxu0 0
      %2299 = vmatpush2.bf16.xpose.msra.mxu0 0
      %2300 = vmatprep.subr.bf16.mxu0 0
      %2301 = vmatpush2.bf16.xpose.msra.mxu0 0
      %2302 = vmatprep.mubr.bf16.mxu0 0
      %2303 = vmatmul.mubr.bf16.gmra.mxu0 %v2265
      %v2304 = vpop.f32.mrf.mxu0
      %v2305 = vadd.f32 %v1064, %v2304
      %v2306 = vpop.f32.mrf.mxu0
      %v2307 = vpop.f32.mrf.mxu0
      %v2308 = vadd.f32 %v1065, %v2307
      %v2309 = vpop.f32.mrf.mxu0
      %2310 = vdwg.mxu0
      %v2312 = vsel %vm1699, %v1664, 0
      %v2315 = vsel %vm1699, %v1680, 0
      %2317 = vmatprep.subr.bf16.mxu0 0
      %2318 = vmatpush1.bf16.xpose.msra.mxu0 0
      %2319 = vmatprep.subr.bf16.mxu0 0
      %2320 = vmatpush1.bf16.xpose.msra.mxu0 0
      %2321 = vmatprep.subr.bf16.mxu0 0
      %2322 = vmatpush1.bf16.xpose.msra.mxu0 0
      %2323 = vmatprep.subr.bf16.mxu0 0
      %2324 = vmatpush1.bf16.xpose.msra.mxu0 0
      %2325 = vmatprep.subr.bf16.mxu0 0
      %2326 = vmatpush1.bf16.xpose.msra.mxu0 0
      %2327 = vmatprep.subr.bf16.mxu0 0
      %2328 = vmatpush1.bf16.xpose.msra.mxu0 0
      %2329 = vmatprep.subr.bf16.mxu0 0
      %2330 = vmatpush1.bf16.xpose.msra.mxu0 0
      %2331 = vmatprep.subr.bf16.mxu0 0
      %2332 = vmatpush1.bf16.xpose.msra.mxu0 %v2315
      %2333 = vmatprep.subr.bf16.mxu0 0
      %2334 = vmatpush2.bf16.xpose.msra.mxu0 0
      %2335 = vmatprep.subr.bf16.mxu0 0
      %2336 = vmatpush2.bf16.xpose.msra.mxu0 0
      %2337 = vmatprep.subr.bf16.mxu0 0
      %2338 = vmatpush2.bf16.xpose.msra.mxu0 0
      %2339 = vmatprep.subr.bf16.mxu0 0
      %2340 = vmatpush2.bf16.xpose.msra.mxu0 0
      %2341 = vmatprep.subr.bf16.mxu0 0
      %2342 = vmatpush2.bf16.xpose.msra.mxu0 0
      %2343 = vmatprep.subr.bf16.mxu0 0
      %2344 = vmatpush2.bf16.xpose.msra.mxu0 0
      %2345 = vmatprep.subr.bf16.mxu0 0
      %2346 = vmatpush2.bf16.xpose.msra.mxu0 0
      %2347 = vmatprep.subr.bf16.mxu0 0
      %2348 = vmatpush2.bf16.xpose.msra.mxu0 0
      %2349 = vmatprep.mubr.bf16.mxu0 0
      %2350 = vmatmul.mubr.bf16.gmra.mxu0 %v2312
      %v2351 = vpop.f32.mrf.mxu0
      %v2352 = vadd.f32 %v1066, %v2351
      %v2353 = vpop.f32.mrf.mxu0
      %v2354 = vpop.f32.mrf.mxu0
      %v2355 = vadd.f32 %v1067, %v2354
      %v2356 = vpop.f32.mrf.mxu0
      %2357 = vdwg.mxu0
      %v2359 = vsel %vm1699, %v1665, 0
      %v2362 = vsel %vm1699, %v1681, 0
      %2364 = vmatprep.subr.bf16.mxu0 0
      %2365 = vmatpush1.bf16.xpose.msra.mxu0 0
      %2366 = vmatprep.subr.bf16.mxu0 0
      %2367 = vmatpush1.bf16.xpose.msra.mxu0 0
      %2368 = vmatprep.subr.bf16.mxu0 0
      %2369 = vmatpush1.bf16.xpose.msra.mxu0 0
      %2370 = vmatprep.subr.bf16.mxu0 0
      %2371 = vmatpush1.bf16.xpose.msra.mxu0 0
      %2372 = vmatprep.subr.bf16.mxu0 0
      %2373 = vmatpush1.bf16.xpose.msra.mxu0 0
      %2374 = vmatprep.subr.bf16.mxu0 0
      %2375 = vmatpush1.bf16.xpose.msra.mxu0 0
      %2376 = vmatprep.subr.bf16.mxu0 0
      %2377 = vmatpush1.bf16.xpose.msra.mxu0 0
      %2378 = vmatprep.subr.bf16.mxu0 0
      %2379 = vmatpush1.bf16.xpose.msra.mxu0 %v2362
      %2380 = vmatprep.subr.bf16.mxu0 0
      %2381 = vmatpush2.bf16.xpose.msra.mxu0 0
      %2382 = vmatprep.subr.bf16.mxu0 0
      %2383 = vmatpush2.bf16.xpose.msra.mxu0 0
      %2384 = vmatprep.subr.bf16.mxu0 0
      %2385 = vmatpush2.bf16.xpose.msra.mxu0 0
      %2386 = vmatprep.subr.bf16.mxu0 0
      %2387 = vmatpush2.bf16.xpose.msra.mxu0 0
      %2388 = vmatprep.subr.bf16.mxu0 0
      %2389 = vmatpush2.bf16.xpose.msra.mxu0 0
      %2390 = vmatprep.subr.bf16.mxu0 0
      %2391 = vmatpush2.bf16.xpose.msra.mxu0 0
      %2392 = vmatprep.subr.bf16.mxu0 0
      %2393 = vmatpush2.bf16.xpose.msra.mxu0 0
      %2394 = vmatprep.subr.bf16.mxu0 0
      %2395 = vmatpush2.bf16.xpose.msra.mxu0 0
      %2396 = vmatprep.mubr.bf16.mxu0 0
      %2397 = vmatmul.mubr.bf16.gmra.mxu0 %v2359
      %v2398 = vpop.f32.mrf.mxu0
      %v2399 = vadd.f32 %v1068, %v2398
      %v2400 = vpop.f32.mrf.mxu0
      %v2401 = vpop.f32.mrf.mxu0
      %v2402 = vadd.f32 %v1069, %v2401
      %v2403 = vpop.f32.mrf.mxu0
      %2404 = vdwg.mxu0
      %v2406 = vsel %vm1699, %v1666, 0
      %v2409 = vsel %vm1699, %v1682, 0
      %2411 = vmatprep.subr.bf16.mxu0 0
      %2412 = vmatpush1.bf16.xpose.msra.mxu0 0
      %2413 = vmatprep.subr.bf16.mxu0 0
      %2414 = vmatpush1.bf16.xpose.msra.mxu0 0
      %2415 = vmatprep.subr.bf16.mxu0 0
      %2416 = vmatpush1.bf16.xpose.msra.mxu0 0
      %2417 = vmatprep.subr.bf16.mxu0 0
      %2418 = vmatpush1.bf16.xpose.msra.mxu0 0
      %2419 = vmatprep.subr.bf16.mxu0 0
      %2420 = vmatpush1.bf16.xpose.msra.mxu0 0
      %2421 = vmatprep.subr.bf16.mxu0 0
      %2422 = vmatpush1.bf16.xpose.msra.mxu0 0
      %2423 = vmatprep.subr.bf16.mxu0 0
      %2424 = vmatpush1.bf16.xpose.msra.mxu0 0
      %2425 = vmatprep.subr.bf16.mxu0 0
      %2426 = vmatpush1.bf16.xpose.msra.mxu0 %v2409
      %2427 = vmatprep.subr.bf16.mxu0 0
      %2428 = vmatpush2.bf16.xpose.msra.mxu0 0
      %2429 = vmatprep.subr.bf16.mxu0 0
      %2430 = vmatpush2.bf16.xpose.msra.mxu0 0
      %2431 = vmatprep.subr.bf16.mxu0 0
      %2432 = vmatpush2.bf16.xpose.msra.mxu0 0
      %2433 = vmatprep.subr.bf16.mxu0 0
      %2434 = vmatpush2.bf16.xpose.msra.mxu0 0
      %2435 = vmatprep.subr.bf16.mxu0 0
      %2436 = vmatpush2.bf16.xpose.msra.mxu0 0
      %2437 = vmatprep.subr.bf16.mxu0 0
      %2438 = vmatpush2.bf16.xpose.msra.mxu0 0
      %2439 = vmatprep.subr.bf16.mxu0 0
      %2440 = vmatpush2.bf16.xpose.msra.mxu0 0
      %2441 = vmatprep.subr.bf16.mxu0 0
      %2442 = vmatpush2.bf16.xpose.msra.mxu0 0
      %2443 = vmatprep.mubr.bf16.mxu0 0
      %2444 = vmatmul.mubr.bf16.gmra.mxu0 %v2406
      %v2445 = vpop.f32.mrf.mxu0
      %v2446 = vadd.f32 %v1070, %v2445
      %v2447 = vpop.f32.mrf.mxu0
      %v2448 = vpop.f32.mrf.mxu0
      %v2449 = vadd.f32 %v1071, %v2448
      %v2450 = vpop.f32.mrf.mxu0
      %2451 = vdwg.mxu0
      %v2452 = vsel %vm1699, %v1741, -inf
      %2453 = vmax.xlane.f32.xlu0 %v2452
      %v2454 = vpop.xlane.xlu0 %2453
      %v2455 = vsel %vm1699, %v1744, -inf
      %2456 = vmax.xlane.f32.xlu0 %v2455
      %v2457 = vpop.xlane.xlu0 %2456
      %v2458 = vsel %vm1699, %v1788, -inf
      %2459 = vmax.xlane.f32.xlu0 %v2458
      %v2460 = vpop.xlane.xlu0 %2459
      %v2461 = vsel %vm1699, %v1791, -inf
      %2462 = vmax.xlane.f32.xlu0 %v2461
      %v2463 = vpop.xlane.xlu0 %2462
      %v2464 = vsel %vm1699, %v1835, -inf
      %2465 = vmax.xlane.f32.xlu0 %v2464
      %v2466 = vpop.xlane.xlu0 %2465
      %v2467 = vsel %vm1699, %v1838, -inf
      %2468 = vmax.xlane.f32.xlu0 %v2467
      %v2469 = vpop.xlane.xlu0 %2468
      %v2470 = vsel %vm1699, %v1882, -inf
      %2471 = vmax.xlane.f32.xlu0 %v2470
      %v2472 = vpop.xlane.xlu0 %2471
      %v2473 = vsel %vm1699, %v1885, -inf
      %2474 = vmax.xlane.f32.xlu0 %v2473
      %v2475 = vpop.xlane.xlu0 %2474
      %v2476 = vsel %vm1699, %v1929, -inf
      %2477 = vmax.xlane.f32.xlu0 %v2476
      %v2478 = vpop.xlane.xlu0 %2477
      %v2479 = vsel %vm1699, %v1932, -inf
      %2480 = vmax.xlane.f32.xlu0 %v2479
      %v2481 = vpop.xlane.xlu0 %2480
      %v2482 = vsel %vm1699, %v1976, -inf
      %2483 = vmax.xlane.f32.xlu0 %v2482
      %v2484 = vpop.xlane.xlu0 %2483
      %v2485 = vsel %vm1699, %v1979, -inf
      %2486 = vmax.xlane.f32.xlu0 %v2485
      %v2487 = vpop.xlane.xlu0 %2486
      %v2488 = vsel %vm1699, %v2023, -inf
      %2489 = vmax.xlane.f32.xlu0 %v2488
      %v2490 = vpop.xlane.xlu0 %2489
      %v2491 = vsel %vm1699, %v2026, -inf
      %2492 = vmax.xlane.f32.xlu0 %v2491
      %v2493 = vpop.xlane.xlu0 %2492
      %v2494 = vsel %vm1699, %v2070, -inf
      %2495 = vmax.xlane.f32.xlu0 %v2494
      %v2496 = vpop.xlane.xlu0 %2495
      %v2497 = vsel %vm1699, %v2073, -inf
      %2498 = vmax.xlane.f32.xlu0 %v2497
      %v2499 = vpop.xlane.xlu0 %2498
      %v2500 = vsel %vm1699, %v2117, -inf
      %2501 = vmax.xlane.f32.xlu0 %v2500
      %v2502 = vpop.xlane.xlu0 %2501
      %v2503 = vsel %vm1699, %v2120, -inf
      %2504 = vmax.xlane.f32.xlu0 %v2503
      %v2505 = vpop.xlane.xlu0 %2504
      %v2506 = vsel %vm1699, %v2164, -inf
      %2507 = vmax.xlane.f32.xlu0 %v2506
      %v2508 = vpop.xlane.xlu0 %2507
      %v2509 = vsel %vm1699, %v2167, -inf
      %2510 = vmax.xlane.f32.xlu0 %v2509
      %v2511 = vpop.xlane.xlu0 %2510
      %v2512 = vsel %vm1699, %v2211, -inf
      %2513 = vmax.xlane.f32.xlu0 %v2512
      %v2514 = vpop.xlane.xlu0 %2513
      %v2515 = vsel %vm1699, %v2214, -inf
      %2516 = vmax.xlane.f32.xlu0 %v2515
      %v2517 = vpop.xlane.xlu0 %2516
      %v2518 = vsel %vm1699, %v2258, -inf
      %2519 = vmax.xlane.f32.xlu0 %v2518
      %v2520 = vpop.xlane.xlu0 %2519
      %v2521 = vsel %vm1699, %v2261, -inf
      %2522 = vmax.xlane.f32.xlu0 %v2521
      %v2523 = vpop.xlane.xlu0 %2522
      %v2524 = vsel %vm1699, %v2305, -inf
      %2525 = vmax.xlane.f32.xlu0 %v2524
      %v2526 = vpop.xlane.xlu0 %2525
      %v2527 = vsel %vm1699, %v2308, -inf
      %2528 = vmax.xlane.f32.xlu0 %v2527
      %v2529 = vpop.xlane.xlu0 %2528
      %v2530 = vsel %vm1699, %v2352, -inf
      %2531 = vmax.xlane.f32.xlu0 %v2530
      %v2532 = vpop.xlane.xlu0 %2531
      %v2533 = vsel %vm1699, %v2355, -inf
      %2534 = vmax.xlane.f32.xlu0 %v2533
      %v2535 = vpop.xlane.xlu0 %2534
      %v2536 = vsel %vm1699, %v2399, -inf
      %2537 = vmax.xlane.f32.xlu0 %v2536
      %v2538 = vpop.xlane.xlu0 %2537
      %v2539 = vsel %vm1699, %v2402, -inf
      %2540 = vmax.xlane.f32.xlu0 %v2539
      %v2541 = vpop.xlane.xlu0 %2540
      %v2542 = vsel %vm1699, %v2446, -inf
      %2543 = vmax.xlane.f32.xlu0 %v2542
      %v2544 = vpop.xlane.xlu0 %2543
      %v2545 = vsel %vm1699, %v2449, -inf
      %2546 = vmax.xlane.f32.xlu0 %v2545
      %v2547 = vpop.xlane.xlu0 %2546
      %v2548 = vsub.f32 %v1741, %v2454
      %v2549 = vsub.f32 %v1744, %v2457
      %v2550 = vsub.f32 %v1788, %v2460
      %v2551 = vsub.f32 %v1791, %v2463
      %v2552 = vsub.f32 %v1835, %v2466
      %v2553 = vsub.f32 %v1838, %v2469
      %v2554 = vsub.f32 %v1882, %v2472
      %v2555 = vsub.f32 %v1885, %v2475
      %v2556 = vsub.f32 %v1929, %v2478
      %v2557 = vsub.f32 %v1932, %v2481
      %v2558 = vsub.f32 %v1976, %v2484
      %v2559 = vsub.f32 %v1979, %v2487
      %v2560 = vsub.f32 %v2023, %v2490
      %v2561 = vsub.f32 %v2026, %v2493
      %v2562 = vsub.f32 %v2070, %v2496
      %v2563 = vsub.f32 %v2073, %v2499
      %v2564 = vsub.f32 %v2117, %v2502
      %v2565 = vsub.f32 %v2120, %v2505
      %v2566 = vsub.f32 %v2164, %v2508
      %v2567 = vsub.f32 %v2167, %v2511
      %v2568 = vsub.f32 %v2211, %v2514
      %v2569 = vsub.f32 %v2214, %v2517
      %v2570 = vsub.f32 %v2258, %v2520
      %v2571 = vsub.f32 %v2261, %v2523
      %v2572 = vsub.f32 %v2305, %v2526
      %v2573 = vsub.f32 %v2308, %v2529
      %v2574 = vsub.f32 %v2352, %v2532
      %v2575 = vsub.f32 %v2355, %v2535
      %v2576 = vsub.f32 %v2399, %v2538
      %v2577 = vsub.f32 %v2402, %v2541
      %v2578 = vsub.f32 %v2446, %v2544
      %v2579 = vsub.f32 %v2449, %v2547
      %v2580 = vmul.f32 %v2548, 1.442695
      %v2581 = vpow.pop %v2580
      %v2582 = vmul.f32 %v2549, 1.442695
      %v2583 = vpow.pop %v2582
      %v2584 = vmul.f32 %v2550, 1.442695
      %v2585 = vpow.pop %v2584
      %v2586 = vmul.f32 %v2551, 1.442695
      %v2587 = vpow.pop %v2586
      %v2588 = vmul.f32 %v2552, 1.442695
      %v2589 = vpow.pop %v2588
      %v2590 = vmul.f32 %v2553, 1.442695
      %v2591 = vpow.pop %v2590
      %v2592 = vmul.f32 %v2554, 1.442695
      %v2593 = vpow.pop %v2592
      %v2594 = vmul.f32 %v2555, 1.442695
      %v2595 = vpow.pop %v2594
      %v2596 = vmul.f32 %v2556, 1.442695
      %v2597 = vpow.pop %v2596
      %v2598 = vmul.f32 %v2557, 1.442695
      %v2599 = vpow.pop %v2598
      %v2600 = vmul.f32 %v2558, 1.442695
      %v2601 = vpow.pop %v2600
      %v2602 = vmul.f32 %v2559, 1.442695
      %v2603 = vpow.pop %v2602
      %v2604 = vmul.f32 %v2560, 1.442695
      %v2605 = vpow.pop %v2604
      %v2606 = vmul.f32 %v2561, 1.442695
      %v2607 = vpow.pop %v2606
      %v2608 = vmul.f32 %v2562, 1.442695
      %v2609 = vpow.pop %v2608
      %v2610 = vmul.f32 %v2563, 1.442695
      %v2611 = vpow.pop %v2610
      %v2612 = vmul.f32 %v2564, 1.442695
      %v2613 = vpow.pop %v2612
      %v2614 = vmul.f32 %v2565, 1.442695
      %v2615 = vpow.pop %v2614
      %v2616 = vmul.f32 %v2566, 1.442695
      %v2617 = vpow.pop %v2616
      %v2618 = vmul.f32 %v2567, 1.442695
      %v2619 = vpow.pop %v2618
      %v2620 = vmul.f32 %v2568, 1.442695
      %v2621 = vpow.pop %v2620
      %v2622 = vmul.f32 %v2569, 1.442695
      %v2623 = vpow.pop %v2622
      %v2624 = vmul.f32 %v2570, 1.442695
      %v2625 = vpow.pop %v2624
      %v2626 = vmul.f32 %v2571, 1.442695
      %v2627 = vpow.pop %v2626
      %v2628 = vmul.f32 %v2572, 1.442695
      %v2629 = vpow.pop %v2628
      %v2630 = vmul.f32 %v2573, 1.442695
      %v2631 = vpow.pop %v2630
      %v2632 = vmul.f32 %v2574, 1.442695
      %v2633 = vpow.pop %v2632
      %v2634 = vmul.f32 %v2575, 1.442695
      %v2635 = vpow.pop %v2634
      %v2636 = vmul.f32 %v2576, 1.442695
      %v2637 = vpow.pop %v2636
      %v2638 = vmul.f32 %v2577, 1.442695
      %v2639 = vpow.pop %v2638
      %v2640 = vmul.f32 %v2578, 1.442695
      %v2641 = vpow.pop %v2640
      %v2642 = vmul.f32 %v2579, 1.442695
      %v2643 = vpow.pop %v2642
      %v2644 = vsel %vm1699, %v2581, 0.0
      %2645 = vadd.xlane.f32.xlu0 %v2644
      %v2646 = vpop.xlane.xlu0 %2645
      %v2647 = vsel %vm1699, %v2583, 0.0
      %2648 = vadd.xlane.f32.xlu0 %v2647
      %v2649 = vpop.xlane.xlu0 %2648
      %v2650 = vsel %vm1699, %v2585, 0.0
      %2651 = vadd.xlane.f32.xlu0 %v2650
      %v2652 = vpop.xlane.xlu0 %2651
      %v2653 = vsel %vm1699, %v2587, 0.0
      %2654 = vadd.xlane.f32.xlu0 %v2653
      %v2655 = vpop.xlane.xlu0 %2654
      %v2656 = vsel %vm1699, %v2589, 0.0
      %2657 = vadd.xlane.f32.xlu0 %v2656
      %v2658 = vpop.xlane.xlu0 %2657
      %v2659 = vsel %vm1699, %v2591, 0.0
      %2660 = vadd.xlane.f32.xlu0 %v2659
      %v2661 = vpop.xlane.xlu0 %2660
      %v2662 = vsel %vm1699, %v2593, 0.0
      %2663 = vadd.xlane.f32.xlu0 %v2662
      %v2664 = vpop.xlane.xlu0 %2663
      %v2665 = vsel %vm1699, %v2595, 0.0
      %2666 = vadd.xlane.f32.xlu0 %v2665
      %v2667 = vpop.xlane.xlu0 %2666
      %v2668 = vsel %vm1699, %v2597, 0.0
      %2669 = vadd.xlane.f32.xlu0 %v2668
      %v2670 = vpop.xlane.xlu0 %2669
      %v2671 = vsel %vm1699, %v2599, 0.0
      %2672 = vadd.xlane.f32.xlu0 %v2671
      %v2673 = vpop.xlane.xlu0 %2672
      %v2674 = vsel %vm1699, %v2601, 0.0
      %2675 = vadd.xlane.f32.xlu0 %v2674
      %v2676 = vpop.xlane.xlu0 %2675
      %v2677 = vsel %vm1699, %v2603, 0.0
      %2678 = vadd.xlane.f32.xlu0 %v2677
      %v2679 = vpop.xlane.xlu0 %2678
      %v2680 = vsel %vm1699, %v2605, 0.0
      %2681 = vadd.xlane.f32.xlu0 %v2680
      %v2682 = vpop.xlane.xlu0 %2681
      %v2683 = vsel %vm1699, %v2607, 0.0
      %2684 = vadd.xlane.f32.xlu0 %v2683
      %v2685 = vpop.xlane.xlu0 %2684
      %v2686 = vsel %vm1699, %v2609, 0.0
      %2687 = vadd.xlane.f32.xlu0 %v2686
      %v2688 = vpop.xlane.xlu0 %2687
      %v2689 = vsel %vm1699, %v2611, 0.0
      %2690 = vadd.xlane.f32.xlu0 %v2689
      %v2691 = vpop.xlane.xlu0 %2690
      %v2692 = vsel %vm1699, %v2613, 0.0
      %2693 = vadd.xlane.f32.xlu0 %v2692
      %v2694 = vpop.xlane.xlu0 %2693
      %v2695 = vsel %vm1699, %v2615, 0.0
      %2696 = vadd.xlane.f32.xlu0 %v2695
      %v2697 = vpop.xlane.xlu0 %2696
      %v2698 = vsel %vm1699, %v2617, 0.0
      %2699 = vadd.xlane.f32.xlu0 %v2698
      %v2700 = vpop.xlane.xlu0 %2699
      %v2701 = vsel %vm1699, %v2619, 0.0
      %2702 = vadd.xlane.f32.xlu0 %v2701
      %v2703 = vpop.xlane.xlu0 %2702
      %v2704 = vsel %vm1699, %v2621, 0.0
      %2705 = vadd.xlane.f32.xlu0 %v2704
      %v2706 = vpop.xlane.xlu0 %2705
      %v2707 = vsel %vm1699, %v2623, 0.0
      %2708 = vadd.xlane.f32.xlu0 %v2707
      %v2709 = vpop.xlane.xlu0 %2708
      %v2710 = vsel %vm1699, %v2625, 0.0
      %2711 = vadd.xlane.f32.xlu0 %v2710
      %v2712 = vpop.xlane.xlu0 %2711
      %v2713 = vsel %vm1699, %v2627, 0.0
      %2714 = vadd.xlane.f32.xlu0 %v2713
      %v2715 = vpop.xlane.xlu0 %2714
      %v2716 = vsel %vm1699, %v2629, 0.0
      %2717 = vadd.xlane.f32.xlu0 %v2716
      %v2718 = vpop.xlane.xlu0 %2717
      %v2719 = vsel %vm1699, %v2631, 0.0
      %2720 = vadd.xlane.f32.xlu0 %v2719
      %v2721 = vpop.xlane.xlu0 %2720
      %v2722 = vsel %vm1699, %v2633, 0.0
      %2723 = vadd.xlane.f32.xlu0 %v2722
      %v2724 = vpop.xlane.xlu0 %2723
      %v2725 = vsel %vm1699, %v2635, 0.0
      %2726 = vadd.xlane.f32.xlu0 %v2725
      %v2727 = vpop.xlane.xlu0 %2726
      %v2728 = vsel %vm1699, %v2637, 0.0
      %2729 = vadd.xlane.f32.xlu0 %v2728
      %v2730 = vpop.xlane.xlu0 %2729
      %v2731 = vsel %vm1699, %v2639, 0.0
      %2732 = vadd.xlane.f32.xlu0 %v2731
      %v2733 = vpop.xlane.xlu0 %2732
      %v2734 = vsel %vm1699, %v2641, 0.0
      %2735 = vadd.xlane.f32.xlu0 %v2734
      %v2736 = vpop.xlane.xlu0 %2735
      %v2737 = vsel %vm1699, %v2643, 0.0
      %2738 = vadd.xlane.f32.xlu0 %v2737
      %v2739 = vpop.xlane.xlu0 %2738
      %v2740 = vrcp.pop %v2646
      %v2741 = vrcp.pop %v2649
      %v2742 = vrcp.pop %v2652
      %v2743 = vrcp.pop %v2655
      %v2744 = vrcp.pop %v2658
      %v2745 = vrcp.pop %v2661
      %v2746 = vrcp.pop %v2664
      %v2747 = vrcp.pop %v2667
      %v2748 = vrcp.pop %v2670
      %v2749 = vrcp.pop %v2673
      %v2750 = vrcp.pop %v2676
      %v2751 = vrcp.pop %v2679
      %v2752 = vrcp.pop %v2682
      %v2753 = vrcp.pop %v2685
      %v2754 = vrcp.pop %v2688
      %v2755 = vrcp.pop %v2691
      %v2756 = vrcp.pop %v2694
      %v2757 = vrcp.pop %v2697
      %v2758 = vrcp.pop %v2700
      %v2759 = vrcp.pop %v2703
      %v2760 = vrcp.pop %v2706
      %v2761 = vrcp.pop %v2709
      %v2762 = vrcp.pop %v2712
      %v2763 = vrcp.pop %v2715
      %v2764 = vrcp.pop %v2718
      %v2765 = vrcp.pop %v2721
      %v2766 = vrcp.pop %v2724
      %v2767 = vrcp.pop %v2727
      %v2768 = vrcp.pop %v2730
      %v2769 = vrcp.pop %v2733
      %v2770 = vrcp.pop %v2736
      %v2771 = vrcp.pop %v2739
      %v2772 = vmul.f32 %v2581, %v2740
      %v2773 = vmul.f32 %v2583, %v2741
      %v2774 = vmul.f32 %v2585, %v2742
      %v2775 = vmul.f32 %v2587, %v2743
      %v2776 = vmul.f32 %v2589, %v2744
      %v2777 = vmul.f32 %v2591, %v2745
      %v2778 = vmul.f32 %v2593, %v2746
      %v2779 = vmul.f32 %v2595, %v2747
      %v2780 = vmul.f32 %v2597, %v2748
      %v2781 = vmul.f32 %v2599, %v2749
      %v2782 = vmul.f32 %v2601, %v2750
      %v2783 = vmul.f32 %v2603, %v2751
      %v2784 = vmul.f32 %v2605, %v2752
      %v2785 = vmul.f32 %v2607, %v2753
      %v2786 = vmul.f32 %v2609, %v2754
      %v2787 = vmul.f32 %v2611, %v2755
      %v2788 = vmul.f32 %v2613, %v2756
      %v2789 = vmul.f32 %v2615, %v2757
      %v2790 = vmul.f32 %v2617, %v2758
      %v2791 = vmul.f32 %v2619, %v2759
      %v2792 = vmul.f32 %v2621, %v2760
      %v2793 = vmul.f32 %v2623, %v2761
      %v2794 = vmul.f32 %v2625, %v2762
      %v2795 = vmul.f32 %v2627, %v2763
      %v2796 = vmul.f32 %v2629, %v2764
      %v2797 = vmul.f32 %v2631, %v2765
      %v2798 = vmul.f32 %v2633, %v2766
      %v2799 = vmul.f32 %v2635, %v2767
      %v2800 = vmul.f32 %v2637, %v2768
      %v2801 = vmul.f32 %v2639, %v2769
      %v2802 = vmul.f32 %v2641, %v2770
      %v2803 = vmul.f32 %v2643, %v2771
      %v2804 = vpack.c.bf16 %v2773, %v2772
      %v2805 = vpack.c.bf16 %v2775, %v2774
      %v2806 = vpack.c.bf16 %v2777, %v2776
      %v2807 = vpack.c.bf16 %v2779, %v2778
      %v2808 = vpack.c.bf16 %v2781, %v2780
      %v2809 = vpack.c.bf16 %v2783, %v2782
      %v2810 = vpack.c.bf16 %v2785, %v2784
      %v2811 = vpack.c.bf16 %v2787, %v2786
      %v2812 = vpack.c.bf16 %v2789, %v2788
      %v2813 = vpack.c.bf16 %v2791, %v2790
      %v2814 = vpack.c.bf16 %v2793, %v2792
      %v2815 = vpack.c.bf16 %v2795, %v2794
      %v2816 = vpack.c.bf16 %v2797, %v2796
      %v2817 = vpack.c.bf16 %v2799, %v2798
      %v2818 = vpack.c.bf16 %v2801, %v2800
      %v2819 = vpack.c.bf16 %v2803, %v2802
      %v2821 = vsel %vm1699, %v2804, 0
      %2823 = vmatprep.subr.bf16.mxu0 0
      %2824 = vmatpush1.bf16.msra.mxu0 0
      %2825 = vmatprep.subr.bf16.mxu0 0
      %2826 = vmatpush1.bf16.msra.mxu0 0
      %2827 = vmatprep.subr.bf16.mxu0 0
      %2828 = vmatpush1.bf16.msra.mxu0 0
      %2829 = vmatprep.subr.bf16.mxu0 0
      %2830 = vmatpush1.bf16.msra.mxu0 0
      %2831 = vmatprep.subr.bf16.mxu0 0
      %2832 = vmatpush1.bf16.msra.mxu0 0
      %2833 = vmatprep.subr.bf16.mxu0 0
      %2834 = vmatpush1.bf16.msra.mxu0 0
      %2835 = vmatprep.subr.bf16.mxu0 0
      %2836 = vmatpush1.bf16.msra.mxu0 0
      %2837 = vmatprep.subr.bf16.mxu0 0
      %2838 = vmatpush1.bf16.msra.mxu0 %v1683
      %2839 = vmatprep.subr.bf16.mxu0 0
      %2840 = vmatpush2.bf16.msra.mxu0 0
      %2841 = vmatprep.subr.bf16.mxu0 0
      %2842 = vmatpush2.bf16.msra.mxu0 0
      %2843 = vmatprep.subr.bf16.mxu0 0
      %2844 = vmatpush2.bf16.msra.mxu0 0
      %2845 = vmatprep.subr.bf16.mxu0 0
      %2846 = vmatpush2.bf16.msra.mxu0 0
      %2847 = vmatprep.subr.bf16.mxu0 0
      %2848 = vmatpush2.bf16.msra.mxu0 0
      %2849 = vmatprep.subr.bf16.mxu0 0
      %2850 = vmatpush2.bf16.msra.mxu0 0
      %2851 = vmatprep.subr.bf16.mxu0 0
      %2852 = vmatpush2.bf16.msra.mxu0 0
      %2853 = vmatprep.subr.bf16.mxu0 0
      %2854 = vmatpush2.bf16.msra.mxu0 0
      %2855 = vmatprep.mubr.bf16.mxu0 0
      %2856 = vmatmul.mubr.bf16.gmra.mxu0 %v2821
      %v2857 = vpop.f32.mrf.mxu0
      %v2858 = vadd.f32 0.0, %v2857
      %v2859 = vpop.f32.mrf.mxu0
      %v2860 = vpop.f32.mrf.mxu0
      %v2861 = vadd.f32 0.0, %v2860
      %v2862 = vpop.f32.mrf.mxu0
      %2863 = vdwg.mxu0
      %v2865 = vsel %vm1699, %v2805, 0
      %2867 = vmatprep.subr.bf16.mxu0 0
      %2868 = vmatpush1.bf16.msra.mxu0 0
      %2869 = vmatprep.subr.bf16.mxu0 0
      %2870 = vmatpush1.bf16.msra.mxu0 0
      %2871 = vmatprep.subr.bf16.mxu0 0
      %2872 = vmatpush1.bf16.msra.mxu0 0
      %2873 = vmatprep.subr.bf16.mxu0 0
      %2874 = vmatpush1.bf16.msra.mxu0 0
      %2875 = vmatprep.subr.bf16.mxu0 0
      %2876 = vmatpush1.bf16.msra.mxu0 0
      %2877 = vmatprep.subr.bf16.mxu0 0
      %2878 = vmatpush1.bf16.msra.mxu0 0
      %2879 = vmatprep.subr.bf16.mxu0 0
      %2880 = vmatpush1.bf16.msra.mxu0 0
      %2881 = vmatprep.subr.bf16.mxu0 0
      %2882 = vmatpush1.bf16.msra.mxu0 %v1684
      %2883 = vmatprep.subr.bf16.mxu0 0
      %2884 = vmatpush2.bf16.msra.mxu0 0
      %2885 = vmatprep.subr.bf16.mxu0 0
      %2886 = vmatpush2.bf16.msra.mxu0 0
      %2887 = vmatprep.subr.bf16.mxu0 0
      %2888 = vmatpush2.bf16.msra.mxu0 0
      %2889 = vmatprep.subr.bf16.mxu0 0
      %2890 = vmatpush2.bf16.msra.mxu0 0
      %2891 = vmatprep.subr.bf16.mxu0 0
      %2892 = vmatpush2.bf16.msra.mxu0 0
      %2893 = vmatprep.subr.bf16.mxu0 0
      %2894 = vmatpush2.bf16.msra.mxu0 0
      %2895 = vmatprep.subr.bf16.mxu0 0
      %2896 = vmatpush2.bf16.msra.mxu0 0
      %2897 = vmatprep.subr.bf16.mxu0 0
      %2898 = vmatpush2.bf16.msra.mxu0 0
      %2899 = vmatprep.mubr.bf16.mxu0 0
      %2900 = vmatmul.mubr.bf16.gmra.mxu0 %v2865
      %v2901 = vpop.f32.mrf.mxu0
      %v2902 = vadd.f32 0.0, %v2901
      %v2903 = vpop.f32.mrf.mxu0
      %v2904 = vpop.f32.mrf.mxu0
      %v2905 = vadd.f32 0.0, %v2904
      %v2906 = vpop.f32.mrf.mxu0
      %2907 = vdwg.mxu0
      %v2909 = vsel %vm1699, %v2806, 0
      %2911 = vmatprep.subr.bf16.mxu0 0
      %2912 = vmatpush1.bf16.msra.mxu0 0
      %2913 = vmatprep.subr.bf16.mxu0 0
      %2914 = vmatpush1.bf16.msra.mxu0 0
      %2915 = vmatprep.subr.bf16.mxu0 0
      %2916 = vmatpush1.bf16.msra.mxu0 0
      %2917 = vmatprep.subr.bf16.mxu0 0
      %2918 = vmatpush1.bf16.msra.mxu0 0
      %2919 = vmatprep.subr.bf16.mxu0 0
      %2920 = vmatpush1.bf16.msra.mxu0 0
      %2921 = vmatprep.subr.bf16.mxu0 0
      %2922 = vmatpush1.bf16.msra.mxu0 0
      %2923 = vmatprep.subr.bf16.mxu0 0
      %2924 = vmatpush1.bf16.msra.mxu0 0
      %2925 = vmatprep.subr.bf16.mxu0 0
      %2926 = vmatpush1.bf16.msra.mxu0 %v1685
      %2927 = vmatprep.subr.bf16.mxu0 0
      %2928 = vmatpush2.bf16.msra.mxu0 0
      %2929 = vmatprep.subr.bf16.mxu0 0
      %2930 = vmatpush2.bf16.msra.mxu0 0
      %2931 = vmatprep.subr.bf16.mxu0 0
      %2932 = vmatpush2.bf16.msra.mxu0 0
      %2933 = vmatprep.subr.bf16.mxu0 0
      %2934 = vmatpush2.bf16.msra.mxu0 0
      %2935 = vmatprep.subr.bf16.mxu0 0
      %2936 = vmatpush2.bf16.msra.mxu0 0
      %2937 = vmatprep.subr.bf16.mxu0 0
      %2938 = vmatpush2.bf16.msra.mxu0 0
      %2939 = vmatprep.subr.bf16.mxu0 0
      %2940 = vmatpush2.bf16.msra.mxu0 0
      %2941 = vmatprep.subr.bf16.mxu0 0
      %2942 = vmatpush2.bf16.msra.mxu0 0
      %2943 = vmatprep.mubr.bf16.mxu0 0
      %2944 = vmatmul.mubr.bf16.gmra.mxu0 %v2909
      %v2945 = vpop.f32.mrf.mxu0
      %v2946 = vadd.f32 0.0, %v2945
      %v2947 = vpop.f32.mrf.mxu0
      %v2948 = vpop.f32.mrf.mxu0
      %v2949 = vadd.f32 0.0, %v2948
      %v2950 = vpop.f32.mrf.mxu0
      %2951 = vdwg.mxu0
      %v2953 = vsel %vm1699, %v2807, 0
      %2955 = vmatprep.subr.bf16.mxu0 0
      %2956 = vmatpush1.bf16.msra.mxu0 0
      %2957 = vmatprep.subr.bf16.mxu0 0
      %2958 = vmatpush1.bf16.msra.mxu0 0
      %2959 = vmatprep.subr.bf16.mxu0 0
      %2960 = vmatpush1.bf16.msra.mxu0 0
      %2961 = vmatprep.subr.bf16.mxu0 0
      %2962 = vmatpush1.bf16.msra.mxu0 0
      %2963 = vmatprep.subr.bf16.mxu0 0
      %2964 = vmatpush1.bf16.msra.mxu0 0
      %2965 = vmatprep.subr.bf16.mxu0 0
      %2966 = vmatpush1.bf16.msra.mxu0 0
      %2967 = vmatprep.subr.bf16.mxu0 0
      %2968 = vmatpush1.bf16.msra.mxu0 0
      %2969 = vmatprep.subr.bf16.mxu0 0
      %2970 = vmatpush1.bf16.msra.mxu0 %v1686
      %2971 = vmatprep.subr.bf16.mxu0 0
      %2972 = vmatpush2.bf16.msra.mxu0 0
      %2973 = vmatprep.subr.bf16.mxu0 0
      %2974 = vmatpush2.bf16.msra.mxu0 0
      %2975 = vmatprep.subr.bf16.mxu0 0
      %2976 = vmatpush2.bf16.msra.mxu0 0
      %2977 = vmatprep.subr.bf16.mxu0 0
      %2978 = vmatpush2.bf16.msra.mxu0 0
      %2979 = vmatprep.subr.bf16.mxu0 0
      %2980 = vmatpush2.bf16.msra.mxu0 0
      %2981 = vmatprep.subr.bf16.mxu0 0
      %2982 = vmatpush2.bf16.msra.mxu0 0
      %2983 = vmatprep.subr.bf16.mxu0 0
      %2984 = vmatpush2.bf16.msra.mxu0 0
      %2985 = vmatprep.subr.bf16.mxu0 0
      %2986 = vmatpush2.bf16.msra.mxu0 0
      %2987 = vmatprep.mubr.bf16.mxu0 0
      %2988 = vmatmul.mubr.bf16.gmra.mxu0 %v2953
      %v2989 = vpop.f32.mrf.mxu0
      %v2990 = vadd.f32 0.0, %v2989
      %v2991 = vpop.f32.mrf.mxu0
      %v2992 = vpop.f32.mrf.mxu0
      %v2993 = vadd.f32 0.0, %v2992
      %v2994 = vpop.f32.mrf.mxu0
      %2995 = vdwg.mxu0
      %v2997 = vsel %vm1699, %v2808, 0
      %2999 = vmatprep.subr.bf16.mxu0 0
      %3000 = vmatpush1.bf16.msra.mxu0 0
      %3001 = vmatprep.subr.bf16.mxu0 0
      %3002 = vmatpush1.bf16.msra.mxu0 0
      %3003 = vmatprep.subr.bf16.mxu0 0
      %3004 = vmatpush1.bf16.msra.mxu0 0
      %3005 = vmatprep.subr.bf16.mxu0 0
      %3006 = vmatpush1.bf16.msra.mxu0 0
      %3007 = vmatprep.subr.bf16.mxu0 0
      %3008 = vmatpush1.bf16.msra.mxu0 0
      %3009 = vmatprep.subr.bf16.mxu0 0
      %3010 = vmatpush1.bf16.msra.mxu0 0
      %3011 = vmatprep.subr.bf16.mxu0 0
      %3012 = vmatpush1.bf16.msra.mxu0 0
      %3013 = vmatprep.subr.bf16.mxu0 0
      %3014 = vmatpush1.bf16.msra.mxu0 %v1687
      %3015 = vmatprep.subr.bf16.mxu0 0
      %3016 = vmatpush2.bf16.msra.mxu0 0
      %3017 = vmatprep.subr.bf16.mxu0 0
      %3018 = vmatpush2.bf16.msra.mxu0 0
      %3019 = vmatprep.subr.bf16.mxu0 0
      %3020 = vmatpush2.bf16.msra.mxu0 0
      %3021 = vmatprep.subr.bf16.mxu0 0
      %3022 = vmatpush2.bf16.msra.mxu0 0
      %3023 = vmatprep.subr.bf16.mxu0 0
      %3024 = vmatpush2.bf16.msra.mxu0 0
      %3025 = vmatprep.subr.bf16.mxu0 0
      %3026 = vmatpush2.bf16.msra.mxu0 0
      %3027 = vmatprep.subr.bf16.mxu0 0
      %3028 = vmatpush2.bf16.msra.mxu0 0
      %3029 = vmatprep.subr.bf16.mxu0 0
      %3030 = vmatpush2.bf16.msra.mxu0 0
      %3031 = vmatprep.mubr.bf16.mxu0 0
      %3032 = vmatmul.mubr.bf16.gmra.mxu0 %v2997
      %v3033 = vpop.f32.mrf.mxu0
      %v3034 = vadd.f32 0.0, %v3033
      %v3035 = vpop.f32.mrf.mxu0
      %v3036 = vpop.f32.mrf.mxu0
      %v3037 = vadd.f32 0.0, %v3036
      %v3038 = vpop.f32.mrf.mxu0
      %3039 = vdwg.mxu0
      %v3041 = vsel %vm1699, %v2809, 0
      %3043 = vmatprep.subr.bf16.mxu0 0
      %3044 = vmatpush1.bf16.msra.mxu0 0
      %3045 = vmatprep.subr.bf16.mxu0 0
      %3046 = vmatpush1.bf16.msra.mxu0 0
      %3047 = vmatprep.subr.bf16.mxu0 0
      %3048 = vmatpush1.bf16.msra.mxu0 0
      %3049 = vmatprep.subr.bf16.mxu0 0
      %3050 = vmatpush1.bf16.msra.mxu0 0
      %3051 = vmatprep.subr.bf16.mxu0 0
      %3052 = vmatpush1.bf16.msra.mxu0 0
      %3053 = vmatprep.subr.bf16.mxu0 0
      %3054 = vmatpush1.bf16.msra.mxu0 0
      %3055 = vmatprep.subr.bf16.mxu0 0
      %3056 = vmatpush1.bf16.msra.mxu0 0
      %3057 = vmatprep.subr.bf16.mxu0 0
      %3058 = vmatpush1.bf16.msra.mxu0 %v1688
      %3059 = vmatprep.subr.bf16.mxu0 0
      %3060 = vmatpush2.bf16.msra.mxu0 0
      %3061 = vmatprep.subr.bf16.mxu0 0
      %3062 = vmatpush2.bf16.msra.mxu0 0
      %3063 = vmatprep.subr.bf16.mxu0 0
      %3064 = vmatpush2.bf16.msra.mxu0 0
      %3065 = vmatprep.subr.bf16.mxu0 0
      %3066 = vmatpush2.bf16.msra.mxu0 0
      %3067 = vmatprep.subr.bf16.mxu0 0
      %3068 = vmatpush2.bf16.msra.mxu0 0
      %3069 = vmatprep.subr.bf16.mxu0 0
      %3070 = vmatpush2.bf16.msra.mxu0 0
      %3071 = vmatprep.subr.bf16.mxu0 0
      %3072 = vmatpush2.bf16.msra.mxu0 0
      %3073 = vmatprep.subr.bf16.mxu0 0
      %3074 = vmatpush2.bf16.msra.mxu0 0
      %3075 = vmatprep.mubr.bf16.mxu0 0
      %3076 = vmatmul.mubr.bf16.gmra.mxu0 %v3041
      %v3077 = vpop.f32.mrf.mxu0
      %v3078 = vadd.f32 0.0, %v3077
      %v3079 = vpop.f32.mrf.mxu0
      %v3080 = vpop.f32.mrf.mxu0
      %v3081 = vadd.f32 0.0, %v3080
      %v3082 = vpop.f32.mrf.mxu0
      %3083 = vdwg.mxu0
      %v3085 = vsel %vm1699, %v2810, 0
      %3087 = vmatprep.subr.bf16.mxu0 0
      %3088 = vmatpush1.bf16.msra.mxu0 0
      %3089 = vmatprep.subr.bf16.mxu0 0
      %3090 = vmatpush1.bf16.msra.mxu0 0
      %3091 = vmatprep.subr.bf16.mxu0 0
      %3092 = vmatpush1.bf16.msra.mxu0 0
      %3093 = vmatprep.subr.bf16.mxu0 0
      %3094 = vmatpush1.bf16.msra.mxu0 0
      %3095 = vmatprep.subr.bf16.mxu0 0
      %3096 = vmatpush1.bf16.msra.mxu0 0
      %3097 = vmatprep.subr.bf16.mxu0 0
      %3098 = vmatpush1.bf16.msra.mxu0 0
      %3099 = vmatprep.subr.bf16.mxu0 0
      %3100 = vmatpush1.bf16.msra.mxu0 0
      %3101 = vmatprep.subr.bf16.mxu0 0
      %3102 = vmatpush1.bf16.msra.mxu0 %v1689
      %3103 = vmatprep.subr.bf16.mxu0 0
      %3104 = vmatpush2.bf16.msra.mxu0 0
      %3105 = vmatprep.subr.bf16.mxu0 0
      %3106 = vmatpush2.bf16.msra.mxu0 0
      %3107 = vmatprep.subr.bf16.mxu0 0
      %3108 = vmatpush2.bf16.msra.mxu0 0
      %3109 = vmatprep.subr.bf16.mxu0 0
      %3110 = vmatpush2.bf16.msra.mxu0 0
      %3111 = vmatprep.subr.bf16.mxu0 0
      %3112 = vmatpush2.bf16.msra.mxu0 0
      %3113 = vmatprep.subr.bf16.mxu0 0
      %3114 = vmatpush2.bf16.msra.mxu0 0
      %3115 = vmatprep.subr.bf16.mxu0 0
      %3116 = vmatpush2.bf16.msra.mxu0 0
      %3117 = vmatprep.subr.bf16.mxu0 0
      %3118 = vmatpush2.bf16.msra.mxu0 0
      %3119 = vmatprep.mubr.bf16.mxu0 0
      %3120 = vmatmul.mubr.bf16.gmra.mxu0 %v3085
      %v3121 = vpop.f32.mrf.mxu0
      %v3122 = vadd.f32 0.0, %v3121
      %v3123 = vpop.f32.mrf.mxu0
      %v3124 = vpop.f32.mrf.mxu0
      %v3125 = vadd.f32 0.0, %v3124
      %v3126 = vpop.f32.mrf.mxu0
      %3127 = vdwg.mxu0
      %v3129 = vsel %vm1699, %v2811, 0
      %3131 = vmatprep.subr.bf16.mxu0 0
      %3132 = vmatpush1.bf16.msra.mxu0 0
      %3133 = vmatprep.subr.bf16.mxu0 0
      %3134 = vmatpush1.bf16.msra.mxu0 0
      %3135 = vmatprep.subr.bf16.mxu0 0
      %3136 = vmatpush1.bf16.msra.mxu0 0
      %3137 = vmatprep.subr.bf16.mxu0 0
      %3138 = vmatpush1.bf16.msra.mxu0 0
      %3139 = vmatprep.subr.bf16.mxu0 0
      %3140 = vmatpush1.bf16.msra.mxu0 0
      %3141 = vmatprep.subr.bf16.mxu0 0
      %3142 = vmatpush1.bf16.msra.mxu0 0
      %3143 = vmatprep.subr.bf16.mxu0 0
      %3144 = vmatpush1.bf16.msra.mxu0 0
      %3145 = vmatprep.subr.bf16.mxu0 0
      %3146 = vmatpush1.bf16.msra.mxu0 %v1690
      %3147 = vmatprep.subr.bf16.mxu0 0
      %3148 = vmatpush2.bf16.msra.mxu0 0
      %3149 = vmatprep.subr.bf16.mxu0 0
      %3150 = vmatpush2.bf16.msra.mxu0 0
      %3151 = vmatprep.subr.bf16.mxu0 0
      %3152 = vmatpush2.bf16.msra.mxu0 0
      %3153 = vmatprep.subr.bf16.mxu0 0
      %3154 = vmatpush2.bf16.msra.mxu0 0
      %3155 = vmatprep.subr.bf16.mxu0 0
      %3156 = vmatpush2.bf16.msra.mxu0 0
      %3157 = vmatprep.subr.bf16.mxu0 0
      %3158 = vmatpush2.bf16.msra.mxu0 0
      %3159 = vmatprep.subr.bf16.mxu0 0
      %3160 = vmatpush2.bf16.msra.mxu0 0
      %3161 = vmatprep.subr.bf16.mxu0 0
      %3162 = vmatpush2.bf16.msra.mxu0 0
      %3163 = vmatprep.mubr.bf16.mxu0 0
      %3164 = vmatmul.mubr.bf16.gmra.mxu0 %v3129
      %v3165 = vpop.f32.mrf.mxu0
      %v3166 = vadd.f32 0.0, %v3165
      %v3167 = vpop.f32.mrf.mxu0
      %v3168 = vpop.f32.mrf.mxu0
      %v3169 = vadd.f32 0.0, %v3168
      %v3170 = vpop.f32.mrf.mxu0
      %3171 = vdwg.mxu0
      %v3173 = vsel %vm1699, %v2812, 0
      %3175 = vmatprep.subr.bf16.mxu0 0
      %3176 = vmatpush1.bf16.msra.mxu0 0
      %3177 = vmatprep.subr.bf16.mxu0 0
      %3178 = vmatpush1.bf16.msra.mxu0 0
      %3179 = vmatprep.subr.bf16.mxu0 0
      %3180 = vmatpush1.bf16.msra.mxu0 0
      %3181 = vmatprep.subr.bf16.mxu0 0
      %3182 = vmatpush1.bf16.msra.mxu0 0
      %3183 = vmatprep.subr.bf16.mxu0 0
      %3184 = vmatpush1.bf16.msra.mxu0 0
      %3185 = vmatprep.subr.bf16.mxu0 0
      %3186 = vmatpush1.bf16.msra.mxu0 0
      %3187 = vmatprep.subr.bf16.mxu0 0
      %3188 = vmatpush1.bf16.msra.mxu0 0
      %3189 = vmatprep.subr.bf16.mxu0 0
      %3190 = vmatpush1.bf16.msra.mxu0 %v1691
      %3191 = vmatprep.subr.bf16.mxu0 0
      %3192 = vmatpush2.bf16.msra.mxu0 0
      %3193 = vmatprep.subr.bf16.mxu0 0
      %3194 = vmatpush2.bf16.msra.mxu0 0
      %3195 = vmatprep.subr.bf16.mxu0 0
      %3196 = vmatpush2.bf16.msra.mxu0 0
      %3197 = vmatprep.subr.bf16.mxu0 0
      %3198 = vmatpush2.bf16.msra.mxu0 0
      %3199 = vmatprep.subr.bf16.mxu0 0
      %3200 = vmatpush2.bf16.msra.mxu0 0
      %3201 = vmatprep.subr.bf16.mxu0 0
      %3202 = vmatpush2.bf16.msra.mxu0 0
      %3203 = vmatprep.subr.bf16.mxu0 0
      %3204 = vmatpush2.bf16.msra.mxu0 0
      %3205 = vmatprep.subr.bf16.mxu0 0
      %3206 = vmatpush2.bf16.msra.mxu0 0
      %3207 = vmatprep.mubr.bf16.mxu0 0
      %3208 = vmatmul.mubr.bf16.gmra.mxu0 %v3173
      %v3209 = vpop.f32.mrf.mxu0
      %v3210 = vadd.f32 0.0, %v3209
      %v3211 = vpop.f32.mrf.mxu0
      %v3212 = vpop.f32.mrf.mxu0
      %v3213 = vadd.f32 0.0, %v3212
      %v3214 = vpop.f32.mrf.mxu0
      %3215 = vdwg.mxu0
      %v3217 = vsel %vm1699, %v2813, 0
      %3219 = vmatprep.subr.bf16.mxu0 0
      %3220 = vmatpush1.bf16.msra.mxu0 0
      %3221 = vmatprep.subr.bf16.mxu0 0
      %3222 = vmatpush1.bf16.msra.mxu0 0
      %3223 = vmatprep.subr.bf16.mxu0 0
      %3224 = vmatpush1.bf16.msra.mxu0 0
      %3225 = vmatprep.subr.bf16.mxu0 0
      %3226 = vmatpush1.bf16.msra.mxu0 0
      %3227 = vmatprep.subr.bf16.mxu0 0
      %3228 = vmatpush1.bf16.msra.mxu0 0
      %3229 = vmatprep.subr.bf16.mxu0 0
      %3230 = vmatpush1.bf16.msra.mxu0 0
      %3231 = vmatprep.subr.bf16.mxu0 0
      %3232 = vmatpush1.bf16.msra.mxu0 0
      %3233 = vmatprep.subr.bf16.mxu0 0
      %3234 = vmatpush1.bf16.msra.mxu0 %v1692
      %3235 = vmatprep.subr.bf16.mxu0 0
      %3236 = vmatpush2.bf16.msra.mxu0 0
      %3237 = vmatprep.subr.bf16.mxu0 0
      %3238 = vmatpush2.bf16.msra.mxu0 0
      %3239 = vmatprep.subr.bf16.mxu0 0
      %3240 = vmatpush2.bf16.msra.mxu0 0
      %3241 = vmatprep.subr.bf16.mxu0 0
      %3242 = vmatpush2.bf16.msra.mxu0 0
      %3243 = vmatprep.subr.bf16.mxu0 0
      %3244 = vmatpush2.bf16.msra.mxu0 0
      %3245 = vmatprep.subr.bf16.mxu0 0
      %3246 = vmatpush2.bf16.msra.mxu0 0
      %3247 = vmatprep.subr.bf16.mxu0 0
      %3248 = vmatpush2.bf16.msra.mxu0 0
      %3249 = vmatprep.subr.bf16.mxu0 0
      %3250 = vmatpush2.bf16.msra.mxu0 0
      %3251 = vmatprep.mubr.bf16.mxu0 0
      %3252 = vmatmul.mubr.bf16.gmra.mxu0 %v3217
      %v3253 = vpop.f32.mrf.mxu0
      %v3254 = vadd.f32 0.0, %v3253
      %v3255 = vpop.f32.mrf.mxu0
      %v3256 = vpop.f32.mrf.mxu0
      %v3257 = vadd.f32 0.0, %v3256
      %v3258 = vpop.f32.mrf.mxu0
      %3259 = vdwg.mxu0
      %v3261 = vsel %vm1699, %v2814, 0
      %3263 = vmatprep.subr.bf16.mxu0 0
      %3264 = vmatpush1.bf16.msra.mxu0 0
      %3265 = vmatprep.subr.bf16.mxu0 0
      %3266 = vmatpush1.bf16.msra.mxu0 0
      %3267 = vmatprep.subr.bf16.mxu0 0
      %3268 = vmatpush1.bf16.msra.mxu0 0
      %3269 = vmatprep.subr.bf16.mxu0 0
      %3270 = vmatpush1.bf16.msra.mxu0 0
      %3271 = vmatprep.subr.bf16.mxu0 0
      %3272 = vmatpush1.bf16.msra.mxu0 0
      %3273 = vmatprep.subr.bf16.mxu0 0
      %3274 = vmatpush1.bf16.msra.mxu0 0
      %3275 = vmatprep.subr.bf16.mxu0 0
      %3276 = vmatpush1.bf16.msra.mxu0 0
      %3277 = vmatprep.subr.bf16.mxu0 0
      %3278 = vmatpush1.bf16.msra.mxu0 %v1693
      %3279 = vmatprep.subr.bf16.mxu0 0
      %3280 = vmatpush2.bf16.msra.mxu0 0
      %3281 = vmatprep.subr.bf16.mxu0 0
      %3282 = vmatpush2.bf16.msra.mxu0 0
      %3283 = vmatprep.subr.bf16.mxu0 0
      %3284 = vmatpush2.bf16.msra.mxu0 0
      %3285 = vmatprep.subr.bf16.mxu0 0
      %3286 = vmatpush2.bf16.msra.mxu0 0
      %3287 = vmatprep.subr.bf16.mxu0 0
      %3288 = vmatpush2.bf16.msra.mxu0 0
      %3289 = vmatprep.subr.bf16.mxu0 0
      %3290 = vmatpush2.bf16.msra.mxu0 0
      %3291 = vmatprep.subr.bf16.mxu0 0
      %3292 = vmatpush2.bf16.msra.mxu0 0
      %3293 = vmatprep.subr.bf16.mxu0 0
      %3294 = vmatpush2.bf16.msra.mxu0 0
      %3295 = vmatprep.mubr.bf16.mxu0 0
      %3296 = vmatmul.mubr.bf16.gmra.mxu0 %v3261
      %v3297 = vpop.f32.mrf.mxu0
      %v3298 = vadd.f32 0.0, %v3297
      %v3299 = vpop.f32.mrf.mxu0
      %v3300 = vpop.f32.mrf.mxu0
      %v3301 = vadd.f32 0.0, %v3300
      %v3302 = vpop.f32.mrf.mxu0
      %3303 = vdwg.mxu0
      %v3305 = vsel %vm1699, %v2815, 0
      %3307 = vmatprep.subr.bf16.mxu0 0
      %3308 = vmatpush1.bf16.msra.mxu0 0
      %3309 = vmatprep.subr.bf16.mxu0 0
      %3310 = vmatpush1.bf16.msra.mxu0 0
      %3311 = vmatprep.subr.bf16.mxu0 0
      %3312 = vmatpush1.bf16.msra.mxu0 0
      %3313 = vmatprep.subr.bf16.mxu0 0
      %3314 = vmatpush1.bf16.msra.mxu0 0
      %3315 = vmatprep.subr.bf16.mxu0 0
      %3316 = vmatpush1.bf16.msra.mxu0 0
      %3317 = vmatprep.subr.bf16.mxu0 0
      %3318 = vmatpush1.bf16.msra.mxu0 0
      %3319 = vmatprep.subr.bf16.mxu0 0
      %3320 = vmatpush1.bf16.msra.mxu0 0
      %3321 = vmatprep.subr.bf16.mxu0 0
      %3322 = vmatpush1.bf16.msra.mxu0 %v1694
      %3323 = vmatprep.subr.bf16.mxu0 0
      %3324 = vmatpush2.bf16.msra.mxu0 0
      %3325 = vmatprep.subr.bf16.mxu0 0
      %3326 = vmatpush2.bf16.msra.mxu0 0
      %3327 = vmatprep.subr.bf16.mxu0 0
      %3328 = vmatpush2.bf16.msra.mxu0 0
      %3329 = vmatprep.subr.bf16.mxu0 0
      %3330 = vmatpush2.bf16.msra.mxu0 0
      %3331 = vmatprep.subr.bf16.mxu0 0
      %3332 = vmatpush2.bf16.msra.mxu0 0
      %3333 = vmatprep.subr.bf16.mxu0 0
      %3334 = vmatpush2.bf16.msra.mxu0 0
      %3335 = vmatprep.subr.bf16.mxu0 0
      %3336 = vmatpush2.bf16.msra.mxu0 0
      %3337 = vmatprep.subr.bf16.mxu0 0
      %3338 = vmatpush2.bf16.msra.mxu0 0
      %3339 = vmatprep.mubr.bf16.mxu0 0
      %3340 = vmatmul.mubr.bf16.gmra.mxu0 %v3305
      %v3341 = vpop.f32.mrf.mxu0
      %v3342 = vadd.f32 0.0, %v3341
      %v3343 = vpop.f32.mrf.mxu0
      %v3344 = vpop.f32.mrf.mxu0
      %v3345 = vadd.f32 0.0, %v3344
      %v3346 = vpop.f32.mrf.mxu0
      %3347 = vdwg.mxu0
      %v3349 = vsel %vm1699, %v2816, 0
      %3351 = vmatprep.subr.bf16.mxu0 0
      %3352 = vmatpush1.bf16.msra.mxu0 0
      %3353 = vmatprep.subr.bf16.mxu0 0
      %3354 = vmatpush1.bf16.msra.mxu0 0
      %3355 = vmatprep.subr.bf16.mxu0 0
      %3356 = vmatpush1.bf16.msra.mxu0 0
      %3357 = vmatprep.subr.bf16.mxu0 0
      %3358 = vmatpush1.bf16.msra.mxu0 0
      %3359 = vmatprep.subr.bf16.mxu0 0
      %3360 = vmatpush1.bf16.msra.mxu0 0
      %3361 = vmatprep.subr.bf16.mxu0 0
      %3362 = vmatpush1.bf16.msra.mxu0 0
      %3363 = vmatprep.subr.bf16.mxu0 0
      %3364 = vmatpush1.bf16.msra.mxu0 0
      %3365 = vmatprep.subr.bf16.mxu0 0
      %3366 = vmatpush1.bf16.msra.mxu0 %v1695
      %3367 = vmatprep.subr.bf16.mxu0 0
      %3368 = vmatpush2.bf16.msra.mxu0 0
      %3369 = vmatprep.subr.bf16.mxu0 0
      %3370 = vmatpush2.bf16.msra.mxu0 0
      %3371 = vmatprep.subr.bf16.mxu0 0
      %3372 = vmatpush2.bf16.msra.mxu0 0
      %3373 = vmatprep.subr.bf16.mxu0 0
      %3374 = vmatpush2.bf16.msra.mxu0 0
      %3375 = vmatprep.subr.bf16.mxu0 0
      %3376 = vmatpush2.bf16.msra.mxu0 0
      %3377 = vmatprep.subr.bf16.mxu0 0
      %3378 = vmatpush2.bf16.msra.mxu0 0
      %3379 = vmatprep.subr.bf16.mxu0 0
      %3380 = vmatpush2.bf16.msra.mxu0 0
      %3381 = vmatprep.subr.bf16.mxu0 0
      %3382 = vmatpush2.bf16.msra.mxu0 0
      %3383 = vmatprep.mubr.bf16.mxu0 0
      %3384 = vmatmul.mubr.bf16.gmra.mxu0 %v3349
      %v3385 = vpop.f32.mrf.mxu0
      %v3386 = vadd.f32 0.0, %v3385
      %v3387 = vpop.f32.mrf.mxu0
      %v3388 = vpop.f32.mrf.mxu0
      %v3389 = vadd.f32 0.0, %v3388
      %v3390 = vpop.f32.mrf.mxu0
      %3391 = vdwg.mxu0
      %v3393 = vsel %vm1699, %v2817, 0
      %3395 = vmatprep.subr.bf16.mxu0 0
      %3396 = vmatpush1.bf16.msra.mxu0 0
      %3397 = vmatprep.subr.bf16.mxu0 0
      %3398 = vmatpush1.bf16.msra.mxu0 0
      %3399 = vmatprep.subr.bf16.mxu0 0
      %3400 = vmatpush1.bf16.msra.mxu0 0
      %3401 = vmatprep.subr.bf16.mxu0 0
      %3402 = vmatpush1.bf16.msra.mxu0 0
      %3403 = vmatprep.subr.bf16.mxu0 0
      %3404 = vmatpush1.bf16.msra.mxu0 0
      %3405 = vmatprep.subr.bf16.mxu0 0
      %3406 = vmatpush1.bf16.msra.mxu0 0
      %3407 = vmatprep.subr.bf16.mxu0 0
      %3408 = vmatpush1.bf16.msra.mxu0 0
      %3409 = vmatprep.subr.bf16.mxu0 0
      %3410 = vmatpush1.bf16.msra.mxu0 %v1696
      %3411 = vmatprep.subr.bf16.mxu0 0
      %3412 = vmatpush2.bf16.msra.mxu0 0
      %3413 = vmatprep.subr.bf16.mxu0 0
      %3414 = vmatpush2.bf16.msra.mxu0 0
      %3415 = vmatprep.subr.bf16.mxu0 0
      %3416 = vmatpush2.bf16.msra.mxu0 0
      %3417 = vmatprep.subr.bf16.mxu0 0
      %3418 = vmatpush2.bf16.msra.mxu0 0
      %3419 = vmatprep.subr.bf16.mxu0 0
      %3420 = vmatpush2.bf16.msra.mxu0 0
      %3421 = vmatprep.subr.bf16.mxu0 0
      %3422 = vmatpush2.bf16.msra.mxu0 0
      %3423 = vmatprep.subr.bf16.mxu0 0
      %3424 = vmatpush2.bf16.msra.mxu0 0
      %3425 = vmatprep.subr.bf16.mxu0 0
      %3426 = vmatpush2.bf16.msra.mxu0 0
      %3427 = vmatprep.mubr.bf16.mxu0 0
      %3428 = vmatmul.mubr.bf16.gmra.mxu0 %v3393
      %v3429 = vpop.f32.mrf.mxu0
      %v3430 = vadd.f32 0.0, %v3429
      %v3431 = vpop.f32.mrf.mxu0
      %v3432 = vpop.f32.mrf.mxu0
      %v3433 = vadd.f32 0.0, %v3432
      %v3434 = vpop.f32.mrf.mxu0
      %3435 = vdwg.mxu0
      %v3437 = vsel %vm1699, %v2818, 0
      %3439 = vmatprep.subr.bf16.mxu0 0
      %3440 = vmatpush1.bf16.msra.mxu0 0
      %3441 = vmatprep.subr.bf16.mxu0 0
      %3442 = vmatpush1.bf16.msra.mxu0 0
      %3443 = vmatprep.subr.bf16.mxu0 0
      %3444 = vmatpush1.bf16.msra.mxu0 0
      %3445 = vmatprep.subr.bf16.mxu0 0
      %3446 = vmatpush1.bf16.msra.mxu0 0
      %3447 = vmatprep.subr.bf16.mxu0 0
      %3448 = vmatpush1.bf16.msra.mxu0 0
      %3449 = vmatprep.subr.bf16.mxu0 0
      %3450 = vmatpush1.bf16.msra.mxu0 0
      %3451 = vmatprep.subr.bf16.mxu0 0
      %3452 = vmatpush1.bf16.msra.mxu0 0
      %3453 = vmatprep.subr.bf16.mxu0 0
      %3454 = vmatpush1.bf16.msra.mxu0 %v1697
      %3455 = vmatprep.subr.bf16.mxu0 0
      %3456 = vmatpush2.bf16.msra.mxu0 0
      %3457 = vmatprep.subr.bf16.mxu0 0
      %3458 = vmatpush2.bf16.msra.mxu0 0
      %3459 = vmatprep.subr.bf16.mxu0 0
      %3460 = vmatpush2.bf16.msra.mxu0 0
      %3461 = vmatprep.subr.bf16.mxu0 0
      %3462 = vmatpush2.bf16.msra.mxu0 0
      %3463 = vmatprep.subr.bf16.mxu0 0
      %3464 = vmatpush2.bf16.msra.mxu0 0
      %3465 = vmatprep.subr.bf16.mxu0 0
      %3466 = vmatpush2.bf16.msra.mxu0 0
      %3467 = vmatprep.subr.bf16.mxu0 0
      %3468 = vmatpush2.bf16.msra.mxu0 0
      %3469 = vmatprep.subr.bf16.mxu0 0
      %3470 = vmatpush2.bf16.msra.mxu0 0
      %3471 = vmatprep.mubr.bf16.mxu0 0
      %3472 = vmatmul.mubr.bf16.gmra.mxu0 %v3437
      %v3473 = vpop.f32.mrf.mxu0
      %v3474 = vadd.f32 0.0, %v3473
      %v3475 = vpop.f32.mrf.mxu0
      %v3476 = vpop.f32.mrf.mxu0
      %v3477 = vadd.f32 0.0, %v3476
      %v3478 = vpop.f32.mrf.mxu0
      %3479 = vdwg.mxu0
      %v3481 = vsel %vm1699, %v2819, 0
      %3483 = vmatprep.subr.bf16.mxu0 0
      %3484 = vmatpush1.bf16.msra.mxu0 0
      %3485 = vmatprep.subr.bf16.mxu0 0
      %3486 = vmatpush1.bf16.msra.mxu0 0
      %3487 = vmatprep.subr.bf16.mxu0 0
      %3488 = vmatpush1.bf16.msra.mxu0 0
      %3489 = vmatprep.subr.bf16.mxu0 0
      %3490 = vmatpush1.bf16.msra.mxu0 0
      %3491 = vmatprep.subr.bf16.mxu0 0
      %3492 = vmatpush1.bf16.msra.mxu0 0
      %3493 = vmatprep.subr.bf16.mxu0 0
      %3494 = vmatpush1.bf16.msra.mxu0 0
      %3495 = vmatprep.subr.bf16.mxu0 0
      %3496 = vmatpush1.bf16.msra.mxu0 0
      %3497 = vmatprep.subr.bf16.mxu0 0
      %3498 = vmatpush1.bf16.msra.mxu0 %v1698
      %3499 = vmatprep.subr.bf16.mxu0 0
      %3500 = vmatpush2.bf16.msra.mxu0 0
      %3501 = vmatprep.subr.bf16.mxu0 0
      %3502 = vmatpush2.bf16.msra.mxu0 0
      %3503 = vmatprep.subr.bf16.mxu0 0
      %3504 = vmatpush2.bf16.msra.mxu0 0
      %3505 = vmatprep.subr.bf16.mxu0 0
      %3506 = vmatpush2.bf16.msra.mxu0 0
      %3507 = vmatprep.subr.bf16.mxu0 0
      %3508 = vmatpush2.bf16.msra.mxu0 0
      %3509 = vmatprep.subr.bf16.mxu0 0
      %3510 = vmatpush2.bf16.msra.mxu0 0
      %3511 = vmatprep.subr.bf16.mxu0 0
      %3512 = vmatpush2.bf16.msra.mxu0 0
      %3513 = vmatprep.subr.bf16.mxu0 0
      %3514 = vmatpush2.bf16.msra.mxu0 0
      %3515 = vmatprep.mubr.bf16.mxu0 0
      %3516 = vmatmul.mubr.bf16.gmra.mxu0 %v3481
      %v3517 = vpop.f32.mrf.mxu0
      %v3518 = vadd.f32 0.0, %v3517
      %v3519 = vpop.f32.mrf.mxu0
      %v3520 = vpop.f32.mrf.mxu0
      %v3521 = vadd.f32 0.0, %v3520
      %v3522 = vpop.f32.mrf.mxu0
      %3523 = vdwg.mxu0
      %v3524 = vpack.c.bf16 %v2861, %v2858
      %v3525 = vpack.c.bf16 %v2905, %v2902
      %v3526 = vpack.c.bf16 %v2949, %v2946
      %v3527 = vpack.c.bf16 %v2993, %v2990
      %v3528 = vpack.c.bf16 %v3037, %v3034
      %v3529 = vpack.c.bf16 %v3081, %v3078
      %v3530 = vpack.c.bf16 %v3125, %v3122
      %v3531 = vpack.c.bf16 %v3169, %v3166
      %v3532 = vpack.c.bf16 %v3213, %v3210
      %v3533 = vpack.c.bf16 %v3257, %v3254
      %v3534 = vpack.c.bf16 %v3301, %v3298
      %v3535 = vpack.c.bf16 %v3345, %v3342
      %v3536 = vpack.c.bf16 %v3389, %v3386
      %v3537 = vpack.c.bf16 %v3433, %v3430
      %v3538 = vpack.c.bf16 %v3477, %v3474
      %v3539 = vpack.c.bf16 %v3521, %v3518
      %v3540 = vld [vmem:[%s5] sm:$0xf]
      %v3541 = vld [vmem:[%s5 + $0x4] sm:$0xf]
      %s3542 = scalar_lea.vmem %s2, 16
      %v3543 = vld [vmem:[%s3542] sm:$0xf]
      %v3544 = vld [vmem:[%s3542 + $0x4] sm:$0xf]
      %v3545 = vld [vmem:[%s3542 + $0x8] sm:$0xf]
      %v3546 = vld [vmem:[%s3542 + $0xc] sm:$0xf]
      %v3551 = vunpack.c.l.b16 %v3543
      %v3552 = vunpack.c.l.b16 %v3544
      %v3553 = vunpack.c.l.b16 %v3545
      %v3554 = vunpack.c.l.b16 %v3546
      %v3555 = vpack.c.b16 %v3552, %v3551
      %v3556 = vpack.c.b16 %v3554, %v3553
      %3559 = vmatprep.subr.bf16.mxu0 0
      %3560 = vmatpush1.bf16.msra.mxu0 0
      %3561 = vmatprep.subr.bf16.mxu0 0
      %3562 = vmatpush1.bf16.msra.mxu0 0
      %3563 = vmatprep.subr.bf16.mxu0 0
      %3564 = vmatpush1.bf16.msra.mxu0 0
      %3565 = vmatprep.subr.bf16.mxu0 0
      %3566 = vmatpush1.bf16.msra.mxu0 0
      %3567 = vmatprep.subr.bf16.mxu0 0
      %3568 = vmatpush1.bf16.msra.mxu0 0
      %3569 = vmatprep.subr.bf16.mxu0 0
      %3570 = vmatpush1.bf16.msra.mxu0 0
      %3571 = vmatprep.subr.bf16.mxu0 0
      %3572 = vmatpush1.bf16.msra.mxu0 %v3556
      %3573 = vmatprep.subr.bf16.mxu0 0
      %3574 = vmatpush1.bf16.msra.mxu0 %v3555
      %3575 = vmatprep.subr.bf16.mxu0 0
      %3576 = vmatpush2.bf16.msra.mxu0 0
      %3577 = vmatprep.subr.bf16.mxu0 0
      %3578 = vmatpush2.bf16.msra.mxu0 0
      %3579 = vmatprep.subr.bf16.mxu0 0
      %3580 = vmatpush2.bf16.msra.mxu0 0
      %3581 = vmatprep.subr.bf16.mxu0 0
      %3582 = vmatpush2.bf16.msra.mxu0 0
      %3583 = vmatprep.subr.bf16.mxu0 0
      %3584 = vmatpush2.bf16.msra.mxu0 0
      %3585 = vmatprep.subr.bf16.mxu0 0
      %3586 = vmatpush2.bf16.msra.mxu0 0
      %3587 = vmatprep.subr.bf16.mxu0 0
      %3588 = vmatpush2.bf16.msra.mxu0 0
      %3589 = vmatprep.subr.bf16.mxu0 0
      %3590 = vmatpush2.bf16.msra.mxu0 0
      %3591 = vmatprep.mubr.bf16.mxu0 0
      %3592 = vmatmul.mubr.bf16.gmra.mxu0 %v1089
      %v3593 = vpop.f32.mrf.mxu0
      %v3594 = vadd.f32 0.0, %v3593
      %v3595 = vpop.f32.mrf.mxu0
      %v3596 = vpop.f32.mrf.mxu0
      %v3597 = vadd.f32 0.0, %v3596
      %v3598 = vpop.f32.mrf.mxu0
      %3599 = vmatprep.mubr.bf16.mxu0 0
      %3600 = vmatmul.mubr.bf16.gmra.mxu0 %v1092
      %v3601 = vpop.f32.mrf.mxu0
      %v3602 = vadd.f32 0.0, %v3601
      %v3603 = vpop.f32.mrf.mxu0
      %v3604 = vpop.f32.mrf.mxu0
      %v3605 = vadd.f32 0.0, %v3604
      %v3606 = vpop.f32.mrf.mxu0
      %3607 = vmatprep.mubr.bf16.mxu0 0
      %3608 = vmatmul.mubr.bf16.gmra.mxu0 %v1095
      %v3609 = vpop.f32.mrf.mxu0
      %v3610 = vadd.f32 0.0, %v3609
      %v3611 = vpop.f32.mrf.mxu0
      %v3612 = vpop.f32.mrf.mxu0
      %v3613 = vadd.f32 0.0, %v3612
      %v3614 = vpop.f32.mrf.mxu0
      %3615 = vmatprep.mubr.bf16.mxu0 0
      %3616 = vmatmul.mubr.bf16.gmra.mxu0 %v1098
      %v3617 = vpop.f32.mrf.mxu0
      %v3618 = vadd.f32 0.0, %v3617
      %v3619 = vpop.f32.mrf.mxu0
      %v3620 = vpop.f32.mrf.mxu0
      %v3621 = vadd.f32 0.0, %v3620
      %v3622 = vpop.f32.mrf.mxu0
      %3623 = vmatprep.mubr.bf16.mxu0 0
      %3624 = vmatmul.mubr.bf16.gmra.mxu0 %v1101
      %v3625 = vpop.f32.mrf.mxu0
      %v3626 = vadd.f32 0.0, %v3625
      %v3627 = vpop.f32.mrf.mxu0
      %v3628 = vpop.f32.mrf.mxu0
      %v3629 = vadd.f32 0.0, %v3628
      %v3630 = vpop.f32.mrf.mxu0
      %3631 = vmatprep.mubr.bf16.mxu0 0
      %3632 = vmatmul.mubr.bf16.gmra.mxu0 %v1104
      %v3633 = vpop.f32.mrf.mxu0
      %v3634 = vadd.f32 0.0, %v3633
      %v3635 = vpop.f32.mrf.mxu0
      %v3636 = vpop.f32.mrf.mxu0
      %v3637 = vadd.f32 0.0, %v3636
      %v3638 = vpop.f32.mrf.mxu0
      %3639 = vmatprep.mubr.bf16.mxu0 0
      %3640 = vmatmul.mubr.bf16.gmra.mxu0 %v1107
      %v3641 = vpop.f32.mrf.mxu0
      %v3642 = vadd.f32 0.0, %v3641
      %v3643 = vpop.f32.mrf.mxu0
      %v3644 = vpop.f32.mrf.mxu0
      %v3645 = vadd.f32 0.0, %v3644
      %v3646 = vpop.f32.mrf.mxu0
      %3647 = vmatprep.mubr.bf16.mxu0 0
      %3648 = vmatmul.mubr.bf16.gmra.mxu0 %v1110
      %v3649 = vpop.f32.mrf.mxu0
      %v3650 = vadd.f32 0.0, %v3649
      %v3651 = vpop.f32.mrf.mxu0
      %v3652 = vpop.f32.mrf.mxu0
      %v3653 = vadd.f32 0.0, %v3652
      %v3654 = vpop.f32.mrf.mxu0
      %3655 = vmatprep.mubr.bf16.mxu0 0
      %3656 = vmatmul.mubr.bf16.gmra.mxu0 %v1113
      %v3657 = vpop.f32.mrf.mxu0
      %v3658 = vadd.f32 0.0, %v3657
      %v3659 = vpop.f32.mrf.mxu0
      %v3660 = vpop.f32.mrf.mxu0
      %v3661 = vadd.f32 0.0, %v3660
      %v3662 = vpop.f32.mrf.mxu0
      %3663 = vmatprep.mubr.bf16.mxu0 0
      %3664 = vmatmul.mubr.bf16.gmra.mxu0 %v1116
      %v3665 = vpop.f32.mrf.mxu0
      %v3666 = vadd.f32 0.0, %v3665
      %v3667 = vpop.f32.mrf.mxu0
      %v3668 = vpop.f32.mrf.mxu0
      %v3669 = vadd.f32 0.0, %v3668
      %v3670 = vpop.f32.mrf.mxu0
      %3671 = vmatprep.mubr.bf16.mxu0 0
      %3672 = vmatmul.mubr.bf16.gmra.mxu0 %v1119
      %v3673 = vpop.f32.mrf.mxu0
      %v3674 = vadd.f32 0.0, %v3673
      %v3675 = vpop.f32.mrf.mxu0
      %v3676 = vpop.f32.mrf.mxu0
      %v3677 = vadd.f32 0.0, %v3676
      %v3678 = vpop.f32.mrf.mxu0
      %3679 = vmatprep.mubr.bf16.mxu0 0
      %3680 = vmatmul.mubr.bf16.gmra.mxu0 %v1122
      %v3681 = vpop.f32.mrf.mxu0
      %v3682 = vadd.f32 0.0, %v3681
      %v3683 = vpop.f32.mrf.mxu0
      %v3684 = vpop.f32.mrf.mxu0
      %v3685 = vadd.f32 0.0, %v3684
      %v3686 = vpop.f32.mrf.mxu0
      %3687 = vmatprep.mubr.bf16.mxu0 0
      %3688 = vmatmul.mubr.bf16.gmra.mxu0 %v1125
      %v3689 = vpop.f32.mrf.mxu0
      %v3690 = vadd.f32 0.0, %v3689
      %v3691 = vpop.f32.mrf.mxu0
      %v3692 = vpop.f32.mrf.mxu0
      %v3693 = vadd.f32 0.0, %v3692
      %v3694 = vpop.f32.mrf.mxu0
      %3695 = vmatprep.mubr.bf16.mxu0 0
      %3696 = vmatmul.mubr.bf16.gmra.mxu0 %v1128
      %v3697 = vpop.f32.mrf.mxu0
      %v3698 = vadd.f32 0.0, %v3697
      %v3699 = vpop.f32.mrf.mxu0
      %v3700 = vpop.f32.mrf.mxu0
      %v3701 = vadd.f32 0.0, %v3700
      %v3702 = vpop.f32.mrf.mxu0
      %3703 = vmatprep.mubr.bf16.mxu0 0
      %3704 = vmatmul.mubr.bf16.gmra.mxu0 %v1131
      %v3705 = vpop.f32.mrf.mxu0
      %v3706 = vadd.f32 0.0, %v3705
      %v3707 = vpop.f32.mrf.mxu0
      %v3708 = vpop.f32.mrf.mxu0
      %v3709 = vadd.f32 0.0, %v3708
      %v3710 = vpop.f32.mrf.mxu0
      %3711 = vmatprep.mubr.bf16.mxu0 0
      %3712 = vmatmul.mubr.bf16.gmra.mxu0 %v1134
      %v3713 = vpop.f32.mrf.mxu0
      %v3714 = vadd.f32 0.0, %v3713
      %v3715 = vpop.f32.mrf.mxu0
      %v3716 = vpop.f32.mrf.mxu0
      %v3717 = vadd.f32 0.0, %v3716
      %v3718 = vpop.f32.mrf.mxu0
      %3719 = vdwg.mxu0
      %s3720 = scalar_lea.vmem %s3, 16
      %v3721 = vld [vmem:[%s3720] sm:$0xf]
      %v3722 = vld [vmem:[%s3720 + $0x4] sm:$0xf]
      %v3723 = vld [vmem:[%s3720 + $0x8] sm:$0xf]
      %v3724 = vld [vmem:[%s3720 + $0xc] sm:$0xf]
      %v3729 = vunpack.c.l.b16 %v3721
      %v3730 = vunpack.c.l.b16 %v3722
      %v3731 = vunpack.c.l.b16 %v3723
      %v3732 = vunpack.c.l.b16 %v3724
      %v3733 = vpack.c.b16 %v3730, %v3729
      %v3734 = vpack.c.b16 %v3732, %v3731
      %3737 = vmatprep.subr.bf16.mxu0 0
      %3738 = vmatpush1.bf16.msra.mxu0 0
      %3739 = vmatprep.subr.bf16.mxu0 0
      %3740 = vmatpush1.bf16.msra.mxu0 0
      %3741 = vmatprep.subr.bf16.mxu0 0
      %3742 = vmatpush1.bf16.msra.mxu0 0
      %3743 = vmatprep.subr.bf16.mxu0 0
      %3744 = vmatpush1.bf16.msra.mxu0 0
      %3745 = vmatprep.subr.bf16.mxu0 0
      %3746 = vmatpush1.bf16.msra.mxu0 0
      %3747 = vmatprep.subr.bf16.mxu0 0
      %3748 = vmatpush1.bf16.msra.mxu0 0
      %3749 = vmatprep.subr.bf16.mxu0 0
      %3750 = vmatpush1.bf16.msra.mxu0 %v3734
      %3751 = vmatprep.subr.bf16.mxu0 0
      %3752 = vmatpush1.bf16.msra.mxu0 %v3733
      %3753 = vmatprep.subr.bf16.mxu0 0
      %3754 = vmatpush2.bf16.msra.mxu0 0
      %3755 = vmatprep.subr.bf16.mxu0 0
      %3756 = vmatpush2.bf16.msra.mxu0 0
      %3757 = vmatprep.subr.bf16.mxu0 0
      %3758 = vmatpush2.bf16.msra.mxu0 0
      %3759 = vmatprep.subr.bf16.mxu0 0
      %3760 = vmatpush2.bf16.msra.mxu0 0
      %3761 = vmatprep.subr.bf16.mxu0 0
      %3762 = vmatpush2.bf16.msra.mxu0 0
      %3763 = vmatprep.subr.bf16.mxu0 0
      %3764 = vmatpush2.bf16.msra.mxu0 0
      %3765 = vmatprep.subr.bf16.mxu0 0
      %3766 = vmatpush2.bf16.msra.mxu0 0
      %3767 = vmatprep.subr.bf16.mxu0 0
      %3768 = vmatpush2.bf16.msra.mxu0 0
      %3769 = vmatprep.mubr.bf16.mxu0 0
      %3770 = vmatmul.mubr.bf16.gmra.mxu0 %v1089
      %v3771 = vpop.f32.mrf.mxu0
      %v3772 = vadd.f32 0.0, %v3771
      %v3773 = vpop.f32.mrf.mxu0
      %v3774 = vpop.f32.mrf.mxu0
      %v3775 = vadd.f32 0.0, %v3774
      %v3776 = vpop.f32.mrf.mxu0
      %3777 = vmatprep.mubr.bf16.mxu0 0
      %3778 = vmatmul.mubr.bf16.gmra.mxu0 %v1092
      %v3779 = vpop.f32.mrf.mxu0
      %v3780 = vadd.f32 0.0, %v3779
      %v3781 = vpop.f32.mrf.mxu0
      %v3782 = vpop.f32.mrf.mxu0
      %v3783 = vadd.f32 0.0, %v3782
      %v3784 = vpop.f32.mrf.mxu0
      %3785 = vmatprep.mubr.bf16.mxu0 0
      %3786 = vmatmul.mubr.bf16.gmra.mxu0 %v1095
      %v3787 = vpop.f32.mrf.mxu0
      %v3788 = vadd.f32 0.0, %v3787
      %v3789 = vpop.f32.mrf.mxu0
      %v3790 = vpop.f32.mrf.mxu0
      %v3791 = vadd.f32 0.0, %v3790
      %v3792 = vpop.f32.mrf.mxu0
      %3793 = vmatprep.mubr.bf16.mxu0 0
      %3794 = vmatmul.mubr.bf16.gmra.mxu0 %v1098
      %v3795 = vpop.f32.mrf.mxu0
      %v3796 = vadd.f32 0.0, %v3795
      %v3797 = vpop.f32.mrf.mxu0
      %v3798 = vpop.f32.mrf.mxu0
      %v3799 = vadd.f32 0.0, %v3798
      %v3800 = vpop.f32.mrf.mxu0
      %3801 = vmatprep.mubr.bf16.mxu0 0
      %3802 = vmatmul.mubr.bf16.gmra.mxu0 %v1101
      %v3803 = vpop.f32.mrf.mxu0
      %v3804 = vadd.f32 0.0, %v3803
      %v3805 = vpop.f32.mrf.mxu0
      %v3806 = vpop.f32.mrf.mxu0
      %v3807 = vadd.f32 0.0, %v3806
      %v3808 = vpop.f32.mrf.mxu0
      %3809 = vmatprep.mubr.bf16.mxu0 0
      %3810 = vmatmul.mubr.bf16.gmra.mxu0 %v1104
      %v3811 = vpop.f32.mrf.mxu0
      %v3812 = vadd.f32 0.0, %v3811
      %v3813 = vpop.f32.mrf.mxu0
      %v3814 = vpop.f32.mrf.mxu0
      %v3815 = vadd.f32 0.0, %v3814
      %v3816 = vpop.f32.mrf.mxu0
      %3817 = vmatprep.mubr.bf16.mxu0 0
      %3818 = vmatmul.mubr.bf16.gmra.mxu0 %v1107
      %v3819 = vpop.f32.mrf.mxu0
      %v3820 = vadd.f32 0.0, %v3819
      %v3821 = vpop.f32.mrf.mxu0
      %v3822 = vpop.f32.mrf.mxu0
      %v3823 = vadd.f32 0.0, %v3822
      %v3824 = vpop.f32.mrf.mxu0
      %3825 = vmatprep.mubr.bf16.mxu0 0
      %3826 = vmatmul.mubr.bf16.gmra.mxu0 %v1110
      %v3827 = vpop.f32.mrf.mxu0
      %v3828 = vadd.f32 0.0, %v3827
      %v3829 = vpop.f32.mrf.mxu0
      %v3830 = vpop.f32.mrf.mxu0
      %v3831 = vadd.f32 0.0, %v3830
      %v3832 = vpop.f32.mrf.mxu0
      %3833 = vmatprep.mubr.bf16.mxu0 0
      %3834 = vmatmul.mubr.bf16.gmra.mxu0 %v1113
      %v3835 = vpop.f32.mrf.mxu0
      %v3836 = vadd.f32 0.0, %v3835
      %v3837 = vpop.f32.mrf.mxu0
      %v3838 = vpop.f32.mrf.mxu0
      %v3839 = vadd.f32 0.0, %v3838
      %v3840 = vpop.f32.mrf.mxu0
      %3841 = vmatprep.mubr.bf16.mxu0 0
      %3842 = vmatmul.mubr.bf16.gmra.mxu0 %v1116
      %v3843 = vpop.f32.mrf.mxu0
      %v3844 = vadd.f32 0.0, %v3843
      %v3845 = vpop.f32.mrf.mxu0
      %v3846 = vpop.f32.mrf.mxu0
      %v3847 = vadd.f32 0.0, %v3846
      %v3848 = vpop.f32.mrf.mxu0
      %3849 = vmatprep.mubr.bf16.mxu0 0
      %3850 = vmatmul.mubr.bf16.gmra.mxu0 %v1119
      %v3851 = vpop.f32.mrf.mxu0
      %v3852 = vadd.f32 0.0, %v3851
      %v3853 = vpop.f32.mrf.mxu0
      %v3854 = vpop.f32.mrf.mxu0
      %v3855 = vadd.f32 0.0, %v3854
      %v3856 = vpop.f32.mrf.mxu0
      %3857 = vmatprep.mubr.bf16.mxu0 0
      %3858 = vmatmul.mubr.bf16.gmra.mxu0 %v1122
      %v3859 = vpop.f32.mrf.mxu0
      %v3860 = vadd.f32 0.0, %v3859
      %v3861 = vpop.f32.mrf.mxu0
      %v3862 = vpop.f32.mrf.mxu0
      %v3863 = vadd.f32 0.0, %v3862
      %v3864 = vpop.f32.mrf.mxu0
      %3865 = vmatprep.mubr.bf16.mxu0 0
      %3866 = vmatmul.mubr.bf16.gmra.mxu0 %v1125
      %v3867 = vpop.f32.mrf.mxu0
      %v3868 = vadd.f32 0.0, %v3867
      %v3869 = vpop.f32.mrf.mxu0
      %v3870 = vpop.f32.mrf.mxu0
      %v3871 = vadd.f32 0.0, %v3870
      %v3872 = vpop.f32.mrf.mxu0
      %3873 = vmatprep.mubr.bf16.mxu0 0
      %3874 = vmatmul.mubr.bf16.gmra.mxu0 %v1128
      %v3875 = vpop.f32.mrf.mxu0
      %v3876 = vadd.f32 0.0, %v3875
      %v3877 = vpop.f32.mrf.mxu0
      %v3878 = vpop.f32.mrf.mxu0
      %v3879 = vadd.f32 0.0, %v3878
      %v3880 = vpop.f32.mrf.mxu0
      %3881 = vmatprep.mubr.bf16.mxu0 0
      %3882 = vmatmul.mubr.bf16.gmra.mxu0 %v1131
      %v3883 = vpop.f32.mrf.mxu0
      %v3884 = vadd.f32 0.0, %v3883
      %v3885 = vpop.f32.mrf.mxu0
      %v3886 = vpop.f32.mrf.mxu0
      %v3887 = vadd.f32 0.0, %v3886
      %v3888 = vpop.f32.mrf.mxu0
      %3889 = vmatprep.mubr.bf16.mxu0 0
      %3890 = vmatmul.mubr.bf16.gmra.mxu0 %v1134
      %v3891 = vpop.f32.mrf.mxu0
      %v3892 = vadd.f32 0.0, %v3891
      %v3893 = vpop.f32.mrf.mxu0
      %v3894 = vpop.f32.mrf.mxu0
      %v3895 = vadd.f32 0.0, %v3894
      %v3896 = vpop.f32.mrf.mxu0
      %3897 = vdwg.mxu0
      %s3898 = scalar_lea.vmem %s4, 16
      %v3899 = vld [vmem:[%s3898] sm:$0xf]
      %v3900 = vld [vmem:[%s3898 + $0x4] sm:$0xf]
      %v3901 = vld [vmem:[%s3898 + $0x8] sm:$0xf]
      %v3902 = vld [vmem:[%s3898 + $0xc] sm:$0xf]
      %v3907 = vunpack.c.l.b16 %v3899
      %v3908 = vunpack.c.l.b16 %v3900
      %v3909 = vunpack.c.l.b16 %v3901
      %v3910 = vunpack.c.l.b16 %v3902
      %v3911 = vpack.c.b16 %v3908, %v3907
      %v3912 = vpack.c.b16 %v3910, %v3909
      %3915 = vmatprep.subr.bf16.mxu0 0
      %3916 = vmatpush1.bf16.msra.mxu0 0
      %3917 = vmatprep.subr.bf16.mxu0 0
      %3918 = vmatpush1.bf16.msra.mxu0 0
      %3919 = vmatprep.subr.bf16.mxu0 0
      %3920 = vmatpush1.bf16.msra.mxu0 0
      %3921 = vmatprep.subr.bf16.mxu0 0
      %3922 = vmatpush1.bf16.msra.mxu0 0
      %3923 = vmatprep.subr.bf16.mxu0 0
      %3924 = vmatpush1.bf16.msra.mxu0 0
      %3925 = vmatprep.subr.bf16.mxu0 0
      %3926 = vmatpush1.bf16.msra.mxu0 0
      %3927 = vmatprep.subr.bf16.mxu0 0
      %3928 = vmatpush1.bf16.msra.mxu0 %v3912
      %3929 = vmatprep.subr.bf16.mxu0 0
      %3930 = vmatpush1.bf16.msra.mxu0 %v3911
      %3931 = vmatprep.subr.bf16.mxu0 0
      %3932 = vmatpush2.bf16.msra.mxu0 0
      %3933 = vmatprep.subr.bf16.mxu0 0
      %3934 = vmatpush2.bf16.msra.mxu0 0
      %3935 = vmatprep.subr.bf16.mxu0 0
      %3936 = vmatpush2.bf16.msra.mxu0 0
      %3937 = vmatprep.subr.bf16.mxu0 0
      %3938 = vmatpush2.bf16.msra.mxu0 0
      %3939 = vmatprep.subr.bf16.mxu0 0
      %3940 = vmatpush2.bf16.msra.mxu0 0
      %3941 = vmatprep.subr.bf16.mxu0 0
      %3942 = vmatpush2.bf16.msra.mxu0 0
      %3943 = vmatprep.subr.bf16.mxu0 0
      %3944 = vmatpush2.bf16.msra.mxu0 0
      %3945 = vmatprep.subr.bf16.mxu0 0
      %3946 = vmatpush2.bf16.msra.mxu0 0
      %3947 = vmatprep.mubr.bf16.mxu0 0
      %3948 = vmatmul.mubr.bf16.gmra.mxu0 %v1089
      %v3949 = vpop.f32.mrf.mxu0
      %v3950 = vadd.f32 0.0, %v3949
      %v3951 = vpop.f32.mrf.mxu0
      %v3952 = vpop.f32.mrf.mxu0
      %v3953 = vadd.f32 0.0, %v3952
      %v3954 = vpop.f32.mrf.mxu0
      %3955 = vmatprep.mubr.bf16.mxu0 0
      %3956 = vmatmul.mubr.bf16.gmra.mxu0 %v1092
      %v3957 = vpop.f32.mrf.mxu0
      %v3958 = vadd.f32 0.0, %v3957
      %v3959 = vpop.f32.mrf.mxu0
      %v3960 = vpop.f32.mrf.mxu0
      %v3961 = vadd.f32 0.0, %v3960
      %v3962 = vpop.f32.mrf.mxu0
      %3963 = vmatprep.mubr.bf16.mxu0 0
      %3964 = vmatmul.mubr.bf16.gmra.mxu0 %v1095
      %v3965 = vpop.f32.mrf.mxu0
      %v3966 = vadd.f32 0.0, %v3965
      %v3967 = vpop.f32.mrf.mxu0
      %v3968 = vpop.f32.mrf.mxu0
      %v3969 = vadd.f32 0.0, %v3968
      %v3970 = vpop.f32.mrf.mxu0
      %3971 = vmatprep.mubr.bf16.mxu0 0
      %3972 = vmatmul.mubr.bf16.gmra.mxu0 %v1098
      %v3973 = vpop.f32.mrf.mxu0
      %v3974 = vadd.f32 0.0, %v3973
      %v3975 = vpop.f32.mrf.mxu0
      %v3976 = vpop.f32.mrf.mxu0
      %v3977 = vadd.f32 0.0, %v3976
      %v3978 = vpop.f32.mrf.mxu0
      %3979 = vmatprep.mubr.bf16.mxu0 0
      %3980 = vmatmul.mubr.bf16.gmra.mxu0 %v1101
      %v3981 = vpop.f32.mrf.mxu0
      %v3982 = vadd.f32 0.0, %v3981
      %v3983 = vpop.f32.mrf.mxu0
      %v3984 = vpop.f32.mrf.mxu0
      %v3985 = vadd.f32 0.0, %v3984
      %v3986 = vpop.f32.mrf.mxu0
      %3987 = vmatprep.mubr.bf16.mxu0 0
      %3988 = vmatmul.mubr.bf16.gmra.mxu0 %v1104
      %v3989 = vpop.f32.mrf.mxu0
      %v3990 = vadd.f32 0.0, %v3989
      %v3991 = vpop.f32.mrf.mxu0
      %v3992 = vpop.f32.mrf.mxu0
      %v3993 = vadd.f32 0.0, %v3992
      %v3994 = vpop.f32.mrf.mxu0
      %3995 = vmatprep.mubr.bf16.mxu0 0
      %3996 = vmatmul.mubr.bf16.gmra.mxu0 %v1107
      %v3997 = vpop.f32.mrf.mxu0
      %v3998 = vadd.f32 0.0, %v3997
      %v3999 = vpop.f32.mrf.mxu0
      %v4000 = vpop.f32.mrf.mxu0
      %v4001 = vadd.f32 0.0, %v4000
      %v4002 = vpop.f32.mrf.mxu0
      %4003 = vmatprep.mubr.bf16.mxu0 0
      %4004 = vmatmul.mubr.bf16.gmra.mxu0 %v1110
      %v4005 = vpop.f32.mrf.mxu0
      %v4006 = vadd.f32 0.0, %v4005
      %v4007 = vpop.f32.mrf.mxu0
      %v4008 = vpop.f32.mrf.mxu0
      %v4009 = vadd.f32 0.0, %v4008
      %v4010 = vpop.f32.mrf.mxu0
      %4011 = vmatprep.mubr.bf16.mxu0 0
      %4012 = vmatmul.mubr.bf16.gmra.mxu0 %v1113
      %v4013 = vpop.f32.mrf.mxu0
      %v4014 = vadd.f32 0.0, %v4013
      %v4015 = vpop.f32.mrf.mxu0
      %v4016 = vpop.f32.mrf.mxu0
      %v4017 = vadd.f32 0.0, %v4016
      %v4018 = vpop.f32.mrf.mxu0
      %4019 = vmatprep.mubr.bf16.mxu0 0
      %4020 = vmatmul.mubr.bf16.gmra.mxu0 %v1116
      %v4021 = vpop.f32.mrf.mxu0
      %v4022 = vadd.f32 0.0, %v4021
      %v4023 = vpop.f32.mrf.mxu0
      %v4024 = vpop.f32.mrf.mxu0
      %v4025 = vadd.f32 0.0, %v4024
      %v4026 = vpop.f32.mrf.mxu0
      %4027 = vmatprep.mubr.bf16.mxu0 0
      %4028 = vmatmul.mubr.bf16.gmra.mxu0 %v1119
      %v4029 = vpop.f32.mrf.mxu0
      %v4030 = vadd.f32 0.0, %v4029
      %v4031 = vpop.f32.mrf.mxu0
      %v4032 = vpop.f32.mrf.mxu0
      %v4033 = vadd.f32 0.0, %v4032
      %v4034 = vpop.f32.mrf.mxu0
      %4035 = vmatprep.mubr.bf16.mxu0 0
      %4036 = vmatmul.mubr.bf16.gmra.mxu0 %v1122
      %v4037 = vpop.f32.mrf.mxu0
      %v4038 = vadd.f32 0.0, %v4037
      %v4039 = vpop.f32.mrf.mxu0
      %v4040 = vpop.f32.mrf.mxu0
      %v4041 = vadd.f32 0.0, %v4040
      %v4042 = vpop.f32.mrf.mxu0
      %4043 = vmatprep.mubr.bf16.mxu0 0
      %4044 = vmatmul.mubr.bf16.gmra.mxu0 %v1125
      %v4045 = vpop.f32.mrf.mxu0
      %v4046 = vadd.f32 0.0, %v4045
      %v4047 = vpop.f32.mrf.mxu0
      %v4048 = vpop.f32.mrf.mxu0
      %v4049 = vadd.f32 0.0, %v4048
      %v4050 = vpop.f32.mrf.mxu0
      %4051 = vmatprep.mubr.bf16.mxu0 0
      %4052 = vmatmul.mubr.bf16.gmra.mxu0 %v1128
      %v4053 = vpop.f32.mrf.mxu0
      %v4054 = vadd.f32 0.0, %v4053
      %v4055 = vpop.f32.mrf.mxu0
      %v4056 = vpop.f32.mrf.mxu0
      %v4057 = vadd.f32 0.0, %v4056
      %v4058 = vpop.f32.mrf.mxu0
      %4059 = vmatprep.mubr.bf16.mxu0 0
      %4060 = vmatmul.mubr.bf16.gmra.mxu0 %v1131
      %v4061 = vpop.f32.mrf.mxu0
      %v4062 = vadd.f32 0.0, %v4061
      %v4063 = vpop.f32.mrf.mxu0
      %v4064 = vpop.f32.mrf.mxu0
      %v4065 = vadd.f32 0.0, %v4064
      %v4066 = vpop.f32.mrf.mxu0
      %4067 = vmatprep.mubr.bf16.mxu0 0
      %4068 = vmatmul.mubr.bf16.gmra.mxu0 %v1134
      %v4069 = vpop.f32.mrf.mxu0
      %v4070 = vadd.f32 0.0, %v4069
      %v4071 = vpop.f32.mrf.mxu0
      %v4072 = vpop.f32.mrf.mxu0
      %v4073 = vadd.f32 0.0, %v4072
      %v4074 = vpop.f32.mrf.mxu0
      %4075 = vdwg.mxu0
      %v4076 = vpack.c.bf16 %v3597, %v3594
      %v4077 = vpack.c.bf16 %v3605, %v3602
      %v4078 = vpack.c.bf16 %v3613, %v3610
      %v4079 = vpack.c.bf16 %v3621, %v3618
      %v4080 = vpack.c.bf16 %v3629, %v3626
      %v4081 = vpack.c.bf16 %v3637, %v3634
      %v4082 = vpack.c.bf16 %v3645, %v3642
      %v4083 = vpack.c.bf16 %v3653, %v3650
      %v4084 = vpack.c.bf16 %v3661, %v3658
      %v4085 = vpack.c.bf16 %v3669, %v3666
      %v4086 = vpack.c.bf16 %v3677, %v3674
      %v4087 = vpack.c.bf16 %v3685, %v3682
      %v4088 = vpack.c.bf16 %v3693, %v3690
      %v4089 = vpack.c.bf16 %v3701, %v3698
      %v4090 = vpack.c.bf16 %v3709, %v3706
      %v4091 = vpack.c.bf16 %v3717, %v3714
      %v4092 = vpack.c.bf16 %v3775, %v3772
      %v4093 = vpack.c.bf16 %v3783, %v3780
      %v4094 = vpack.c.bf16 %v3791, %v3788
      %v4095 = vpack.c.bf16 %v3799, %v3796
      %v4096 = vpack.c.bf16 %v3807, %v3804
      %v4097 = vpack.c.bf16 %v3815, %v3812
      %v4098 = vpack.c.bf16 %v3823, %v3820
      %v4099 = vpack.c.bf16 %v3831, %v3828
      %v4100 = vpack.c.bf16 %v3839, %v3836
      %v4101 = vpack.c.bf16 %v3847, %v3844
      %v4102 = vpack.c.bf16 %v3855, %v3852
      %v4103 = vpack.c.bf16 %v3863, %v3860
      %v4104 = vpack.c.bf16 %v3871, %v3868
      %v4105 = vpack.c.bf16 %v3879, %v3876
      %v4106 = vpack.c.bf16 %v3887, %v3884
      %v4107 = vpack.c.bf16 %v3895, %v3892
      %v4108 = vpack.c.bf16 %v3953, %v3950
      %v4109 = vpack.c.bf16 %v3961, %v3958
      %v4110 = vpack.c.bf16 %v3969, %v3966
      %v4111 = vpack.c.bf16 %v3977, %v3974
      %v4112 = vpack.c.bf16 %v3985, %v3982
      %v4113 = vpack.c.bf16 %v3993, %v3990
      %v4114 = vpack.c.bf16 %v4001, %v3998
      %v4115 = vpack.c.bf16 %v4009, %v4006
      %v4116 = vpack.c.bf16 %v4017, %v4014
      %v4117 = vpack.c.bf16 %v4025, %v4022
      %v4118 = vpack.c.bf16 %v4033, %v4030
      %v4119 = vpack.c.bf16 %v4041, %v4038
      %v4120 = vpack.c.bf16 %v4049, %v4046
      %v4121 = vpack.c.bf16 %v4057, %v4054
      %v4122 = vpack.c.bf16 %v4065, %v4062
      %v4123 = vpack.c.bf16 %v4073, %v4070
      %v4125 = vsel %vm1699, %v4076, 0
      %v4128 = vsel %vm1699, %v4092, 0
      %4130 = vmatprep.subr.bf16.mxu0 0
      %4131 = vmatpush1.bf16.xpose.msra.mxu0 0
      %4132 = vmatprep.subr.bf16.mxu0 0
      %4133 = vmatpush1.bf16.xpose.msra.mxu0 0
      %4134 = vmatprep.subr.bf16.mxu0 0
      %4135 = vmatpush1.bf16.xpose.msra.mxu0 0
      %4136 = vmatprep.subr.bf16.mxu0 0
      %4137 = vmatpush1.bf16.xpose.msra.mxu0 0
      %4138 = vmatprep.subr.bf16.mxu0 0
      %4139 = vmatpush1.bf16.xpose.msra.mxu0 0
      %4140 = vmatprep.subr.bf16.mxu0 0
      %4141 = vmatpush1.bf16.xpose.msra.mxu0 0
      %4142 = vmatprep.subr.bf16.mxu0 0
      %4143 = vmatpush1.bf16.xpose.msra.mxu0 0
      %4144 = vmatprep.subr.bf16.mxu0 0
      %4145 = vmatpush1.bf16.xpose.msra.mxu0 %v4128
      %4146 = vmatprep.subr.bf16.mxu0 0
      %4147 = vmatpush2.bf16.xpose.msra.mxu0 0
      %4148 = vmatprep.subr.bf16.mxu0 0
      %4149 = vmatpush2.bf16.xpose.msra.mxu0 0
      %4150 = vmatprep.subr.bf16.mxu0 0
      %4151 = vmatpush2.bf16.xpose.msra.mxu0 0
      %4152 = vmatprep.subr.bf16.mxu0 0
      %4153 = vmatpush2.bf16.xpose.msra.mxu0 0
      %4154 = vmatprep.subr.bf16.mxu0 0
      %4155 = vmatpush2.bf16.xpose.msra.mxu0 0
      %4156 = vmatprep.subr.bf16.mxu0 0
      %4157 = vmatpush2.bf16.xpose.msra.mxu0 0
      %4158 = vmatprep.subr.bf16.mxu0 0
      %4159 = vmatpush2.bf16.xpose.msra.mxu0 0
      %4160 = vmatprep.subr.bf16.mxu0 0
      %4161 = vmatpush2.bf16.xpose.msra.mxu0 0
      %4162 = vmatprep.mubr.bf16.mxu0 0
      %4163 = vmatmul.mubr.bf16.gmra.mxu0 %v4125
      %v4164 = vpop.f32.mrf.mxu0
      %v4165 = vadd.f32 %v1040, %v4164
      %v4166 = vpop.f32.mrf.mxu0
      %v4167 = vpop.f32.mrf.mxu0
      %v4168 = vadd.f32 %v1041, %v4167
      %v4169 = vpop.f32.mrf.mxu0
      %4170 = vdwg.mxu0
      %v4172 = vsel %vm1699, %v4077, 0
      %v4175 = vsel %vm1699, %v4093, 0
      %4177 = vmatprep.subr.bf16.mxu0 0
      %4178 = vmatpush1.bf16.xpose.msra.mxu0 0
      %4179 = vmatprep.subr.bf16.mxu0 0
      %4180 = vmatpush1.bf16.xpose.msra.mxu0 0
      %4181 = vmatprep.subr.bf16.mxu0 0
      %4182 = vmatpush1.bf16.xpose.msra.mxu0 0
      %4183 = vmatprep.subr.bf16.mxu0 0
      %4184 = vmatpush1.bf16.xpose.msra.mxu0 0
      %4185 = vmatprep.subr.bf16.mxu0 0
      %4186 = vmatpush1.bf16.xpose.msra.mxu0 0
      %4187 = vmatprep.subr.bf16.mxu0 0
      %4188 = vmatpush1.bf16.xpose.msra.mxu0 0
      %4189 = vmatprep.subr.bf16.mxu0 0
      %4190 = vmatpush1.bf16.xpose.msra.mxu0 0
      %4191 = vmatprep.subr.bf16.mxu0 0
      %4192 = vmatpush1.bf16.xpose.msra.mxu0 %v4175
      %4193 = vmatprep.subr.bf16.mxu0 0
      %4194 = vmatpush2.bf16.xpose.msra.mxu0 0
      %4195 = vmatprep.subr.bf16.mxu0 0
      %4196 = vmatpush2.bf16.xpose.msra.mxu0 0
      %4197 = vmatprep.subr.bf16.mxu0 0
      %4198 = vmatpush2.bf16.xpose.msra.mxu0 0
      %4199 = vmatprep.subr.bf16.mxu0 0
      %4200 = vmatpush2.bf16.xpose.msra.mxu0 0
      %4201 = vmatprep.subr.bf16.mxu0 0
      %4202 = vmatpush2.bf16.xpose.msra.mxu0 0
      %4203 = vmatprep.subr.bf16.mxu0 0
      %4204 = vmatpush2.bf16.xpose.msra.mxu0 0
      %4205 = vmatprep.subr.bf16.mxu0 0
      %4206 = vmatpush2.bf16.xpose.msra.mxu0 0
      %4207 = vmatprep.subr.bf16.mxu0 0
      %4208 = vmatpush2.bf16.xpose.msra.mxu0 0
      %4209 = vmatprep.mubr.bf16.mxu0 0
      %4210 = vmatmul.mubr.bf16.gmra.mxu0 %v4172
      %v4211 = vpop.f32.mrf.mxu0
      %v4212 = vadd.f32 %v1042, %v4211
      %v4213 = vpop.f32.mrf.mxu0
      %v4214 = vpop.f32.mrf.mxu0
      %v4215 = vadd.f32 %v1043, %v4214
      %v4216 = vpop.f32.mrf.mxu0
      %4217 = vdwg.mxu0
      %v4219 = vsel %vm1699, %v4078, 0
      %v4222 = vsel %vm1699, %v4094, 0
      %4224 = vmatprep.subr.bf16.mxu0 0
      %4225 = vmatpush1.bf16.xpose.msra.mxu0 0
      %4226 = vmatprep.subr.bf16.mxu0 0
      %4227 = vmatpush1.bf16.xpose.msra.mxu0 0
      %4228 = vmatprep.subr.bf16.mxu0 0
      %4229 = vmatpush1.bf16.xpose.msra.mxu0 0
      %4230 = vmatprep.subr.bf16.mxu0 0
      %4231 = vmatpush1.bf16.xpose.msra.mxu0 0
      %4232 = vmatprep.subr.bf16.mxu0 0
      %4233 = vmatpush1.bf16.xpose.msra.mxu0 0
      %4234 = vmatprep.subr.bf16.mxu0 0
      %4235 = vmatpush1.bf16.xpose.msra.mxu0 0
      %4236 = vmatprep.subr.bf16.mxu0 0
      %4237 = vmatpush1.bf16.xpose.msra.mxu0 0
      %4238 = vmatprep.subr.bf16.mxu0 0
      %4239 = vmatpush1.bf16.xpose.msra.mxu0 %v4222
      %4240 = vmatprep.subr.bf16.mxu0 0
      %4241 = vmatpush2.bf16.xpose.msra.mxu0 0
      %4242 = vmatprep.subr.bf16.mxu0 0
      %4243 = vmatpush2.bf16.xpose.msra.mxu0 0
      %4244 = vmatprep.subr.bf16.mxu0 0
      %4245 = vmatpush2.bf16.xpose.msra.mxu0 0
      %4246 = vmatprep.subr.bf16.mxu0 0
      %4247 = vmatpush2.bf16.xpose.msra.mxu0 0
      %4248 = vmatprep.subr.bf16.mxu0 0
      %4249 = vmatpush2.bf16.xpose.msra.mxu0 0
      %4250 = vmatprep.subr.bf16.mxu0 0
      %4251 = vmatpush2.bf16.xpose.msra.mxu0 0
      %4252 = vmatprep.subr.bf16.mxu0 0
      %4253 = vmatpush2.bf16.xpose.msra.mxu0 0
      %4254 = vmatprep.subr.bf16.mxu0 0
      %4255 = vmatpush2.bf16.xpose.msra.mxu0 0
      %4256 = vmatprep.mubr.bf16.mxu0 0
      %4257 = vmatmul.mubr.bf16.gmra.mxu0 %v4219
      %v4258 = vpop.f32.mrf.mxu0
      %v4259 = vadd.f32 %v1044, %v4258
      %v4260 = vpop.f32.mrf.mxu0
      %v4261 = vpop.f32.mrf.mxu0
      %v4262 = vadd.f32 %v1045, %v4261
      %v4263 = vpop.f32.mrf.mxu0
      %4264 = vdwg.mxu0
      %v4266 = vsel %vm1699, %v4079, 0
      %v4269 = vsel %vm1699, %v4095, 0
      %4271 = vmatprep.subr.bf16.mxu0 0
      %4272 = vmatpush1.bf16.xpose.msra.mxu0 0
      %4273 = vmatprep.subr.bf16.mxu0 0
      %4274 = vmatpush1.bf16.xpose.msra.mxu0 0
      %4275 = vmatprep.subr.bf16.mxu0 0
      %4276 = vmatpush1.bf16.xpose.msra.mxu0 0
      %4277 = vmatprep.subr.bf16.mxu0 0
      %4278 = vmatpush1.bf16.xpose.msra.mxu0 0
      %4279 = vmatprep.subr.bf16.mxu0 0
      %4280 = vmatpush1.bf16.xpose.msra.mxu0 0
      %4281 = vmatprep.subr.bf16.mxu0 0
      %4282 = vmatpush1.bf16.xpose.msra.mxu0 0
      %4283 = vmatprep.subr.bf16.mxu0 0
      %4284 = vmatpush1.bf16.xpose.msra.mxu0 0
      %4285 = vmatprep.subr.bf16.mxu0 0
      %4286 = vmatpush1.bf16.xpose.msra.mxu0 %v4269
      %4287 = vmatprep.subr.bf16.mxu0 0
      %4288 = vmatpush2.bf16.xpose.msra.mxu0 0
      %4289 = vmatprep.subr.bf16.mxu0 0
      %4290 = vmatpush2.bf16.xpose.msra.mxu0 0
      %4291 = vmatprep.subr.bf16.mxu0 0
      %4292 = vmatpush2.bf16.xpose.msra.mxu0 0
      %4293 = vmatprep.subr.bf16.mxu0 0
      %4294 = vmatpush2.bf16.xpose.msra.mxu0 0
      %4295 = vmatprep.subr.bf16.mxu0 0
      %4296 = vmatpush2.bf16.xpose.msra.mxu0 0
      %4297 = vmatprep.subr.bf16.mxu0 0
      %4298 = vmatpush2.bf16.xpose.msra.mxu0 0
      %4299 = vmatprep.subr.bf16.mxu0 0
      %4300 = vmatpush2.bf16.xpose.msra.mxu0 0
      %4301 = vmatprep.subr.bf16.mxu0 0
      %4302 = vmatpush2.bf16.xpose.msra.mxu0 0
      %4303 = vmatprep.mubr.bf16.mxu0 0
      %4304 = vmatmul.mubr.bf16.gmra.mxu0 %v4266
      %v4305 = vpop.f32.mrf.mxu0
      %v4306 = vadd.f32 %v1046, %v4305
      %v4307 = vpop.f32.mrf.mxu0
      %v4308 = vpop.f32.mrf.mxu0
      %v4309 = vadd.f32 %v1047, %v4308
      %v4310 = vpop.f32.mrf.mxu0
      %4311 = vdwg.mxu0
      %v4313 = vsel %vm1699, %v4080, 0
      %v4316 = vsel %vm1699, %v4096, 0
      %4318 = vmatprep.subr.bf16.mxu0 0
      %4319 = vmatpush1.bf16.xpose.msra.mxu0 0
      %4320 = vmatprep.subr.bf16.mxu0 0
      %4321 = vmatpush1.bf16.xpose.msra.mxu0 0
      %4322 = vmatprep.subr.bf16.mxu0 0
      %4323 = vmatpush1.bf16.xpose.msra.mxu0 0
      %4324 = vmatprep.subr.bf16.mxu0 0
      %4325 = vmatpush1.bf16.xpose.msra.mxu0 0
      %4326 = vmatprep.subr.bf16.mxu0 0
      %4327 = vmatpush1.bf16.xpose.msra.mxu0 0
      %4328 = vmatprep.subr.bf16.mxu0 0
      %4329 = vmatpush1.bf16.xpose.msra.mxu0 0
      %4330 = vmatprep.subr.bf16.mxu0 0
      %4331 = vmatpush1.bf16.xpose.msra.mxu0 0
      %4332 = vmatprep.subr.bf16.mxu0 0
      %4333 = vmatpush1.bf16.xpose.msra.mxu0 %v4316
      %4334 = vmatprep.subr.bf16.mxu0 0
      %4335 = vmatpush2.bf16.xpose.msra.mxu0 0
      %4336 = vmatprep.subr.bf16.mxu0 0
      %4337 = vmatpush2.bf16.xpose.msra.mxu0 0
      %4338 = vmatprep.subr.bf16.mxu0 0
      %4339 = vmatpush2.bf16.xpose.msra.mxu0 0
      %4340 = vmatprep.subr.bf16.mxu0 0
      %4341 = vmatpush2.bf16.xpose.msra.mxu0 0
      %4342 = vmatprep.subr.bf16.mxu0 0
      %4343 = vmatpush2.bf16.xpose.msra.mxu0 0
      %4344 = vmatprep.subr.bf16.mxu0 0
      %4345 = vmatpush2.bf16.xpose.msra.mxu0 0
      %4346 = vmatprep.subr.bf16.mxu0 0
      %4347 = vmatpush2.bf16.xpose.msra.mxu0 0
      %4348 = vmatprep.subr.bf16.mxu0 0
      %4349 = vmatpush2.bf16.xpose.msra.mxu0 0
      %4350 = vmatprep.mubr.bf16.mxu0 0
      %4351 = vmatmul.mubr.bf16.gmra.mxu0 %v4313
      %v4352 = vpop.f32.mrf.mxu0
      %v4353 = vadd.f32 %v1048, %v4352
      %v4354 = vpop.f32.mrf.mxu0
      %v4355 = vpop.f32.mrf.mxu0
      %v4356 = vadd.f32 %v1049, %v4355
      %v4357 = vpop.f32.mrf.mxu0
      %4358 = vdwg.mxu0
      %v4360 = vsel %vm1699, %v4081, 0
      %v4363 = vsel %vm1699, %v4097, 0
      %4365 = vmatprep.subr.bf16.mxu0 0
      %4366 = vmatpush1.bf16.xpose.msra.mxu0 0
      %4367 = vmatprep.subr.bf16.mxu0 0
      %4368 = vmatpush1.bf16.xpose.msra.mxu0 0
      %4369 = vmatprep.subr.bf16.mxu0 0
      %4370 = vmatpush1.bf16.xpose.msra.mxu0 0
      %4371 = vmatprep.subr.bf16.mxu0 0
      %4372 = vmatpush1.bf16.xpose.msra.mxu0 0
      %4373 = vmatprep.subr.bf16.mxu0 0
      %4374 = vmatpush1.bf16.xpose.msra.mxu0 0
      %4375 = vmatprep.subr.bf16.mxu0 0
      %4376 = vmatpush1.bf16.xpose.msra.mxu0 0
      %4377 = vmatprep.subr.bf16.mxu0 0
      %4378 = vmatpush1.bf16.xpose.msra.mxu0 0
      %4379 = vmatprep.subr.bf16.mxu0 0
      %4380 = vmatpush1.bf16.xpose.msra.mxu0 %v4363
      %4381 = vmatprep.subr.bf16.mxu0 0
      %4382 = vmatpush2.bf16.xpose.msra.mxu0 0
      %4383 = vmatprep.subr.bf16.mxu0 0
      %4384 = vmatpush2.bf16.xpose.msra.mxu0 0
      %4385 = vmatprep.subr.bf16.mxu0 0
      %4386 = vmatpush2.bf16.xpose.msra.mxu0 0
      %4387 = vmatprep.subr.bf16.mxu0 0
      %4388 = vmatpush2.bf16.xpose.msra.mxu0 0
      %4389 = vmatprep.subr.bf16.mxu0 0
      %4390 = vmatpush2.bf16.xpose.msra.mxu0 0
      %4391 = vmatprep.subr.bf16.mxu0 0
      %4392 = vmatpush2.bf16.xpose.msra.mxu0 0
      %4393 = vmatprep.subr.bf16.mxu0 0
      %4394 = vmatpush2.bf16.xpose.msra.mxu0 0
      %4395 = vmatprep.subr.bf16.mxu0 0
      %4396 = vmatpush2.bf16.xpose.msra.mxu0 0
      %4397 = vmatprep.mubr.bf16.mxu0 0
      %4398 = vmatmul.mubr.bf16.gmra.mxu0 %v4360
      %v4399 = vpop.f32.mrf.mxu0
      %v4400 = vadd.f32 %v1050, %v4399
      %v4401 = vpop.f32.mrf.mxu0
      %v4402 = vpop.f32.mrf.mxu0
      %v4403 = vadd.f32 %v1051, %v4402
      %v4404 = vpop.f32.mrf.mxu0
      %4405 = vdwg.mxu0
      %v4407 = vsel %vm1699, %v4082, 0
      %v4410 = vsel %vm1699, %v4098, 0
      %4412 = vmatprep.subr.bf16.mxu0 0
      %4413 = vmatpush1.bf16.xpose.msra.mxu0 0
      %4414 = vmatprep.subr.bf16.mxu0 0
      %4415 = vmatpush1.bf16.xpose.msra.mxu0 0
      %4416 = vmatprep.subr.bf16.mxu0 0
      %4417 = vmatpush1.bf16.xpose.msra.mxu0 0
      %4418 = vmatprep.subr.bf16.mxu0 0
      %4419 = vmatpush1.bf16.xpose.msra.mxu0 0
      %4420 = vmatprep.subr.bf16.mxu0 0
      %4421 = vmatpush1.bf16.xpose.msra.mxu0 0
      %4422 = vmatprep.subr.bf16.mxu0 0
      %4423 = vmatpush1.bf16.xpose.msra.mxu0 0
      %4424 = vmatprep.subr.bf16.mxu0 0
      %4425 = vmatpush1.bf16.xpose.msra.mxu0 0
      %4426 = vmatprep.subr.bf16.mxu0 0
      %4427 = vmatpush1.bf16.xpose.msra.mxu0 %v4410
      %4428 = vmatprep.subr.bf16.mxu0 0
      %4429 = vmatpush2.bf16.xpose.msra.mxu0 0
      %4430 = vmatprep.subr.bf16.mxu0 0
      %4431 = vmatpush2.bf16.xpose.msra.mxu0 0
      %4432 = vmatprep.subr.bf16.mxu0 0
      %4433 = vmatpush2.bf16.xpose.msra.mxu0 0
      %4434 = vmatprep.subr.bf16.mxu0 0
      %4435 = vmatpush2.bf16.xpose.msra.mxu0 0
      %4436 = vmatprep.subr.bf16.mxu0 0
      %4437 = vmatpush2.bf16.xpose.msra.mxu0 0
      %4438 = vmatprep.subr.bf16.mxu0 0
      %4439 = vmatpush2.bf16.xpose.msra.mxu0 0
      %4440 = vmatprep.subr.bf16.mxu0 0
      %4441 = vmatpush2.bf16.xpose.msra.mxu0 0
      %4442 = vmatprep.subr.bf16.mxu0 0
      %4443 = vmatpush2.bf16.xpose.msra.mxu0 0
      %4444 = vmatprep.mubr.bf16.mxu0 0
      %4445 = vmatmul.mubr.bf16.gmra.mxu0 %v4407
      %v4446 = vpop.f32.mrf.mxu0
      %v4447 = vadd.f32 %v1052, %v4446
      %v4448 = vpop.f32.mrf.mxu0
      %v4449 = vpop.f32.mrf.mxu0
      %v4450 = vadd.f32 %v1053, %v4449
      %v4451 = vpop.f32.mrf.mxu0
      %4452 = vdwg.mxu0
      %v4454 = vsel %vm1699, %v4083, 0
      %v4457 = vsel %vm1699, %v4099, 0
      %4459 = vmatprep.subr.bf16.mxu0 0
      %4460 = vmatpush1.bf16.xpose.msra.mxu0 0
      %4461 = vmatprep.subr.bf16.mxu0 0
      %4462 = vmatpush1.bf16.xpose.msra.mxu0 0
      %4463 = vmatprep.subr.bf16.mxu0 0
      %4464 = vmatpush1.bf16.xpose.msra.mxu0 0
      %4465 = vmatprep.subr.bf16.mxu0 0
      %4466 = vmatpush1.bf16.xpose.msra.mxu0 0
      %4467 = vmatprep.subr.bf16.mxu0 0
      %4468 = vmatpush1.bf16.xpose.msra.mxu0 0
      %4469 = vmatprep.subr.bf16.mxu0 0
      %4470 = vmatpush1.bf16.xpose.msra.mxu0 0
      %4471 = vmatprep.subr.bf16.mxu0 0
      %4472 = vmatpush1.bf16.xpose.msra.mxu0 0
      %4473 = vmatprep.subr.bf16.mxu0 0
      %4474 = vmatpush1.bf16.xpose.msra.mxu0 %v4457
      %4475 = vmatprep.subr.bf16.mxu0 0
      %4476 = vmatpush2.bf16.xpose.msra.mxu0 0
      %4477 = vmatprep.subr.bf16.mxu0 0
      %4478 = vmatpush2.bf16.xpose.msra.mxu0 0
      %4479 = vmatprep.subr.bf16.mxu0 0
      %4480 = vmatpush2.bf16.xpose.msra.mxu0 0
      %4481 = vmatprep.subr.bf16.mxu0 0
      %4482 = vmatpush2.bf16.xpose.msra.mxu0 0
      %4483 = vmatprep.subr.bf16.mxu0 0
      %4484 = vmatpush2.bf16.xpose.msra.mxu0 0
      %4485 = vmatprep.subr.bf16.mxu0 0
      %4486 = vmatpush2.bf16.xpose.msra.mxu0 0
      %4487 = vmatprep.subr.bf16.mxu0 0
      %4488 = vmatpush2.bf16.xpose.msra.mxu0 0
      %4489 = vmatprep.subr.bf16.mxu0 0
      %4490 = vmatpush2.bf16.xpose.msra.mxu0 0
      %4491 = vmatprep.mubr.bf16.mxu0 0
      %4492 = vmatmul.mubr.bf16.gmra.mxu0 %v4454
      %v4493 = vpop.f32.mrf.mxu0
      %v4494 = vadd.f32 %v1054, %v4493
      %v4495 = vpop.f32.mrf.mxu0
      %v4496 = vpop.f32.mrf.mxu0
      %v4497 = vadd.f32 %v1055, %v4496
      %v4498 = vpop.f32.mrf.mxu0
      %4499 = vdwg.mxu0
      %v4501 = vsel %vm1699, %v4084, 0
      %v4504 = vsel %vm1699, %v4100, 0
      %4506 = vmatprep.subr.bf16.mxu0 0
      %4507 = vmatpush1.bf16.xpose.msra.mxu0 0
      %4508 = vmatprep.subr.bf16.mxu0 0
      %4509 = vmatpush1.bf16.xpose.msra.mxu0 0
      %4510 = vmatprep.subr.bf16.mxu0 0
      %4511 = vmatpush1.bf16.xpose.msra.mxu0 0
      %4512 = vmatprep.subr.bf16.mxu0 0
      %4513 = vmatpush1.bf16.xpose.msra.mxu0 0
      %4514 = vmatprep.subr.bf16.mxu0 0
      %4515 = vmatpush1.bf16.xpose.msra.mxu0 0
      %4516 = vmatprep.subr.bf16.mxu0 0
      %4517 = vmatpush1.bf16.xpose.msra.mxu0 0
      %4518 = vmatprep.subr.bf16.mxu0 0
      %4519 = vmatpush1.bf16.xpose.msra.mxu0 0
      %4520 = vmatprep.subr.bf16.mxu0 0
      %4521 = vmatpush1.bf16.xpose.msra.mxu0 %v4504
      %4522 = vmatprep.subr.bf16.mxu0 0
      %4523 = vmatpush2.bf16.xpose.msra.mxu0 0
      %4524 = vmatprep.subr.bf16.mxu0 0
      %4525 = vmatpush2.bf16.xpose.msra.mxu0 0
      %4526 = vmatprep.subr.bf16.mxu0 0
      %4527 = vmatpush2.bf16.xpose.msra.mxu0 0
      %4528 = vmatprep.subr.bf16.mxu0 0
      %4529 = vmatpush2.bf16.xpose.msra.mxu0 0
      %4530 = vmatprep.subr.bf16.mxu0 0
      %4531 = vmatpush2.bf16.xpose.msra.mxu0 0
      %4532 = vmatprep.subr.bf16.mxu0 0
      %4533 = vmatpush2.bf16.xpose.msra.mxu0 0
      %4534 = vmatprep.subr.bf16.mxu0 0
      %4535 = vmatpush2.bf16.xpose.msra.mxu0 0
      %4536 = vmatprep.subr.bf16.mxu0 0
      %4537 = vmatpush2.bf16.xpose.msra.mxu0 0
      %4538 = vmatprep.mubr.bf16.mxu0 0
      %4539 = vmatmul.mubr.bf16.gmra.mxu0 %v4501
      %v4540 = vpop.f32.mrf.mxu0
      %v4541 = vadd.f32 %v1056, %v4540
      %v4542 = vpop.f32.mrf.mxu0
      %v4543 = vpop.f32.mrf.mxu0
      %v4544 = vadd.f32 %v1057, %v4543
      %v4545 = vpop.f32.mrf.mxu0
      %4546 = vdwg.mxu0
      %v4548 = vsel %vm1699, %v4085, 0
      %v4551 = vsel %vm1699, %v4101, 0
      %4553 = vmatprep.subr.bf16.mxu0 0
      %4554 = vmatpush1.bf16.xpose.msra.mxu0 0
      %4555 = vmatprep.subr.bf16.mxu0 0
      %4556 = vmatpush1.bf16.xpose.msra.mxu0 0
      %4557 = vmatprep.subr.bf16.mxu0 0
      %4558 = vmatpush1.bf16.xpose.msra.mxu0 0
      %4559 = vmatprep.subr.bf16.mxu0 0
      %4560 = vmatpush1.bf16.xpose.msra.mxu0 0
      %4561 = vmatprep.subr.bf16.mxu0 0
      %4562 = vmatpush1.bf16.xpose.msra.mxu0 0
      %4563 = vmatprep.subr.bf16.mxu0 0
      %4564 = vmatpush1.bf16.xpose.msra.mxu0 0
      %4565 = vmatprep.subr.bf16.mxu0 0
      %4566 = vmatpush1.bf16.xpose.msra.mxu0 0
      %4567 = vmatprep.subr.bf16.mxu0 0
      %4568 = vmatpush1.bf16.xpose.msra.mxu0 %v4551
      %4569 = vmatprep.subr.bf16.mxu0 0
      %4570 = vmatpush2.bf16.xpose.msra.mxu0 0
      %4571 = vmatprep.subr.bf16.mxu0 0
      %4572 = vmatpush2.bf16.xpose.msra.mxu0 0
      %4573 = vmatprep.subr.bf16.mxu0 0
      %4574 = vmatpush2.bf16.xpose.msra.mxu0 0
      %4575 = vmatprep.subr.bf16.mxu0 0
      %4576 = vmatpush2.bf16.xpose.msra.mxu0 0
      %4577 = vmatprep.subr.bf16.mxu0 0
      %4578 = vmatpush2.bf16.xpose.msra.mxu0 0
      %4579 = vmatprep.subr.bf16.mxu0 0
      %4580 = vmatpush2.bf16.xpose.msra.mxu0 0
      %4581 = vmatprep.subr.bf16.mxu0 0
      %4582 = vmatpush2.bf16.xpose.msra.mxu0 0
      %4583 = vmatprep.subr.bf16.mxu0 0
      %4584 = vmatpush2.bf16.xpose.msra.mxu0 0
      %4585 = vmatprep.mubr.bf16.mxu0 0
      %4586 = vmatmul.mubr.bf16.gmra.mxu0 %v4548
      %v4587 = vpop.f32.mrf.mxu0
      %v4588 = vadd.f32 %v1058, %v4587
      %v4589 = vpop.f32.mrf.mxu0
      %v4590 = vpop.f32.mrf.mxu0
      %v4591 = vadd.f32 %v1059, %v4590
      %v4592 = vpop.f32.mrf.mxu0
      %4593 = vdwg.mxu0
      %v4595 = vsel %vm1699, %v4086, 0
      %v4598 = vsel %vm1699, %v4102, 0
      %4600 = vmatprep.subr.bf16.mxu0 0
      %4601 = vmatpush1.bf16.xpose.msra.mxu0 0
      %4602 = vmatprep.subr.bf16.mxu0 0
      %4603 = vmatpush1.bf16.xpose.msra.mxu0 0
      %4604 = vmatprep.subr.bf16.mxu0 0
      %4605 = vmatpush1.bf16.xpose.msra.mxu0 0
      %4606 = vmatprep.subr.bf16.mxu0 0
      %4607 = vmatpush1.bf16.xpose.msra.mxu0 0
      %4608 = vmatprep.subr.bf16.mxu0 0
      %4609 = vmatpush1.bf16.xpose.msra.mxu0 0
      %4610 = vmatprep.subr.bf16.mxu0 0
      %4611 = vmatpush1.bf16.xpose.msra.mxu0 0
      %4612 = vmatprep.subr.bf16.mxu0 0
      %4613 = vmatpush1.bf16.xpose.msra.mxu0 0
      %4614 = vmatprep.subr.bf16.mxu0 0
      %4615 = vmatpush1.bf16.xpose.msra.mxu0 %v4598
      %4616 = vmatprep.subr.bf16.mxu0 0
      %4617 = vmatpush2.bf16.xpose.msra.mxu0 0
      %4618 = vmatprep.subr.bf16.mxu0 0
      %4619 = vmatpush2.bf16.xpose.msra.mxu0 0
      %4620 = vmatprep.subr.bf16.mxu0 0
      %4621 = vmatpush2.bf16.xpose.msra.mxu0 0
      %4622 = vmatprep.subr.bf16.mxu0 0
      %4623 = vmatpush2.bf16.xpose.msra.mxu0 0
      %4624 = vmatprep.subr.bf16.mxu0 0
      %4625 = vmatpush2.bf16.xpose.msra.mxu0 0
      %4626 = vmatprep.subr.bf16.mxu0 0
      %4627 = vmatpush2.bf16.xpose.msra.mxu0 0
      %4628 = vmatprep.subr.bf16.mxu0 0
      %4629 = vmatpush2.bf16.xpose.msra.mxu0 0
      %4630 = vmatprep.subr.bf16.mxu0 0
      %4631 = vmatpush2.bf16.xpose.msra.mxu0 0
      %4632 = vmatprep.mubr.bf16.mxu0 0
      %4633 = vmatmul.mubr.bf16.gmra.mxu0 %v4595
      %v4634 = vpop.f32.mrf.mxu0
      %v4635 = vadd.f32 %v1060, %v4634
      %v4636 = vpop.f32.mrf.mxu0
      %v4637 = vpop.f32.mrf.mxu0
      %v4638 = vadd.f32 %v1061, %v4637
      %v4639 = vpop.f32.mrf.mxu0
      %4640 = vdwg.mxu0
      %v4642 = vsel %vm1699, %v4087, 0
      %v4645 = vsel %vm1699, %v4103, 0
      %4647 = vmatprep.subr.bf16.mxu0 0
      %4648 = vmatpush1.bf16.xpose.msra.mxu0 0
      %4649 = vmatprep.subr.bf16.mxu0 0
      %4650 = vmatpush1.bf16.xpose.msra.mxu0 0
      %4651 = vmatprep.subr.bf16.mxu0 0
      %4652 = vmatpush1.bf16.xpose.msra.mxu0 0
      %4653 = vmatprep.subr.bf16.mxu0 0
      %4654 = vmatpush1.bf16.xpose.msra.mxu0 0
      %4655 = vmatprep.subr.bf16.mxu0 0
      %4656 = vmatpush1.bf16.xpose.msra.mxu0 0
      %4657 = vmatprep.subr.bf16.mxu0 0
      %4658 = vmatpush1.bf16.xpose.msra.mxu0 0
      %4659 = vmatprep.subr.bf16.mxu0 0
      %4660 = vmatpush1.bf16.xpose.msra.mxu0 0
      %4661 = vmatprep.subr.bf16.mxu0 0
      %4662 = vmatpush1.bf16.xpose.msra.mxu0 %v4645
      %4663 = vmatprep.subr.bf16.mxu0 0
      %4664 = vmatpush2.bf16.xpose.msra.mxu0 0
      %4665 = vmatprep.subr.bf16.mxu0 0
      %4666 = vmatpush2.bf16.xpose.msra.mxu0 0
      %4667 = vmatprep.subr.bf16.mxu0 0
      %4668 = vmatpush2.bf16.xpose.msra.mxu0 0
      %4669 = vmatprep.subr.bf16.mxu0 0
      %4670 = vmatpush2.bf16.xpose.msra.mxu0 0
      %4671 = vmatprep.subr.bf16.mxu0 0
      %4672 = vmatpush2.bf16.xpose.msra.mxu0 0
      %4673 = vmatprep.subr.bf16.mxu0 0
      %4674 = vmatpush2.bf16.xpose.msra.mxu0 0
      %4675 = vmatprep.subr.bf16.mxu0 0
      %4676 = vmatpush2.bf16.xpose.msra.mxu0 0
      %4677 = vmatprep.subr.bf16.mxu0 0
      %4678 = vmatpush2.bf16.xpose.msra.mxu0 0
      %4679 = vmatprep.mubr.bf16.mxu0 0
      %4680 = vmatmul.mubr.bf16.gmra.mxu0 %v4642
      %v4681 = vpop.f32.mrf.mxu0
      %v4682 = vadd.f32 %v1062, %v4681
      %v4683 = vpop.f32.mrf.mxu0
      %v4684 = vpop.f32.mrf.mxu0
      %v4685 = vadd.f32 %v1063, %v4684
      %v4686 = vpop.f32.mrf.mxu0
      %4687 = vdwg.mxu0
      %v4689 = vsel %vm1699, %v4088, 0
      %v4692 = vsel %vm1699, %v4104, 0
      %4694 = vmatprep.subr.bf16.mxu0 0
      %4695 = vmatpush1.bf16.xpose.msra.mxu0 0
      %4696 = vmatprep.subr.bf16.mxu0 0
      %4697 = vmatpush1.bf16.xpose.msra.mxu0 0
      %4698 = vmatprep.subr.bf16.mxu0 0
      %4699 = vmatpush1.bf16.xpose.msra.mxu0 0
      %4700 = vmatprep.subr.bf16.mxu0 0
      %4701 = vmatpush1.bf16.xpose.msra.mxu0 0
      %4702 = vmatprep.subr.bf16.mxu0 0
      %4703 = vmatpush1.bf16.xpose.msra.mxu0 0
      %4704 = vmatprep.subr.bf16.mxu0 0
      %4705 = vmatpush1.bf16.xpose.msra.mxu0 0
      %4706 = vmatprep.subr.bf16.mxu0 0
      %4707 = vmatpush1.bf16.xpose.msra.mxu0 0
      %4708 = vmatprep.subr.bf16.mxu0 0
      %4709 = vmatpush1.bf16.xpose.msra.mxu0 %v4692
      %4710 = vmatprep.subr.bf16.mxu0 0
      %4711 = vmatpush2.bf16.xpose.msra.mxu0 0
      %4712 = vmatprep.subr.bf16.mxu0 0
      %4713 = vmatpush2.bf16.xpose.msra.mxu0 0
      %4714 = vmatprep.subr.bf16.mxu0 0
      %4715 = vmatpush2.bf16.xpose.msra.mxu0 0
      %4716 = vmatprep.subr.bf16.mxu0 0
      %4717 = vmatpush2.bf16.xpose.msra.mxu0 0
      %4718 = vmatprep.subr.bf16.mxu0 0
      %4719 = vmatpush2.bf16.xpose.msra.mxu0 0
      %4720 = vmatprep.subr.bf16.mxu0 0
      %4721 = vmatpush2.bf16.xpose.msra.mxu0 0
      %4722 = vmatprep.subr.bf16.mxu0 0
      %4723 = vmatpush2.bf16.xpose.msra.mxu0 0
      %4724 = vmatprep.subr.bf16.mxu0 0
      %4725 = vmatpush2.bf16.xpose.msra.mxu0 0
      %4726 = vmatprep.mubr.bf16.mxu0 0
      %4727 = vmatmul.mubr.bf16.gmra.mxu0 %v4689
      %v4728 = vpop.f32.mrf.mxu0
      %v4729 = vadd.f32 %v1064, %v4728
      %v4730 = vpop.f32.mrf.mxu0
      %v4731 = vpop.f32.mrf.mxu0
      %v4732 = vadd.f32 %v1065, %v4731
      %v4733 = vpop.f32.mrf.mxu0
      %4734 = vdwg.mxu0
      %v4736 = vsel %vm1699, %v4089, 0
      %v4739 = vsel %vm1699, %v4105, 0
      %4741 = vmatprep.subr.bf16.mxu0 0
      %4742 = vmatpush1.bf16.xpose.msra.mxu0 0
      %4743 = vmatprep.subr.bf16.mxu0 0
      %4744 = vmatpush1.bf16.xpose.msra.mxu0 0
      %4745 = vmatprep.subr.bf16.mxu0 0
      %4746 = vmatpush1.bf16.xpose.msra.mxu0 0
      %4747 = vmatprep.subr.bf16.mxu0 0
      %4748 = vmatpush1.bf16.xpose.msra.mxu0 0
      %4749 = vmatprep.subr.bf16.mxu0 0
      %4750 = vmatpush1.bf16.xpose.msra.mxu0 0
      %4751 = vmatprep.subr.bf16.mxu0 0
      %4752 = vmatpush1.bf16.xpose.msra.mxu0 0
      %4753 = vmatprep.subr.bf16.mxu0 0
      %4754 = vmatpush1.bf16.xpose.msra.mxu0 0
      %4755 = vmatprep.subr.bf16.mxu0 0
      %4756 = vmatpush1.bf16.xpose.msra.mxu0 %v4739
      %4757 = vmatprep.subr.bf16.mxu0 0
      %4758 = vmatpush2.bf16.xpose.msra.mxu0 0
      %4759 = vmatprep.subr.bf16.mxu0 0
      %4760 = vmatpush2.bf16.xpose.msra.mxu0 0
      %4761 = vmatprep.subr.bf16.mxu0 0
      %4762 = vmatpush2.bf16.xpose.msra.mxu0 0
      %4763 = vmatprep.subr.bf16.mxu0 0
      %4764 = vmatpush2.bf16.xpose.msra.mxu0 0
      %4765 = vmatprep.subr.bf16.mxu0 0
      %4766 = vmatpush2.bf16.xpose.msra.mxu0 0
      %4767 = vmatprep.subr.bf16.mxu0 0
      %4768 = vmatpush2.bf16.xpose.msra.mxu0 0
      %4769 = vmatprep.subr.bf16.mxu0 0
      %4770 = vmatpush2.bf16.xpose.msra.mxu0 0
      %4771 = vmatprep.subr.bf16.mxu0 0
      %4772 = vmatpush2.bf16.xpose.msra.mxu0 0
      %4773 = vmatprep.mubr.bf16.mxu0 0
      %4774 = vmatmul.mubr.bf16.gmra.mxu0 %v4736
      %v4775 = vpop.f32.mrf.mxu0
      %v4776 = vadd.f32 %v1066, %v4775
      %v4777 = vpop.f32.mrf.mxu0
      %v4778 = vpop.f32.mrf.mxu0
      %v4779 = vadd.f32 %v1067, %v4778
      %v4780 = vpop.f32.mrf.mxu0
      %4781 = vdwg.mxu0
      %v4783 = vsel %vm1699, %v4090, 0
      %v4786 = vsel %vm1699, %v4106, 0
      %4788 = vmatprep.subr.bf16.mxu0 0
      %4789 = vmatpush1.bf16.xpose.msra.mxu0 0
      %4790 = vmatprep.subr.bf16.mxu0 0
      %4791 = vmatpush1.bf16.xpose.msra.mxu0 0
      %4792 = vmatprep.subr.bf16.mxu0 0
      %4793 = vmatpush1.bf16.xpose.msra.mxu0 0
      %4794 = vmatprep.subr.bf16.mxu0 0
      %4795 = vmatpush1.bf16.xpose.msra.mxu0 0
      %4796 = vmatprep.subr.bf16.mxu0 0
      %4797 = vmatpush1.bf16.xpose.msra.mxu0 0
      %4798 = vmatprep.subr.bf16.mxu0 0
      %4799 = vmatpush1.bf16.xpose.msra.mxu0 0
      %4800 = vmatprep.subr.bf16.mxu0 0
      %4801 = vmatpush1.bf16.xpose.msra.mxu0 0
      %4802 = vmatprep.subr.bf16.mxu0 0
      %4803 = vmatpush1.bf16.xpose.msra.mxu0 %v4786
      %4804 = vmatprep.subr.bf16.mxu0 0
      %4805 = vmatpush2.bf16.xpose.msra.mxu0 0
      %4806 = vmatprep.subr.bf16.mxu0 0
      %4807 = vmatpush2.bf16.xpose.msra.mxu0 0
      %4808 = vmatprep.subr.bf16.mxu0 0
      %4809 = vmatpush2.bf16.xpose.msra.mxu0 0
      %4810 = vmatprep.subr.bf16.mxu0 0
      %4811 = vmatpush2.bf16.xpose.msra.mxu0 0
      %4812 = vmatprep.subr.bf16.mxu0 0
      %4813 = vmatpush2.bf16.xpose.msra.mxu0 0
      %4814 = vmatprep.subr.bf16.mxu0 0
      %4815 = vmatpush2.bf16.xpose.msra.mxu0 0
      %4816 = vmatprep.subr.bf16.mxu0 0
      %4817 = vmatpush2.bf16.xpose.msra.mxu0 0
      %4818 = vmatprep.subr.bf16.mxu0 0
      %4819 = vmatpush2.bf16.xpose.msra.mxu0 0
      %4820 = vmatprep.mubr.bf16.mxu0 0
      %4821 = vmatmul.mubr.bf16.gmra.mxu0 %v4783
      %v4822 = vpop.f32.mrf.mxu0
      %v4823 = vadd.f32 %v1068, %v4822
      %v4824 = vpop.f32.mrf.mxu0
      %v4825 = vpop.f32.mrf.mxu0
      %v4826 = vadd.f32 %v1069, %v4825
      %v4827 = vpop.f32.mrf.mxu0
      %4828 = vdwg.mxu0
      %v4830 = vsel %vm1699, %v4091, 0
      %v4833 = vsel %vm1699, %v4107, 0
      %4835 = vmatprep.subr.bf16.mxu0 0
      %4836 = vmatpush1.bf16.xpose.msra.mxu0 0
      %4837 = vmatprep.subr.bf16.mxu0 0
      %4838 = vmatpush1.bf16.xpose.msra.mxu0 0
      %4839 = vmatprep.subr.bf16.mxu0 0
      %4840 = vmatpush1.bf16.xpose.msra.mxu0 0
      %4841 = vmatprep.subr.bf16.mxu0 0
      %4842 = vmatpush1.bf16.xpose.msra.mxu0 0
      %4843 = vmatprep.subr.bf16.mxu0 0
      %4844 = vmatpush1.bf16.xpose.msra.mxu0 0
      %4845 = vmatprep.subr.bf16.mxu0 0
      %4846 = vmatpush1.bf16.xpose.msra.mxu0 0
      %4847 = vmatprep.subr.bf16.mxu0 0
      %4848 = vmatpush1.bf16.xpose.msra.mxu0 0
      %4849 = vmatprep.subr.bf16.mxu0 0
      %4850 = vmatpush1.bf16.xpose.msra.mxu0 %v4833
      %4851 = vmatprep.subr.bf16.mxu0 0
      %4852 = vmatpush2.bf16.xpose.msra.mxu0 0
      %4853 = vmatprep.subr.bf16.mxu0 0
      %4854 = vmatpush2.bf16.xpose.msra.mxu0 0
      %4855 = vmatprep.subr.bf16.mxu0 0
      %4856 = vmatpush2.bf16.xpose.msra.mxu0 0
      %4857 = vmatprep.subr.bf16.mxu0 0
      %4858 = vmatpush2.bf16.xpose.msra.mxu0 0
      %4859 = vmatprep.subr.bf16.mxu0 0
      %4860 = vmatpush2.bf16.xpose.msra.mxu0 0
      %4861 = vmatprep.subr.bf16.mxu0 0
      %4862 = vmatpush2.bf16.xpose.msra.mxu0 0
      %4863 = vmatprep.subr.bf16.mxu0 0
      %4864 = vmatpush2.bf16.xpose.msra.mxu0 0
      %4865 = vmatprep.subr.bf16.mxu0 0
      %4866 = vmatpush2.bf16.xpose.msra.mxu0 0
      %4867 = vmatprep.mubr.bf16.mxu0 0
      %4868 = vmatmul.mubr.bf16.gmra.mxu0 %v4830
      %v4869 = vpop.f32.mrf.mxu0
      %v4870 = vadd.f32 %v1070, %v4869
      %v4871 = vpop.f32.mrf.mxu0
      %v4872 = vpop.f32.mrf.mxu0
      %v4873 = vadd.f32 %v1071, %v4872
      %v4874 = vpop.f32.mrf.mxu0
      %4875 = vdwg.mxu0
      %v4876 = vsel %vm1699, %v4165, -inf
      %4877 = vmax.xlane.f32.xlu0 %v4876
      %v4878 = vpop.xlane.xlu0 %4877
      %v4879 = vsel %vm1699, %v4168, -inf
      %4880 = vmax.xlane.f32.xlu0 %v4879
      %v4881 = vpop.xlane.xlu0 %4880
      %v4882 = vsel %vm1699, %v4212, -inf
      %4883 = vmax.xlane.f32.xlu0 %v4882
      %v4884 = vpop.xlane.xlu0 %4883
      %v4885 = vsel %vm1699, %v4215, -inf
      %4886 = vmax.xlane.f32.xlu0 %v4885
      %v4887 = vpop.xlane.xlu0 %4886
      %v4888 = vsel %vm1699, %v4259, -inf
      %4889 = vmax.xlane.f32.xlu0 %v4888
      %v4890 = vpop.xlane.xlu0 %4889
      %v4891 = vsel %vm1699, %v4262, -inf
      %4892 = vmax.xlane.f32.xlu0 %v4891
      %v4893 = vpop.xlane.xlu0 %4892
      %v4894 = vsel %vm1699, %v4306, -inf
      %4895 = vmax.xlane.f32.xlu0 %v4894
      %v4896 = vpop.xlane.xlu0 %4895
      %v4897 = vsel %vm1699, %v4309, -inf
      %4898 = vmax.xlane.f32.xlu0 %v4897
      %v4899 = vpop.xlane.xlu0 %4898
      %v4900 = vsel %vm1699, %v4353, -inf
      %4901 = vmax.xlane.f32.xlu0 %v4900
      %v4902 = vpop.xlane.xlu0 %4901
      %v4903 = vsel %vm1699, %v4356, -inf
      %4904 = vmax.xlane.f32.xlu0 %v4903
      %v4905 = vpop.xlane.xlu0 %4904
      %v4906 = vsel %vm1699, %v4400, -inf
      %4907 = vmax.xlane.f32.xlu0 %v4906
      %v4908 = vpop.xlane.xlu0 %4907
      %v4909 = vsel %vm1699, %v4403, -inf
      %4910 = vmax.xlane.f32.xlu0 %v4909
      %v4911 = vpop.xlane.xlu0 %4910
      %v4912 = vsel %vm1699, %v4447, -inf
      %4913 = vmax.xlane.f32.xlu0 %v4912
      %v4914 = vpop.xlane.xlu0 %4913
      %v4915 = vsel %vm1699, %v4450, -inf
      %4916 = vmax.xlane.f32.xlu0 %v4915
      %v4917 = vpop.xlane.xlu0 %4916
      %v4918 = vsel %vm1699, %v4494, -inf
      %4919 = vmax.xlane.f32.xlu0 %v4918
      %v4920 = vpop.xlane.xlu0 %4919
      %v4921 = vsel %vm1699, %v4497, -inf
      %4922 = vmax.xlane.f32.xlu0 %v4921
      %v4923 = vpop.xlane.xlu0 %4922
      %v4924 = vsel %vm1699, %v4541, -inf
      %4925 = vmax.xlane.f32.xlu0 %v4924
      %v4926 = vpop.xlane.xlu0 %4925
      %v4927 = vsel %vm1699, %v4544, -inf
      %4928 = vmax.xlane.f32.xlu0 %v4927
      %v4929 = vpop.xlane.xlu0 %4928
      %v4930 = vsel %vm1699, %v4588, -inf
      %4931 = vmax.xlane.f32.xlu0 %v4930
      %v4932 = vpop.xlane.xlu0 %4931
      %v4933 = vsel %vm1699, %v4591, -inf
      %4934 = vmax.xlane.f32.xlu0 %v4933
      %v4935 = vpop.xlane.xlu0 %4934
      %v4936 = vsel %vm1699, %v4635, -inf
      %4937 = vmax.xlane.f32.xlu0 %v4936
      %v4938 = vpop.xlane.xlu0 %4937
      %v4939 = vsel %vm1699, %v4638, -inf
      %4940 = vmax.xlane.f32.xlu0 %v4939
      %v4941 = vpop.xlane.xlu0 %4940
      %v4942 = vsel %vm1699, %v4682, -inf
      %4943 = vmax.xlane.f32.xlu0 %v4942
      %v4944 = vpop.xlane.xlu0 %4943
      %v4945 = vsel %vm1699, %v4685, -inf
      %4946 = vmax.xlane.f32.xlu0 %v4945
      %v4947 = vpop.xlane.xlu0 %4946
      %v4948 = vsel %vm1699, %v4729, -inf
      %4949 = vmax.xlane.f32.xlu0 %v4948
      %v4950 = vpop.xlane.xlu0 %4949
      %v4951 = vsel %vm1699, %v4732, -inf
      %4952 = vmax.xlane.f32.xlu0 %v4951
      %v4953 = vpop.xlane.xlu0 %4952
      %v4954 = vsel %vm1699, %v4776, -inf
      %4955 = vmax.xlane.f32.xlu0 %v4954
      %v4956 = vpop.xlane.xlu0 %4955
      %v4957 = vsel %vm1699, %v4779, -inf
      %4958 = vmax.xlane.f32.xlu0 %v4957
      %v4959 = vpop.xlane.xlu0 %4958
      %v4960 = vsel %vm1699, %v4823, -inf
      %4961 = vmax.xlane.f32.xlu0 %v4960
      %v4962 = vpop.xlane.xlu0 %4961
      %v4963 = vsel %vm1699, %v4826, -inf
      %4964 = vmax.xlane.f32.xlu0 %v4963
      %v4965 = vpop.xlane.xlu0 %4964
      %v4966 = vsel %vm1699, %v4870, -inf
      %4967 = vmax.xlane.f32.xlu0 %v4966
      %v4968 = vpop.xlane.xlu0 %4967
      %v4969 = vsel %vm1699, %v4873, -inf
      %4970 = vmax.xlane.f32.xlu0 %v4969
      %v4971 = vpop.xlane.xlu0 %4970
      %v4972 = vsub.f32 %v4165, %v4878
      %v4973 = vsub.f32 %v4168, %v4881
      %v4974 = vsub.f32 %v4212, %v4884
      %v4975 = vsub.f32 %v4215, %v4887
      %v4976 = vsub.f32 %v4259, %v4890
      %v4977 = vsub.f32 %v4262, %v4893
      %v4978 = vsub.f32 %v4306, %v4896
      %v4979 = vsub.f32 %v4309, %v4899
      %v4980 = vsub.f32 %v4353, %v4902
      %v4981 = vsub.f32 %v4356, %v4905
      %v4982 = vsub.f32 %v4400, %v4908
      %v4983 = vsub.f32 %v4403, %v4911
      %v4984 = vsub.f32 %v4447, %v4914
      %v4985 = vsub.f32 %v4450, %v4917
      %v4986 = vsub.f32 %v4494, %v4920
      %v4987 = vsub.f32 %v4497, %v4923
      %v4988 = vsub.f32 %v4541, %v4926
      %v4989 = vsub.f32 %v4544, %v4929
      %v4990 = vsub.f32 %v4588, %v4932
      %v4991 = vsub.f32 %v4591, %v4935
      %v4992 = vsub.f32 %v4635, %v4938
      %v4993 = vsub.f32 %v4638, %v4941
      %v4994 = vsub.f32 %v4682, %v4944
      %v4995 = vsub.f32 %v4685, %v4947
      %v4996 = vsub.f32 %v4729, %v4950
      %v4997 = vsub.f32 %v4732, %v4953
      %v4998 = vsub.f32 %v4776, %v4956
      %v4999 = vsub.f32 %v4779, %v4959
      %v5000 = vsub.f32 %v4823, %v4962
      %v5001 = vsub.f32 %v4826, %v4965
      %v5002 = vsub.f32 %v4870, %v4968
      %v5003 = vsub.f32 %v4873, %v4971
      %v5004 = vmul.f32 %v4972, 1.442695
      %v5005 = vpow.pop %v5004
      %v5006 = vmul.f32 %v4973, 1.442695
      %v5007 = vpow.pop %v5006
      %v5008 = vmul.f32 %v4974, 1.442695
      %v5009 = vpow.pop %v5008
      %v5010 = vmul.f32 %v4975, 1.442695
      %v5011 = vpow.pop %v5010
      %v5012 = vmul.f32 %v4976, 1.442695
      %v5013 = vpow.pop %v5012
      %v5014 = vmul.f32 %v4977, 1.442695
      %v5015 = vpow.pop %v5014
      %v5016 = vmul.f32 %v4978, 1.442695
      %v5017 = vpow.pop %v5016
      %v5018 = vmul.f32 %v4979, 1.442695
      %v5019 = vpow.pop %v5018
      %v5020 = vmul.f32 %v4980, 1.442695
      %v5021 = vpow.pop %v5020
      %v5022 = vmul.f32 %v4981, 1.442695
      %v5023 = vpow.pop %v5022
      %v5024 = vmul.f32 %v4982, 1.442695
      %v5025 = vpow.pop %v5024
      %v5026 = vmul.f32 %v4983, 1.442695
      %v5027 = vpow.pop %v5026
      %v5028 = vmul.f32 %v4984, 1.442695
      %v5029 = vpow.pop %v5028
      %v5030 = vmul.f32 %v4985, 1.442695
      %v5031 = vpow.pop %v5030
      %v5032 = vmul.f32 %v4986, 1.442695
      %v5033 = vpow.pop %v5032
      %v5034 = vmul.f32 %v4987, 1.442695
      %v5035 = vpow.pop %v5034
      %v5036 = vmul.f32 %v4988, 1.442695
      %v5037 = vpow.pop %v5036
      %v5038 = vmul.f32 %v4989, 1.442695
      %v5039 = vpow.pop %v5038
      %v5040 = vmul.f32 %v4990, 1.442695
      %v5041 = vpow.pop %v5040
      %v5042 = vmul.f32 %v4991, 1.442695
      %v5043 = vpow.pop %v5042
      %v5044 = vmul.f32 %v4992, 1.442695
      %v5045 = vpow.pop %v5044
      %v5046 = vmul.f32 %v4993, 1.442695
      %v5047 = vpow.pop %v5046
      %v5048 = vmul.f32 %v4994, 1.442695
      %v5049 = vpow.pop %v5048
      %v5050 = vmul.f32 %v4995, 1.442695
      %v5051 = vpow.pop %v5050
      %v5052 = vmul.f32 %v4996, 1.442695
      %v5053 = vpow.pop %v5052
      %v5054 = vmul.f32 %v4997, 1.442695
      %v5055 = vpow.pop %v5054
      %v5056 = vmul.f32 %v4998, 1.442695
      %v5057 = vpow.pop %v5056
      %v5058 = vmul.f32 %v4999, 1.442695
      %v5059 = vpow.pop %v5058
      %v5060 = vmul.f32 %v5000, 1.442695
      %v5061 = vpow.pop %v5060
      %v5062 = vmul.f32 %v5001, 1.442695
      %v5063 = vpow.pop %v5062
      %v5064 = vmul.f32 %v5002, 1.442695
      %v5065 = vpow.pop %v5064
      %v5066 = vmul.f32 %v5003, 1.442695
      %v5067 = vpow.pop %v5066
      %v5068 = vsel %vm1699, %v5005, 0.0
      %5069 = vadd.xlane.f32.xlu0 %v5068
      %v5070 = vpop.xlane.xlu0 %5069
      %v5071 = vsel %vm1699, %v5007, 0.0
      %5072 = vadd.xlane.f32.xlu0 %v5071
      %v5073 = vpop.xlane.xlu0 %5072
      %v5074 = vsel %vm1699, %v5009, 0.0
      %5075 = vadd.xlane.f32.xlu0 %v5074
      %v5076 = vpop.xlane.xlu0 %5075
      %v5077 = vsel %vm1699, %v5011, 0.0
      %5078 = vadd.xlane.f32.xlu0 %v5077
      %v5079 = vpop.xlane.xlu0 %5078
      %v5080 = vsel %vm1699, %v5013, 0.0
      %5081 = vadd.xlane.f32.xlu0 %v5080
      %v5082 = vpop.xlane.xlu0 %5081
      %v5083 = vsel %vm1699, %v5015, 0.0
      %5084 = vadd.xlane.f32.xlu0 %v5083
      %v5085 = vpop.xlane.xlu0 %5084
      %v5086 = vsel %vm1699, %v5017, 0.0
      %5087 = vadd.xlane.f32.xlu0 %v5086
      %v5088 = vpop.xlane.xlu0 %5087
      %v5089 = vsel %vm1699, %v5019, 0.0
      %5090 = vadd.xlane.f32.xlu0 %v5089
      %v5091 = vpop.xlane.xlu0 %5090
      %v5092 = vsel %vm1699, %v5021, 0.0
      %5093 = vadd.xlane.f32.xlu0 %v5092
      %v5094 = vpop.xlane.xlu0 %5093
      %v5095 = vsel %vm1699, %v5023, 0.0
      %5096 = vadd.xlane.f32.xlu0 %v5095
      %v5097 = vpop.xlane.xlu0 %5096
      %v5098 = vsel %vm1699, %v5025, 0.0
      %5099 = vadd.xlane.f32.xlu0 %v5098
      %v5100 = vpop.xlane.xlu0 %5099
      %v5101 = vsel %vm1699, %v5027, 0.0
      %5102 = vadd.xlane.f32.xlu0 %v5101
      %v5103 = vpop.xlane.xlu0 %5102
      %v5104 = vsel %vm1699, %v5029, 0.0
      %5105 = vadd.xlane.f32.xlu0 %v5104
      %v5106 = vpop.xlane.xlu0 %5105
      %v5107 = vsel %vm1699, %v5031, 0.0
      %5108 = vadd.xlane.f32.xlu0 %v5107
      %v5109 = vpop.xlane.xlu0 %5108
      %v5110 = vsel %vm1699, %v5033, 0.0
      %5111 = vadd.xlane.f32.xlu0 %v5110
      %v5112 = vpop.xlane.xlu0 %5111
      %v5113 = vsel %vm1699, %v5035, 0.0
      %5114 = vadd.xlane.f32.xlu0 %v5113
      %v5115 = vpop.xlane.xlu0 %5114
      %v5116 = vsel %vm1699, %v5037, 0.0
      %5117 = vadd.xlane.f32.xlu0 %v5116
      %v5118 = vpop.xlane.xlu0 %5117
      %v5119 = vsel %vm1699, %v5039, 0.0
      %5120 = vadd.xlane.f32.xlu0 %v5119
      %v5121 = vpop.xlane.xlu0 %5120
      %v5122 = vsel %vm1699, %v5041, 0.0
      %5123 = vadd.xlane.f32.xlu0 %v5122
      %v5124 = vpop.xlane.xlu0 %5123
      %v5125 = vsel %vm1699, %v5043, 0.0
      %5126 = vadd.xlane.f32.xlu0 %v5125
      %v5127 = vpop.xlane.xlu0 %5126
      %v5128 = vsel %vm1699, %v5045, 0.0
      %5129 = vadd.xlane.f32.xlu0 %v5128
      %v5130 = vpop.xlane.xlu0 %5129
      %v5131 = vsel %vm1699, %v5047, 0.0
      %5132 = vadd.xlane.f32.xlu0 %v5131
      %v5133 = vpop.xlane.xlu0 %5132
      %v5134 = vsel %vm1699, %v5049, 0.0
      %5135 = vadd.xlane.f32.xlu0 %v5134
      %v5136 = vpop.xlane.xlu0 %5135
      %v5137 = vsel %vm1699, %v5051, 0.0
      %5138 = vadd.xlane.f32.xlu0 %v5137
      %v5139 = vpop.xlane.xlu0 %5138
      %v5140 = vsel %vm1699, %v5053, 0.0
      %5141 = vadd.xlane.f32.xlu0 %v5140
      %v5142 = vpop.xlane.xlu0 %5141
      %v5143 = vsel %vm1699, %v5055, 0.0
      %5144 = vadd.xlane.f32.xlu0 %v5143
      %v5145 = vpop.xlane.xlu0 %5144
      %v5146 = vsel %vm1699, %v5057, 0.0
      %5147 = vadd.xlane.f32.xlu0 %v5146
      %v5148 = vpop.xlane.xlu0 %5147
      %v5149 = vsel %vm1699, %v5059, 0.0
      %5150 = vadd.xlane.f32.xlu0 %v5149
      %v5151 = vpop.xlane.xlu0 %5150
      %v5152 = vsel %vm1699, %v5061, 0.0
      %5153 = vadd.xlane.f32.xlu0 %v5152
      %v5154 = vpop.xlane.xlu0 %5153
      %v5155 = vsel %vm1699, %v5063, 0.0
      %5156 = vadd.xlane.f32.xlu0 %v5155
      %v5157 = vpop.xlane.xlu0 %5156
      %v5158 = vsel %vm1699, %v5065, 0.0
      %5159 = vadd.xlane.f32.xlu0 %v5158
      %v5160 = vpop.xlane.xlu0 %5159
      %v5161 = vsel %vm1699, %v5067, 0.0
      %5162 = vadd.xlane.f32.xlu0 %v5161
      %v5163 = vpop.xlane.xlu0 %5162
      %v5164 = vrcp.pop %v5070
      %v5165 = vrcp.pop %v5073
      %v5166 = vrcp.pop %v5076
      %v5167 = vrcp.pop %v5079
      %v5168 = vrcp.pop %v5082
      %v5169 = vrcp.pop %v5085
      %v5170 = vrcp.pop %v5088
      %v5171 = vrcp.pop %v5091
      %v5172 = vrcp.pop %v5094
      %v5173 = vrcp.pop %v5097
      %v5174 = vrcp.pop %v5100
      %v5175 = vrcp.pop %v5103
      %v5176 = vrcp.pop %v5106
      %v5177 = vrcp.pop %v5109
      %v5178 = vrcp.pop %v5112
      %v5179 = vrcp.pop %v5115
      %v5180 = vrcp.pop %v5118
      %v5181 = vrcp.pop %v5121
      %v5182 = vrcp.pop %v5124
      %v5183 = vrcp.pop %v5127
      %v5184 = vrcp.pop %v5130
      %v5185 = vrcp.pop %v5133
      %v5186 = vrcp.pop %v5136
      %v5187 = vrcp.pop %v5139
      %v5188 = vrcp.pop %v5142
      %v5189 = vrcp.pop %v5145
      %v5190 = vrcp.pop %v5148
      %v5191 = vrcp.pop %v5151
      %v5192 = vrcp.pop %v5154
      %v5193 = vrcp.pop %v5157
      %v5194 = vrcp.pop %v5160
      %v5195 = vrcp.pop %v5163
      %v5196 = vmul.f32 %v5005, %v5164
      %v5197 = vmul.f32 %v5007, %v5165
      %v5198 = vmul.f32 %v5009, %v5166
      %v5199 = vmul.f32 %v5011, %v5167
      %v5200 = vmul.f32 %v5013, %v5168
      %v5201 = vmul.f32 %v5015, %v5169
      %v5202 = vmul.f32 %v5017, %v5170
      %v5203 = vmul.f32 %v5019, %v5171
      %v5204 = vmul.f32 %v5021, %v5172
      %v5205 = vmul.f32 %v5023, %v5173
      %v5206 = vmul.f32 %v5025, %v5174
      %v5207 = vmul.f32 %v5027, %v5175
      %v5208 = vmul.f32 %v5029, %v5176
      %v5209 = vmul.f32 %v5031, %v5177
      %v5210 = vmul.f32 %v5033, %v5178
      %v5211 = vmul.f32 %v5035, %v5179
      %v5212 = vmul.f32 %v5037, %v5180
      %v5213 = vmul.f32 %v5039, %v5181
      %v5214 = vmul.f32 %v5041, %v5182
      %v5215 = vmul.f32 %v5043, %v5183
      %v5216 = vmul.f32 %v5045, %v5184
      %v5217 = vmul.f32 %v5047, %v5185
      %v5218 = vmul.f32 %v5049, %v5186
      %v5219 = vmul.f32 %v5051, %v5187
      %v5220 = vmul.f32 %v5053, %v5188
      %v5221 = vmul.f32 %v5055, %v5189
      %v5222 = vmul.f32 %v5057, %v5190
      %v5223 = vmul.f32 %v5059, %v5191
      %v5224 = vmul.f32 %v5061, %v5192
      %v5225 = vmul.f32 %v5063, %v5193
      %v5226 = vmul.f32 %v5065, %v5194
      %v5227 = vmul.f32 %v5067, %v5195
      %v5228 = vpack.c.bf16 %v5197, %v5196
      %v5229 = vpack.c.bf16 %v5199, %v5198
      %v5230 = vpack.c.bf16 %v5201, %v5200
      %v5231 = vpack.c.bf16 %v5203, %v5202
      %v5232 = vpack.c.bf16 %v5205, %v5204
      %v5233 = vpack.c.bf16 %v5207, %v5206
      %v5234 = vpack.c.bf16 %v5209, %v5208
      %v5235 = vpack.c.bf16 %v5211, %v5210
      %v5236 = vpack.c.bf16 %v5213, %v5212
      %v5237 = vpack.c.bf16 %v5215, %v5214
      %v5238 = vpack.c.bf16 %v5217, %v5216
      %v5239 = vpack.c.bf16 %v5219, %v5218
      %v5240 = vpack.c.bf16 %v5221, %v5220
      %v5241 = vpack.c.bf16 %v5223, %v5222
      %v5242 = vpack.c.bf16 %v5225, %v5224
      %v5243 = vpack.c.bf16 %v5227, %v5226
      %v5245 = vsel %vm1699, %v5228, 0
      %5247 = vmatprep.subr.bf16.mxu0 0
      %5248 = vmatpush1.bf16.msra.mxu0 0
      %5249 = vmatprep.subr.bf16.mxu0 0
      %5250 = vmatpush1.bf16.msra.mxu0 0
      %5251 = vmatprep.subr.bf16.mxu0 0
      %5252 = vmatpush1.bf16.msra.mxu0 0
      %5253 = vmatprep.subr.bf16.mxu0 0
      %5254 = vmatpush1.bf16.msra.mxu0 0
      %5255 = vmatprep.subr.bf16.mxu0 0
      %5256 = vmatpush1.bf16.msra.mxu0 0
      %5257 = vmatprep.subr.bf16.mxu0 0
      %5258 = vmatpush1.bf16.msra.mxu0 0
      %5259 = vmatprep.subr.bf16.mxu0 0
      %5260 = vmatpush1.bf16.msra.mxu0 0
      %5261 = vmatprep.subr.bf16.mxu0 0
      %5262 = vmatpush1.bf16.msra.mxu0 %v4108
      %5263 = vmatprep.subr.bf16.mxu0 0
      %5264 = vmatpush2.bf16.msra.mxu0 0
      %5265 = vmatprep.subr.bf16.mxu0 0
      %5266 = vmatpush2.bf16.msra.mxu0 0
      %5267 = vmatprep.subr.bf16.mxu0 0
      %5268 = vmatpush2.bf16.msra.mxu0 0
      %5269 = vmatprep.subr.bf16.mxu0 0
      %5270 = vmatpush2.bf16.msra.mxu0 0
      %5271 = vmatprep.subr.bf16.mxu0 0
      %5272 = vmatpush2.bf16.msra.mxu0 0
      %5273 = vmatprep.subr.bf16.mxu0 0
      %5274 = vmatpush2.bf16.msra.mxu0 0
      %5275 = vmatprep.subr.bf16.mxu0 0
      %5276 = vmatpush2.bf16.msra.mxu0 0
      %5277 = vmatprep.subr.bf16.mxu0 0
      %5278 = vmatpush2.bf16.msra.mxu0 0
      %5279 = vmatprep.mubr.bf16.mxu0 0
      %5280 = vmatmul.mubr.bf16.gmra.mxu0 %v5245
      %v5281 = vpop.f32.mrf.mxu0
      %v5282 = vadd.f32 0.0, %v5281
      %v5283 = vpop.f32.mrf.mxu0
      %v5284 = vpop.f32.mrf.mxu0
      %v5285 = vadd.f32 0.0, %v5284
      %v5286 = vpop.f32.mrf.mxu0
      %5287 = vdwg.mxu0
      %v5289 = vsel %vm1699, %v5229, 0
      %5291 = vmatprep.subr.bf16.mxu0 0
      %5292 = vmatpush1.bf16.msra.mxu0 0
      %5293 = vmatprep.subr.bf16.mxu0 0
      %5294 = vmatpush1.bf16.msra.mxu0 0
      %5295 = vmatprep.subr.bf16.mxu0 0
      %5296 = vmatpush1.bf16.msra.mxu0 0
      %5297 = vmatprep.subr.bf16.mxu0 0
      %5298 = vmatpush1.bf16.msra.mxu0 0
      %5299 = vmatprep.subr.bf16.mxu0 0
      %5300 = vmatpush1.bf16.msra.mxu0 0
      %5301 = vmatprep.subr.bf16.mxu0 0
      %5302 = vmatpush1.bf16.msra.mxu0 0
      %5303 = vmatprep.subr.bf16.mxu0 0
      %5304 = vmatpush1.bf16.msra.mxu0 0
      %5305 = vmatprep.subr.bf16.mxu0 0
      %5306 = vmatpush1.bf16.msra.mxu0 %v4109
      %5307 = vmatprep.subr.bf16.mxu0 0
      %5308 = vmatpush2.bf16.msra.mxu0 0
      %5309 = vmatprep.subr.bf16.mxu0 0
      %5310 = vmatpush2.bf16.msra.mxu0 0
      %5311 = vmatprep.subr.bf16.mxu0 0
      %5312 = vmatpush2.bf16.msra.mxu0 0
      %5313 = vmatprep.subr.bf16.mxu0 0
      %5314 = vmatpush2.bf16.msra.mxu0 0
      %5315 = vmatprep.subr.bf16.mxu0 0
      %5316 = vmatpush2.bf16.msra.mxu0 0
      %5317 = vmatprep.subr.bf16.mxu0 0
      %5318 = vmatpush2.bf16.msra.mxu0 0
      %5319 = vmatprep.subr.bf16.mxu0 0
      %5320 = vmatpush2.bf16.msra.mxu0 0
      %5321 = vmatprep.subr.bf16.mxu0 0
      %5322 = vmatpush2.bf16.msra.mxu0 0
      %5323 = vmatprep.mubr.bf16.mxu0 0
      %5324 = vmatmul.mubr.bf16.gmra.mxu0 %v5289
      %v5325 = vpop.f32.mrf.mxu0
      %v5326 = vadd.f32 0.0, %v5325
      %v5327 = vpop.f32.mrf.mxu0
      %v5328 = vpop.f32.mrf.mxu0
      %v5329 = vadd.f32 0.0, %v5328
      %v5330 = vpop.f32.mrf.mxu0
      %5331 = vdwg.mxu0
      %v5333 = vsel %vm1699, %v5230, 0
      %5335 = vmatprep.subr.bf16.mxu0 0
      %5336 = vmatpush1.bf16.msra.mxu0 0
      %5337 = vmatprep.subr.bf16.mxu0 0
      %5338 = vmatpush1.bf16.msra.mxu0 0
      %5339 = vmatprep.subr.bf16.mxu0 0
      %5340 = vmatpush1.bf16.msra.mxu0 0
      %5341 = vmatprep.subr.bf16.mxu0 0
      %5342 = vmatpush1.bf16.msra.mxu0 0
      %5343 = vmatprep.subr.bf16.mxu0 0
      %5344 = vmatpush1.bf16.msra.mxu0 0
      %5345 = vmatprep.subr.bf16.mxu0 0
      %5346 = vmatpush1.bf16.msra.mxu0 0
      %5347 = vmatprep.subr.bf16.mxu0 0
      %5348 = vmatpush1.bf16.msra.mxu0 0
      %5349 = vmatprep.subr.bf16.mxu0 0
      %5350 = vmatpush1.bf16.msra.mxu0 %v4110
      %5351 = vmatprep.subr.bf16.mxu0 0
      %5352 = vmatpush2.bf16.msra.mxu0 0
      %5353 = vmatprep.subr.bf16.mxu0 0
      %5354 = vmatpush2.bf16.msra.mxu0 0
      %5355 = vmatprep.subr.bf16.mxu0 0
      %5356 = vmatpush2.bf16.msra.mxu0 0
      %5357 = vmatprep.subr.bf16.mxu0 0
      %5358 = vmatpush2.bf16.msra.mxu0 0
      %5359 = vmatprep.subr.bf16.mxu0 0
      %5360 = vmatpush2.bf16.msra.mxu0 0
      %5361 = vmatprep.subr.bf16.mxu0 0
      %5362 = vmatpush2.bf16.msra.mxu0 0
      %5363 = vmatprep.subr.bf16.mxu0 0
      %5364 = vmatpush2.bf16.msra.mxu0 0
      %5365 = vmatprep.subr.bf16.mxu0 0
      %5366 = vmatpush2.bf16.msra.mxu0 0
      %5367 = vmatprep.mubr.bf16.mxu0 0
      %5368 = vmatmul.mubr.bf16.gmra.mxu0 %v5333
      %v5369 = vpop.f32.mrf.mxu0
      %v5370 = vadd.f32 0.0, %v5369
      %v5371 = vpop.f32.mrf.mxu0
      %v5372 = vpop.f32.mrf.mxu0
      %v5373 = vadd.f32 0.0, %v5372
      %v5374 = vpop.f32.mrf.mxu0
      %5375 = vdwg.mxu0
      %v5377 = vsel %vm1699, %v5231, 0
      %5379 = vmatprep.subr.bf16.mxu0 0
      %5380 = vmatpush1.bf16.msra.mxu0 0
      %5381 = vmatprep.subr.bf16.mxu0 0
      %5382 = vmatpush1.bf16.msra.mxu0 0
      %5383 = vmatprep.subr.bf16.mxu0 0
      %5384 = vmatpush1.bf16.msra.mxu0 0
      %5385 = vmatprep.subr.bf16.mxu0 0
      %5386 = vmatpush1.bf16.msra.mxu0 0
      %5387 = vmatprep.subr.bf16.mxu0 0
      %5388 = vmatpush1.bf16.msra.mxu0 0
      %5389 = vmatprep.subr.bf16.mxu0 0
      %5390 = vmatpush1.bf16.msra.mxu0 0
      %5391 = vmatprep.subr.bf16.mxu0 0
      %5392 = vmatpush1.bf16.msra.mxu0 0
      %5393 = vmatprep.subr.bf16.mxu0 0
      %5394 = vmatpush1.bf16.msra.mxu0 %v4111
      %5395 = vmatprep.subr.bf16.mxu0 0
      %5396 = vmatpush2.bf16.msra.mxu0 0
      %5397 = vmatprep.subr.bf16.mxu0 0
      %5398 = vmatpush2.bf16.msra.mxu0 0
      %5399 = vmatprep.subr.bf16.mxu0 0
      %5400 = vmatpush2.bf16.msra.mxu0 0
      %5401 = vmatprep.subr.bf16.mxu0 0
      %5402 = vmatpush2.bf16.msra.mxu0 0
      %5403 = vmatprep.subr.bf16.mxu0 0
      %5404 = vmatpush2.bf16.msra.mxu0 0
      %5405 = vmatprep.subr.bf16.mxu0 0
      %5406 = vmatpush2.bf16.msra.mxu0 0
      %5407 = vmatprep.subr.bf16.mxu0 0
      %5408 = vmatpush2.bf16.msra.mxu0 0
      %5409 = vmatprep.subr.bf16.mxu0 0
      %5410 = vmatpush2.bf16.msra.mxu0 0
      %5411 = vmatprep.mubr.bf16.mxu0 0
      %5412 = vmatmul.mubr.bf16.gmra.mxu0 %v5377
      %v5413 = vpop.f32.mrf.mxu0
      %v5414 = vadd.f32 0.0, %v5413
      %v5415 = vpop.f32.mrf.mxu0
      %v5416 = vpop.f32.mrf.mxu0
      %v5417 = vadd.f32 0.0, %v5416
      %v5418 = vpop.f32.mrf.mxu0
      %5419 = vdwg.mxu0
      %v5421 = vsel %vm1699, %v5232, 0
      %5423 = vmatprep.subr.bf16.mxu0 0
      %5424 = vmatpush1.bf16.msra.mxu0 0
      %5425 = vmatprep.subr.bf16.mxu0 0
      %5426 = vmatpush1.bf16.msra.mxu0 0
      %5427 = vmatprep.subr.bf16.mxu0 0
      %5428 = vmatpush1.bf16.msra.mxu0 0
      %5429 = vmatprep.subr.bf16.mxu0 0
      %5430 = vmatpush1.bf16.msra.mxu0 0
      %5431 = vmatprep.subr.bf16.mxu0 0
      %5432 = vmatpush1.bf16.msra.mxu0 0
      %5433 = vmatprep.subr.bf16.mxu0 0
      %5434 = vmatpush1.bf16.msra.mxu0 0
      %5435 = vmatprep.subr.bf16.mxu0 0
      %5436 = vmatpush1.bf16.msra.mxu0 0
      %5437 = vmatprep.subr.bf16.mxu0 0
      %5438 = vmatpush1.bf16.msra.mxu0 %v4112
      %5439 = vmatprep.subr.bf16.mxu0 0
      %5440 = vmatpush2.bf16.msra.mxu0 0
      %5441 = vmatprep.subr.bf16.mxu0 0
      %5442 = vmatpush2.bf16.msra.mxu0 0
      %5443 = vmatprep.subr.bf16.mxu0 0
      %5444 = vmatpush2.bf16.msra.mxu0 0
      %5445 = vmatprep.subr.bf16.mxu0 0
      %5446 = vmatpush2.bf16.msra.mxu0 0
      %5447 = vmatprep.subr.bf16.mxu0 0
      %5448 = vmatpush2.bf16.msra.mxu0 0
      %5449 = vmatprep.subr.bf16.mxu0 0
      %5450 = vmatpush2.bf16.msra.mxu0 0
      %5451 = vmatprep.subr.bf16.mxu0 0
      %5452 = vmatpush2.bf16.msra.mxu0 0
      %5453 = vmatprep.subr.bf16.mxu0 0
      %5454 = vmatpush2.bf16.msra.mxu0 0
      %5455 = vmatprep.mubr.bf16.mxu0 0
      %5456 = vmatmul.mubr.bf16.gmra.mxu0 %v5421
      %v5457 = vpop.f32.mrf.mxu0
      %v5458 = vadd.f32 0.0, %v5457
      %v5459 = vpop.f32.mrf.mxu0
      %v5460 = vpop.f32.mrf.mxu0
      %v5461 = vadd.f32 0.0, %v5460
      %v5462 = vpop.f32.mrf.mxu0
      %5463 = vdwg.mxu0
      %v5465 = vsel %vm1699, %v5233, 0
      %5467 = vmatprep.subr.bf16.mxu0 0
      %5468 = vmatpush1.bf16.msra.mxu0 0
      %5469 = vmatprep.subr.bf16.mxu0 0
      %5470 = vmatpush1.bf16.msra.mxu0 0
      %5471 = vmatprep.subr.bf16.mxu0 0
      %5472 = vmatpush1.bf16.msra.mxu0 0
      %5473 = vmatprep.subr.bf16.mxu0 0
      %5474 = vmatpush1.bf16.msra.mxu0 0
      %5475 = vmatprep.subr.bf16.mxu0 0
      %5476 = vmatpush1.bf16.msra.mxu0 0
      %5477 = vmatprep.subr.bf16.mxu0 0
      %5478 = vmatpush1.bf16.msra.mxu0 0
      %5479 = vmatprep.subr.bf16.mxu0 0
      %5480 = vmatpush1.bf16.msra.mxu0 0
      %5481 = vmatprep.subr.bf16.mxu0 0
      %5482 = vmatpush1.bf16.msra.mxu0 %v4113
      %5483 = vmatprep.subr.bf16.mxu0 0
      %5484 = vmatpush2.bf16.msra.mxu0 0
      %5485 = vmatprep.subr.bf16.mxu0 0
      %5486 = vmatpush2.bf16.msra.mxu0 0
      %5487 = vmatprep.subr.bf16.mxu0 0
      %5488 = vmatpush2.bf16.msra.mxu0 0
      %5489 = vmatprep.subr.bf16.mxu0 0
      %5490 = vmatpush2.bf16.msra.mxu0 0
      %5491 = vmatprep.subr.bf16.mxu0 0
      %5492 = vmatpush2.bf16.msra.mxu0 0
      %5493 = vmatprep.subr.bf16.mxu0 0
      %5494 = vmatpush2.bf16.msra.mxu0 0
      %5495 = vmatprep.subr.bf16.mxu0 0
      %5496 = vmatpush2.bf16.msra.mxu0 0
      %5497 = vmatprep.subr.bf16.mxu0 0
      %5498 = vmatpush2.bf16.msra.mxu0 0
      %5499 = vmatprep.mubr.bf16.mxu0 0
      %5500 = vmatmul.mubr.bf16.gmra.mxu0 %v5465
      %v5501 = vpop.f32.mrf.mxu0
      %v5502 = vadd.f32 0.0, %v5501
      %v5503 = vpop.f32.mrf.mxu0
      %v5504 = vpop.f32.mrf.mxu0
      %v5505 = vadd.f32 0.0, %v5504
      %v5506 = vpop.f32.mrf.mxu0
      %5507 = vdwg.mxu0
      %v5509 = vsel %vm1699, %v5234, 0
      %5511 = vmatprep.subr.bf16.mxu0 0
      %5512 = vmatpush1.bf16.msra.mxu0 0
      %5513 = vmatprep.subr.bf16.mxu0 0
      %5514 = vmatpush1.bf16.msra.mxu0 0
      %5515 = vmatprep.subr.bf16.mxu0 0
      %5516 = vmatpush1.bf16.msra.mxu0 0
      %5517 = vmatprep.subr.bf16.mxu0 0
      %5518 = vmatpush1.bf16.msra.mxu0 0
      %5519 = vmatprep.subr.bf16.mxu0 0
      %5520 = vmatpush1.bf16.msra.mxu0 0
      %5521 = vmatprep.subr.bf16.mxu0 0
      %5522 = vmatpush1.bf16.msra.mxu0 0
      %5523 = vmatprep.subr.bf16.mxu0 0
      %5524 = vmatpush1.bf16.msra.mxu0 0
      %5525 = vmatprep.subr.bf16.mxu0 0
      %5526 = vmatpush1.bf16.msra.mxu0 %v4114
      %5527 = vmatprep.subr.bf16.mxu0 0
      %5528 = vmatpush2.bf16.msra.mxu0 0
      %5529 = vmatprep.subr.bf16.mxu0 0
      %5530 = vmatpush2.bf16.msra.mxu0 0
      %5531 = vmatprep.subr.bf16.mxu0 0
      %5532 = vmatpush2.bf16.msra.mxu0 0
      %5533 = vmatprep.subr.bf16.mxu0 0
      %5534 = vmatpush2.bf16.msra.mxu0 0
      %5535 = vmatprep.subr.bf16.mxu0 0
      %5536 = vmatpush2.bf16.msra.mxu0 0
      %5537 = vmatprep.subr.bf16.mxu0 0
      %5538 = vmatpush2.bf16.msra.mxu0 0
      %5539 = vmatprep.subr.bf16.mxu0 0
      %5540 = vmatpush2.bf16.msra.mxu0 0
      %5541 = vmatprep.subr.bf16.mxu0 0
      %5542 = vmatpush2.bf16.msra.mxu0 0
      %5543 = vmatprep.mubr.bf16.mxu0 0
      %5544 = vmatmul.mubr.bf16.gmra.mxu0 %v5509
      %v5545 = vpop.f32.mrf.mxu0
      %v5546 = vadd.f32 0.0, %v5545
      %v5547 = vpop.f32.mrf.mxu0
      %v5548 = vpop.f32.mrf.mxu0
      %v5549 = vadd.f32 0.0, %v5548
      %v5550 = vpop.f32.mrf.mxu0
      %5551 = vdwg.mxu0
      %v5553 = vsel %vm1699, %v5235, 0
      %5555 = vmatprep.subr.bf16.mxu0 0
      %5556 = vmatpush1.bf16.msra.mxu0 0
      %5557 = vmatprep.subr.bf16.mxu0 0
      %5558 = vmatpush1.bf16.msra.mxu0 0
      %5559 = vmatprep.subr.bf16.mxu0 0
      %5560 = vmatpush1.bf16.msra.mxu0 0
      %5561 = vmatprep.subr.bf16.mxu0 0
      %5562 = vmatpush1.bf16.msra.mxu0 0
      %5563 = vmatprep.subr.bf16.mxu0 0
      %5564 = vmatpush1.bf16.msra.mxu0 0
      %5565 = vmatprep.subr.bf16.mxu0 0
      %5566 = vmatpush1.bf16.msra.mxu0 0
      %5567 = vmatprep.subr.bf16.mxu0 0
      %5568 = vmatpush1.bf16.msra.mxu0 0
      %5569 = vmatprep.subr.bf16.mxu0 0
      %5570 = vmatpush1.bf16.msra.mxu0 %v4115
      %5571 = vmatprep.subr.bf16.mxu0 0
      %5572 = vmatpush2.bf16.msra.mxu0 0
      %5573 = vmatprep.subr.bf16.mxu0 0
      %5574 = vmatpush2.bf16.msra.mxu0 0
      %5575 = vmatprep.subr.bf16.mxu0 0
      %5576 = vmatpush2.bf16.msra.mxu0 0
      %5577 = vmatprep.subr.bf16.mxu0 0
      %5578 = vmatpush2.bf16.msra.mxu0 0
      %5579 = vmatprep.subr.bf16.mxu0 0
      %5580 = vmatpush2.bf16.msra.mxu0 0
      %5581 = vmatprep.subr.bf16.mxu0 0
      %5582 = vmatpush2.bf16.msra.mxu0 0
      %5583 = vmatprep.subr.bf16.mxu0 0
      %5584 = vmatpush2.bf16.msra.mxu0 0
      %5585 = vmatprep.subr.bf16.mxu0 0
      %5586 = vmatpush2.bf16.msra.mxu0 0
      %5587 = vmatprep.mubr.bf16.mxu0 0
      %5588 = vmatmul.mubr.bf16.gmra.mxu0 %v5553
      %v5589 = vpop.f32.mrf.mxu0
      %v5590 = vadd.f32 0.0, %v5589
      %v5591 = vpop.f32.mrf.mxu0
      %v5592 = vpop.f32.mrf.mxu0
      %v5593 = vadd.f32 0.0, %v5592
      %v5594 = vpop.f32.mrf.mxu0
      %5595 = vdwg.mxu0
      %v5597 = vsel %vm1699, %v5236, 0
      %5599 = vmatprep.subr.bf16.mxu0 0
      %5600 = vmatpush1.bf16.msra.mxu0 0
      %5601 = vmatprep.subr.bf16.mxu0 0
      %5602 = vmatpush1.bf16.msra.mxu0 0
      %5603 = vmatprep.subr.bf16.mxu0 0
      %5604 = vmatpush1.bf16.msra.mxu0 0
      %5605 = vmatprep.subr.bf16.mxu0 0
      %5606 = vmatpush1.bf16.msra.mxu0 0
      %5607 = vmatprep.subr.bf16.mxu0 0
      %5608 = vmatpush1.bf16.msra.mxu0 0
      %5609 = vmatprep.subr.bf16.mxu0 0
      %5610 = vmatpush1.bf16.msra.mxu0 0
      %5611 = vmatprep.subr.bf16.mxu0 0
      %5612 = vmatpush1.bf16.msra.mxu0 0
      %5613 = vmatprep.subr.bf16.mxu0 0
      %5614 = vmatpush1.bf16.msra.mxu0 %v4116
      %5615 = vmatprep.subr.bf16.mxu0 0
      %5616 = vmatpush2.bf16.msra.mxu0 0
      %5617 = vmatprep.subr.bf16.mxu0 0
      %5618 = vmatpush2.bf16.msra.mxu0 0
      %5619 = vmatprep.subr.bf16.mxu0 0
      %5620 = vmatpush2.bf16.msra.mxu0 0
      %5621 = vmatprep.subr.bf16.mxu0 0
      %5622 = vmatpush2.bf16.msra.mxu0 0
      %5623 = vmatprep.subr.bf16.mxu0 0
      %5624 = vmatpush2.bf16.msra.mxu0 0
      %5625 = vmatprep.subr.bf16.mxu0 0
      %5626 = vmatpush2.bf16.msra.mxu0 0
      %5627 = vmatprep.subr.bf16.mxu0 0
      %5628 = vmatpush2.bf16.msra.mxu0 0
      %5629 = vmatprep.subr.bf16.mxu0 0
      %5630 = vmatpush2.bf16.msra.mxu0 0
      %5631 = vmatprep.mubr.bf16.mxu0 0
      %5632 = vmatmul.mubr.bf16.gmra.mxu0 %v5597
      %v5633 = vpop.f32.mrf.mxu0
      %v5634 = vadd.f32 0.0, %v5633
      %v5635 = vpop.f32.mrf.mxu0
      %v5636 = vpop.f32.mrf.mxu0
      %v5637 = vadd.f32 0.0, %v5636
      %v5638 = vpop.f32.mrf.mxu0
      %5639 = vdwg.mxu0
      %v5641 = vsel %vm1699, %v5237, 0
      %5643 = vmatprep.subr.bf16.mxu0 0
      %5644 = vmatpush1.bf16.msra.mxu0 0
      %5645 = vmatprep.subr.bf16.mxu0 0
      %5646 = vmatpush1.bf16.msra.mxu0 0
      %5647 = vmatprep.subr.bf16.mxu0 0
      %5648 = vmatpush1.bf16.msra.mxu0 0
      %5649 = vmatprep.subr.bf16.mxu0 0
      %5650 = vmatpush1.bf16.msra.mxu0 0
      %5651 = vmatprep.subr.bf16.mxu0 0
      %5652 = vmatpush1.bf16.msra.mxu0 0
      %5653 = vmatprep.subr.bf16.mxu0 0
      %5654 = vmatpush1.bf16.msra.mxu0 0
      %5655 = vmatprep.subr.bf16.mxu0 0
      %5656 = vmatpush1.bf16.msra.mxu0 0
      %5657 = vmatprep.subr.bf16.mxu0 0
      %5658 = vmatpush1.bf16.msra.mxu0 %v4117
      %5659 = vmatprep.subr.bf16.mxu0 0
      %5660 = vmatpush2.bf16.msra.mxu0 0
      %5661 = vmatprep.subr.bf16.mxu0 0
      %5662 = vmatpush2.bf16.msra.mxu0 0
      %5663 = vmatprep.subr.bf16.mxu0 0
      %5664 = vmatpush2.bf16.msra.mxu0 0
      %5665 = vmatprep.subr.bf16.mxu0 0
      %5666 = vmatpush2.bf16.msra.mxu0 0
      %5667 = vmatprep.subr.bf16.mxu0 0
      %5668 = vmatpush2.bf16.msra.mxu0 0
      %5669 = vmatprep.subr.bf16.mxu0 0
      %5670 = vmatpush2.bf16.msra.mxu0 0
      %5671 = vmatprep.subr.bf16.mxu0 0
      %5672 = vmatpush2.bf16.msra.mxu0 0
      %5673 = vmatprep.subr.bf16.mxu0 0
      %5674 = vmatpush2.bf16.msra.mxu0 0
      %5675 = vmatprep.mubr.bf16.mxu0 0
      %5676 = vmatmul.mubr.bf16.gmra.mxu0 %v5641
      %v5677 = vpop.f32.mrf.mxu0
      %v5678 = vadd.f32 0.0, %v5677
      %v5679 = vpop.f32.mrf.mxu0
      %v5680 = vpop.f32.mrf.mxu0
      %v5681 = vadd.f32 0.0, %v5680
      %v5682 = vpop.f32.mrf.mxu0
      %5683 = vdwg.mxu0
      %v5685 = vsel %vm1699, %v5238, 0
      %5687 = vmatprep.subr.bf16.mxu0 0
      %5688 = vmatpush1.bf16.msra.mxu0 0
      %5689 = vmatprep.subr.bf16.mxu0 0
      %5690 = vmatpush1.bf16.msra.mxu0 0
      %5691 = vmatprep.subr.bf16.mxu0 0
      %5692 = vmatpush1.bf16.msra.mxu0 0
      %5693 = vmatprep.subr.bf16.mxu0 0
      %5694 = vmatpush1.bf16.msra.mxu0 0
      %5695 = vmatprep.subr.bf16.mxu0 0
      %5696 = vmatpush1.bf16.msra.mxu0 0
      %5697 = vmatprep.subr.bf16.mxu0 0
      %5698 = vmatpush1.bf16.msra.mxu0 0
      %5699 = vmatprep.subr.bf16.mxu0 0
      %5700 = vmatpush1.bf16.msra.mxu0 0
      %5701 = vmatprep.subr.bf16.mxu0 0
      %5702 = vmatpush1.bf16.msra.mxu0 %v4118
      %5703 = vmatprep.subr.bf16.mxu0 0
      %5704 = vmatpush2.bf16.msra.mxu0 0
      %5705 = vmatprep.subr.bf16.mxu0 0
      %5706 = vmatpush2.bf16.msra.mxu0 0
      %5707 = vmatprep.subr.bf16.mxu0 0
      %5708 = vmatpush2.bf16.msra.mxu0 0
      %5709 = vmatprep.subr.bf16.mxu0 0
      %5710 = vmatpush2.bf16.msra.mxu0 0
      %5711 = vmatprep.subr.bf16.mxu0 0
      %5712 = vmatpush2.bf16.msra.mxu0 0
      %5713 = vmatprep.subr.bf16.mxu0 0
      %5714 = vmatpush2.bf16.msra.mxu0 0
      %5715 = vmatprep.subr.bf16.mxu0 0
      %5716 = vmatpush2.bf16.msra.mxu0 0
      %5717 = vmatprep.subr.bf16.mxu0 0
      %5718 = vmatpush2.bf16.msra.mxu0 0
      %5719 = vmatprep.mubr.bf16.mxu0 0
      %5720 = vmatmul.mubr.bf16.gmra.mxu0 %v5685
      %v5721 = vpop.f32.mrf.mxu0
      %v5722 = vadd.f32 0.0, %v5721
      %v5723 = vpop.f32.mrf.mxu0
      %v5724 = vpop.f32.mrf.mxu0
      %v5725 = vadd.f32 0.0, %v5724
      %v5726 = vpop.f32.mrf.mxu0
      %5727 = vdwg.mxu0
      %v5729 = vsel %vm1699, %v5239, 0
      %5731 = vmatprep.subr.bf16.mxu0 0
      %5732 = vmatpush1.bf16.msra.mxu0 0
      %5733 = vmatprep.subr.bf16.mxu0 0
      %5734 = vmatpush1.bf16.msra.mxu0 0
      %5735 = vmatprep.subr.bf16.mxu0 0
      %5736 = vmatpush1.bf16.msra.mxu0 0
      %5737 = vmatprep.subr.bf16.mxu0 0
      %5738 = vmatpush1.bf16.msra.mxu0 0
      %5739 = vmatprep.subr.bf16.mxu0 0
      %5740 = vmatpush1.bf16.msra.mxu0 0
      %5741 = vmatprep.subr.bf16.mxu0 0
      %5742 = vmatpush1.bf16.msra.mxu0 0
      %5743 = vmatprep.subr.bf16.mxu0 0
      %5744 = vmatpush1.bf16.msra.mxu0 0
      %5745 = vmatprep.subr.bf16.mxu0 0
      %5746 = vmatpush1.bf16.msra.mxu0 %v4119
      %5747 = vmatprep.subr.bf16.mxu0 0
      %5748 = vmatpush2.bf16.msra.mxu0 0
      %5749 = vmatprep.subr.bf16.mxu0 0
      %5750 = vmatpush2.bf16.msra.mxu0 0
      %5751 = vmatprep.subr.bf16.mxu0 0
      %5752 = vmatpush2.bf16.msra.mxu0 0
      %5753 = vmatprep.subr.bf16.mxu0 0
      %5754 = vmatpush2.bf16.msra.mxu0 0
      %5755 = vmatprep.subr.bf16.mxu0 0
      %5756 = vmatpush2.bf16.msra.mxu0 0
      %5757 = vmatprep.subr.bf16.mxu0 0
      %5758 = vmatpush2.bf16.msra.mxu0 0
      %5759 = vmatprep.subr.bf16.mxu0 0
      %5760 = vmatpush2.bf16.msra.mxu0 0
      %5761 = vmatprep.subr.bf16.mxu0 0
      %5762 = vmatpush2.bf16.msra.mxu0 0
      %5763 = vmatprep.mubr.bf16.mxu0 0
      %5764 = vmatmul.mubr.bf16.gmra.mxu0 %v5729
      %v5765 = vpop.f32.mrf.mxu0
      %v5766 = vadd.f32 0.0, %v5765
      %v5767 = vpop.f32.mrf.mxu0
      %v5768 = vpop.f32.mrf.mxu0
      %v5769 = vadd.f32 0.0, %v5768
      %v5770 = vpop.f32.mrf.mxu0
      %5771 = vdwg.mxu0
      %v5773 = vsel %vm1699, %v5240, 0
      %5775 = vmatprep.subr.bf16.mxu0 0
      %5776 = vmatpush1.bf16.msra.mxu0 0
      %5777 = vmatprep.subr.bf16.mxu0 0
      %5778 = vmatpush1.bf16.msra.mxu0 0
      %5779 = vmatprep.subr.bf16.mxu0 0
      %5780 = vmatpush1.bf16.msra.mxu0 0
      %5781 = vmatprep.subr.bf16.mxu0 0
      %5782 = vmatpush1.bf16.msra.mxu0 0
      %5783 = vmatprep.subr.bf16.mxu0 0
      %5784 = vmatpush1.bf16.msra.mxu0 0
      %5785 = vmatprep.subr.bf16.mxu0 0
      %5786 = vmatpush1.bf16.msra.mxu0 0
      %5787 = vmatprep.subr.bf16.mxu0 0
      %5788 = vmatpush1.bf16.msra.mxu0 0
      %5789 = vmatprep.subr.bf16.mxu0 0
      %5790 = vmatpush1.bf16.msra.mxu0 %v4120
      %5791 = vmatprep.subr.bf16.mxu0 0
      %5792 = vmatpush2.bf16.msra.mxu0 0
      %5793 = vmatprep.subr.bf16.mxu0 0
      %5794 = vmatpush2.bf16.msra.mxu0 0
      %5795 = vmatprep.subr.bf16.mxu0 0
      %5796 = vmatpush2.bf16.msra.mxu0 0
      %5797 = vmatprep.subr.bf16.mxu0 0
      %5798 = vmatpush2.bf16.msra.mxu0 0
      %5799 = vmatprep.subr.bf16.mxu0 0
      %5800 = vmatpush2.bf16.msra.mxu0 0
      %5801 = vmatprep.subr.bf16.mxu0 0
      %5802 = vmatpush2.bf16.msra.mxu0 0
      %5803 = vmatprep.subr.bf16.mxu0 0
      %5804 = vmatpush2.bf16.msra.mxu0 0
      %5805 = vmatprep.subr.bf16.mxu0 0
      %5806 = vmatpush2.bf16.msra.mxu0 0
      %5807 = vmatprep.mubr.bf16.mxu0 0
      %5808 = vmatmul.mubr.bf16.gmra.mxu0 %v5773
      %v5809 = vpop.f32.mrf.mxu0
      %v5810 = vadd.f32 0.0, %v5809
      %v5811 = vpop.f32.mrf.mxu0
      %v5812 = vpop.f32.mrf.mxu0
      %v5813 = vadd.f32 0.0, %v5812
      %v5814 = vpop.f32.mrf.mxu0
      %5815 = vdwg.mxu0
      %v5817 = vsel %vm1699, %v5241, 0
      %5819 = vmatprep.subr.bf16.mxu0 0
      %5820 = vmatpush1.bf16.msra.mxu0 0
      %5821 = vmatprep.subr.bf16.mxu0 0
      %5822 = vmatpush1.bf16.msra.mxu0 0
      %5823 = vmatprep.subr.bf16.mxu0 0
      %5824 = vmatpush1.bf16.msra.mxu0 0
      %5825 = vmatprep.subr.bf16.mxu0 0
      %5826 = vmatpush1.bf16.msra.mxu0 0
      %5827 = vmatprep.subr.bf16.mxu0 0
      %5828 = vmatpush1.bf16.msra.mxu0 0
      %5829 = vmatprep.subr.bf16.mxu0 0
      %5830 = vmatpush1.bf16.msra.mxu0 0
      %5831 = vmatprep.subr.bf16.mxu0 0
      %5832 = vmatpush1.bf16.msra.mxu0 0
      %5833 = vmatprep.subr.bf16.mxu0 0
      %5834 = vmatpush1.bf16.msra.mxu0 %v4121
      %5835 = vmatprep.subr.bf16.mxu0 0
      %5836 = vmatpush2.bf16.msra.mxu0 0
      %5837 = vmatprep.subr.bf16.mxu0 0
      %5838 = vmatpush2.bf16.msra.mxu0 0
      %5839 = vmatprep.subr.bf16.mxu0 0
      %5840 = vmatpush2.bf16.msra.mxu0 0
      %5841 = vmatprep.subr.bf16.mxu0 0
      %5842 = vmatpush2.bf16.msra.mxu0 0
      %5843 = vmatprep.subr.bf16.mxu0 0
      %5844 = vmatpush2.bf16.msra.mxu0 0
      %5845 = vmatprep.subr.bf16.mxu0 0
      %5846 = vmatpush2.bf16.msra.mxu0 0
      %5847 = vmatprep.subr.bf16.mxu0 0
      %5848 = vmatpush2.bf16.msra.mxu0 0
      %5849 = vmatprep.subr.bf16.mxu0 0
      %5850 = vmatpush2.bf16.msra.mxu0 0
      %5851 = vmatprep.mubr.bf16.mxu0 0
      %5852 = vmatmul.mubr.bf16.gmra.mxu0 %v5817
      %v5853 = vpop.f32.mrf.mxu0
      %v5854 = vadd.f32 0.0, %v5853
      %v5855 = vpop.f32.mrf.mxu0
      %v5856 = vpop.f32.mrf.mxu0
      %v5857 = vadd.f32 0.0, %v5856
      %v5858 = vpop.f32.mrf.mxu0
      %5859 = vdwg.mxu0
      %v5861 = vsel %vm1699, %v5242, 0
      %5863 = vmatprep.subr.bf16.mxu0 0
      %5864 = vmatpush1.bf16.msra.mxu0 0
      %5865 = vmatprep.subr.bf16.mxu0 0
      %5866 = vmatpush1.bf16.msra.mxu0 0
      %5867 = vmatprep.subr.bf16.mxu0 0
      %5868 = vmatpush1.bf16.msra.mxu0 0
      %5869 = vmatprep.subr.bf16.mxu0 0
      %5870 = vmatpush1.bf16.msra.mxu0 0
      %5871 = vmatprep.subr.bf16.mxu0 0
      %5872 = vmatpush1.bf16.msra.mxu0 0
      %5873 = vmatprep.subr.bf16.mxu0 0
      %5874 = vmatpush1.bf16.msra.mxu0 0
      %5875 = vmatprep.subr.bf16.mxu0 0
      %5876 = vmatpush1.bf16.msra.mxu0 0
      %5877 = vmatprep.subr.bf16.mxu0 0
      %5878 = vmatpush1.bf16.msra.mxu0 %v4122
      %5879 = vmatprep.subr.bf16.mxu0 0
      %5880 = vmatpush2.bf16.msra.mxu0 0
      %5881 = vmatprep.subr.bf16.mxu0 0
      %5882 = vmatpush2.bf16.msra.mxu0 0
      %5883 = vmatprep.subr.bf16.mxu0 0
      %5884 = vmatpush2.bf16.msra.mxu0 0
      %5885 = vmatprep.subr.bf16.mxu0 0
      %5886 = vmatpush2.bf16.msra.mxu0 0
      %5887 = vmatprep.subr.bf16.mxu0 0
      %5888 = vmatpush2.bf16.msra.mxu0 0
      %5889 = vmatprep.subr.bf16.mxu0 0
      %5890 = vmatpush2.bf16.msra.mxu0 0
      %5891 = vmatprep.subr.bf16.mxu0 0
      %5892 = vmatpush2.bf16.msra.mxu0 0
      %5893 = vmatprep.subr.bf16.mxu0 0
      %5894 = vmatpush2.bf16.msra.mxu0 0
      %5895 = vmatprep.mubr.bf16.mxu0 0
      %5896 = vmatmul.mubr.bf16.gmra.mxu0 %v5861
      %v5897 = vpop.f32.mrf.mxu0
      %v5898 = vadd.f32 0.0, %v5897
      %v5899 = vpop.f32.mrf.mxu0
      %v5900 = vpop.f32.mrf.mxu0
      %v5901 = vadd.f32 0.0, %v5900
      %v5902 = vpop.f32.mrf.mxu0
      %5903 = vdwg.mxu0
      %v5905 = vsel %vm1699, %v5243, 0
      %5907 = vmatprep.subr.bf16.mxu0 0
      %5908 = vmatpush1.bf16.msra.mxu0 0
      %5909 = vmatprep.subr.bf16.mxu0 0
      %5910 = vmatpush1.bf16.msra.mxu0 0
      %5911 = vmatprep.subr.bf16.mxu0 0
      %5912 = vmatpush1.bf16.msra.mxu0 0
      %5913 = vmatprep.subr.bf16.mxu0 0
      %5914 = vmatpush1.bf16.msra.mxu0 0
      %5915 = vmatprep.subr.bf16.mxu0 0
      %5916 = vmatpush1.bf16.msra.mxu0 0
      %5917 = vmatprep.subr.bf16.mxu0 0
      %5918 = vmatpush1.bf16.msra.mxu0 0
      %5919 = vmatprep.subr.bf16.mxu0 0
      %5920 = vmatpush1.bf16.msra.mxu0 0
      %5921 = vmatprep.subr.bf16.mxu0 0
      %5922 = vmatpush1.bf16.msra.mxu0 %v4123
      %5923 = vmatprep.subr.bf16.mxu0 0
      %5924 = vmatpush2.bf16.msra.mxu0 0
      %5925 = vmatprep.subr.bf16.mxu0 0
      %5926 = vmatpush2.bf16.msra.mxu0 0
      %5927 = vmatprep.subr.bf16.mxu0 0
      %5928 = vmatpush2.bf16.msra.mxu0 0
      %5929 = vmatprep.subr.bf16.mxu0 0
      %5930 = vmatpush2.bf16.msra.mxu0 0
      %5931 = vmatprep.subr.bf16.mxu0 0
      %5932 = vmatpush2.bf16.msra.mxu0 0
      %5933 = vmatprep.subr.bf16.mxu0 0
      %5934 = vmatpush2.bf16.msra.mxu0 0
      %5935 = vmatprep.subr.bf16.mxu0 0
      %5936 = vmatpush2.bf16.msra.mxu0 0
      %5937 = vmatprep.subr.bf16.mxu0 0
      %5938 = vmatpush2.bf16.msra.mxu0 0
      %5939 = vmatprep.mubr.bf16.mxu0 0
      %5940 = vmatmul.mubr.bf16.gmra.mxu0 %v5905
      %v5941 = vpop.f32.mrf.mxu0
      %v5942 = vadd.f32 0.0, %v5941
      %v5943 = vpop.f32.mrf.mxu0
      %v5944 = vpop.f32.mrf.mxu0
      %v5945 = vadd.f32 0.0, %v5944
      %v5946 = vpop.f32.mrf.mxu0
      %5947 = vdwg.mxu0
      %v5948 = vpack.c.bf16 %v5285, %v5282
      %v5949 = vpack.c.bf16 %v5329, %v5326
      %v5950 = vpack.c.bf16 %v5373, %v5370
      %v5951 = vpack.c.bf16 %v5417, %v5414
      %v5952 = vpack.c.bf16 %v5461, %v5458
      %v5953 = vpack.c.bf16 %v5505, %v5502
      %v5954 = vpack.c.bf16 %v5549, %v5546
      %v5955 = vpack.c.bf16 %v5593, %v5590
      %v5956 = vpack.c.bf16 %v5637, %v5634
      %v5957 = vpack.c.bf16 %v5681, %v5678
      %v5958 = vpack.c.bf16 %v5725, %v5722
      %v5959 = vpack.c.bf16 %v5769, %v5766
      %v5960 = vpack.c.bf16 %v5813, %v5810
      %v5961 = vpack.c.bf16 %v5857, %v5854
      %v5962 = vpack.c.bf16 %v5901, %v5898
      %v5963 = vpack.c.bf16 %v5945, %v5942
      %s5964 = scalar_lea.vmem %s5, 8
      %v5965 = vld [vmem:[%s5964] sm:$0xf]
      %v5966 = vld [vmem:[%s5964 + $0x4] sm:$0xf]
      %v5969 = vunpack.c.l.b16 %v5965
      %v5970 = vunpack.c.l.b16 %v5966
      %v5971 = vpack.c.b16 %v5970, %v5969
      %v5974 = vsel %vm1699, %v5948, 0
      %v5977 = vsel %vm1699, %v5949, 0
      %v5980 = vsel %vm1699, %v5950, 0
      %v5983 = vsel %vm1699, %v5951, 0
      %v5986 = vsel %vm1699, %v5952, 0
      %v5989 = vsel %vm1699, %v5953, 0
      %v5992 = vsel %vm1699, %v5954, 0
      %v5995 = vsel %vm1699, %v5955, 0
      %v5998 = vsel %vm1699, %v5956, 0
      %v6001 = vsel %vm1699, %v5957, 0
      %v6004 = vsel %vm1699, %v5958, 0
      %v6007 = vsel %vm1699, %v5959, 0
      %v6010 = vsel %vm1699, %v5960, 0
      %v6013 = vsel %vm1699, %v5961, 0
      %v6016 = vsel %vm1699, %v5962, 0
      %v6019 = vsel %vm1699, %v5963, 0
      %6021 = vmatprep.subr.bf16.mxu0 0
      %6022 = vmatpush1.bf16.msra.mxu0 0
      %6023 = vmatprep.subr.bf16.mxu0 0
      %6024 = vmatpush1.bf16.msra.mxu0 0
      %6025 = vmatprep.subr.bf16.mxu0 0
      %6026 = vmatpush1.bf16.msra.mxu0 0
      %6027 = vmatprep.subr.bf16.mxu0 0
      %6028 = vmatpush1.bf16.msra.mxu0 0
      %6029 = vmatprep.subr.bf16.mxu0 0
      %6030 = vmatpush1.bf16.msra.mxu0 0
      %6031 = vmatprep.subr.bf16.mxu0 0
      %6032 = vmatpush1.bf16.msra.mxu0 0
      %6033 = vmatprep.subr.bf16.mxu0 0
      %6034 = vmatpush1.bf16.msra.mxu0 0
      %6035 = vmatprep.subr.bf16.mxu0 0
      %6036 = vmatpush1.bf16.msra.mxu0 %v5971
      %6037 = vmatprep.subr.bf16.mxu0 0
      %6038 = vmatpush2.bf16.msra.mxu0 0
      %6039 = vmatprep.subr.bf16.mxu0 0
      %6040 = vmatpush2.bf16.msra.mxu0 0
      %6041 = vmatprep.subr.bf16.mxu0 0
      %6042 = vmatpush2.bf16.msra.mxu0 0
      %6043 = vmatprep.subr.bf16.mxu0 0
      %6044 = vmatpush2.bf16.msra.mxu0 0
      %6045 = vmatprep.subr.bf16.mxu0 0
      %6046 = vmatpush2.bf16.msra.mxu0 0
      %6047 = vmatprep.subr.bf16.mxu0 0
      %6048 = vmatpush2.bf16.msra.mxu0 0
      %6049 = vmatprep.subr.bf16.mxu0 0
      %6050 = vmatpush2.bf16.msra.mxu0 0
      %6051 = vmatprep.subr.bf16.mxu0 0
      %6052 = vmatpush2.bf16.msra.mxu0 0
      %6053 = vmatprep.mubr.bf16.mxu0 0
      %6054 = vmatmul.mubr.bf16.gmra.mxu0 %v5974
      %v6055 = vpop.f32.mrf.mxu0
      %v6056 = vadd.f32 0.0, %v6055
      %v6057 = vpop.f32.mrf.mxu0
      %v6058 = vpop.f32.mrf.mxu0
      %v6059 = vadd.f32 0.0, %v6058
      %v6060 = vpop.f32.mrf.mxu0
      %6061 = vmatprep.mubr.bf16.mxu0 0
      %6062 = vmatmul.mubr.bf16.gmra.mxu0 %v5977
      %v6063 = vpop.f32.mrf.mxu0
      %v6064 = vadd.f32 0.0, %v6063
      %v6065 = vpop.f32.mrf.mxu0
      %v6066 = vpop.f32.mrf.mxu0
      %v6067 = vadd.f32 0.0, %v6066
      %v6068 = vpop.f32.mrf.mxu0
      %6069 = vmatprep.mubr.bf16.mxu0 0
      %6070 = vmatmul.mubr.bf16.gmra.mxu0 %v5980
      %v6071 = vpop.f32.mrf.mxu0
      %v6072 = vadd.f32 0.0, %v6071
      %v6073 = vpop.f32.mrf.mxu0
      %v6074 = vpop.f32.mrf.mxu0
      %v6075 = vadd.f32 0.0, %v6074
      %v6076 = vpop.f32.mrf.mxu0
      %6077 = vmatprep.mubr.bf16.mxu0 0
      %6078 = vmatmul.mubr.bf16.gmra.mxu0 %v5983
      %v6079 = vpop.f32.mrf.mxu0
      %v6080 = vadd.f32 0.0, %v6079
      %v6081 = vpop.f32.mrf.mxu0
      %v6082 = vpop.f32.mrf.mxu0
      %v6083 = vadd.f32 0.0, %v6082
      %v6084 = vpop.f32.mrf.mxu0
      %6085 = vmatprep.mubr.bf16.mxu0 0
      %6086 = vmatmul.mubr.bf16.gmra.mxu0 %v5986
      %v6087 = vpop.f32.mrf.mxu0
      %v6088 = vadd.f32 0.0, %v6087
      %v6089 = vpop.f32.mrf.mxu0
      %v6090 = vpop.f32.mrf.mxu0
      %v6091 = vadd.f32 0.0, %v6090
      %v6092 = vpop.f32.mrf.mxu0
      %6093 = vmatprep.mubr.bf16.mxu0 0
      %6094 = vmatmul.mubr.bf16.gmra.mxu0 %v5989
      %v6095 = vpop.f32.mrf.mxu0
      %v6096 = vadd.f32 0.0, %v6095
      %v6097 = vpop.f32.mrf.mxu0
      %v6098 = vpop.f32.mrf.mxu0
      %v6099 = vadd.f32 0.0, %v6098
      %v6100 = vpop.f32.mrf.mxu0
      %6101 = vmatprep.mubr.bf16.mxu0 0
      %6102 = vmatmul.mubr.bf16.gmra.mxu0 %v5992
      %v6103 = vpop.f32.mrf.mxu0
      %v6104 = vadd.f32 0.0, %v6103
      %v6105 = vpop.f32.mrf.mxu0
      %v6106 = vpop.f32.mrf.mxu0
      %v6107 = vadd.f32 0.0, %v6106
      %v6108 = vpop.f32.mrf.mxu0
      %6109 = vmatprep.mubr.bf16.mxu0 0
      %6110 = vmatmul.mubr.bf16.gmra.mxu0 %v5995
      %v6111 = vpop.f32.mrf.mxu0
      %v6112 = vadd.f32 0.0, %v6111
      %v6113 = vpop.f32.mrf.mxu0
      %v6114 = vpop.f32.mrf.mxu0
      %v6115 = vadd.f32 0.0, %v6114
      %v6116 = vpop.f32.mrf.mxu0
      %6117 = vmatprep.mubr.bf16.mxu0 0
      %6118 = vmatmul.mubr.bf16.gmra.mxu0 %v5998
      %v6119 = vpop.f32.mrf.mxu0
      %v6120 = vadd.f32 0.0, %v6119
      %v6121 = vpop.f32.mrf.mxu0
      %v6122 = vpop.f32.mrf.mxu0
      %v6123 = vadd.f32 0.0, %v6122
      %v6124 = vpop.f32.mrf.mxu0
      %6125 = vmatprep.mubr.bf16.mxu0 0
      %6126 = vmatmul.mubr.bf16.gmra.mxu0 %v6001
      %v6127 = vpop.f32.mrf.mxu0
      %v6128 = vadd.f32 0.0, %v6127
      %v6129 = vpop.f32.mrf.mxu0
      %v6130 = vpop.f32.mrf.mxu0
      %v6131 = vadd.f32 0.0, %v6130
      %v6132 = vpop.f32.mrf.mxu0
      %6133 = vmatprep.mubr.bf16.mxu0 0
      %6134 = vmatmul.mubr.bf16.gmra.mxu0 %v6004
      %v6135 = vpop.f32.mrf.mxu0
      %v6136 = vadd.f32 0.0, %v6135
      %v6137 = vpop.f32.mrf.mxu0
      %v6138 = vpop.f32.mrf.mxu0
      %v6139 = vadd.f32 0.0, %v6138
      %v6140 = vpop.f32.mrf.mxu0
      %6141 = vmatprep.mubr.bf16.mxu0 0
      %6142 = vmatmul.mubr.bf16.gmra.mxu0 %v6007
      %v6143 = vpop.f32.mrf.mxu0
      %v6144 = vadd.f32 0.0, %v6143
      %v6145 = vpop.f32.mrf.mxu0
      %v6146 = vpop.f32.mrf.mxu0
      %v6147 = vadd.f32 0.0, %v6146
      %v6148 = vpop.f32.mrf.mxu0
      %6149 = vmatprep.mubr.bf16.mxu0 0
      %6150 = vmatmul.mubr.bf16.gmra.mxu0 %v6010
      %v6151 = vpop.f32.mrf.mxu0
      %v6152 = vadd.f32 0.0, %v6151
      %v6153 = vpop.f32.mrf.mxu0
      %v6154 = vpop.f32.mrf.mxu0
      %v6155 = vadd.f32 0.0, %v6154
      %v6156 = vpop.f32.mrf.mxu0
      %6157 = vmatprep.mubr.bf16.mxu0 0
      %6158 = vmatmul.mubr.bf16.gmra.mxu0 %v6013
      %v6159 = vpop.f32.mrf.mxu0
      %v6160 = vadd.f32 0.0, %v6159
      %v6161 = vpop.f32.mrf.mxu0
      %v6162 = vpop.f32.mrf.mxu0
      %v6163 = vadd.f32 0.0, %v6162
      %v6164 = vpop.f32.mrf.mxu0
      %6165 = vmatprep.mubr.bf16.mxu0 0
      %6166 = vmatmul.mubr.bf16.gmra.mxu0 %v6016
      %v6167 = vpop.f32.mrf.mxu0
      %v6168 = vadd.f32 0.0, %v6167
      %v6169 = vpop.f32.mrf.mxu0
      %v6170 = vpop.f32.mrf.mxu0
      %v6171 = vadd.f32 0.0, %v6170
      %v6172 = vpop.f32.mrf.mxu0
      %6173 = vmatprep.mubr.bf16.mxu0 0
      %6174 = vmatmul.mubr.bf16.gmra.mxu0 %v6019
      %v6175 = vpop.f32.mrf.mxu0
      %v6176 = vadd.f32 0.0, %v6175
      %v6177 = vpop.f32.mrf.mxu0
      %v6178 = vpop.f32.mrf.mxu0
      %v6179 = vadd.f32 0.0, %v6178
      %v6180 = vpop.f32.mrf.mxu0
      %6181 = vdwg.mxu0
      %v6184 = vunpack.c.l.b16 %v3540
      %v6185 = vunpack.c.l.b16 %v3541
      %v6186 = vpack.c.b16 %v6185, %v6184
      %v6189 = vsel %vm1699, %v3524, 0
      %v6192 = vsel %vm1699, %v3525, 0
      %v6195 = vsel %vm1699, %v3526, 0
      %v6198 = vsel %vm1699, %v3527, 0
      %v6201 = vsel %vm1699, %v3528, 0
      %v6204 = vsel %vm1699, %v3529, 0
      %v6207 = vsel %vm1699, %v3530, 0
      %v6210 = vsel %vm1699, %v3531, 0
      %v6213 = vsel %vm1699, %v3532, 0
      %v6216 = vsel %vm1699, %v3533, 0
      %v6219 = vsel %vm1699, %v3534, 0
      %v6222 = vsel %vm1699, %v3535, 0
      %v6225 = vsel %vm1699, %v3536, 0
      %v6228 = vsel %vm1699, %v3537, 0
      %v6231 = vsel %vm1699, %v3538, 0
      %v6234 = vsel %vm1699, %v3539, 0
      %6236 = vmatprep.subr.bf16.mxu0 0
      %6237 = vmatpush1.bf16.msra.mxu0 0
      %6238 = vmatprep.subr.bf16.mxu0 0
      %6239 = vmatpush1.bf16.msra.mxu0 0
      %6240 = vmatprep.subr.bf16.mxu0 0
      %6241 = vmatpush1.bf16.msra.mxu0 0
      %6242 = vmatprep.subr.bf16.mxu0 0
      %6243 = vmatpush1.bf16.msra.mxu0 0
      %6244 = vmatprep.subr.bf16.mxu0 0
      %6245 = vmatpush1.bf16.msra.mxu0 0
      %6246 = vmatprep.subr.bf16.mxu0 0
      %6247 = vmatpush1.bf16.msra.mxu0 0
      %6248 = vmatprep.subr.bf16.mxu0 0
      %6249 = vmatpush1.bf16.msra.mxu0 0
      %6250 = vmatprep.subr.bf16.mxu0 0
      %6251 = vmatpush1.bf16.msra.mxu0 %v6186
      %6252 = vmatprep.subr.bf16.mxu0 0
      %6253 = vmatpush2.bf16.msra.mxu0 0
      %6254 = vmatprep.subr.bf16.mxu0 0
      %6255 = vmatpush2.bf16.msra.mxu0 0
      %6256 = vmatprep.subr.bf16.mxu0 0
      %6257 = vmatpush2.bf16.msra.mxu0 0
      %6258 = vmatprep.subr.bf16.mxu0 0
      %6259 = vmatpush2.bf16.msra.mxu0 0
      %6260 = vmatprep.subr.bf16.mxu0 0
      %6261 = vmatpush2.bf16.msra.mxu0 0
      %6262 = vmatprep.subr.bf16.mxu0 0
      %6263 = vmatpush2.bf16.msra.mxu0 0
      %6264 = vmatprep.subr.bf16.mxu0 0
      %6265 = vmatpush2.bf16.msra.mxu0 0
      %6266 = vmatprep.subr.bf16.mxu0 0
      %6267 = vmatpush2.bf16.msra.mxu0 0
      %6268 = vmatprep.mubr.bf16.mxu0 0
      %6269 = vmatmul.mubr.bf16.gmra.mxu0 %v6189
      %v6270 = vpop.f32.mrf.mxu0
      %v6271 = vadd.f32 %v6056, %v6270
      %v6272 = vpop.f32.mrf.mxu0
      %v6273 = vpop.f32.mrf.mxu0
      %v6274 = vadd.f32 %v6059, %v6273
      %v6275 = vpop.f32.mrf.mxu0
      %6276 = vmatprep.mubr.bf16.mxu0 0
      %6277 = vmatmul.mubr.bf16.gmra.mxu0 %v6192
      %v6278 = vpop.f32.mrf.mxu0
      %v6279 = vadd.f32 %v6064, %v6278
      %v6280 = vpop.f32.mrf.mxu0
      %v6281 = vpop.f32.mrf.mxu0
      %v6282 = vadd.f32 %v6067, %v6281
      %v6283 = vpop.f32.mrf.mxu0
      %6284 = vmatprep.mubr.bf16.mxu0 0
      %6285 = vmatmul.mubr.bf16.gmra.mxu0 %v6195
      %v6286 = vpop.f32.mrf.mxu0
      %v6287 = vadd.f32 %v6072, %v6286
      %v6288 = vpop.f32.mrf.mxu0
      %v6289 = vpop.f32.mrf.mxu0
      %v6290 = vadd.f32 %v6075, %v6289
      %v6291 = vpop.f32.mrf.mxu0
      %6292 = vmatprep.mubr.bf16.mxu0 0
      %6293 = vmatmul.mubr.bf16.gmra.mxu0 %v6198
      %v6294 = vpop.f32.mrf.mxu0
      %v6295 = vadd.f32 %v6080, %v6294
      %v6296 = vpop.f32.mrf.mxu0
      %v6297 = vpop.f32.mrf.mxu0
      %v6298 = vadd.f32 %v6083, %v6297
      %v6299 = vpop.f32.mrf.mxu0
      %6300 = vmatprep.mubr.bf16.mxu0 0
      %6301 = vmatmul.mubr.bf16.gmra.mxu0 %v6201
      %v6302 = vpop.f32.mrf.mxu0
      %v6303 = vadd.f32 %v6088, %v6302
      %v6304 = vpop.f32.mrf.mxu0
      %v6305 = vpop.f32.mrf.mxu0
      %v6306 = vadd.f32 %v6091, %v6305
      %v6307 = vpop.f32.mrf.mxu0
      %6308 = vmatprep.mubr.bf16.mxu0 0
      %6309 = vmatmul.mubr.bf16.gmra.mxu0 %v6204
      %v6310 = vpop.f32.mrf.mxu0
      %v6311 = vadd.f32 %v6096, %v6310
      %v6312 = vpop.f32.mrf.mxu0
      %v6313 = vpop.f32.mrf.mxu0
      %v6314 = vadd.f32 %v6099, %v6313
      %v6315 = vpop.f32.mrf.mxu0
      %6316 = vmatprep.mubr.bf16.mxu0 0
      %6317 = vmatmul.mubr.bf16.gmra.mxu0 %v6207
      %v6318 = vpop.f32.mrf.mxu0
      %v6319 = vadd.f32 %v6104, %v6318
      %v6320 = vpop.f32.mrf.mxu0
      %v6321 = vpop.f32.mrf.mxu0
      %v6322 = vadd.f32 %v6107, %v6321
      %v6323 = vpop.f32.mrf.mxu0
      %6324 = vmatprep.mubr.bf16.mxu0 0
      %6325 = vmatmul.mubr.bf16.gmra.mxu0 %v6210
      %v6326 = vpop.f32.mrf.mxu0
      %v6327 = vadd.f32 %v6112, %v6326
      %v6328 = vpop.f32.mrf.mxu0
      %v6329 = vpop.f32.mrf.mxu0
      %v6330 = vadd.f32 %v6115, %v6329
      %v6331 = vpop.f32.mrf.mxu0
      %6332 = vmatprep.mubr.bf16.mxu0 0
      %6333 = vmatmul.mubr.bf16.gmra.mxu0 %v6213
      %v6334 = vpop.f32.mrf.mxu0
      %v6335 = vadd.f32 %v6120, %v6334
      %v6336 = vpop.f32.mrf.mxu0
      %v6337 = vpop.f32.mrf.mxu0
      %v6338 = vadd.f32 %v6123, %v6337
      %v6339 = vpop.f32.mrf.mxu0
      %6340 = vmatprep.mubr.bf16.mxu0 0
      %6341 = vmatmul.mubr.bf16.gmra.mxu0 %v6216
      %v6342 = vpop.f32.mrf.mxu0
      %v6343 = vadd.f32 %v6128, %v6342
      %v6344 = vpop.f32.mrf.mxu0
      %v6345 = vpop.f32.mrf.mxu0
      %v6346 = vadd.f32 %v6131, %v6345
      %v6347 = vpop.f32.mrf.mxu0
      %6348 = vmatprep.mubr.bf16.mxu0 0
      %6349 = vmatmul.mubr.bf16.gmra.mxu0 %v6219
      %v6350 = vpop.f32.mrf.mxu0
      %v6351 = vadd.f32 %v6136, %v6350
      %v6352 = vpop.f32.mrf.mxu0
      %v6353 = vpop.f32.mrf.mxu0
      %v6354 = vadd.f32 %v6139, %v6353
      %v6355 = vpop.f32.mrf.mxu0
      %6356 = vmatprep.mubr.bf16.mxu0 0
      %6357 = vmatmul.mubr.bf16.gmra.mxu0 %v6222
      %v6358 = vpop.f32.mrf.mxu0
      %v6359 = vadd.f32 %v6144, %v6358
      %v6360 = vpop.f32.mrf.mxu0
      %v6361 = vpop.f32.mrf.mxu0
      %v6362 = vadd.f32 %v6147, %v6361
      %v6363 = vpop.f32.mrf.mxu0
      %6364 = vmatprep.mubr.bf16.mxu0 0
      %6365 = vmatmul.mubr.bf16.gmra.mxu0 %v6225
      %v6366 = vpop.f32.mrf.mxu0
      %v6367 = vadd.f32 %v6152, %v6366
      %v6368 = vpop.f32.mrf.mxu0
      %v6369 = vpop.f32.mrf.mxu0
      %v6370 = vadd.f32 %v6155, %v6369
      %v6371 = vpop.f32.mrf.mxu0
      %6372 = vmatprep.mubr.bf16.mxu0 0
      %6373 = vmatmul.mubr.bf16.gmra.mxu0 %v6228
      %v6374 = vpop.f32.mrf.mxu0
      %v6375 = vadd.f32 %v6160, %v6374
      %v6376 = vpop.f32.mrf.mxu0
      %v6377 = vpop.f32.mrf.mxu0
      %v6378 = vadd.f32 %v6163, %v6377
      %v6379 = vpop.f32.mrf.mxu0
      %6380 = vmatprep.mubr.bf16.mxu0 0
      %6381 = vmatmul.mubr.bf16.gmra.mxu0 %v6231
      %v6382 = vpop.f32.mrf.mxu0
      %v6383 = vadd.f32 %v6168, %v6382
      %v6384 = vpop.f32.mrf.mxu0
      %v6385 = vpop.f32.mrf.mxu0
      %v6386 = vadd.f32 %v6171, %v6385
      %v6387 = vpop.f32.mrf.mxu0
      %6388 = vmatprep.mubr.bf16.mxu0 0
      %6389 = vmatmul.mubr.bf16.gmra.mxu0 %v6234
      %v6390 = vpop.f32.mrf.mxu0
      %v6391 = vadd.f32 %v6176, %v6390
      %v6392 = vpop.f32.mrf.mxu0
      %v6393 = vpop.f32.mrf.mxu0
      %v6394 = vadd.f32 %v6179, %v6393
      %v6395 = vpop.f32.mrf.mxu0
      %6396 = vdwg.mxu0
      %v6397 = vadd.f32 %v496, %v6271
      %v6398 = vadd.f32 %v497, %v6274
      %v6399 = vadd.f32 %v498, %v6279
      %v6400 = vadd.f32 %v499, %v6282
      %v6401 = vadd.f32 %v500, %v6287
      %v6402 = vadd.f32 %v501, %v6290
      %v6403 = vadd.f32 %v502, %v6295
      %v6404 = vadd.f32 %v503, %v6298
      %v6405 = vadd.f32 %v504, %v6303
      %v6406 = vadd.f32 %v505, %v6306
      %v6407 = vadd.f32 %v506, %v6311
      %v6408 = vadd.f32 %v507, %v6314
      %v6409 = vadd.f32 %v508, %v6319
      %v6410 = vadd.f32 %v509, %v6322
      %v6411 = vadd.f32 %v510, %v6327
      %v6412 = vadd.f32 %v511, %v6330
      %v6413 = vadd.f32 %v512, %v6335
      %v6414 = vadd.f32 %v513, %v6338
      %v6415 = vadd.f32 %v514, %v6343
      %v6416 = vadd.f32 %v515, %v6346
      %v6417 = vadd.f32 %v516, %v6351
      %v6418 = vadd.f32 %v517, %v6354
      %v6419 = vadd.f32 %v518, %v6359
      %v6420 = vadd.f32 %v519, %v6362
      %v6421 = vadd.f32 %v520, %v6367
      %v6422 = vadd.f32 %v521, %v6370
      %v6423 = vadd.f32 %v522, %v6375
      %v6424 = vadd.f32 %v523, %v6378
      %v6425 = vadd.f32 %v524, %v6383
      %v6426 = vadd.f32 %v525, %v6386
      %v6427 = vadd.f32 %v526, %v6391
      %v6428 = vadd.f32 %v527, %v6394
      %v6429 = vld [vmem:[%s6] sm:$0x1]
      %v6431 = vlaneseq
      %v6432 = vshrl.u32 %v6431, 7
      %v6433 = vsub.s32 0, %v6432
      %v6434 = vrot.slane %v6429, %v6433
      %v6436 = vadd.f32 %v6397, %v6434
      %v6437 = vadd.f32 %v6398, %v6434
      %v6438 = vadd.f32 %v6399, %v6434
      %v6439 = vadd.f32 %v6400, %v6434
      %v6440 = vadd.f32 %v6401, %v6434
      %v6441 = vadd.f32 %v6402, %v6434
      %v6442 = vadd.f32 %v6403, %v6434
      %v6443 = vadd.f32 %v6404, %v6434
      %v6444 = vadd.f32 %v6405, %v6434
      %v6445 = vadd.f32 %v6406, %v6434
      %v6446 = vadd.f32 %v6407, %v6434
      %v6447 = vadd.f32 %v6408, %v6434
      %v6448 = vadd.f32 %v6409, %v6434
      %v6449 = vadd.f32 %v6410, %v6434
      %v6450 = vadd.f32 %v6411, %v6434
      %v6451 = vadd.f32 %v6412, %v6434
      %v6452 = vadd.f32 %v6413, %v6434
      %v6453 = vadd.f32 %v6414, %v6434
      %v6454 = vadd.f32 %v6415, %v6434
      %v6455 = vadd.f32 %v6416, %v6434
      %v6456 = vadd.f32 %v6417, %v6434
      %v6457 = vadd.f32 %v6418, %v6434
      %v6458 = vadd.f32 %v6419, %v6434
      %v6459 = vadd.f32 %v6420, %v6434
      %v6460 = vadd.f32 %v6421, %v6434
      %v6461 = vadd.f32 %v6422, %v6434
      %v6462 = vadd.f32 %v6423, %v6434
      %v6463 = vadd.f32 %v6424, %v6434
      %v6464 = vadd.f32 %v6425, %v6434
      %v6465 = vadd.f32 %v6426, %v6434
      %v6466 = vadd.f32 %v6427, %v6434
      %v6467 = vadd.f32 %v6428, %v6434
      %v6468 = vsel %vm528, %v6436, 0.0
      %6469 = vadd.xlane.f32.xlu0 %v6468
      %v6470 = vpop.xlane.xlu0 %6469
      %v6471 = vsel %vm528, %v6437, 0.0
      %6472 = vadd.xlane.f32.xlu0 %v6471
      %v6473 = vpop.xlane.xlu0 %6472
      %v6474 = vsel %vm528, %v6438, 0.0
      %6475 = vadd.xlane.f32.xlu0 %v6474
      %v6476 = vpop.xlane.xlu0 %6475
      %v6477 = vsel %vm528, %v6439, 0.0
      %6478 = vadd.xlane.f32.xlu0 %v6477
      %v6479 = vpop.xlane.xlu0 %6478
      %v6480 = vsel %vm528, %v6440, 0.0
      %6481 = vadd.xlane.f32.xlu0 %v6480
      %v6482 = vpop.xlane.xlu0 %6481
      %v6483 = vsel %vm528, %v6441, 0.0
      %6484 = vadd.xlane.f32.xlu0 %v6483
      %v6485 = vpop.xlane.xlu0 %6484
      %v6486 = vsel %vm528, %v6442, 0.0
      %6487 = vadd.xlane.f32.xlu0 %v6486
      %v6488 = vpop.xlane.xlu0 %6487
      %v6489 = vsel %vm528, %v6443, 0.0
      %6490 = vadd.xlane.f32.xlu0 %v6489
      %v6491 = vpop.xlane.xlu0 %6490
      %v6492 = vsel %vm528, %v6444, 0.0
      %6493 = vadd.xlane.f32.xlu0 %v6492
      %v6494 = vpop.xlane.xlu0 %6493
      %v6495 = vsel %vm528, %v6445, 0.0
      %6496 = vadd.xlane.f32.xlu0 %v6495
      %v6497 = vpop.xlane.xlu0 %6496
      %v6498 = vsel %vm528, %v6446, 0.0
      %6499 = vadd.xlane.f32.xlu0 %v6498
      %v6500 = vpop.xlane.xlu0 %6499
      %v6501 = vsel %vm528, %v6447, 0.0
      %6502 = vadd.xlane.f32.xlu0 %v6501
      %v6503 = vpop.xlane.xlu0 %6502
      %v6504 = vsel %vm528, %v6448, 0.0
      %6505 = vadd.xlane.f32.xlu0 %v6504
      %v6506 = vpop.xlane.xlu0 %6505
      %v6507 = vsel %vm528, %v6449, 0.0
      %6508 = vadd.xlane.f32.xlu0 %v6507
      %v6509 = vpop.xlane.xlu0 %6508
      %v6510 = vsel %vm528, %v6450, 0.0
      %6511 = vadd.xlane.f32.xlu0 %v6510
      %v6512 = vpop.xlane.xlu0 %6511
      %v6513 = vsel %vm528, %v6451, 0.0
      %6514 = vadd.xlane.f32.xlu0 %v6513
      %v6515 = vpop.xlane.xlu0 %6514
      %v6516 = vsel %vm528, %v6452, 0.0
      %6517 = vadd.xlane.f32.xlu0 %v6516
      %v6518 = vpop.xlane.xlu0 %6517
      %v6519 = vsel %vm528, %v6453, 0.0
      %6520 = vadd.xlane.f32.xlu0 %v6519
      %v6521 = vpop.xlane.xlu0 %6520
      %v6522 = vsel %vm528, %v6454, 0.0
      %6523 = vadd.xlane.f32.xlu0 %v6522
      %v6524 = vpop.xlane.xlu0 %6523
      %v6525 = vsel %vm528, %v6455, 0.0
      %6526 = vadd.xlane.f32.xlu0 %v6525
      %v6527 = vpop.xlane.xlu0 %6526
      %v6528 = vsel %vm528, %v6456, 0.0
      %6529 = vadd.xlane.f32.xlu0 %v6528
      %v6530 = vpop.xlane.xlu0 %6529
      %v6531 = vsel %vm528, %v6457, 0.0
      %6532 = vadd.xlane.f32.xlu0 %v6531
      %v6533 = vpop.xlane.xlu0 %6532
      %v6534 = vsel %vm528, %v6458, 0.0
      %6535 = vadd.xlane.f32.xlu0 %v6534
      %v6536 = vpop.xlane.xlu0 %6535
      %v6537 = vsel %vm528, %v6459, 0.0
      %6538 = vadd.xlane.f32.xlu0 %v6537
      %v6539 = vpop.xlane.xlu0 %6538
      %v6540 = vsel %vm528, %v6460, 0.0
      %6541 = vadd.xlane.f32.xlu0 %v6540
      %v6542 = vpop.xlane.xlu0 %6541
      %v6543 = vsel %vm528, %v6461, 0.0
      %6544 = vadd.xlane.f32.xlu0 %v6543
      %v6545 = vpop.xlane.xlu0 %6544
      %v6546 = vsel %vm528, %v6462, 0.0
      %6547 = vadd.xlane.f32.xlu0 %v6546
      %v6548 = vpop.xlane.xlu0 %6547
      %v6549 = vsel %vm528, %v6463, 0.0
      %6550 = vadd.xlane.f32.xlu0 %v6549
      %v6551 = vpop.xlane.xlu0 %6550
      %v6552 = vsel %vm528, %v6464, 0.0
      %6553 = vadd.xlane.f32.xlu0 %v6552
      %v6554 = vpop.xlane.xlu0 %6553
      %v6555 = vsel %vm528, %v6465, 0.0
      %6556 = vadd.xlane.f32.xlu0 %v6555
      %v6557 = vpop.xlane.xlu0 %6556
      %v6558 = vsel %vm528, %v6466, 0.0
      %6559 = vadd.xlane.f32.xlu0 %v6558
      %v6560 = vpop.xlane.xlu0 %6559
      %v6561 = vsel %vm528, %v6467, 0.0
      %6562 = vadd.xlane.f32.xlu0 %v6561
      %v6563 = vpop.xlane.xlu0 %6562
      %v6564 = vmul.f32 %v6470, %v625
      %v6565 = vmul.f32 %v6473, %v625
      %v6566 = vmul.f32 %v6476, %v625
      %v6567 = vmul.f32 %v6479, %v625
      %v6568 = vmul.f32 %v6482, %v625
      %v6569 = vmul.f32 %v6485, %v625
      %v6570 = vmul.f32 %v6488, %v625
      %v6571 = vmul.f32 %v6491, %v625
      %v6572 = vmul.f32 %v6494, %v625
      %v6573 = vmul.f32 %v6497, %v625
      %v6574 = vmul.f32 %v6500, %v625
      %v6575 = vmul.f32 %v6503, %v625
      %v6576 = vmul.f32 %v6506, %v625
      %v6577 = vmul.f32 %v6509, %v625
      %v6578 = vmul.f32 %v6512, %v625
      %v6579 = vmul.f32 %v6515, %v625
      %v6580 = vmul.f32 %v6518, %v625
      %v6581 = vmul.f32 %v6521, %v625
      %v6582 = vmul.f32 %v6524, %v625
      %v6583 = vmul.f32 %v6527, %v625
      %v6584 = vmul.f32 %v6530, %v625
      %v6585 = vmul.f32 %v6533, %v625
      %v6586 = vmul.f32 %v6536, %v625
      %v6587 = vmul.f32 %v6539, %v625
      %v6588 = vmul.f32 %v6542, %v625
      %v6589 = vmul.f32 %v6545, %v625
      %v6590 = vmul.f32 %v6548, %v625
      %v6591 = vmul.f32 %v6551, %v625
      %v6592 = vmul.f32 %v6554, %v625
      %v6593 = vmul.f32 %v6557, %v625
      %v6594 = vmul.f32 %v6560, %v625
      %v6595 = vmul.f32 %v6563, %v625
      %v6596 = vsub.f32 %v6436, %v6564
      %v6597 = vsub.f32 %v6437, %v6565
      %v6598 = vsub.f32 %v6438, %v6566
      %v6599 = vsub.f32 %v6439, %v6567
      %v6600 = vsub.f32 %v6440, %v6568
      %v6601 = vsub.f32 %v6441, %v6569
      %v6602 = vsub.f32 %v6442, %v6570
      %v6603 = vsub.f32 %v6443, %v6571
      %v6604 = vsub.f32 %v6444, %v6572
      %v6605 = vsub.f32 %v6445, %v6573
      %v6606 = vsub.f32 %v6446, %v6574
      %v6607 = vsub.f32 %v6447, %v6575
      %v6608 = vsub.f32 %v6448, %v6576
      %v6609 = vsub.f32 %v6449, %v6577
      %v6610 = vsub.f32 %v6450, %v6578
      %v6611 = vsub.f32 %v6451, %v6579
      %v6612 = vsub.f32 %v6452, %v6580
      %v6613 = vsub.f32 %v6453, %v6581
      %v6614 = vsub.f32 %v6454, %v6582
      %v6615 = vsub.f32 %v6455, %v6583
      %v6616 = vsub.f32 %v6456, %v6584
      %v6617 = vsub.f32 %v6457, %v6585
      %v6618 = vsub.f32 %v6458, %v6586
      %v6619 = vsub.f32 %v6459, %v6587
      %v6620 = vsub.f32 %v6460, %v6588
      %v6621 = vsub.f32 %v6461, %v6589
      %v6622 = vsub.f32 %v6462, %v6590
      %v6623 = vsub.f32 %v6463, %v6591
      %v6624 = vsub.f32 %v6464, %v6592
      %v6625 = vsub.f32 %v6465, %v6593
      %v6626 = vsub.f32 %v6466, %v6594
      %v6627 = vsub.f32 %v6467, %v6595
      %v6628 = vmul.f32 %v6596, %v6596
      %v6629 = vmul.f32 %v6597, %v6597
      %v6630 = vmul.f32 %v6598, %v6598
      %v6631 = vmul.f32 %v6599, %v6599
      %v6632 = vmul.f32 %v6600, %v6600
      %v6633 = vmul.f32 %v6601, %v6601
      %v6634 = vmul.f32 %v6602, %v6602
      %v6635 = vmul.f32 %v6603, %v6603
      %v6636 = vmul.f32 %v6604, %v6604
      %v6637 = vmul.f32 %v6605, %v6605
      %v6638 = vmul.f32 %v6606, %v6606
      %v6639 = vmul.f32 %v6607, %v6607
      %v6640 = vmul.f32 %v6608, %v6608
      %v6641 = vmul.f32 %v6609, %v6609
      %v6642 = vmul.f32 %v6610, %v6610
      %v6643 = vmul.f32 %v6611, %v6611
      %v6644 = vmul.f32 %v6612, %v6612
      %v6645 = vmul.f32 %v6613, %v6613
      %v6646 = vmul.f32 %v6614, %v6614
      %v6647 = vmul.f32 %v6615, %v6615
      %v6648 = vmul.f32 %v6616, %v6616
      %v6649 = vmul.f32 %v6617, %v6617
      %v6650 = vmul.f32 %v6618, %v6618
      %v6651 = vmul.f32 %v6619, %v6619
      %v6652 = vmul.f32 %v6620, %v6620
      %v6653 = vmul.f32 %v6621, %v6621
      %v6654 = vmul.f32 %v6622, %v6622
      %v6655 = vmul.f32 %v6623, %v6623
      %v6656 = vmul.f32 %v6624, %v6624
      %v6657 = vmul.f32 %v6625, %v6625
      %v6658 = vmul.f32 %v6626, %v6626
      %v6659 = vmul.f32 %v6627, %v6627
      %v6660 = vsel %vm528, %v6628, 0.0
      %6661 = vadd.xlane.f32.xlu0 %v6660
      %v6662 = vpop.xlane.xlu0 %6661
      %v6663 = vsel %vm528, %v6629, 0.0
      %6664 = vadd.xlane.f32.xlu0 %v6663
      %v6665 = vpop.xlane.xlu0 %6664
      %v6666 = vsel %vm528, %v6630, 0.0
      %6667 = vadd.xlane.f32.xlu0 %v6666
      %v6668 = vpop.xlane.xlu0 %6667
      %v6669 = vsel %vm528, %v6631, 0.0
      %6670 = vadd.xlane.f32.xlu0 %v6669
      %v6671 = vpop.xlane.xlu0 %6670
      %v6672 = vsel %vm528, %v6632, 0.0
      %6673 = vadd.xlane.f32.xlu0 %v6672
      %v6674 = vpop.xlane.xlu0 %6673
      %v6675 = vsel %vm528, %v6633, 0.0
      %6676 = vadd.xlane.f32.xlu0 %v6675
      %v6677 = vpop.xlane.xlu0 %6676
      %v6678 = vsel %vm528, %v6634, 0.0
      %6679 = vadd.xlane.f32.xlu0 %v6678
      %v6680 = vpop.xlane.xlu0 %6679
      %v6681 = vsel %vm528, %v6635, 0.0
      %6682 = vadd.xlane.f32.xlu0 %v6681
      %v6683 = vpop.xlane.xlu0 %6682
      %v6684 = vsel %vm528, %v6636, 0.0
      %6685 = vadd.xlane.f32.xlu0 %v6684
      %v6686 = vpop.xlane.xlu0 %6685
      %v6687 = vsel %vm528, %v6637, 0.0
      %6688 = vadd.xlane.f32.xlu0 %v6687
      %v6689 = vpop.xlane.xlu0 %6688
      %v6690 = vsel %vm528, %v6638, 0.0
      %6691 = vadd.xlane.f32.xlu0 %v6690
      %v6692 = vpop.xlane.xlu0 %6691
      %v6693 = vsel %vm528, %v6639, 0.0
      %6694 = vadd.xlane.f32.xlu0 %v6693
      %v6695 = vpop.xlane.xlu0 %6694
      %v6696 = vsel %vm528, %v6640, 0.0
      %6697 = vadd.xlane.f32.xlu0 %v6696
      %v6698 = vpop.xlane.xlu0 %6697
      %v6699 = vsel %vm528, %v6641, 0.0
      %6700 = vadd.xlane.f32.xlu0 %v6699
      %v6701 = vpop.xlane.xlu0 %6700
      %v6702 = vsel %vm528, %v6642, 0.0
      %6703 = vadd.xlane.f32.xlu0 %v6702
      %v6704 = vpop.xlane.xlu0 %6703
      %v6705 = vsel %vm528, %v6643, 0.0
      %6706 = vadd.xlane.f32.xlu0 %v6705
      %v6707 = vpop.xlane.xlu0 %6706
      %v6708 = vsel %vm528, %v6644, 0.0
      %6709 = vadd.xlane.f32.xlu0 %v6708
      %v6710 = vpop.xlane.xlu0 %6709
      %v6711 = vsel %vm528, %v6645, 0.0
      %6712 = vadd.xlane.f32.xlu0 %v6711
      %v6713 = vpop.xlane.xlu0 %6712
      %v6714 = vsel %vm528, %v6646, 0.0
      %6715 = vadd.xlane.f32.xlu0 %v6714
      %v6716 = vpop.xlane.xlu0 %6715
      %v6717 = vsel %vm528, %v6647, 0.0
      %6718 = vadd.xlane.f32.xlu0 %v6717
      %v6719 = vpop.xlane.xlu0 %6718
      %v6720 = vsel %vm528, %v6648, 0.0
      %6721 = vadd.xlane.f32.xlu0 %v6720
      %v6722 = vpop.xlane.xlu0 %6721
      %v6723 = vsel %vm528, %v6649, 0.0
      %6724 = vadd.xlane.f32.xlu0 %v6723
      %v6725 = vpop.xlane.xlu0 %6724
      %v6726 = vsel %vm528, %v6650, 0.0
      %6727 = vadd.xlane.f32.xlu0 %v6726
      %v6728 = vpop.xlane.xlu0 %6727
      %v6729 = vsel %vm528, %v6651, 0.0
      %6730 = vadd.xlane.f32.xlu0 %v6729
      %v6731 = vpop.xlane.xlu0 %6730
      %v6732 = vsel %vm528, %v6652, 0.0
      %6733 = vadd.xlane.f32.xlu0 %v6732
      %v6734 = vpop.xlane.xlu0 %6733
      %v6735 = vsel %vm528, %v6653, 0.0
      %6736 = vadd.xlane.f32.xlu0 %v6735
      %v6737 = vpop.xlane.xlu0 %6736
      %v6738 = vsel %vm528, %v6654, 0.0
      %6739 = vadd.xlane.f32.xlu0 %v6738
      %v6740 = vpop.xlane.xlu0 %6739
      %v6741 = vsel %vm528, %v6655, 0.0
      %6742 = vadd.xlane.f32.xlu0 %v6741
      %v6743 = vpop.xlane.xlu0 %6742
      %v6744 = vsel %vm528, %v6656, 0.0
      %6745 = vadd.xlane.f32.xlu0 %v6744
      %v6746 = vpop.xlane.xlu0 %6745
      %v6747 = vsel %vm528, %v6657, 0.0
      %6748 = vadd.xlane.f32.xlu0 %v6747
      %v6749 = vpop.xlane.xlu0 %6748
      %v6750 = vsel %vm528, %v6658, 0.0
      %6751 = vadd.xlane.f32.xlu0 %v6750
      %v6752 = vpop.xlane.xlu0 %6751
      %v6753 = vsel %vm528, %v6659, 0.0
      %6754 = vadd.xlane.f32.xlu0 %v6753
      %v6755 = vpop.xlane.xlu0 %6754
      %v6756 = vmul.f32 %v6662, %v625
      %v6757 = vmul.f32 %v6665, %v625
      %v6758 = vmul.f32 %v6668, %v625
      %v6759 = vmul.f32 %v6671, %v625
      %v6760 = vmul.f32 %v6674, %v625
      %v6761 = vmul.f32 %v6677, %v625
      %v6762 = vmul.f32 %v6680, %v625
      %v6763 = vmul.f32 %v6683, %v625
      %v6764 = vmul.f32 %v6686, %v625
      %v6765 = vmul.f32 %v6689, %v625
      %v6766 = vmul.f32 %v6692, %v625
      %v6767 = vmul.f32 %v6695, %v625
      %v6768 = vmul.f32 %v6698, %v625
      %v6769 = vmul.f32 %v6701, %v625
      %v6770 = vmul.f32 %v6704, %v625
      %v6771 = vmul.f32 %v6707, %v625
      %v6772 = vmul.f32 %v6710, %v625
      %v6773 = vmul.f32 %v6713, %v625
      %v6774 = vmul.f32 %v6716, %v625
      %v6775 = vmul.f32 %v6719, %v625
      %v6776 = vmul.f32 %v6722, %v625
      %v6777 = vmul.f32 %v6725, %v625
      %v6778 = vmul.f32 %v6728, %v625
      %v6779 = vmul.f32 %v6731, %v625
      %v6780 = vmul.f32 %v6734, %v625
      %v6781 = vmul.f32 %v6737, %v625
      %v6782 = vmul.f32 %v6740, %v625
      %v6783 = vmul.f32 %v6743, %v625
      %v6784 = vmul.f32 %v6746, %v625
      %v6785 = vmul.f32 %v6749, %v625
      %v6786 = vmul.f32 %v6752, %v625
      %v6787 = vmul.f32 %v6755, %v625
      %v6788 = vadd.f32 %v6756, 1e-05
      %v6789 = vadd.f32 %v6757, 1e-05
      %v6790 = vadd.f32 %v6758, 1e-05
      %v6791 = vadd.f32 %v6759, 1e-05
      %v6792 = vadd.f32 %v6760, 1e-05
      %v6793 = vadd.f32 %v6761, 1e-05
      %v6794 = vadd.f32 %v6762, 1e-05
      %v6795 = vadd.f32 %v6763, 1e-05
      %v6796 = vadd.f32 %v6764, 1e-05
      %v6797 = vadd.f32 %v6765, 1e-05
      %v6798 = vadd.f32 %v6766, 1e-05
      %v6799 = vadd.f32 %v6767, 1e-05
      %v6800 = vadd.f32 %v6768, 1e-05
      %v6801 = vadd.f32 %v6769, 1e-05
      %v6802 = vadd.f32 %v6770, 1e-05
      %v6803 = vadd.f32 %v6771, 1e-05
      %v6804 = vadd.f32 %v6772, 1e-05
      %v6805 = vadd.f32 %v6773, 1e-05
      %v6806 = vadd.f32 %v6774, 1e-05
      %v6807 = vadd.f32 %v6775, 1e-05
      %v6808 = vadd.f32 %v6776, 1e-05
      %v6809 = vadd.f32 %v6777, 1e-05
      %v6810 = vadd.f32 %v6778, 1e-05
      %v6811 = vadd.f32 %v6779, 1e-05
      %v6812 = vadd.f32 %v6780, 1e-05
      %v6813 = vadd.f32 %v6781, 1e-05
      %v6814 = vadd.f32 %v6782, 1e-05
      %v6815 = vadd.f32 %v6783, 1e-05
      %v6816 = vadd.f32 %v6784, 1e-05
      %v6817 = vadd.f32 %v6785, 1e-05
      %v6818 = vadd.f32 %v6786, 1e-05
      %v6819 = vadd.f32 %v6787, 1e-05
      %v6820 = vrsqrt.pop %v6788
      %v6821 = vrsqrt.pop %v6789
      %v6822 = vrsqrt.pop %v6790
      %v6823 = vrsqrt.pop %v6791
      %v6824 = vrsqrt.pop %v6792
      %v6825 = vrsqrt.pop %v6793
      %v6826 = vrsqrt.pop %v6794
      %v6827 = vrsqrt.pop %v6795
      %v6828 = vrsqrt.pop %v6796
      %v6829 = vrsqrt.pop %v6797
      %v6830 = vrsqrt.pop %v6798
      %v6831 = vrsqrt.pop %v6799
      %v6832 = vrsqrt.pop %v6800
      %v6833 = vrsqrt.pop %v6801
      %v6834 = vrsqrt.pop %v6802
      %v6835 = vrsqrt.pop %v6803
      %v6836 = vrsqrt.pop %v6804
      %v6837 = vrsqrt.pop %v6805
      %v6838 = vrsqrt.pop %v6806
      %v6839 = vrsqrt.pop %v6807
      %v6840 = vrsqrt.pop %v6808
      %v6841 = vrsqrt.pop %v6809
      %v6842 = vrsqrt.pop %v6810
      %v6843 = vrsqrt.pop %v6811
      %v6844 = vrsqrt.pop %v6812
      %v6845 = vrsqrt.pop %v6813
      %v6846 = vrsqrt.pop %v6814
      %v6847 = vrsqrt.pop %v6815
      %v6848 = vrsqrt.pop %v6816
      %v6849 = vrsqrt.pop %v6817
      %v6850 = vrsqrt.pop %v6818
      %v6851 = vrsqrt.pop %v6819
      %v6852 = vmul.f32 %v6596, %v6820
      %v6853 = vmul.f32 %v6597, %v6821
      %v6854 = vmul.f32 %v6598, %v6822
      %v6855 = vmul.f32 %v6599, %v6823
      %v6856 = vmul.f32 %v6600, %v6824
      %v6857 = vmul.f32 %v6601, %v6825
      %v6858 = vmul.f32 %v6602, %v6826
      %v6859 = vmul.f32 %v6603, %v6827
      %v6860 = vmul.f32 %v6604, %v6828
      %v6861 = vmul.f32 %v6605, %v6829
      %v6862 = vmul.f32 %v6606, %v6830
      %v6863 = vmul.f32 %v6607, %v6831
      %v6864 = vmul.f32 %v6608, %v6832
      %v6865 = vmul.f32 %v6609, %v6833
      %v6866 = vmul.f32 %v6610, %v6834
      %v6867 = vmul.f32 %v6611, %v6835
      %v6868 = vmul.f32 %v6612, %v6836
      %v6869 = vmul.f32 %v6613, %v6837
      %v6870 = vmul.f32 %v6614, %v6838
      %v6871 = vmul.f32 %v6615, %v6839
      %v6872 = vmul.f32 %v6616, %v6840
      %v6873 = vmul.f32 %v6617, %v6841
      %v6874 = vmul.f32 %v6618, %v6842
      %v6875 = vmul.f32 %v6619, %v6843
      %v6876 = vmul.f32 %v6620, %v6844
      %v6877 = vmul.f32 %v6621, %v6845
      %v6878 = vmul.f32 %v6622, %v6846
      %v6879 = vmul.f32 %v6623, %v6847
      %v6880 = vmul.f32 %v6624, %v6848
      %v6881 = vmul.f32 %v6625, %v6849
      %v6882 = vmul.f32 %v6626, %v6850
      %v6883 = vmul.f32 %v6627, %v6851
      %v6884 = vld [vmem:[%s9] sm:$0x1]
      %v6886 = vlaneseq
      %v6887 = vshrl.u32 %v6886, 7
      %v6888 = vsub.s32 0, %v6887
      %v6889 = vrot.slane %v6884, %v6888
      %v6891 = vmul.f32 %v6852, %v6889
      %v6892 = vmul.f32 %v6853, %v6889
      %v6893 = vmul.f32 %v6854, %v6889
      %v6894 = vmul.f32 %v6855, %v6889
      %v6895 = vmul.f32 %v6856, %v6889
      %v6896 = vmul.f32 %v6857, %v6889
      %v6897 = vmul.f32 %v6858, %v6889
      %v6898 = vmul.f32 %v6859, %v6889
      %v6899 = vmul.f32 %v6860, %v6889
      %v6900 = vmul.f32 %v6861, %v6889
      %v6901 = vmul.f32 %v6862, %v6889
      %v6902 = vmul.f32 %v6863, %v6889
      %v6903 = vmul.f32 %v6864, %v6889
      %v6904 = vmul.f32 %v6865, %v6889
      %v6905 = vmul.f32 %v6866, %v6889
      %v6906 = vmul.f32 %v6867, %v6889
      %v6907 = vmul.f32 %v6868, %v6889
      %v6908 = vmul.f32 %v6869, %v6889
      %v6909 = vmul.f32 %v6870, %v6889
      %v6910 = vmul.f32 %v6871, %v6889
      %v6911 = vmul.f32 %v6872, %v6889
      %v6912 = vmul.f32 %v6873, %v6889
      %v6913 = vmul.f32 %v6874, %v6889
      %v6914 = vmul.f32 %v6875, %v6889
      %v6915 = vmul.f32 %v6876, %v6889
      %v6916 = vmul.f32 %v6877, %v6889
      %v6917 = vmul.f32 %v6878, %v6889
      %v6918 = vmul.f32 %v6879, %v6889
      %v6919 = vmul.f32 %v6880, %v6889
      %v6920 = vmul.f32 %v6881, %v6889
      %v6921 = vmul.f32 %v6882, %v6889
      %v6922 = vmul.f32 %v6883, %v6889
      %v6923 = vld [vmem:[%s10] sm:$0x1]
      %v6925 = vlaneseq
      %v6926 = vshrl.u32 %v6925, 7
      %v6927 = vsub.s32 0, %v6926
      %v6928 = vrot.slane %v6923, %v6927
      %v6930 = vadd.f32 %v6891, %v6928
      %v6931 = vadd.f32 %v6892, %v6928
      %v6932 = vadd.f32 %v6893, %v6928
      %v6933 = vadd.f32 %v6894, %v6928
      %v6934 = vadd.f32 %v6895, %v6928
      %v6935 = vadd.f32 %v6896, %v6928
      %v6936 = vadd.f32 %v6897, %v6928
      %v6937 = vadd.f32 %v6898, %v6928
      %v6938 = vadd.f32 %v6899, %v6928
      %v6939 = vadd.f32 %v6900, %v6928
      %v6940 = vadd.f32 %v6901, %v6928
      %v6941 = vadd.f32 %v6902, %v6928
      %v6942 = vadd.f32 %v6903, %v6928
      %v6943 = vadd.f32 %v6904, %v6928
      %v6944 = vadd.f32 %v6905, %v6928
      %v6945 = vadd.f32 %v6906, %v6928
      %v6946 = vadd.f32 %v6907, %v6928
      %v6947 = vadd.f32 %v6908, %v6928
      %v6948 = vadd.f32 %v6909, %v6928
      %v6949 = vadd.f32 %v6910, %v6928
      %v6950 = vadd.f32 %v6911, %v6928
      %v6951 = vadd.f32 %v6912, %v6928
      %v6952 = vadd.f32 %v6913, %v6928
      %v6953 = vadd.f32 %v6914, %v6928
      %v6954 = vadd.f32 %v6915, %v6928
      %v6955 = vadd.f32 %v6916, %v6928
      %v6956 = vadd.f32 %v6917, %v6928
      %v6957 = vadd.f32 %v6918, %v6928
      %v6958 = vadd.f32 %v6919, %v6928
      %v6959 = vadd.f32 %v6920, %v6928
      %v6960 = vadd.f32 %v6921, %v6928
      %v6961 = vadd.f32 %v6922, %v6928
      %v6962 = vpack.c.bf16 %v6931, %v6930
      %v6963 = vpack.c.bf16 %v6933, %v6932
      %v6964 = vpack.c.bf16 %v6935, %v6934
      %v6965 = vpack.c.bf16 %v6937, %v6936
      %v6966 = vpack.c.bf16 %v6939, %v6938
      %v6967 = vpack.c.bf16 %v6941, %v6940
      %v6968 = vpack.c.bf16 %v6943, %v6942
      %v6969 = vpack.c.bf16 %v6945, %v6944
      %v6970 = vpack.c.bf16 %v6947, %v6946
      %v6971 = vpack.c.bf16 %v6949, %v6948
      %v6972 = vpack.c.bf16 %v6951, %v6950
      %v6973 = vpack.c.bf16 %v6953, %v6952
      %v6974 = vpack.c.bf16 %v6955, %v6954
      %v6975 = vpack.c.bf16 %v6957, %v6956
      %v6976 = vpack.c.bf16 %v6959, %v6958
      %v6977 = vpack.c.bf16 %v6961, %v6960
      %v6978 = vld [vmem:[%s11] sm:$0xf]
      %v6979 = vld [vmem:[%s11 + $0x4] sm:$0xf]
      %v6980 = vld [vmem:[%s11 + $0x8] sm:$0xf]
      %v6981 = vld [vmem:[%s11 + $0xc] sm:$0xf]
      %v6982 = vld [vmem:[%s12] sm:$0x1]
      %v6984 = vlaneseq
      %v6985 = vshrl.u32 %v6984, 7
      %v6986 = vsub.s32 0, %v6985
      %v6987 = vrot.slane %v6982, %v6986
      %v6993 = vunpack.c.l.b16 %v6978
      %v6994 = vunpack.c.l.b16 %v6979
      %v6995 = vunpack.c.l.b16 %v6980
      %v6996 = vunpack.c.l.b16 %v6981
      %v6997 = vpack.c.b16 %v6994, %v6993
      %v6998 = vpack.c.b16 %v6996, %v6995
      %v7002 = vsel %vm528, %v6962, 0
      %v7005 = vsel %vm528, %v6963, 0
      %v7008 = vsel %vm528, %v6964, 0
      %v7011 = vsel %vm528, %v6965, 0
      %v7014 = vsel %vm528, %v6966, 0
      %v7017 = vsel %vm528, %v6967, 0
      %v7020 = vsel %vm528, %v6968, 0
      %v7023 = vsel %vm528, %v6969, 0
      %v7026 = vsel %vm528, %v6970, 0
      %v7029 = vsel %vm528, %v6971, 0
      %v7032 = vsel %vm528, %v6972, 0
      %v7035 = vsel %vm528, %v6973, 0
      %v7038 = vsel %vm528, %v6974, 0
      %v7041 = vsel %vm528, %v6975, 0
      %v7044 = vsel %vm528, %v6976, 0
      %v7047 = vsel %vm528, %v6977, 0
      %7049 = vmatprep.subr.bf16.mxu0 0
      %7050 = vmatpush1.bf16.msra.mxu0 0
      %7051 = vmatprep.subr.bf16.mxu0 0
      %7052 = vmatpush1.bf16.msra.mxu0 0
      %7053 = vmatprep.subr.bf16.mxu0 0
      %7054 = vmatpush1.bf16.msra.mxu0 0
      %7055 = vmatprep.subr.bf16.mxu0 0
      %7056 = vmatpush1.bf16.msra.mxu0 0
      %7057 = vmatprep.subr.bf16.mxu0 0
      %7058 = vmatpush1.bf16.msra.mxu0 0
      %7059 = vmatprep.subr.bf16.mxu0 0
      %7060 = vmatpush1.bf16.msra.mxu0 0
      %7061 = vmatprep.subr.bf16.mxu0 0
      %7062 = vmatpush1.bf16.msra.mxu0 %v6998
      %7063 = vmatprep.subr.bf16.mxu0 0
      %7064 = vmatpush1.bf16.msra.mxu0 %v6997
      %7065 = vmatprep.subr.bf16.mxu0 0
      %7066 = vmatpush2.bf16.msra.mxu0 0
      %7067 = vmatprep.subr.bf16.mxu0 0
      %7068 = vmatpush2.bf16.msra.mxu0 0
      %7069 = vmatprep.subr.bf16.mxu0 0
      %7070 = vmatpush2.bf16.msra.mxu0 0
      %7071 = vmatprep.subr.bf16.mxu0 0
      %7072 = vmatpush2.bf16.msra.mxu0 0
      %7073 = vmatprep.subr.bf16.mxu0 0
      %7074 = vmatpush2.bf16.msra.mxu0 0
      %7075 = vmatprep.subr.bf16.mxu0 0
      %7076 = vmatpush2.bf16.msra.mxu0 0
      %7077 = vmatprep.subr.bf16.mxu0 0
      %7078 = vmatpush2.bf16.msra.mxu0 0
      %7079 = vmatprep.subr.bf16.mxu0 0
      %7080 = vmatpush2.bf16.msra.mxu0 0
      %7081 = vmatprep.mubr.bf16.mxu0 0
      %7082 = vmatmul.mubr.bf16.gmra.mxu0 %v7002
      %v7083 = vpop.f32.mrf.mxu0
      %v7084 = vadd.f32 %v6987, %v7083
      %v7085 = vpop.f32.mrf.mxu0
      %v7086 = vpop.f32.mrf.mxu0
      %v7087 = vadd.f32 %v6987, %v7086
      %v7088 = vpop.f32.mrf.mxu0
      %7089 = vmatprep.mubr.bf16.mxu0 0
      %7090 = vmatmul.mubr.bf16.gmra.mxu0 %v7005
      %v7091 = vpop.f32.mrf.mxu0
      %v7092 = vadd.f32 %v6987, %v7091
      %v7093 = vpop.f32.mrf.mxu0
      %v7094 = vpop.f32.mrf.mxu0
      %v7095 = vadd.f32 %v6987, %v7094
      %v7096 = vpop.f32.mrf.mxu0
      %7097 = vmatprep.mubr.bf16.mxu0 0
      %7098 = vmatmul.mubr.bf16.gmra.mxu0 %v7008
      %v7099 = vpop.f32.mrf.mxu0
      %v7100 = vadd.f32 %v6987, %v7099
      %v7101 = vpop.f32.mrf.mxu0
      %v7102 = vpop.f32.mrf.mxu0
      %v7103 = vadd.f32 %v6987, %v7102
      %v7104 = vpop.f32.mrf.mxu0
      %7105 = vmatprep.mubr.bf16.mxu0 0
      %7106 = vmatmul.mubr.bf16.gmra.mxu0 %v7011
      %v7107 = vpop.f32.mrf.mxu0
      %v7108 = vadd.f32 %v6987, %v7107
      %v7109 = vpop.f32.mrf.mxu0
      %v7110 = vpop.f32.mrf.mxu0
      %v7111 = vadd.f32 %v6987, %v7110
      %v7112 = vpop.f32.mrf.mxu0
      %7113 = vmatprep.mubr.bf16.mxu0 0
      %7114 = vmatmul.mubr.bf16.gmra.mxu0 %v7014
      %v7115 = vpop.f32.mrf.mxu0
      %v7116 = vadd.f32 %v6987, %v7115
      %v7117 = vpop.f32.mrf.mxu0
      %v7118 = vpop.f32.mrf.mxu0
      %v7119 = vadd.f32 %v6987, %v7118
      %v7120 = vpop.f32.mrf.mxu0
      %7121 = vmatprep.mubr.bf16.mxu0 0
      %7122 = vmatmul.mubr.bf16.gmra.mxu0 %v7017
      %v7123 = vpop.f32.mrf.mxu0
      %v7124 = vadd.f32 %v6987, %v7123
      %v7125 = vpop.f32.mrf.mxu0
      %v7126 = vpop.f32.mrf.mxu0
      %v7127 = vadd.f32 %v6987, %v7126
      %v7128 = vpop.f32.mrf.mxu0
      %7129 = vmatprep.mubr.bf16.mxu0 0
      %7130 = vmatmul.mubr.bf16.gmra.mxu0 %v7020
      %v7131 = vpop.f32.mrf.mxu0
      %v7132 = vadd.f32 %v6987, %v7131
      %v7133 = vpop.f32.mrf.mxu0
      %v7134 = vpop.f32.mrf.mxu0
      %v7135 = vadd.f32 %v6987, %v7134
      %v7136 = vpop.f32.mrf.mxu0
      %7137 = vmatprep.mubr.bf16.mxu0 0
      %7138 = vmatmul.mubr.bf16.gmra.mxu0 %v7023
      %v7139 = vpop.f32.mrf.mxu0
      %v7140 = vadd.f32 %v6987, %v7139
      %v7141 = vpop.f32.mrf.mxu0
      %v7142 = vpop.f32.mrf.mxu0
      %v7143 = vadd.f32 %v6987, %v7142
      %v7144 = vpop.f32.mrf.mxu0
      %7145 = vmatprep.mubr.bf16.mxu0 0
      %7146 = vmatmul.mubr.bf16.gmra.mxu0 %v7026
      %v7147 = vpop.f32.mrf.mxu0
      %v7148 = vadd.f32 %v6987, %v7147
      %v7149 = vpop.f32.mrf.mxu0
      %v7150 = vpop.f32.mrf.mxu0
      %v7151 = vadd.f32 %v6987, %v7150
      %v7152 = vpop.f32.mrf.mxu0
      %7153 = vmatprep.mubr.bf16.mxu0 0
      %7154 = vmatmul.mubr.bf16.gmra.mxu0 %v7029
      %v7155 = vpop.f32.mrf.mxu0
      %v7156 = vadd.f32 %v6987, %v7155
      %v7157 = vpop.f32.mrf.mxu0
      %v7158 = vpop.f32.mrf.mxu0
      %v7159 = vadd.f32 %v6987, %v7158
      %v7160 = vpop.f32.mrf.mxu0
      %7161 = vmatprep.mubr.bf16.mxu0 0
      %7162 = vmatmul.mubr.bf16.gmra.mxu0 %v7032
      %v7163 = vpop.f32.mrf.mxu0
      %v7164 = vadd.f32 %v6987, %v7163
      %v7165 = vpop.f32.mrf.mxu0
      %v7166 = vpop.f32.mrf.mxu0
      %v7167 = vadd.f32 %v6987, %v7166
      %v7168 = vpop.f32.mrf.mxu0
      %7169 = vmatprep.mubr.bf16.mxu0 0
      %7170 = vmatmul.mubr.bf16.gmra.mxu0 %v7035
      %v7171 = vpop.f32.mrf.mxu0
      %v7172 = vadd.f32 %v6987, %v7171
      %v7173 = vpop.f32.mrf.mxu0
      %v7174 = vpop.f32.mrf.mxu0
      %v7175 = vadd.f32 %v6987, %v7174
      %v7176 = vpop.f32.mrf.mxu0
      %7177 = vmatprep.mubr.bf16.mxu0 0
      %7178 = vmatmul.mubr.bf16.gmra.mxu0 %v7038
      %v7179 = vpop.f32.mrf.mxu0
      %v7180 = vadd.f32 %v6987, %v7179
      %v7181 = vpop.f32.mrf.mxu0
      %v7182 = vpop.f32.mrf.mxu0
      %v7183 = vadd.f32 %v6987, %v7182
      %v7184 = vpop.f32.mrf.mxu0
      %7185 = vmatprep.mubr.bf16.mxu0 0
      %7186 = vmatmul.mubr.bf16.gmra.mxu0 %v7041
      %v7187 = vpop.f32.mrf.mxu0
      %v7188 = vadd.f32 %v6987, %v7187
      %v7189 = vpop.f32.mrf.mxu0
      %v7190 = vpop.f32.mrf.mxu0
      %v7191 = vadd.f32 %v6987, %v7190
      %v7192 = vpop.f32.mrf.mxu0
      %7193 = vmatprep.mubr.bf16.mxu0 0
      %7194 = vmatmul.mubr.bf16.gmra.mxu0 %v7044
      %v7195 = vpop.f32.mrf.mxu0
      %v7196 = vadd.f32 %v6987, %v7195
      %v7197 = vpop.f32.mrf.mxu0
      %v7198 = vpop.f32.mrf.mxu0
      %v7199 = vadd.f32 %v6987, %v7198
      %v7200 = vpop.f32.mrf.mxu0
      %7201 = vmatprep.mubr.bf16.mxu0 0
      %7202 = vmatmul.mubr.bf16.gmra.mxu0 %v7047
      %v7203 = vpop.f32.mrf.mxu0
      %v7204 = vadd.f32 %v6987, %v7203
      %v7205 = vpop.f32.mrf.mxu0
      %v7206 = vpop.f32.mrf.mxu0
      %v7207 = vadd.f32 %v6987, %v7206
      %v7208 = vpop.f32.mrf.mxu0
      %7209 = vdwg.mxu0
      %v7210 = vmul.f32 %v7084, 0.5
      %v7211 = vmul.f32 %v7087, 0.5
      %v7212 = vmul.f32 %v7092, 0.5
      %v7213 = vmul.f32 %v7095, 0.5
      %v7214 = vmul.f32 %v7100, 0.5
      %v7215 = vmul.f32 %v7103, 0.5
      %v7216 = vmul.f32 %v7108, 0.5
      %v7217 = vmul.f32 %v7111, 0.5
      %v7218 = vmul.f32 %v7116, 0.5
      %v7219 = vmul.f32 %v7119, 0.5
      %v7220 = vmul.f32 %v7124, 0.5
      %v7221 = vmul.f32 %v7127, 0.5
      %v7222 = vmul.f32 %v7132, 0.5
      %v7223 = vmul.f32 %v7135, 0.5
      %v7224 = vmul.f32 %v7140, 0.5
      %v7225 = vmul.f32 %v7143, 0.5
      %v7226 = vmul.f32 %v7148, 0.5
      %v7227 = vmul.f32 %v7151, 0.5
      %v7228 = vmul.f32 %v7156, 0.5
      %v7229 = vmul.f32 %v7159, 0.5
      %v7230 = vmul.f32 %v7164, 0.5
      %v7231 = vmul.f32 %v7167, 0.5
      %v7232 = vmul.f32 %v7172, 0.5
      %v7233 = vmul.f32 %v7175, 0.5
      %v7234 = vmul.f32 %v7180, 0.5
      %v7235 = vmul.f32 %v7183, 0.5
      %v7236 = vmul.f32 %v7188, 0.5
      %v7237 = vmul.f32 %v7191, 0.5
      %v7238 = vmul.f32 %v7196, 0.5
      %v7239 = vmul.f32 %v7199, 0.5
      %v7240 = vmul.f32 %v7204, 0.5
      %v7241 = vmul.f32 %v7207, 0.5
      %v7242 = vmul.f32 %v7084, 0.044715
      %v7243 = vmul.f32 %v7087, 0.044715
      %v7244 = vmul.f32 %v7092, 0.044715
      %v7245 = vmul.f32 %v7095, 0.044715
      %v7246 = vmul.f32 %v7100, 0.044715
      %v7247 = vmul.f32 %v7103, 0.044715
      %v7248 = vmul.f32 %v7108, 0.044715
      %v7249 = vmul.f32 %v7111, 0.044715
      %v7250 = vmul.f32 %v7116, 0.044715
      %v7251 = vmul.f32 %v7119, 0.044715
      %v7252 = vmul.f32 %v7124, 0.044715
      %v7253 = vmul.f32 %v7127, 0.044715
      %v7254 = vmul.f32 %v7132, 0.044715
      %v7255 = vmul.f32 %v7135, 0.044715
      %v7256 = vmul.f32 %v7140, 0.044715
      %v7257 = vmul.f32 %v7143, 0.044715
      %v7258 = vmul.f32 %v7148, 0.044715
      %v7259 = vmul.f32 %v7151, 0.044715
      %v7260 = vmul.f32 %v7156, 0.044715
      %v7261 = vmul.f32 %v7159, 0.044715
      %v7262 = vmul.f32 %v7164, 0.044715
      %v7263 = vmul.f32 %v7167, 0.044715
      %v7264 = vmul.f32 %v7172, 0.044715
      %v7265 = vmul.f32 %v7175, 0.044715
      %v7266 = vmul.f32 %v7180, 0.044715
      %v7267 = vmul.f32 %v7183, 0.044715
      %v7268 = vmul.f32 %v7188, 0.044715
      %v7269 = vmul.f32 %v7191, 0.044715
      %v7270 = vmul.f32 %v7196, 0.044715
      %v7271 = vmul.f32 %v7199, 0.044715
      %v7272 = vmul.f32 %v7204, 0.044715
      %v7273 = vmul.f32 %v7207, 0.044715
      %v7274 = vmul.f32 %v7242, %v7084
      %v7275 = vmul.f32 %v7243, %v7087
      %v7276 = vmul.f32 %v7244, %v7092
      %v7277 = vmul.f32 %v7245, %v7095
      %v7278 = vmul.f32 %v7246, %v7100
      %v7279 = vmul.f32 %v7247, %v7103
      %v7280 = vmul.f32 %v7248, %v7108
      %v7281 = vmul.f32 %v7249, %v7111
      %v7282 = vmul.f32 %v7250, %v7116
      %v7283 = vmul.f32 %v7251, %v7119
      %v7284 = vmul.f32 %v7252, %v7124
      %v7285 = vmul.f32 %v7253, %v7127
      %v7286 = vmul.f32 %v7254, %v7132
      %v7287 = vmul.f32 %v7255, %v7135
      %v7288 = vmul.f32 %v7256, %v7140
      %v7289 = vmul.f32 %v7257, %v7143
      %v7290 = vmul.f32 %v7258, %v7148
      %v7291 = vmul.f32 %v7259, %v7151
      %v7292 = vmul.f32 %v7260, %v7156
      %v7293 = vmul.f32 %v7261, %v7159
      %v7294 = vmul.f32 %v7262, %v7164
      %v7295 = vmul.f32 %v7263, %v7167
      %v7296 = vmul.f32 %v7264, %v7172
      %v7297 = vmul.f32 %v7265, %v7175
      %v7298 = vmul.f32 %v7266, %v7180
      %v7299 = vmul.f32 %v7267, %v7183
      %v7300 = vmul.f32 %v7268, %v7188
      %v7301 = vmul.f32 %v7269, %v7191
      %v7302 = vmul.f32 %v7270, %v7196
      %v7303 = vmul.f32 %v7271, %v7199
      %v7304 = vmul.f32 %v7272, %v7204
      %v7305 = vmul.f32 %v7273, %v7207
      %v7306 = vmul.f32 %v7274, %v7084
      %v7307 = vmul.f32 %v7275, %v7087
      %v7308 = vmul.f32 %v7276, %v7092
      %v7309 = vmul.f32 %v7277, %v7095
      %v7310 = vmul.f32 %v7278, %v7100
      %v7311 = vmul.f32 %v7279, %v7103
      %v7312 = vmul.f32 %v7280, %v7108
      %v7313 = vmul.f32 %v7281, %v7111
      %v7314 = vmul.f32 %v7282, %v7116
      %v7315 = vmul.f32 %v7283, %v7119
      %v7316 = vmul.f32 %v7284, %v7124
      %v7317 = vmul.f32 %v7285, %v7127
      %v7318 = vmul.f32 %v7286, %v7132
      %v7319 = vmul.f32 %v7287, %v7135
      %v7320 = vmul.f32 %v7288, %v7140
      %v7321 = vmul.f32 %v7289, %v7143
      %v7322 = vmul.f32 %v7290, %v7148
      %v7323 = vmul.f32 %v7291, %v7151
      %v7324 = vmul.f32 %v7292, %v7156
      %v7325 = vmul.f32 %v7293, %v7159
      %v7326 = vmul.f32 %v7294, %v7164
      %v7327 = vmul.f32 %v7295, %v7167
      %v7328 = vmul.f32 %v7296, %v7172
      %v7329 = vmul.f32 %v7297, %v7175
      %v7330 = vmul.f32 %v7298, %v7180
      %v7331 = vmul.f32 %v7299, %v7183
      %v7332 = vmul.f32 %v7300, %v7188
      %v7333 = vmul.f32 %v7301, %v7191
      %v7334 = vmul.f32 %v7302, %v7196
      %v7335 = vmul.f32 %v7303, %v7199
      %v7336 = vmul.f32 %v7304, %v7204
      %v7337 = vmul.f32 %v7305, %v7207
      %v7338 = vadd.f32 %v7084, %v7306
      %v7339 = vadd.f32 %v7087, %v7307
      %v7340 = vadd.f32 %v7092, %v7308
      %v7341 = vadd.f32 %v7095, %v7309
      %v7342 = vadd.f32 %v7100, %v7310
      %v7343 = vadd.f32 %v7103, %v7311
      %v7344 = vadd.f32 %v7108, %v7312
      %v7345 = vadd.f32 %v7111, %v7313
      %v7346 = vadd.f32 %v7116, %v7314
      %v7347 = vadd.f32 %v7119, %v7315
      %v7348 = vadd.f32 %v7124, %v7316
      %v7349 = vadd.f32 %v7127, %v7317
      %v7350 = vadd.f32 %v7132, %v7318
      %v7351 = vadd.f32 %v7135, %v7319
      %v7352 = vadd.f32 %v7140, %v7320
      %v7353 = vadd.f32 %v7143, %v7321
      %v7354 = vadd.f32 %v7148, %v7322
      %v7355 = vadd.f32 %v7151, %v7323
      %v7356 = vadd.f32 %v7156, %v7324
      %v7357 = vadd.f32 %v7159, %v7325
      %v7358 = vadd.f32 %v7164, %v7326
      %v7359 = vadd.f32 %v7167, %v7327
      %v7360 = vadd.f32 %v7172, %v7328
      %v7361 = vadd.f32 %v7175, %v7329
      %v7362 = vadd.f32 %v7180, %v7330
      %v7363 = vadd.f32 %v7183, %v7331
      %v7364 = vadd.f32 %v7188, %v7332
      %v7365 = vadd.f32 %v7191, %v7333
      %v7366 = vadd.f32 %v7196, %v7334
      %v7367 = vadd.f32 %v7199, %v7335
      %v7368 = vadd.f32 %v7204, %v7336
      %v7369 = vadd.f32 %v7207, %v7337
      %v7370 = vmul.f32 %v7338, 0.7978846
      %v7371 = vmul.f32 %v7339, 0.7978846
      %v7372 = vmul.f32 %v7340, 0.7978846
      %v7373 = vmul.f32 %v7341, 0.7978846
      %v7374 = vmul.f32 %v7342, 0.7978846
      %v7375 = vmul.f32 %v7343, 0.7978846
      %v7376 = vmul.f32 %v7344, 0.7978846
      %v7377 = vmul.f32 %v7345, 0.7978846
      %v7378 = vmul.f32 %v7346, 0.7978846
      %v7379 = vmul.f32 %v7347, 0.7978846
      %v7380 = vmul.f32 %v7348, 0.7978846
      %v7381 = vmul.f32 %v7349, 0.7978846
      %v7382 = vmul.f32 %v7350, 0.7978846
      %v7383 = vmul.f32 %v7351, 0.7978846
      %v7384 = vmul.f32 %v7352, 0.7978846
      %v7385 = vmul.f32 %v7353, 0.7978846
      %v7386 = vmul.f32 %v7354, 0.7978846
      %v7387 = vmul.f32 %v7355, 0.7978846
      %v7388 = vmul.f32 %v7356, 0.7978846
      %v7389 = vmul.f32 %v7357, 0.7978846
      %v7390 = vmul.f32 %v7358, 0.7978846
      %v7391 = vmul.f32 %v7359, 0.7978846
      %v7392 = vmul.f32 %v7360, 0.7978846
      %v7393 = vmul.f32 %v7361, 0.7978846
      %v7394 = vmul.f32 %v7362, 0.7978846
      %v7395 = vmul.f32 %v7363, 0.7978846
      %v7396 = vmul.f32 %v7364, 0.7978846
      %v7397 = vmul.f32 %v7365, 0.7978846
      %v7398 = vmul.f32 %v7366, 0.7978846
      %v7399 = vmul.f32 %v7367, 0.7978846
      %v7400 = vmul.f32 %v7368, 0.7978846
      %v7401 = vmul.f32 %v7369, 0.7978846
      %v7402 = vtanh.pop %v7370
      %v7403 = vtanh.pop %v7371
      %v7404 = vtanh.pop %v7372
      %v7405 = vtanh.pop %v7373
      %v7406 = vtanh.pop %v7374
      %v7407 = vtanh.pop %v7375
      %v7408 = vtanh.pop %v7376
      %v7409 = vtanh.pop %v7377
      %v7410 = vtanh.pop %v7378
      %v7411 = vtanh.pop %v7379
      %v7412 = vtanh.pop %v7380
      %v7413 = vtanh.pop %v7381
      %v7414 = vtanh.pop %v7382
      %v7415 = vtanh.pop %v7383
      %v7416 = vtanh.pop %v7384
      %v7417 = vtanh.pop %v7385
      %v7418 = vtanh.pop %v7386
      %v7419 = vtanh.pop %v7387
      %v7420 = vtanh.pop %v7388
      %v7421 = vtanh.pop %v7389
      %v7422 = vtanh.pop %v7390
      %v7423 = vtanh.pop %v7391
      %v7424 = vtanh.pop %v7392
      %v7425 = vtanh.pop %v7393
      %v7426 = vtanh.pop %v7394
      %v7427 = vtanh.pop %v7395
      %v7428 = vtanh.pop %v7396
      %v7429 = vtanh.pop %v7397
      %v7430 = vtanh.pop %v7398
      %v7431 = vtanh.pop %v7399
      %v7432 = vtanh.pop %v7400
      %v7433 = vtanh.pop %v7401
      %v7434 = vadd.f32 %v7402, 1.0
      %v7435 = vadd.f32 %v7403, 1.0
      %v7436 = vadd.f32 %v7404, 1.0
      %v7437 = vadd.f32 %v7405, 1.0
      %v7438 = vadd.f32 %v7406, 1.0
      %v7439 = vadd.f32 %v7407, 1.0
      %v7440 = vadd.f32 %v7408, 1.0
      %v7441 = vadd.f32 %v7409, 1.0
      %v7442 = vadd.f32 %v7410, 1.0
      %v7443 = vadd.f32 %v7411, 1.0
      %v7444 = vadd.f32 %v7412, 1.0
      %v7445 = vadd.f32 %v7413, 1.0
      %v7446 = vadd.f32 %v7414, 1.0
      %v7447 = vadd.f32 %v7415, 1.0
      %v7448 = vadd.f32 %v7416, 1.0
      %v7449 = vadd.f32 %v7417, 1.0
      %v7450 = vadd.f32 %v7418, 1.0
      %v7451 = vadd.f32 %v7419, 1.0
      %v7452 = vadd.f32 %v7420, 1.0
      %v7453 = vadd.f32 %v7421, 1.0
      %v7454 = vadd.f32 %v7422, 1.0
      %v7455 = vadd.f32 %v7423, 1.0
      %v7456 = vadd.f32 %v7424, 1.0
      %v7457 = vadd.f32 %v7425, 1.0
      %v7458 = vadd.f32 %v7426, 1.0
      %v7459 = vadd.f32 %v7427, 1.0
      %v7460 = vadd.f32 %v7428, 1.0
      %v7461 = vadd.f32 %v7429, 1.0
      %v7462 = vadd.f32 %v7430, 1.0
      %v7463 = vadd.f32 %v7431, 1.0
      %v7464 = vadd.f32 %v7432, 1.0
      %v7465 = vadd.f32 %v7433, 1.0
      %v7466 = vmul.f32 %v7210, %v7434
      %v7467 = vmul.f32 %v7211, %v7435
      %v7468 = vmul.f32 %v7212, %v7436
      %v7469 = vmul.f32 %v7213, %v7437
      %v7470 = vmul.f32 %v7214, %v7438
      %v7471 = vmul.f32 %v7215, %v7439
      %v7472 = vmul.f32 %v7216, %v7440
      %v7473 = vmul.f32 %v7217, %v7441
      %v7474 = vmul.f32 %v7218, %v7442
      %v7475 = vmul.f32 %v7219, %v7443
      %v7476 = vmul.f32 %v7220, %v7444
      %v7477 = vmul.f32 %v7221, %v7445
      %v7478 = vmul.f32 %v7222, %v7446
      %v7479 = vmul.f32 %v7223, %v7447
      %v7480 = vmul.f32 %v7224, %v7448
      %v7481 = vmul.f32 %v7225, %v7449
      %v7482 = vmul.f32 %v7226, %v7450
      %v7483 = vmul.f32 %v7227, %v7451
      %v7484 = vmul.f32 %v7228, %v7452
      %v7485 = vmul.f32 %v7229, %v7453
      %v7486 = vmul.f32 %v7230, %v7454
      %v7487 = vmul.f32 %v7231, %v7455
      %v7488 = vmul.f32 %v7232, %v7456
      %v7489 = vmul.f32 %v7233, %v7457
      %v7490 = vmul.f32 %v7234, %v7458
      %v7491 = vmul.f32 %v7235, %v7459
      %v7492 = vmul.f32 %v7236, %v7460
      %v7493 = vmul.f32 %v7237, %v7461
      %v7494 = vmul.f32 %v7238, %v7462
      %v7495 = vmul.f32 %v7239, %v7463
      %v7496 = vmul.f32 %v7240, %v7464
      %v7497 = vmul.f32 %v7241, %v7465
      %v7498 = vpack.c.bf16 %v7467, %v7466
      %v7499 = vpack.c.bf16 %v7469, %v7468
      %v7500 = vpack.c.bf16 %v7471, %v7470
      %v7501 = vpack.c.bf16 %v7473, %v7472
      %v7502 = vpack.c.bf16 %v7475, %v7474
      %v7503 = vpack.c.bf16 %v7477, %v7476
      %v7504 = vpack.c.bf16 %v7479, %v7478
      %v7505 = vpack.c.bf16 %v7481, %v7480
      %v7506 = vpack.c.bf16 %v7483, %v7482
      %v7507 = vpack.c.bf16 %v7485, %v7484
      %v7508 = vpack.c.bf16 %v7487, %v7486
      %v7509 = vpack.c.bf16 %v7489, %v7488
      %v7510 = vpack.c.bf16 %v7491, %v7490
      %v7511 = vpack.c.bf16 %v7493, %v7492
      %v7512 = vpack.c.bf16 %v7495, %v7494
      %v7513 = vpack.c.bf16 %v7497, %v7496
      %v7514 = vld [vmem:[%s13] sm:$0xf]
      %v7515 = vld [vmem:[%s13 + $0x4] sm:$0xf]
      %v7516 = vld [vmem:[%s13 + $0x8] sm:$0xf]
      %v7517 = vld [vmem:[%s13 + $0xc] sm:$0xf]
      %v7518 = vld [vmem:[%s13 + $0x10] sm:$0xf]
      %v7519 = vld [vmem:[%s13 + $0x14] sm:$0xf]
      %v7520 = vld [vmem:[%s13 + $0x18] sm:$0xf]
      %v7521 = vld [vmem:[%s13 + $0x1c] sm:$0xf]
      %v7522 = vld [vmem:[%s14] sm:$0x1]
      %v7524 = vlaneseq
      %v7525 = vshrl.u32 %v7524, 7
      %v7526 = vsub.s32 0, %v7525
      %v7527 = vrot.slane %v7522, %v7526
      %v7537 = vunpack.c.l.b16 %v7514
      %v7538 = vunpack.c.l.b16 %v7515
      %v7539 = vunpack.c.l.b16 %v7516
      %v7540 = vunpack.c.l.b16 %v7517
      %v7541 = vunpack.c.l.b16 %v7518
      %v7542 = vunpack.c.l.b16 %v7519
      %v7543 = vunpack.c.l.b16 %v7520
      %v7544 = vunpack.c.l.b16 %v7521
      %v7545 = vpack.c.b16 %v7538, %v7537
      %v7546 = vpack.c.b16 %v7540, %v7539
      %v7547 = vpack.c.b16 %v7542, %v7541
      %v7548 = vpack.c.b16 %v7544, %v7543
      %vm7553 = vcmask 523264
      %v7555 = vsel %vm7553, %v7498, 0
      %v7558 = vsel %vm7553, %v7499, 0
      %v7561 = vsel %vm7553, %v7500, 0
      %v7564 = vsel %vm7553, %v7501, 0
      %v7567 = vsel %vm7553, %v7502, 0
      %v7570 = vsel %vm7553, %v7503, 0
      %v7573 = vsel %vm7553, %v7504, 0
      %v7576 = vsel %vm7553, %v7505, 0
      %v7579 = vsel %vm7553, %v7506, 0
      %v7582 = vsel %vm7553, %v7507, 0
      %v7585 = vsel %vm7553, %v7508, 0
      %v7588 = vsel %vm7553, %v7509, 0
      %v7591 = vsel %vm7553, %v7510, 0
      %v7594 = vsel %vm7553, %v7511, 0
      %v7597 = vsel %vm7553, %v7512, 0
      %v7600 = vsel %vm7553, %v7513, 0
      %7602 = vmatprep.subr.bf16.mxu0 0
      %7603 = vmatpush1.bf16.msra.mxu0 0
      %7604 = vmatprep.subr.bf16.mxu0 0
      %7605 = vmatpush1.bf16.msra.mxu0 0
      %7606 = vmatprep.subr.bf16.mxu0 0
      %7607 = vmatpush1.bf16.msra.mxu0 0
      %7608 = vmatprep.subr.bf16.mxu0 0
      %7609 = vmatpush1.bf16.msra.mxu0 0
      %7610 = vmatprep.subr.bf16.mxu0 0
      %7611 = vmatpush1.bf16.msra.mxu0 %v7548
      %7612 = vmatprep.subr.bf16.mxu0 0
      %7613 = vmatpush1.bf16.msra.mxu0 %v7547
      %7614 = vmatprep.subr.bf16.mxu0 0
      %7615 = vmatpush1.bf16.msra.mxu0 %v7546
      %7616 = vmatprep.subr.bf16.mxu0 0
      %7617 = vmatpush1.bf16.msra.mxu0 %v7545
      %7618 = vmatprep.subr.bf16.mxu0 0
      %7619 = vmatpush2.bf16.msra.mxu0 0
      %7620 = vmatprep.subr.bf16.mxu0 0
      %7621 = vmatpush2.bf16.msra.mxu0 0
      %7622 = vmatprep.subr.bf16.mxu0 0
      %7623 = vmatpush2.bf16.msra.mxu0 0
      %7624 = vmatprep.subr.bf16.mxu0 0
      %7625 = vmatpush2.bf16.msra.mxu0 0
      %7626 = vmatprep.subr.bf16.mxu0 0
      %7627 = vmatpush2.bf16.msra.mxu0 0
      %7628 = vmatprep.subr.bf16.mxu0 0
      %7629 = vmatpush2.bf16.msra.mxu0 0
      %7630 = vmatprep.subr.bf16.mxu0 0
      %7631 = vmatpush2.bf16.msra.mxu0 0
      %7632 = vmatprep.subr.bf16.mxu0 0
      %7633 = vmatpush2.bf16.msra.mxu0 0
      %7634 = vmatprep.mubr.bf16.mxu0 0
      %7635 = vmatmul.mubr.bf16.gmra.mxu0 %v7555
      %v7636 = vpop.f32.mrf.mxu0
      %v7637 = vadd.f32 %v7527, %v7636
      %v7638 = vpop.f32.mrf.mxu0
      %v7639 = vpop.f32.mrf.mxu0
      %v7640 = vadd.f32 %v7527, %v7639
      %v7641 = vpop.f32.mrf.mxu0
      %7642 = vmatprep.mubr.bf16.mxu0 0
      %7643 = vmatmul.mubr.bf16.gmra.mxu0 %v7558
      %v7644 = vpop.f32.mrf.mxu0
      %v7645 = vadd.f32 %v7527, %v7644
      %v7646 = vpop.f32.mrf.mxu0
      %v7647 = vpop.f32.mrf.mxu0
      %v7648 = vadd.f32 %v7527, %v7647
      %v7649 = vpop.f32.mrf.mxu0
      %7650 = vmatprep.mubr.bf16.mxu0 0
      %7651 = vmatmul.mubr.bf16.gmra.mxu0 %v7561
      %v7652 = vpop.f32.mrf.mxu0
      %v7653 = vadd.f32 %v7527, %v7652
      %v7654 = vpop.f32.mrf.mxu0
      %v7655 = vpop.f32.mrf.mxu0
      %v7656 = vadd.f32 %v7527, %v7655
      %v7657 = vpop.f32.mrf.mxu0
      %7658 = vmatprep.mubr.bf16.mxu0 0
      %7659 = vmatmul.mubr.bf16.gmra.mxu0 %v7564
      %v7660 = vpop.f32.mrf.mxu0
      %v7661 = vadd.f32 %v7527, %v7660
      %v7662 = vpop.f32.mrf.mxu0
      %v7663 = vpop.f32.mrf.mxu0
      %v7664 = vadd.f32 %v7527, %v7663
      %v7665 = vpop.f32.mrf.mxu0
      %7666 = vmatprep.mubr.bf16.mxu0 0
      %7667 = vmatmul.mubr.bf16.gmra.mxu0 %v7567
      %v7668 = vpop.f32.mrf.mxu0
      %v7669 = vadd.f32 %v7527, %v7668
      %v7670 = vpop.f32.mrf.mxu0
      %v7671 = vpop.f32.mrf.mxu0
      %v7672 = vadd.f32 %v7527, %v7671
      %v7673 = vpop.f32.mrf.mxu0
      %7674 = vmatprep.mubr.bf16.mxu0 0
      %7675 = vmatmul.mubr.bf16.gmra.mxu0 %v7570
      %v7676 = vpop.f32.mrf.mxu0
      %v7677 = vadd.f32 %v7527, %v7676
      %v7678 = vpop.f32.mrf.mxu0
      %v7679 = vpop.f32.mrf.mxu0
      %v7680 = vadd.f32 %v7527, %v7679
      %v7681 = vpop.f32.mrf.mxu0
      %7682 = vmatprep.mubr.bf16.mxu0 0
      %7683 = vmatmul.mubr.bf16.gmra.mxu0 %v7573
      %v7684 = vpop.f32.mrf.mxu0
      %v7685 = vadd.f32 %v7527, %v7684
      %v7686 = vpop.f32.mrf.mxu0
      %v7687 = vpop.f32.mrf.mxu0
      %v7688 = vadd.f32 %v7527, %v7687
      %v7689 = vpop.f32.mrf.mxu0
      %7690 = vmatprep.mubr.bf16.mxu0 0
      %7691 = vmatmul.mubr.bf16.gmra.mxu0 %v7576
      %v7692 = vpop.f32.mrf.mxu0
      %v7693 = vadd.f32 %v7527, %v7692
      %v7694 = vpop.f32.mrf.mxu0
      %v7695 = vpop.f32.mrf.mxu0
      %v7696 = vadd.f32 %v7527, %v7695
      %v7697 = vpop.f32.mrf.mxu0
      %7698 = vmatprep.mubr.bf16.mxu0 0
      %7699 = vmatmul.mubr.bf16.gmra.mxu0 %v7579
      %v7700 = vpop.f32.mrf.mxu0
      %v7701 = vadd.f32 %v7527, %v7700
      %v7702 = vpop.f32.mrf.mxu0
      %v7703 = vpop.f32.mrf.mxu0
      %v7704 = vadd.f32 %v7527, %v7703
      %v7705 = vpop.f32.mrf.mxu0
      %7706 = vmatprep.mubr.bf16.mxu0 0
      %7707 = vmatmul.mubr.bf16.gmra.mxu0 %v7582
      %v7708 = vpop.f32.mrf.mxu0
      %v7709 = vadd.f32 %v7527, %v7708
      %v7710 = vpop.f32.mrf.mxu0
      %v7711 = vpop.f32.mrf.mxu0
      %v7712 = vadd.f32 %v7527, %v7711
      %v7713 = vpop.f32.mrf.mxu0
      %7714 = vmatprep.mubr.bf16.mxu0 0
      %7715 = vmatmul.mubr.bf16.gmra.mxu0 %v7585
      %v7716 = vpop.f32.mrf.mxu0
      %v7717 = vadd.f32 %v7527, %v7716
      %v7718 = vpop.f32.mrf.mxu0
      %v7719 = vpop.f32.mrf.mxu0
      %v7720 = vadd.f32 %v7527, %v7719
      %v7721 = vpop.f32.mrf.mxu0
      %7722 = vmatprep.mubr.bf16.mxu0 0
      %7723 = vmatmul.mubr.bf16.gmra.mxu0 %v7588
      %v7724 = vpop.f32.mrf.mxu0
      %v7725 = vadd.f32 %v7527, %v7724
      %v7726 = vpop.f32.mrf.mxu0
      %v7727 = vpop.f32.mrf.mxu0
      %v7728 = vadd.f32 %v7527, %v7727
      %v7729 = vpop.f32.mrf.mxu0
      %7730 = vmatprep.mubr.bf16.mxu0 0
      %7731 = vmatmul.mubr.bf16.gmra.mxu0 %v7591
      %v7732 = vpop.f32.mrf.mxu0
      %v7733 = vadd.f32 %v7527, %v7732
      %v7734 = vpop.f32.mrf.mxu0
      %v7735 = vpop.f32.mrf.mxu0
      %v7736 = vadd.f32 %v7527, %v7735
      %v7737 = vpop.f32.mrf.mxu0
      %7738 = vmatprep.mubr.bf16.mxu0 0
      %7739 = vmatmul.mubr.bf16.gmra.mxu0 %v7594
      %v7740 = vpop.f32.mrf.mxu0
      %v7741 = vadd.f32 %v7527, %v7740
      %v7742 = vpop.f32.mrf.mxu0
      %v7743 = vpop.f32.mrf.mxu0
      %v7744 = vadd.f32 %v7527, %v7743
      %v7745 = vpop.f32.mrf.mxu0
      %7746 = vmatprep.mubr.bf16.mxu0 0
      %7747 = vmatmul.mubr.bf16.gmra.mxu0 %v7597
      %v7748 = vpop.f32.mrf.mxu0
      %v7749 = vadd.f32 %v7527, %v7748
      %v7750 = vpop.f32.mrf.mxu0
      %v7751 = vpop.f32.mrf.mxu0
      %v7752 = vadd.f32 %v7527, %v7751
      %v7753 = vpop.f32.mrf.mxu0
      %7754 = vmatprep.mubr.bf16.mxu0 0
      %7755 = vmatmul.mubr.bf16.gmra.mxu0 %v7600
      %v7756 = vpop.f32.mrf.mxu0
      %v7757 = vadd.f32 %v7527, %v7756
      %v7758 = vpop.f32.mrf.mxu0
      %v7759 = vpop.f32.mrf.mxu0
      %v7760 = vadd.f32 %v7527, %v7759
      %v7761 = vpop.f32.mrf.mxu0
      %7762 = vdwg.mxu0
      %v7763 = vadd.f32 %v6436, %v7637
      %v7764 = vadd.f32 %v6437, %v7640
      %v7765 = vadd.f32 %v6438, %v7645
      %v7766 = vadd.f32 %v6439, %v7648
      %v7767 = vadd.f32 %v6440, %v7653
      %v7768 = vadd.f32 %v6441, %v7656
      %v7769 = vadd.f32 %v6442, %v7661
      %v7770 = vadd.f32 %v6443, %v7664
      %v7771 = vadd.f32 %v6444, %v7669
      %v7772 = vadd.f32 %v6445, %v7672
      %v7773 = vadd.f32 %v6446, %v7677
      %v7774 = vadd.f32 %v6447, %v7680
      %v7775 = vadd.f32 %v6448, %v7685
      %v7776 = vadd.f32 %v6449, %v7688
      %v7777 = vadd.f32 %v6450, %v7693
      %v7778 = vadd.f32 %v6451, %v7696
      %v7779 = vadd.f32 %v6452, %v7701
      %v7780 = vadd.f32 %v6453, %v7704
      %v7781 = vadd.f32 %v6454, %v7709
      %v7782 = vadd.f32 %v6455, %v7712
      %v7783 = vadd.f32 %v6456, %v7717
      %v7784 = vadd.f32 %v6457, %v7720
      %v7785 = vadd.f32 %v6458, %v7725
      %v7786 = vadd.f32 %v6459, %v7728
      %v7787 = vadd.f32 %v6460, %v7733
      %v7788 = vadd.f32 %v6461, %v7736
      %v7789 = vadd.f32 %v6462, %v7741
      %v7790 = vadd.f32 %v6463, %v7744
      %v7791 = vadd.f32 %v6464, %v7749
      %v7792 = vadd.f32 %v6465, %v7752
      %v7793 = vadd.f32 %v6466, %v7757
      %v7794 = vadd.f32 %v6467, %v7760
      %7795 = vst.msk [vmem:[%s494] sm:$0xff] %vm528, %v7763
      %7796 = vst.msk [vmem:[%s494 + $0x8] sm:$0xff] %vm528, %v7764
      %7797 = vst.msk [vmem:[%s494 + $0x10] sm:$0xff] %vm528, %v7765
      %7798 = vst.msk [vmem:[%s494 + $0x18] sm:$0xff] %vm528, %v7766
      %7799 = vst.msk [vmem:[%s494 + $0x20] sm:$0xff] %vm528, %v7767
      %7800 = vst.msk [vmem:[%s494 + $0x28] sm:$0xff] %vm528, %v7768
      %7801 = vst.msk [vmem:[%s494 + $0x30] sm:$0xff] %vm528, %v7769
      %7802 = vst.msk [vmem:[%s494 + $0x38] sm:$0xff] %vm528, %v7770
      %7803 = vst.msk [vmem:[%s494 + $0x40] sm:$0xff] %vm528, %v7771
      %7804 = vst.msk [vmem:[%s494 + $0x48] sm:$0xff] %vm528, %v7772
      %7805 = vst.msk [vmem:[%s494 + $0x50] sm:$0xff] %vm528, %v7773
      %7806 = vst.msk [vmem:[%s494 + $0x58] sm:$0xff] %vm528, %v7774
      %7807 = vst.msk [vmem:[%s494 + $0x60] sm:$0xff] %vm528, %v7775
      %7808 = vst.msk [vmem:[%s494 + $0x68] sm:$0xff] %vm528, %v7776
      %7809 = vst.msk [vmem:[%s494 + $0x70] sm:$0xff] %vm528, %v7777
      %7810 = vst.msk [vmem:[%s494 + $0x78] sm:$0xff] %vm528, %v7778
      %7811 = vst.msk [vmem:[%s494 + $0x80] sm:$0xff] %vm528, %v7779
      %7812 = vst.msk [vmem:[%s494 + $0x88] sm:$0xff] %vm528, %v7780
      %7813 = vst.msk [vmem:[%s494 + $0x90] sm:$0xff] %vm528, %v7781
      %7814 = vst.msk [vmem:[%s494 + $0x98] sm:$0xff] %vm528, %v7782
      %7815 = vst.msk [vmem:[%s494 + $0xa0] sm:$0xff] %vm528, %v7783
      %7816 = vst.msk [vmem:[%s494 + $0xa8] sm:$0xff] %vm528, %v7784
      %7817 = vst.msk [vmem:[%s494 + $0xb0] sm:$0xff] %vm528, %v7785
      %7818 = vst.msk [vmem:[%s494 + $0xb8] sm:$0xff] %vm528, %v7786
      %7819 = vst.msk [vmem:[%s494 + $0xc0] sm:$0xff] %vm528, %v7787
      %7820 = vst.msk [vmem:[%s494 + $0xc8] sm:$0xff] %vm528, %v7788
      %7821 = vst.msk [vmem:[%s494 + $0xd0] sm:$0xff] %vm528, %v7789
      %7822 = vst.msk [vmem:[%s494 + $0xd8] sm:$0xff] %vm528, %v7790
      %7823 = vst.msk [vmem:[%s494 + $0xe0] sm:$0xff] %vm528, %v7791
      %7824 = vst.msk [vmem:[%s494 + $0xe8] sm:$0xff] %vm528, %v7792
      %7825 = vst.msk [vmem:[%s494 + $0xf0] sm:$0xff] %vm528, %v7793
      %7826 = vst.msk [vmem:[%s494 + $0xf8] sm:$0xff] %vm528, %v7794
      %p7827 = scmp.lt.s32.totalorder %s26, 1
      %s7828 = scalar_select %p7827, %s26, 1
      %s7829 = smul.addr %s7828, 32
      %s7830 = smul.addr %s7829, 8
      %s7831 = scalar_lea.vmem %s15, %s7830
      // Predicated region
      $region81: #{swin_block.1} parent=79 // pred_check
        %p7832 = pneg %p364
      $region82: #{swin_block.1} parent=79 // pred_check_branch
        %7834 = sbr.rel (%p7832) target = $region84
      $region83: #{swin_block.1} parent=79 // pred_region
        _
      $region84: #{swin_block.1} parent=79 // pred_fallthru
        _
    $region80: #{swin_block.1} parent=5 // pred_fallthru
      _
    %p7835 = scmp.le.s32.totalorder 2, %s21
    // Predicated region
    $region85: #{swin_block.1} parent=5 // pred_check
      %p7836 = pneg %p7835
    $region86: #{swin_block.1} parent=5 // pred_check_branch
      %7838 = sbr.rel (%p7836) target = $region88
    $region87: #{swin_block.1} parent=5 // pred_region
      %s7839 = ssub.s32 %s21, 2
      // Predicated region
      $region89: #{swin_block.1} parent=87 // pred_check
        %p7840 = pneg %p370
      $region90: #{swin_block.1} parent=87 // pred_check_branch
        %7842 = sbr.rel (%p7840) target = $region92
      $region91: #{swin_block.1} parent=87 // pred_region
        %p7843 = scmp.lt.s32.totalorder %s27, 1
        %s7844 = scalar_select %p7843, %s27, 1
        %s7845 = smul.addr %s7844, 32
        %s7846 = smul.addr %s7845, 8
        %s7847 = scalar_lea.vmem %s15, %s7846
      $region92: #{swin_block.1} parent=87 // pred_fallthru
        _
    $region88: #{swin_block.1} parent=5 // pred_fallthru
      _
  $region6: #{swin_block.1} parent=0 // loop_footer
    %s25 = sadd.s32 1, %s21
  $region7: #{swin_block.1} parent=0 // loop_footer_branch
    %20 = sbr.rel target = $region3
  $region8: #{swin_block.1} parent=0 // loop_exit
    _

</llo_original>
